<compile_context>
chip_gen: v5e
topology: v5e:2x2
jax: 0.10.0
libtpu: 0.0.40
codegen_flags: <defaults>
</compile_context>

<pallas_src>
import numpy as np
import jax
import jax.numpy as jnp
from jax import lax
from jax.experimental import pallas as pl
from jax.experimental.pallas import tpu as pltpu

# ----------------------- model constants (small synthetic sizes) ------------
BOX_LEN = 15            # boxes last dim = 2 * BOX_LEN (fixed by the module)
SPLIT_SIZE = 4          # stands in for 16 -> position_size = SPLIT_SIZE**2
IMG_DIM = 256           # stands in for 2048
TAG_DIM = 128           # stands in for 768 (BERT tag features)
POS_EMBED = 128         # position_embed_size (stands in for 200)
EMBED_SIZE = 128        # fc output size (lane-dense)
B, R = 4, 64            # batch, regions per image  -> N = 256 rows
POSITION_SIZE = SPLIT_SIZE * SPLIT_SIZE
ROW_TILE = 128          # rows per grid step (2 "parallel" steps at N=256)


# ------------------------------- Pallas kernel -------------------------------
def _encoder_kernel(img_ref, tag_ref, idx_ref, boxw_ref,
                    tab_ref, tab_t_ref,
                    w_img_ref, w_tag_ref,      # fused [attn | fc] weights
                    wf_box_ref, bfc_ref,
                    out_ref):
    f32, bf16 = jnp.float32, jnp.bfloat16
    img = img_ref[...]                       # (TM, IMG_DIM)  bf16
    tag = tag_ref[...]                       # (TM, TAG_DIM)  bf16
    idxf = idx_ref[...].astype(f32)          # (TM, L)        box indices as f32
    box_w = boxw_ref[...]                    # (TM, L)        f32

    tm, L = idxf.shape
    T, P = tab_ref.shape                     # position table rows / embed dim
    E = out_ref.shape[-1]

    # One fused 256-wide matmul per operand:
    #   fused[:, :P]  = posi_attn_matrix_add_tag([images ; images_tag])
    #   fused[:, P:]  = fc weight applied to [images ; images_tag] (partial sum)
    fused = (jnp.dot(img, w_img_ref[...], preferred_element_type=f32) +
             jnp.dot(tag, w_tag_ref[...], preferred_element_type=f32))  # (TM, P+E)
    region = fused[:, :P]                    # (TM, P) f32  (lane-block aligned slice)
    fc_img_tag = fused[:, P:]                # (TM, E) f32

    # proj[n, t] = region[n] . pos_table[t]   -- tiny MXU matmul, T pads to 128
    proj = jnp.dot(region.astype(bf16), tab_t_ref[...],
                   preferred_element_type=f32)                           # (TM, T)

    iota_L = lax.broadcasted_iota(jnp.int32, (tm, L), 1)                 # (TM, L)
    iota_Tf = lax.broadcasted_iota(jnp.int32, (tm, T), 1).astype(f32)    # (TM, T)

    # ---- pass 1: scores[n, l] = proj[n, idx[n, l]]  (no (TM,L,T) temp) -----
    # Out-of-range indices contribute a score of 0 (same convention as the
    # previous one-hot formulation); verify against real-data padding indices.
    scores = jnp.zeros((tm, L), f32)
    for l in range(L):
        onecol = iota_L == l                                             # (TM, L)
        idx_l = jnp.sum(jnp.where(onecol, idxf, 0.0),
                        axis=-1, keepdims=True)                          # (TM, 1)
        mask = iota_Tf == idx_l                                          # (TM, T)
        s_l = jnp.sum(jnp.where(mask, proj, 0.0),
                      axis=-1, keepdims=True)                            # (TM, 1)
        scores = jnp.where(onecol, s_l, scores)

    # tanh + softmax over BOX_LEN; tanh bounds scores so no max-subtraction.
    e = jnp.exp(jnp.tanh(scores))
    attn = e * pl.reciprocal(jnp.sum(e, axis=-1, keepdims=True), approx=True)
    attn = attn * box_w
    attn = attn * pl.reciprocal(jnp.sum(attn, axis=-1, keepdims=True) + 1e-6,
                                approx=True)

    # ---- pass 2: wsel[n, t] = sum_l attn[n, l] * (idx[n, l] == t) -----------
    wsel = jnp.zeros((tm, T), f32)
    for l in range(L):
        onecol = iota_L == l
        idx_l = jnp.sum(jnp.where(onecol, idxf, 0.0), axis=-1, keepdims=True)
        a_l = jnp.sum(jnp.where(onecol, attn, 0.0), axis=-1, keepdims=True)
        mask = iota_Tf == idx_l
        wsel = wsel + jnp.where(mask, a_l, 0.0)

    # box_feat[n] = sum_l attn[n, l] * pos_table[idx[n, l]] = wsel @ pos_table
    box_feat = jnp.dot(wsel.astype(bf16), tab_ref[...],
                       preferred_element_type=f32)                       # (TM, P)

    # fc([images ; box_feat ; images_tag]); img/tag partial already in fused.
    feats = (fc_img_tag +
             jnp.dot(box_feat.astype(bf16), wf_box_ref[...],
                     preferred_element_type=f32) +
             bfc_ref[...])                                               # (TM, E)

    # l2norm matching the PyTorch eps placement: x / (sqrt(sum(x^2)) + 1e-8).
    norm = jnp.sqrt(jnp.sum(feats * feats, axis=-1, keepdims=True)) + 1e-8
    out_ref[...] = feats / norm


# ------------------------------- wrapper --------------------------------------
def encoder_image_precomp(images, images_tag, boxes, params, row_tile=ROW_TILE):
    bf16 = jnp.bfloat16
    Bn, Rn, img_dim = images.shape
    tag_dim = images_tag.shape[-1]
    L = boxes.shape[2] // 2
    pos_tab_rows, pos_dim = params["pos_emb"].shape
    embed = params["w_fc"].shape[0]

    # --- glue: flatten (B, R) -> rows, split boxes into indices / weights ---
    N = Bn * Rn
    flat_boxes = boxes.reshape(N, 2 * L)
    idx = flat_boxes[:, :L].astype(jnp.int32)            # new_boxes_index (trunc)
    box_w = flat_boxes[:, L:].astype(jnp.float32)        # new_boxes_weight
    img2 = images.reshape(N, img_dim).astype(bf16)
    tag2 = images_tag.reshape(N, tag_dim).astype(bf16)

    # pad rows to a multiple of the row tile (padded rows are sliced away)
    num_tiles = -(-N // row_tile)
    n_pad = num_tiles * row_tile
    if n_pad != N:
        pad = n_pad - N
        img2 = jnp.pad(img2, ((0, pad), (0, 0)))
        tag2 = jnp.pad(tag2, ((0, pad), (0, 0)))
        idx = jnp.pad(idx, ((0, pad), (0, 0)))
        box_w = jnp.pad(box_w, ((0, pad), (0, 0)))

    # --- glue: pre-split / transpose / fuse / bf16-cast weights (one-time) ---
    w_attn = params["w_attn"].astype(bf16)                # (P, img+tag)
    wa_img = w_attn[:, :img_dim].T                        # (img, P)
    wa_tag = w_attn[:, img_dim:].T                        # (tag, P)
    w_fc = params["w_fc"].astype(bf16)                    # (E, img+P+tag)
    wf_img = w_fc[:, :img_dim].T                          # (img, E)
    wf_box = w_fc[:, img_dim:img_dim + pos_dim].T         # (P, E)
    wf_tag = w_fc[:, img_dim + pos_dim:].T                # (tag, E)
    # fuse attn + fc blocks along the output dim -> one 256-wide MXU matmul
    w_img_fused = jnp.concatenate([wa_img, wf_img], axis=1)   # (img, P+E)
    w_tag_fused = jnp.concatenate([wa_tag, wf_tag], axis=1)   # (tag, P+E)
    b_fc = params["b_fc"].reshape(1, embed).astype(jnp.float32)
    pos_tab = params["pos_emb"].astype(bf16)              # (T, P)
    pos_tab_t = pos_tab.T                                 # (P, T)

    row_spec = lambda cols: pl.BlockSpec((row_tile, cols), lambda i: (i, 0))
    full = lambda shape: pl.BlockSpec(shape, lambda i: (0,) * len(shape))
    # TODO(synk): at real sizes mark the grid-invariant weight blocks with
    # pipeline_mode=pl.Buffered(1) and set vmem_limit_bytes (v7x has 64 MiB).

    # advisory cost estimate so XLA schedules around the custom call
    flops = int(2 * n_pad * (img_dim + tag_dim) * (pos_dim + embed) +
                2 * n_pad * pos_dim * pos_tab_rows +       # proj
                2 * n_pad * pos_tab_rows * pos_dim +       # box_feat
                2 * n_pad * pos_dim * embed)               # fc box block
    transcendentals = int(n_pad * (2 * L + 4))
    bytes_accessed = int(img2.size * 2 + tag2.size * 2 + idx.size * 4 +
                         box_w.size * 4 + pos_tab.size * 2 * 2 +
                         w_img_fused.size * 2 + w_tag_fused.size * 2 +
                         wf_box.size * 2 + b_fc.size * 4 + n_pad * embed * 4)

    out = pl.pallas_call(
        _encoder_kernel,
        out_shape=jax.ShapeDtypeStruct((n_pad, embed), jnp.float32),
        grid=(num_tiles,),
        in_specs=[
            row_spec(img_dim),                 # images (rows)
            row_spec(tag_dim),                 # images_tag (rows)
            row_spec(L),                       # box indices (rows)
            row_spec(L),                       # box weights (rows)
            full((pos_tab_rows, pos_dim)),     # position table
            full((pos_dim, pos_tab_rows)),     # position table, transposed
            full((img_dim, pos_dim + embed)),  # fused [attn|fc] weight (img)
            full((tag_dim, pos_dim + embed)),  # fused [attn|fc] weight (tag)
            full((pos_dim, embed)),            # fc weight (box block)
            full((1, embed)),                  # fc bias
        ],
        out_specs=pl.BlockSpec((row_tile, embed), lambda i: (i, 0)),
        compiler_params=pltpu.CompilerParams(
            dimension_semantics=("parallel",)),
        cost_estimate=pl.CostEstimate(flops=flops,
                                      transcendentals=transcendentals,
                                      bytes_accessed=bytes_accessed),
    )(img2, tag2, idx, box_w, pos_tab, pos_tab_t,
      w_img_fused, w_tag_fused, wf_box, b_fc)

    return out[:N].reshape(Bn, Rn, embed)


# ------------------------------- pure-JAX reference ---------------------------
def reference(images, images_tag, boxes, params):
    """Reference mirroring the kernel's bf16 matmul-operand casts (f32 accum)."""
    f32, bf16 = jnp.float32, jnp.bfloat16
    Bn, Rn, img_dim = images.shape
    L = boxes.shape[2] // 2
    pos_dim = params["pos_emb"].shape[-1]

    flat = boxes.reshape(Bn * Rn, 2 * L)
    idx = flat[:, :L].astype(jnp.int32)
    box_w = flat[:, L:].reshape(Bn, Rn, L)
    emb = params["pos_emb"].astype(bf16)[idx].astype(f32).reshape(Bn, Rn, L, pos_dim)

    img_b = images.astype(bf16)
    tag_b = images_tag.astype(bf16)
    w_attn = params["w_attn"].astype(bf16)
    region = (jnp.einsum("brd,pd->brp", img_b, w_attn[:, :img_dim],
                         preferred_element_type=f32) +
              jnp.einsum("brd,pd->brp", tag_b, w_attn[:, img_dim:],
                         preferred_element_type=f32))
    scores = jnp.einsum("brp,brlp->brl", region.astype(bf16), emb.astype(bf16),
                        preferred_element_type=f32)
    attn = jax.nn.softmax(jnp.tanh(scores), axis=-1)
    attn = attn * box_w
    attn = attn / (jnp.sum(attn, axis=-1, keepdims=True) + 1e-6)
    box_feat = jnp.einsum("brl,brlp->brp", attn, emb)

    w_fc = params["w_fc"].astype(bf16)
    feats = (jnp.einsum("brd,ed->bre", img_b, w_fc[:, :img_dim],
                        preferred_element_type=f32) +
             jnp.einsum("brp,ep->bre", box_feat.astype(bf16),
                        w_fc[:, img_dim:img_dim + pos_dim],
                        preferred_element_type=f32) +
             jnp.einsum("brd,ed->bre", tag_b, w_fc[:, img_dim + pos_dim:],
                        preferred_element_type=f32) +
             params["b_fc"])
    norm = jnp.sqrt(jnp.sum(feats ** 2, axis=-1, keepdims=True)) + 1e-8
    return feats / norm


# ------------------------------- main ------------------------------------------
if __name__ == "__main__":
    key = jax.random.PRNGKey(0)
    k_img, k_tag, k_idx, k_w, k_fc, k_attn, k_emb = jax.random.split(key, 7)

    # deterministic parameter init (Xavier uniform as in init_weights, N(0,1) embedding)
    fc_in = IMG_DIM + POS_EMBED + TAG_DIM
    r_fc = np.sqrt(6.0) / np.sqrt(fc_in + EMBED_SIZE)
    w_fc = jax.random.uniform(k_fc, (EMBED_SIZE, fc_in), jnp.float32, -r_fc, r_fc)
    b_fc = jnp.zeros((EMBED_SIZE,), jnp.float32)

    attn_in = IMG_DIM + TAG_DIM
    r_attn = np.sqrt(6.0) / np.sqrt(attn_in + POS_EMBED)
    w_attn = jax.random.uniform(k_attn, (POS_EMBED, attn_in), jnp.float32, -r_attn, r_attn)

    pos_emb = jax.random.normal(k_emb, (POSITION_SIZE + 1, POS_EMBED), jnp.float32)

    params = {"w_fc": w_fc, "b_fc": b_fc, "w_attn": w_attn, "pos_emb": pos_emb}

    # deterministic example inputs
    images = jax.random.normal(k_img, (B, R, IMG_DIM), jnp.float32)
    images_tag = jax.random.normal(k_tag, (B, R, TAG_DIM), jnp.float32)
    box_idx = jax.random.randint(k_idx, (B, R, BOX_LEN), 0, POSITION_SIZE + 1).astype(jnp.float32)
    box_wts = jax.random.uniform(k_w, (B, R, BOX_LEN), jnp.float32)
    boxes = jnp.concatenate([box_idx, box_wts], axis=2)   # (B, R, 2*BOX_LEN)

    out = jax.block_until_ready(encoder_image_precomp(images, images_tag, boxes, params))
    ref = jax.block_until_ready(reference(images, images_tag, boxes, params))

    # bf16 MXU operands + EUP approx reciprocals -> compare at 1e-2.
    np.testing.assert_allclose(np.asarray(out), np.asarray(ref), rtol=1e-2, atol=1e-2)

    print("KERNEL_OK")
</pallas_src>

<mosaic_0001>
module attributes {stable_mosaic.version = 11 : i64} {
  func.func @_encoder_kernel(%arg0: i32, %arg1: memref<128x256xbf16, #tpu.memory_space<vmem>>, %arg2: memref<128x128xbf16, #tpu.memory_space<vmem>>, %arg3: memref<128x15xi32, #tpu.memory_space<vmem>>, %arg4: memref<128x15xf32, #tpu.memory_space<vmem>>, %arg5: memref<17x128xbf16, #tpu.memory_space<vmem>>, %arg6: memref<128x17xbf16, #tpu.memory_space<vmem>>, %arg7: memref<256x256xbf16, #tpu.memory_space<vmem>>, %arg8: memref<128x256xbf16, #tpu.memory_space<vmem>>, %arg9: memref<128x128xbf16, #tpu.memory_space<vmem>>, %arg10: memref<1x128xf32, #tpu.memory_space<vmem>>, %arg11: memref<128x128xf32, #tpu.memory_space<vmem>>) attributes {dimension_semantics = [#tpu.dimension_semantics<parallel>], iteration_bounds = array<i64: 2>, scalar_prefetch = 0 : i64, scratch_operands = 0 : i64, tpu.core_type = #tpu.core_type<tc>, window_params = [{transform_indices = @transform_0, window_bounds = array<i64: 128, 256>}, {transform_indices = @transform_1, window_bounds = array<i64: 128, 128>}, {transform_indices = @transform_2, window_bounds = array<i64: 128, 15>}, {transform_indices = @transform_3, window_bounds = array<i64: 128, 15>}, {pipeline_mode = #tpu.pipeline_mode<synchronous>, transform_indices = @transform_4, window_bounds = array<i64: 17, 128>}, {pipeline_mode = #tpu.pipeline_mode<synchronous>, transform_indices = @transform_5, window_bounds = array<i64: 128, 17>}, {pipeline_mode = #tpu.pipeline_mode<synchronous>, transform_indices = @transform_6, window_bounds = array<i64: 256, 256>}, {pipeline_mode = #tpu.pipeline_mode<synchronous>, transform_indices = @transform_7, window_bounds = array<i64: 128, 256>}, {pipeline_mode = #tpu.pipeline_mode<synchronous>, transform_indices = @transform_8, window_bounds = array<i64: 128, 128>}, {pipeline_mode = #tpu.pipeline_mode<synchronous>, transform_indices = @transform_9, window_bounds = array<i64: 1, 128>}, {transform_indices = @transform_10, window_bounds = array<i64: 128, 128>}]} {
    %c0 = arith.constant 0 : index
    %c0_0 = arith.constant 0 : index
    %0 = vector.load %arg1[%c0, %c0_0] : memref<128x256xbf16, #tpu.memory_space<vmem>>, vector<128x256xbf16>
    %c0_1 = arith.constant 0 : index
    %c0_2 = arith.constant 0 : index
    %1 = vector.load %arg2[%c0_1, %c0_2] : memref<128x128xbf16, #tpu.memory_space<vmem>>, vector<128x128xbf16>
    %c0_3 = arith.constant 0 : index
    %c0_4 = arith.constant 0 : index
    %2 = vector.load %arg3[%c0_3, %c0_4] : memref<128x15xi32, #tpu.memory_space<vmem>>, vector<128x15xi32>
    %3 = arith.sitofp %2 : vector<128x15xi32> to vector<128x15xf32>
    %c0_5 = arith.constant 0 : index
    %c0_6 = arith.constant 0 : index
    %4 = vector.load %arg4[%c0_5, %c0_6] : memref<128x15xf32, #tpu.memory_space<vmem>>, vector<128x15xf32>
    %c0_7 = arith.constant 0 : index
    %c0_8 = arith.constant 0 : index
    %5 = vector.load %arg7[%c0_7, %c0_8] : memref<256x256xbf16, #tpu.memory_space<vmem>>, vector<256x256xbf16>
    %cst = arith.constant dense<0.000000e+00> : vector<128x256xf32>
    %6 = tpu.matmul %0, %5, %cst {dimension_numbers = #tpu.dot_dimension_numbers<[1], [0], [0], [1], [0, 0, 1, 1], [], []>} : vector<128x256xbf16>, vector<256x256xbf16>, vector<128x256xf32> -> vector<128x256xf32>
    %c0_9 = arith.constant 0 : index
    %c0_10 = arith.constant 0 : index
    %7 = vector.load %arg8[%c0_9, %c0_10] : memref<128x256xbf16, #tpu.memory_space<vmem>>, vector<128x256xbf16>
    %cst_11 = arith.constant dense<0.000000e+00> : vector<128x256xf32>
    %8 = tpu.matmul %1, %7, %cst_11 {dimension_numbers = #tpu.dot_dimension_numbers<[1], [0], [0], [1], [0, 0, 1, 1], [], []>} : vector<128x128xbf16>, vector<128x256xbf16>, vector<128x256xf32> -> vector<128x256xf32>
    %9 = arith.addf %6, %8 : vector<128x256xf32>
    %10 = vector.extract_strided_slice %9 {offsets = [0, 0], sizes = [128, 128], strides = [1, 1]} : vector<128x256xf32> to vector<128x128xf32>
    %11 = vector.extract_strided_slice %9 {offsets = [0, 128], sizes = [128, 128], strides = [1, 1]} : vector<128x256xf32> to vector<128x128xf32>
    %12 = arith.truncf %10 : vector<128x128xf32> to vector<128x128xbf16>
    %c0_12 = arith.constant 0 : index
    %c0_13 = arith.constant 0 : index
    %13 = vector.load %arg6[%c0_12, %c0_13] : memref<128x17xbf16, #tpu.memory_space<vmem>>, vector<128x17xbf16>
    %cst_14 = arith.constant dense<0.000000e+00> : vector<128x17xf32>
    %14 = tpu.matmul %12, %13, %cst_14 {dimension_numbers = #tpu.dot_dimension_numbers<[1], [0], [0], [1], [0, 0, 1, 1], [], []>} : vector<128x128xbf16>, vector<128x17xbf16>, vector<128x17xf32> -> vector<128x17xf32>
    %15 = tpu.iota {dimensions = array<i32: 1>} : vector<128x15xi32>
    %16 = tpu.iota {dimensions = array<i32: 1>} : vector<128x17xi32>
    %17 = arith.sitofp %16 : vector<128x17xi32> to vector<128x17xf32>
    %cst_15 = arith.constant 0.000000e+00 : f32
    %18 = vector.broadcast %cst_15 : f32 to vector<128x15xf32>
    %c0_i32 = arith.constant 0 : i32
    %19 = vector.broadcast %c0_i32 : i32 to vector<128x15xi32>
    %20 = arith.cmpi eq, %15, %19 : vector<128x15xi32>
    %cst_16 = arith.constant 0.000000e+00 : f32
    %21 = vector.broadcast %cst_16 : f32 to vector<128x15xf32>
    %22 = arith.select %20, %3, %21 : vector<128x15xi1>, vector<128x15xf32>
    %cst_17 = arith.constant dense<0.000000e+00> : vector<128xf32>
    %23 = vector.multi_reduction <add>, %22, %cst_17 [1] : vector<128x15xf32> to vector<128xf32>
    %24 = vector.shape_cast %23 : vector<128xf32> to vector<128x1xf32>
    %25 = vector.broadcast %24 : vector<128x1xf32> to vector<128x17xf32>
    %26 = arith.cmpf oeq, %17, %25 : vector<128x17xf32>
    %cst_18 = arith.constant 0.000000e+00 : f32
    %27 = vector.broadcast %cst_18 : f32 to vector<128x17xf32>
    %28 = arith.select %26, %14, %27 : vector<128x17xi1>, vector<128x17xf32>
    %cst_19 = arith.constant dense<0.000000e+00> : vector<128xf32>
    %29 = vector.multi_reduction <add>, %28, %cst_19 [1] : vector<128x17xf32> to vector<128xf32>
    %30 = vector.shape_cast %29 : vector<128xf32> to vector<128x1xf32>
    %31 = vector.shape_cast %30 : vector<128x1xf32> to vector<128x1xf32>
    %32 = vector.broadcast %31 : vector<128x1xf32> to vector<128x15xf32>
    %33 = arith.select %20, %32, %18 : vector<128x15xi1>, vector<128x15xf32>
    %c1_i32 = arith.constant 1 : i32
    %34 = vector.broadcast %c1_i32 : i32 to vector<128x15xi32>
    %35 = arith.cmpi eq, %15, %34 : vector<128x15xi32>
    %cst_20 = arith.constant 0.000000e+00 : f32
    %36 = vector.broadcast %cst_20 : f32 to vector<128x15xf32>
    %37 = arith.select %35, %3, %36 : vector<128x15xi1>, vector<128x15xf32>
    %cst_21 = arith.constant dense<0.000000e+00> : vector<128xf32>
    %38 = vector.multi_reduction <add>, %37, %cst_21 [1] : vector<128x15xf32> to vector<128xf32>
    %39 = vector.shape_cast %38 : vector<128xf32> to vector<128x1xf32>
    %40 = vector.broadcast %39 : vector<128x1xf32> to vector<128x17xf32>
    %41 = arith.cmpf oeq, %17, %40 : vector<128x17xf32>
    %cst_22 = arith.constant 0.000000e+00 : f32
    %42 = vector.broadcast %cst_22 : f32 to vector<128x17xf32>
    %43 = arith.select %41, %14, %42 : vector<128x17xi1>, vector<128x17xf32>
    %cst_23 = arith.constant dense<0.000000e+00> : vector<128xf32>
    %44 = vector.multi_reduction <add>, %43, %cst_23 [1] : vector<128x17xf32> to vector<128xf32>
    %45 = vector.shape_cast %44 : vector<128xf32> to vector<128x1xf32>
    %46 = vector.shape_cast %45 : vector<128x1xf32> to vector<128x1xf32>
    %47 = vector.broadcast %46 : vector<128x1xf32> to vector<128x15xf32>
    %48 = arith.select %35, %47, %33 : vector<128x15xi1>, vector<128x15xf32>
    %c2_i32 = arith.constant 2 : i32
    %49 = vector.broadcast %c2_i32 : i32 to vector<128x15xi32>
    %50 = arith.cmpi eq, %15, %49 : vector<128x15xi32>
    %cst_24 = arith.constant 0.000000e+00 : f32
    %51 = vector.broadcast %cst_24 : f32 to vector<128x15xf32>
    %52 = arith.select %50, %3, %51 : vector<128x15xi1>, vector<128x15xf32>
    %cst_25 = arith.constant dense<0.000000e+00> : vector<128xf32>
    %53 = vector.multi_reduction <add>, %52, %cst_25 [1] : vector<128x15xf32> to vector<128xf32>
    %54 = vector.shape_cast %53 : vector<128xf32> to vector<128x1xf32>
    %55 = vector.broadcast %54 : vector<128x1xf32> to vector<128x17xf32>
    %56 = arith.cmpf oeq, %17, %55 : vector<128x17xf32>
    %cst_26 = arith.constant 0.000000e+00 : f32
    %57 = vector.broadcast %cst_26 : f32 to vector<128x17xf32>
    %58 = arith.select %56, %14, %57 : vector<128x17xi1>, vector<128x17xf32>
    %cst_27 = arith.constant dense<0.000000e+00> : vector<128xf32>
    %59 = vector.multi_reduction <add>, %58, %cst_27 [1] : vector<128x17xf32> to vector<128xf32>
    %60 = vector.shape_cast %59 : vector<128xf32> to vector<128x1xf32>
    %61 = vector.shape_cast %60 : vector<128x1xf32> to vector<128x1xf32>
    %62 = vector.broadcast %61 : vector<128x1xf32> to vector<128x15xf32>
    %63 = arith.select %50, %62, %48 : vector<128x15xi1>, vector<128x15xf32>
    %c3_i32 = arith.constant 3 : i32
    %64 = vector.broadcast %c3_i32 : i32 to vector<128x15xi32>
    %65 = arith.cmpi eq, %15, %64 : vector<128x15xi32>
    %cst_28 = arith.constant 0.000000e+00 : f32
    %66 = vector.broadcast %cst_28 : f32 to vector<128x15xf32>
    %67 = arith.select %65, %3, %66 : vector<128x15xi1>, vector<128x15xf32>
    %cst_29 = arith.constant dense<0.000000e+00> : vector<128xf32>
    %68 = vector.multi_reduction <add>, %67, %cst_29 [1] : vector<128x15xf32> to vector<128xf32>
    %69 = vector.shape_cast %68 : vector<128xf32> to vector<128x1xf32>
    %70 = vector.broadcast %69 : vector<128x1xf32> to vector<128x17xf32>
    %71 = arith.cmpf oeq, %17, %70 : vector<128x17xf32>
    %cst_30 = arith.constant 0.000000e+00 : f32
    %72 = vector.broadcast %cst_30 : f32 to vector<128x17xf32>
    %73 = arith.select %71, %14, %72 : vector<128x17xi1>, vector<128x17xf32>
    %cst_31 = arith.constant dense<0.000000e+00> : vector<128xf32>
    %74 = vector.multi_reduction <add>, %73, %cst_31 [1] : vector<128x17xf32> to vector<128xf32>
    %75 = vector.shape_cast %74 : vector<128xf32> to vector<128x1xf32>
    %76 = vector.shape_cast %75 : vector<128x1xf32> to vector<128x1xf32>
    %77 = vector.broadcast %76 : vector<128x1xf32> to vector<128x15xf32>
    %78 = arith.select %65, %77, %63 : vector<128x15xi1>, vector<128x15xf32>
    %c4_i32 = arith.constant 4 : i32
    %79 = vector.broadcast %c4_i32 : i32 to vector<128x15xi32>
    %80 = arith.cmpi eq, %15, %79 : vector<128x15xi32>
    %cst_32 = arith.constant 0.000000e+00 : f32
    %81 = vector.broadcast %cst_32 : f32 to vector<128x15xf32>
    %82 = arith.select %80, %3, %81 : vector<128x15xi1>, vector<128x15xf32>
    %cst_33 = arith.constant dense<0.000000e+00> : vector<128xf32>
    %83 = vector.multi_reduction <add>, %82, %cst_33 [1] : vector<128x15xf32> to vector<128xf32>
    %84 = vector.shape_cast %83 : vector<128xf32> to vector<128x1xf32>
    %85 = vector.broadcast %84 : vector<128x1xf32> to vector<128x17xf32>
    %86 = arith.cmpf oeq, %17, %85 : vector<128x17xf32>
    %cst_34 = arith.constant 0.000000e+00 : f32
    %87 = vector.broadcast %cst_34 : f32 to vector<128x17xf32>
    %88 = arith.select %86, %14, %87 : vector<128x17xi1>, vector<128x17xf32>
    %cst_35 = arith.constant dense<0.000000e+00> : vector<128xf32>
    %89 = vector.multi_reduction <add>, %88, %cst_35 [1] : vector<128x17xf32> to vector<128xf32>
    %90 = vector.shape_cast %89 : vector<128xf32> to vector<128x1xf32>
    %91 = vector.shape_cast %90 : vector<128x1xf32> to vector<128x1xf32>
    %92 = vector.broadcast %91 : vector<128x1xf32> to vector<128x15xf32>
    %93 = arith.select %80, %92, %78 : vector<128x15xi1>, vector<128x15xf32>
    %c5_i32 = arith.constant 5 : i32
    %94 = vector.broadcast %c5_i32 : i32 to vector<128x15xi32>
    %95 = arith.cmpi eq, %15, %94 : vector<128x15xi32>
    %cst_36 = arith.constant 0.000000e+00 : f32
    %96 = vector.broadcast %cst_36 : f32 to vector<128x15xf32>
    %97 = arith.select %95, %3, %96 : vector<128x15xi1>, vector<128x15xf32>
    %cst_37 = arith.constant dense<0.000000e+00> : vector<128xf32>
    %98 = vector.multi_reduction <add>, %97, %cst_37 [1] : vector<128x15xf32> to vector<128xf32>
    %99 = vector.shape_cast %98 : vector<128xf32> to vector<128x1xf32>
    %100 = vector.broadcast %99 : vector<128x1xf32> to vector<128x17xf32>
    %101 = arith.cmpf oeq, %17, %100 : vector<128x17xf32>
    %cst_38 = arith.constant 0.000000e+00 : f32
    %102 = vector.broadcast %cst_38 : f32 to vector<128x17xf32>
    %103 = arith.select %101, %14, %102 : vector<128x17xi1>, vector<128x17xf32>
    %cst_39 = arith.constant dense<0.000000e+00> : vector<128xf32>
    %104 = vector.multi_reduction <add>, %103, %cst_39 [1] : vector<128x17xf32> to vector<128xf32>
    %105 = vector.shape_cast %104 : vector<128xf32> to vector<128x1xf32>
    %106 = vector.shape_cast %105 : vector<128x1xf32> to vector<128x1xf32>
    %107 = vector.broadcast %106 : vector<128x1xf32> to vector<128x15xf32>
    %108 = arith.select %95, %107, %93 : vector<128x15xi1>, vector<128x15xf32>
    %c6_i32 = arith.constant 6 : i32
    %109 = vector.broadcast %c6_i32 : i32 to vector<128x15xi32>
    %110 = arith.cmpi eq, %15, %109 : vector<128x15xi32>
    %cst_40 = arith.constant 0.000000e+00 : f32
    %111 = vector.broadcast %cst_40 : f32 to vector<128x15xf32>
    %112 = arith.select %110, %3, %111 : vector<128x15xi1>, vector<128x15xf32>
    %cst_41 = arith.constant dense<0.000000e+00> : vector<128xf32>
    %113 = vector.multi_reduction <add>, %112, %cst_41 [1] : vector<128x15xf32> to vector<128xf32>
    %114 = vector.shape_cast %113 : vector<128xf32> to vector<128x1xf32>
    %115 = vector.broadcast %114 : vector<128x1xf32> to vector<128x17xf32>
    %116 = arith.cmpf oeq, %17, %115 : vector<128x17xf32>
    %cst_42 = arith.constant 0.000000e+00 : f32
    %117 = vector.broadcast %cst_42 : f32 to vector<128x17xf32>
    %118 = arith.select %116, %14, %117 : vector<128x17xi1>, vector<128x17xf32>
    %cst_43 = arith.constant dense<0.000000e+00> : vector<128xf32>
    %119 = vector.multi_reduction <add>, %118, %cst_43 [1] : vector<128x17xf32> to vector<128xf32>
    %120 = vector.shape_cast %119 : vector<128xf32> to vector<128x1xf32>
    %121 = vector.shape_cast %120 : vector<128x1xf32> to vector<128x1xf32>
    %122 = vector.broadcast %121 : vector<128x1xf32> to vector<128x15xf32>
    %123 = arith.select %110, %122, %108 : vector<128x15xi1>, vector<128x15xf32>
    %c7_i32 = arith.constant 7 : i32
    %124 = vector.broadcast %c7_i32 : i32 to vector<128x15xi32>
    %125 = arith.cmpi eq, %15, %124 : vector<128x15xi32>
    %cst_44 = arith.constant 0.000000e+00 : f32
    %126 = vector.broadcast %cst_44 : f32 to vector<128x15xf32>
    %127 = arith.select %125, %3, %126 : vector<128x15xi1>, vector<128x15xf32>
    %cst_45 = arith.constant dense<0.000000e+00> : vector<128xf32>
    %128 = vector.multi_reduction <add>, %127, %cst_45 [1] : vector<128x15xf32> to vector<128xf32>
    %129 = vector.shape_cast %128 : vector<128xf32> to vector<128x1xf32>
    %130 = vector.broadcast %129 : vector<128x1xf32> to vector<128x17xf32>
    %131 = arith.cmpf oeq, %17, %130 : vector<128x17xf32>
    %cst_46 = arith.constant 0.000000e+00 : f32
    %132 = vector.broadcast %cst_46 : f32 to vector<128x17xf32>
    %133 = arith.select %131, %14, %132 : vector<128x17xi1>, vector<128x17xf32>
    %cst_47 = arith.constant dense<0.000000e+00> : vector<128xf32>
    %134 = vector.multi_reduction <add>, %133, %cst_47 [1] : vector<128x17xf32> to vector<128xf32>
    %135 = vector.shape_cast %134 : vector<128xf32> to vector<128x1xf32>
    %136 = vector.shape_cast %135 : vector<128x1xf32> to vector<128x1xf32>
    %137 = vector.broadcast %136 : vector<128x1xf32> to vector<128x15xf32>
    %138 = arith.select %125, %137, %123 : vector<128x15xi1>, vector<128x15xf32>
    %c8_i32 = arith.constant 8 : i32
    %139 = vector.broadcast %c8_i32 : i32 to vector<128x15xi32>
    %140 = arith.cmpi eq, %15, %139 : vector<128x15xi32>
    %cst_48 = arith.constant 0.000000e+00 : f32
    %141 = vector.broadcast %cst_48 : f32 to vector<128x15xf32>
    %142 = arith.select %140, %3, %141 : vector<128x15xi1>, vector<128x15xf32>
    %cst_49 = arith.constant dense<0.000000e+00> : vector<128xf32>
    %143 = vector.multi_reduction <add>, %142, %cst_49 [1] : vector<128x15xf32> to vector<128xf32>
    %144 = vector.shape_cast %143 : vector<128xf32> to vector<128x1xf32>
    %145 = vector.broadcast %144 : vector<128x1xf32> to vector<128x17xf32>
    %146 = arith.cmpf oeq, %17, %145 : vector<128x17xf32>
    %cst_50 = arith.constant 0.000000e+00 : f32
    %147 = vector.broadcast %cst_50 : f32 to vector<128x17xf32>
    %148 = arith.select %146, %14, %147 : vector<128x17xi1>, vector<128x17xf32>
    %cst_51 = arith.constant dense<0.000000e+00> : vector<128xf32>
    %149 = vector.multi_reduction <add>, %148, %cst_51 [1] : vector<128x17xf32> to vector<128xf32>
    %150 = vector.shape_cast %149 : vector<128xf32> to vector<128x1xf32>
    %151 = vector.shape_cast %150 : vector<128x1xf32> to vector<128x1xf32>
    %152 = vector.broadcast %151 : vector<128x1xf32> to vector<128x15xf32>
    %153 = arith.select %140, %152, %138 : vector<128x15xi1>, vector<128x15xf32>
    %c9_i32 = arith.constant 9 : i32
    %154 = vector.broadcast %c9_i32 : i32 to vector<128x15xi32>
    %155 = arith.cmpi eq, %15, %154 : vector<128x15xi32>
    %cst_52 = arith.constant 0.000000e+00 : f32
    %156 = vector.broadcast %cst_52 : f32 to vector<128x15xf32>
    %157 = arith.select %155, %3, %156 : vector<128x15xi1>, vector<128x15xf32>
    %cst_53 = arith.constant dense<0.000000e+00> : vector<128xf32>
    %158 = vector.multi_reduction <add>, %157, %cst_53 [1] : vector<128x15xf32> to vector<128xf32>
    %159 = vector.shape_cast %158 : vector<128xf32> to vector<128x1xf32>
    %160 = vector.broadcast %159 : vector<128x1xf32> to vector<128x17xf32>
    %161 = arith.cmpf oeq, %17, %160 : vector<128x17xf32>
    %cst_54 = arith.constant 0.000000e+00 : f32
    %162 = vector.broadcast %cst_54 : f32 to vector<128x17xf32>
    %163 = arith.select %161, %14, %162 : vector<128x17xi1>, vector<128x17xf32>
    %cst_55 = arith.constant dense<0.000000e+00> : vector<128xf32>
    %164 = vector.multi_reduction <add>, %163, %cst_55 [1] : vector<128x17xf32> to vector<128xf32>
    %165 = vector.shape_cast %164 : vector<128xf32> to vector<128x1xf32>
    %166 = vector.shape_cast %165 : vector<128x1xf32> to vector<128x1xf32>
    %167 = vector.broadcast %166 : vector<128x1xf32> to vector<128x15xf32>
    %168 = arith.select %155, %167, %153 : vector<128x15xi1>, vector<128x15xf32>
    %c10_i32 = arith.constant 10 : i32
    %169 = vector.broadcast %c10_i32 : i32 to vector<128x15xi32>
    %170 = arith.cmpi eq, %15, %169 : vector<128x15xi32>
    %cst_56 = arith.constant 0.000000e+00 : f32
    %171 = vector.broadcast %cst_56 : f32 to vector<128x15xf32>
    %172 = arith.select %170, %3, %171 : vector<128x15xi1>, vector<128x15xf32>
    %cst_57 = arith.constant dense<0.000000e+00> : vector<128xf32>
    %173 = vector.multi_reduction <add>, %172, %cst_57 [1] : vector<128x15xf32> to vector<128xf32>
    %174 = vector.shape_cast %173 : vector<128xf32> to vector<128x1xf32>
    %175 = vector.broadcast %174 : vector<128x1xf32> to vector<128x17xf32>
    %176 = arith.cmpf oeq, %17, %175 : vector<128x17xf32>
    %cst_58 = arith.constant 0.000000e+00 : f32
    %177 = vector.broadcast %cst_58 : f32 to vector<128x17xf32>
    %178 = arith.select %176, %14, %177 : vector<128x17xi1>, vector<128x17xf32>
    %cst_59 = arith.constant dense<0.000000e+00> : vector<128xf32>
    %179 = vector.multi_reduction <add>, %178, %cst_59 [1] : vector<128x17xf32> to vector<128xf32>
    %180 = vector.shape_cast %179 : vector<128xf32> to vector<128x1xf32>
    %181 = vector.shape_cast %180 : vector<128x1xf32> to vector<128x1xf32>
    %182 = vector.broadcast %181 : vector<128x1xf32> to vector<128x15xf32>
    %183 = arith.select %170, %182, %168 : vector<128x15xi1>, vector<128x15xf32>
    %c11_i32 = arith.constant 11 : i32
    %184 = vector.broadcast %c11_i32 : i32 to vector<128x15xi32>
    %185 = arith.cmpi eq, %15, %184 : vector<128x15xi32>
    %cst_60 = arith.constant 0.000000e+00 : f32
    %186 = vector.broadcast %cst_60 : f32 to vector<128x15xf32>
    %187 = arith.select %185, %3, %186 : vector<128x15xi1>, vector<128x15xf32>
    %cst_61 = arith.constant dense<0.000000e+00> : vector<128xf32>
    %188 = vector.multi_reduction <add>, %187, %cst_61 [1] : vector<128x15xf32> to vector<128xf32>
    %189 = vector.shape_cast %188 : vector<128xf32> to vector<128x1xf32>
    %190 = vector.broadcast %189 : vector<128x1xf32> to vector<128x17xf32>
    %191 = arith.cmpf oeq, %17, %190 : vector<128x17xf32>
    %cst_62 = arith.constant 0.000000e+00 : f32
    %192 = vector.broadcast %cst_62 : f32 to vector<128x17xf32>
    %193 = arith.select %191, %14, %192 : vector<128x17xi1>, vector<128x17xf32>
    %cst_63 = arith.constant dense<0.000000e+00> : vector<128xf32>
    %194 = vector.multi_reduction <add>, %193, %cst_63 [1] : vector<128x17xf32> to vector<128xf32>
    %195 = vector.shape_cast %194 : vector<128xf32> to vector<128x1xf32>
    %196 = vector.shape_cast %195 : vector<128x1xf32> to vector<128x1xf32>
    %197 = vector.broadcast %196 : vector<128x1xf32> to vector<128x15xf32>
    %198 = arith.select %185, %197, %183 : vector<128x15xi1>, vector<128x15xf32>
    %c12_i32 = arith.constant 12 : i32
    %199 = vector.broadcast %c12_i32 : i32 to vector<128x15xi32>
    %200 = arith.cmpi eq, %15, %199 : vector<128x15xi32>
    %cst_64 = arith.constant 0.000000e+00 : f32
    %201 = vector.broadcast %cst_64 : f32 to vector<128x15xf32>
    %202 = arith.select %200, %3, %201 : vector<128x15xi1>, vector<128x15xf32>
    %cst_65 = arith.constant dense<0.000000e+00> : vector<128xf32>
    %203 = vector.multi_reduction <add>, %202, %cst_65 [1] : vector<128x15xf32> to vector<128xf32>
    %204 = vector.shape_cast %203 : vector<128xf32> to vector<128x1xf32>
    %205 = vector.broadcast %204 : vector<128x1xf32> to vector<128x17xf32>
    %206 = arith.cmpf oeq, %17, %205 : vector<128x17xf32>
    %cst_66 = arith.constant 0.000000e+00 : f32
    %207 = vector.broadcast %cst_66 : f32 to vector<128x17xf32>
    %208 = arith.select %206, %14, %207 : vector<128x17xi1>, vector<128x17xf32>
    %cst_67 = arith.constant dense<0.000000e+00> : vector<128xf32>
    %209 = vector.multi_reduction <add>, %208, %cst_67 [1] : vector<128x17xf32> to vector<128xf32>
    %210 = vector.shape_cast %209 : vector<128xf32> to vector<128x1xf32>
    %211 = vector.shape_cast %210 : vector<128x1xf32> to vector<128x1xf32>
    %212 = vector.broadcast %211 : vector<128x1xf32> to vector<128x15xf32>
    %213 = arith.select %200, %212, %198 : vector<128x15xi1>, vector<128x15xf32>
    %c13_i32 = arith.constant 13 : i32
    %214 = vector.broadcast %c13_i32 : i32 to vector<128x15xi32>
    %215 = arith.cmpi eq, %15, %214 : vector<128x15xi32>
    %cst_68 = arith.constant 0.000000e+00 : f32
    %216 = vector.broadcast %cst_68 : f32 to vector<128x15xf32>
    %217 = arith.select %215, %3, %216 : vector<128x15xi1>, vector<128x15xf32>
    %cst_69 = arith.constant dense<0.000000e+00> : vector<128xf32>
    %218 = vector.multi_reduction <add>, %217, %cst_69 [1] : vector<128x15xf32> to vector<128xf32>
    %219 = vector.shape_cast %218 : vector<128xf32> to vector<128x1xf32>
    %220 = vector.broadcast %219 : vector<128x1xf32> to vector<128x17xf32>
    %221 = arith.cmpf oeq, %17, %220 : vector<128x17xf32>
    %cst_70 = arith.constant 0.000000e+00 : f32
    %222 = vector.broadcast %cst_70 : f32 to vector<128x17xf32>
    %223 = arith.select %221, %14, %222 : vector<128x17xi1>, vector<128x17xf32>
    %cst_71 = arith.constant dense<0.000000e+00> : vector<128xf32>
    %224 = vector.multi_reduction <add>, %223, %cst_71 [1] : vector<128x17xf32> to vector<128xf32>
    %225 = vector.shape_cast %224 : vector<128xf32> to vector<128x1xf32>
    %226 = vector.shape_cast %225 : vector<128x1xf32> to vector<128x1xf32>
    %227 = vector.broadcast %226 : vector<128x1xf32> to vector<128x15xf32>
    %228 = arith.select %215, %227, %213 : vector<128x15xi1>, vector<128x15xf32>
    %c14_i32 = arith.constant 14 : i32
    %229 = vector.broadcast %c14_i32 : i32 to vector<128x15xi32>
    %230 = arith.cmpi eq, %15, %229 : vector<128x15xi32>
    %cst_72 = arith.constant 0.000000e+00 : f32
    %231 = vector.broadcast %cst_72 : f32 to vector<128x15xf32>
    %232 = arith.select %230, %3, %231 : vector<128x15xi1>, vector<128x15xf32>
    %cst_73 = arith.constant dense<0.000000e+00> : vector<128xf32>
    %233 = vector.multi_reduction <add>, %232, %cst_73 [1] : vector<128x15xf32> to vector<128xf32>
    %234 = vector.shape_cast %233 : vector<128xf32> to vector<128x1xf32>
    %235 = vector.broadcast %234 : vector<128x1xf32> to vector<128x17xf32>
    %236 = arith.cmpf oeq, %17, %235 : vector<128x17xf32>
    %cst_74 = arith.constant 0.000000e+00 : f32
    %237 = vector.broadcast %cst_74 : f32 to vector<128x17xf32>
    %238 = arith.select %236, %14, %237 : vector<128x17xi1>, vector<128x17xf32>
    %cst_75 = arith.constant dense<0.000000e+00> : vector<128xf32>
    %239 = vector.multi_reduction <add>, %238, %cst_75 [1] : vector<128x17xf32> to vector<128xf32>
    %240 = vector.shape_cast %239 : vector<128xf32> to vector<128x1xf32>
    %241 = vector.shape_cast %240 : vector<128x1xf32> to vector<128x1xf32>
    %242 = vector.broadcast %241 : vector<128x1xf32> to vector<128x15xf32>
    %243 = arith.select %230, %242, %228 : vector<128x15xi1>, vector<128x15xf32>
    %244 = math.tanh %243 : vector<128x15xf32>
    %245 = math.exp %244 : vector<128x15xf32>
    %cst_76 = arith.constant dense<0.000000e+00> : vector<128xf32>
    %246 = vector.multi_reduction <add>, %245, %cst_76 [1] : vector<128x15xf32> to vector<128xf32>
    %247 = vector.shape_cast %246 : vector<128xf32> to vector<128x1xf32>
    %248 = tpu.reciprocal %247 {approx = true} : vector<128x1xf32> -> vector<128x1xf32>
    %249 = vector.broadcast %248 : vector<128x1xf32> to vector<128x15xf32>
    %250 = arith.mulf %245, %249 : vector<128x15xf32>
    %251 = arith.mulf %250, %4 : vector<128x15xf32>
    %cst_77 = arith.constant dense<0.000000e+00> : vector<128xf32>
    %252 = vector.multi_reduction <add>, %251, %cst_77 [1] : vector<128x15xf32> to vector<128xf32>
    %253 = vector.shape_cast %252 : vector<128xf32> to vector<128x1xf32>
    %cst_78 = arith.constant 9.99999997E-7 : f32
    %254 = vector.broadcast %cst_78 : f32 to vector<128x1xf32>
    %255 = arith.addf %253, %254 : vector<128x1xf32>
    %256 = tpu.reciprocal %255 {approx = true} : vector<128x1xf32> -> vector<128x1xf32>
    %257 = vector.broadcast %256 : vector<128x1xf32> to vector<128x15xf32>
    %258 = arith.mulf %251, %257 : vector<128x15xf32>
    %cst_79 = arith.constant 0.000000e+00 : f32
    %259 = vector.broadcast %cst_79 : f32 to vector<128x17xf32>
    %c0_i32_80 = arith.constant 0 : i32
    %260 = vector.broadcast %c0_i32_80 : i32 to vector<128x15xi32>
    %261 = arith.cmpi eq, %15, %260 : vector<128x15xi32>
    %cst_81 = arith.constant 0.000000e+00 : f32
    %262 = vector.broadcast %cst_81 : f32 to vector<128x15xf32>
    %263 = arith.select %261, %3, %262 : vector<128x15xi1>, vector<128x15xf32>
    %cst_82 = arith.constant dense<0.000000e+00> : vector<128xf32>
    %264 = vector.multi_reduction <add>, %263, %cst_82 [1] : vector<128x15xf32> to vector<128xf32>
    %265 = vector.shape_cast %264 : vector<128xf32> to vector<128x1xf32>
    %cst_83 = arith.constant 0.000000e+00 : f32
    %266 = vector.broadcast %cst_83 : f32 to vector<128x15xf32>
    %267 = arith.select %261, %258, %266 : vector<128x15xi1>, vector<128x15xf32>
    %cst_84 = arith.constant dense<0.000000e+00> : vector<128xf32>
    %268 = vector.multi_reduction <add>, %267, %cst_84 [1] : vector<128x15xf32> to vector<128xf32>
    %269 = vector.shape_cast %268 : vector<128xf32> to vector<128x1xf32>
    %270 = vector.broadcast %265 : vector<128x1xf32> to vector<128x17xf32>
    %271 = arith.cmpf oeq, %17, %270 : vector<128x17xf32>
    %cst_85 = arith.constant 0.000000e+00 : f32
    %272 = vector.shape_cast %269 : vector<128x1xf32> to vector<128x1xf32>
    %273 = vector.broadcast %272 : vector<128x1xf32> to vector<128x17xf32>
    %274 = vector.broadcast %cst_85 : f32 to vector<128x17xf32>
    %275 = arith.select %271, %273, %274 : vector<128x17xi1>, vector<128x17xf32>
    %276 = arith.addf %259, %275 : vector<128x17xf32>
    %c1_i32_86 = arith.constant 1 : i32
    %277 = vector.broadcast %c1_i32_86 : i32 to vector<128x15xi32>
    %278 = arith.cmpi eq, %15, %277 : vector<128x15xi32>
    %cst_87 = arith.constant 0.000000e+00 : f32
    %279 = vector.broadcast %cst_87 : f32 to vector<128x15xf32>
    %280 = arith.select %278, %3, %279 : vector<128x15xi1>, vector<128x15xf32>
    %cst_88 = arith.constant dense<0.000000e+00> : vector<128xf32>
    %281 = vector.multi_reduction <add>, %280, %cst_88 [1] : vector<128x15xf32> to vector<128xf32>
    %282 = vector.shape_cast %281 : vector<128xf32> to vector<128x1xf32>
    %cst_89 = arith.constant 0.000000e+00 : f32
    %283 = vector.broadcast %cst_89 : f32 to vector<128x15xf32>
    %284 = arith.select %278, %258, %283 : vector<128x15xi1>, vector<128x15xf32>
    %cst_90 = arith.constant dense<0.000000e+00> : vector<128xf32>
    %285 = vector.multi_reduction <add>, %284, %cst_90 [1] : vector<128x15xf32> to vector<128xf32>
    %286 = vector.shape_cast %285 : vector<128xf32> to vector<128x1xf32>
    %287 = vector.broadcast %282 : vector<128x1xf32> to vector<128x17xf32>
    %288 = arith.cmpf oeq, %17, %287 : vector<128x17xf32>
    %cst_91 = arith.constant 0.000000e+00 : f32
    %289 = vector.shape_cast %286 : vector<128x1xf32> to vector<128x1xf32>
    %290 = vector.broadcast %289 : vector<128x1xf32> to vector<128x17xf32>
    %291 = vector.broadcast %cst_91 : f32 to vector<128x17xf32>
    %292 = arith.select %288, %290, %291 : vector<128x17xi1>, vector<128x17xf32>
    %293 = arith.addf %276, %292 : vector<128x17xf32>
    %c2_i32_92 = arith.constant 2 : i32
    %294 = vector.broadcast %c2_i32_92 : i32 to vector<128x15xi32>
    %295 = arith.cmpi eq, %15, %294 : vector<128x15xi32>
    %cst_93 = arith.constant 0.000000e+00 : f32
    %296 = vector.broadcast %cst_93 : f32 to vector<128x15xf32>
    %297 = arith.select %295, %3, %296 : vector<128x15xi1>, vector<128x15xf32>
    %cst_94 = arith.constant dense<0.000000e+00> : vector<128xf32>
    %298 = vector.multi_reduction <add>, %297, %cst_94 [1] : vector<128x15xf32> to vector<128xf32>
    %299 = vector.shape_cast %298 : vector<128xf32> to vector<128x1xf32>
    %cst_95 = arith.constant 0.000000e+00 : f32
    %300 = vector.broadcast %cst_95 : f32 to vector<128x15xf32>
    %301 = arith.select %295, %258, %300 : vector<128x15xi1>, vector<128x15xf32>
    %cst_96 = arith.constant dense<0.000000e+00> : vector<128xf32>
    %302 = vector.multi_reduction <add>, %301, %cst_96 [1] : vector<128x15xf32> to vector<128xf32>
    %303 = vector.shape_cast %302 : vector<128xf32> to vector<128x1xf32>
    %304 = vector.broadcast %299 : vector<128x1xf32> to vector<128x17xf32>
    %305 = arith.cmpf oeq, %17, %304 : vector<128x17xf32>
    %cst_97 = arith.constant 0.000000e+00 : f32
    %306 = vector.shape_cast %303 : vector<128x1xf32> to vector<128x1xf32>
    %307 = vector.broadcast %306 : vector<128x1xf32> to vector<128x17xf32>
    %308 = vector.broadcast %cst_97 : f32 to vector<128x17xf32>
    %309 = arith.select %305, %307, %308 : vector<128x17xi1>, vector<128x17xf32>
    %310 = arith.addf %293, %309 : vector<128x17xf32>
    %c3_i32_98 = arith.constant 3 : i32
    %311 = vector.broadcast %c3_i32_98 : i32 to vector<128x15xi32>
    %312 = arith.cmpi eq, %15, %311 : vector<128x15xi32>
    %cst_99 = arith.constant 0.000000e+00 : f32
    %313 = vector.broadcast %cst_99 : f32 to vector<128x15xf32>
    %314 = arith.select %312, %3, %313 : vector<128x15xi1>, vector<128x15xf32>
    %cst_100 = arith.constant dense<0.000000e+00> : vector<128xf32>
    %315 = vector.multi_reduction <add>, %314, %cst_100 [1] : vector<128x15xf32> to vector<128xf32>
    %316 = vector.shape_cast %315 : vector<128xf32> to vector<128x1xf32>
    %cst_101 = arith.constant 0.000000e+00 : f32
    %317 = vector.broadcast %cst_101 : f32 to vector<128x15xf32>
    %318 = arith.select %312, %258, %317 : vector<128x15xi1>, vector<128x15xf32>
    %cst_102 = arith.constant dense<0.000000e+00> : vector<128xf32>
    %319 = vector.multi_reduction <add>, %318, %cst_102 [1] : vector<128x15xf32> to vector<128xf32>
    %320 = vector.shape_cast %319 : vector<128xf32> to vector<128x1xf32>
    %321 = vector.broadcast %316 : vector<128x1xf32> to vector<128x17xf32>
    %322 = arith.cmpf oeq, %17, %321 : vector<128x17xf32>
    %cst_103 = arith.constant 0.000000e+00 : f32
    %323 = vector.shape_cast %320 : vector<128x1xf32> to vector<128x1xf32>
    %324 = vector.broadcast %323 : vector<128x1xf32> to vector<128x17xf32>
    %325 = vector.broadcast %cst_103 : f32 to vector<128x17xf32>
    %326 = arith.select %322, %324, %325 : vector<128x17xi1>, vector<128x17xf32>
    %327 = arith.addf %310, %326 : vector<128x17xf32>
    %c4_i32_104 = arith.constant 4 : i32
    %328 = vector.broadcast %c4_i32_104 : i32 to vector<128x15xi32>
    %329 = arith.cmpi eq, %15, %328 : vector<128x15xi32>
    %cst_105 = arith.constant 0.000000e+00 : f32
    %330 = vector.broadcast %cst_105 : f32 to vector<128x15xf32>
    %331 = arith.select %329, %3, %330 : vector<128x15xi1>, vector<128x15xf32>
    %cst_106 = arith.constant dense<0.000000e+00> : vector<128xf32>
    %332 = vector.multi_reduction <add>, %331, %cst_106 [1] : vector<128x15xf32> to vector<128xf32>
    %333 = vector.shape_cast %332 : vector<128xf32> to vector<128x1xf32>
    %cst_107 = arith.constant 0.000000e+00 : f32
    %334 = vector.broadcast %cst_107 : f32 to vector<128x15xf32>
    %335 = arith.select %329, %258, %334 : vector<128x15xi1>, vector<128x15xf32>
    %cst_108 = arith.constant dense<0.000000e+00> : vector<128xf32>
    %336 = vector.multi_reduction <add>, %335, %cst_108 [1] : vector<128x15xf32> to vector<128xf32>
    %337 = vector.shape_cast %336 : vector<128xf32> to vector<128x1xf32>
    %338 = vector.broadcast %333 : vector<128x1xf32> to vector<128x17xf32>
    %339 = arith.cmpf oeq, %17, %338 : vector<128x17xf32>
    %cst_109 = arith.constant 0.000000e+00 : f32
    %340 = vector.shape_cast %337 : vector<128x1xf32> to vector<128x1xf32>
    %341 = vector.broadcast %340 : vector<128x1xf32> to vector<128x17xf32>
    %342 = vector.broadcast %cst_109 : f32 to vector<128x17xf32>
    %343 = arith.select %339, %341, %342 : vector<128x17xi1>, vector<128x17xf32>
    %344 = arith.addf %327, %343 : vector<128x17xf32>
    %c5_i32_110 = arith.constant 5 : i32
    %345 = vector.broadcast %c5_i32_110 : i32 to vector<128x15xi32>
    %346 = arith.cmpi eq, %15, %345 : vector<128x15xi32>
    %cst_111 = arith.constant 0.000000e+00 : f32
    %347 = vector.broadcast %cst_111 : f32 to vector<128x15xf32>
    %348 = arith.select %346, %3, %347 : vector<128x15xi1>, vector<128x15xf32>
    %cst_112 = arith.constant dense<0.000000e+00> : vector<128xf32>
    %349 = vector.multi_reduction <add>, %348, %cst_112 [1] : vector<128x15xf32> to vector<128xf32>
    %350 = vector.shape_cast %349 : vector<128xf32> to vector<128x1xf32>
    %cst_113 = arith.constant 0.000000e+00 : f32
    %351 = vector.broadcast %cst_113 : f32 to vector<128x15xf32>
    %352 = arith.select %346, %258, %351 : vector<128x15xi1>, vector<128x15xf32>
    %cst_114 = arith.constant dense<0.000000e+00> : vector<128xf32>
    %353 = vector.multi_reduction <add>, %352, %cst_114 [1] : vector<128x15xf32> to vector<128xf32>
    %354 = vector.shape_cast %353 : vector<128xf32> to vector<128x1xf32>
    %355 = vector.broadcast %350 : vector<128x1xf32> to vector<128x17xf32>
    %356 = arith.cmpf oeq, %17, %355 : vector<128x17xf32>
    %cst_115 = arith.constant 0.000000e+00 : f32
    %357 = vector.shape_cast %354 : vector<128x1xf32> to vector<128x1xf32>
    %358 = vector.broadcast %357 : vector<128x1xf32> to vector<128x17xf32>
    %359 = vector.broadcast %cst_115 : f32 to vector<128x17xf32>
    %360 = arith.select %356, %358, %359 : vector<128x17xi1>, vector<128x17xf32>
    %361 = arith.addf %344, %360 : vector<128x17xf32>
    %c6_i32_116 = arith.constant 6 : i32
    %362 = vector.broadcast %c6_i32_116 : i32 to vector<128x15xi32>
    %363 = arith.cmpi eq, %15, %362 : vector<128x15xi32>
    %cst_117 = arith.constant 0.000000e+00 : f32
    %364 = vector.broadcast %cst_117 : f32 to vector<128x15xf32>
    %365 = arith.select %363, %3, %364 : vector<128x15xi1>, vector<128x15xf32>
    %cst_118 = arith.constant dense<0.000000e+00> : vector<128xf32>
    %366 = vector.multi_reduction <add>, %365, %cst_118 [1] : vector<128x15xf32> to vector<128xf32>
    %367 = vector.shape_cast %366 : vector<128xf32> to vector<128x1xf32>
    %cst_119 = arith.constant 0.000000e+00 : f32
    %368 = vector.broadcast %cst_119 : f32 to vector<128x15xf32>
    %369 = arith.select %363, %258, %368 : vector<128x15xi1>, vector<128x15xf32>
    %cst_120 = arith.constant dense<0.000000e+00> : vector<128xf32>
    %370 = vector.multi_reduction <add>, %369, %cst_120 [1] : vector<128x15xf32> to vector<128xf32>
    %371 = vector.shape_cast %370 : vector<128xf32> to vector<128x1xf32>
    %372 = vector.broadcast %367 : vector<128x1xf32> to vector<128x17xf32>
    %373 = arith.cmpf oeq, %17, %372 : vector<128x17xf32>
    %cst_121 = arith.constant 0.000000e+00 : f32
    %374 = vector.shape_cast %371 : vector<128x1xf32> to vector<128x1xf32>
    %375 = vector.broadcast %374 : vector<128x1xf32> to vector<128x17xf32>
    %376 = vector.broadcast %cst_121 : f32 to vector<128x17xf32>
    %377 = arith.select %373, %375, %376 : vector<128x17xi1>, vector<128x17xf32>
    %378 = arith.addf %361, %377 : vector<128x17xf32>
    %c7_i32_122 = arith.constant 7 : i32
    %379 = vector.broadcast %c7_i32_122 : i32 to vector<128x15xi32>
    %380 = arith.cmpi eq, %15, %379 : vector<128x15xi32>
    %cst_123 = arith.constant 0.000000e+00 : f32
    %381 = vector.broadcast %cst_123 : f32 to vector<128x15xf32>
    %382 = arith.select %380, %3, %381 : vector<128x15xi1>, vector<128x15xf32>
    %cst_124 = arith.constant dense<0.000000e+00> : vector<128xf32>
    %383 = vector.multi_reduction <add>, %382, %cst_124 [1] : vector<128x15xf32> to vector<128xf32>
    %384 = vector.shape_cast %383 : vector<128xf32> to vector<128x1xf32>
    %cst_125 = arith.constant 0.000000e+00 : f32
    %385 = vector.broadcast %cst_125 : f32 to vector<128x15xf32>
    %386 = arith.select %380, %258, %385 : vector<128x15xi1>, vector<128x15xf32>
    %cst_126 = arith.constant dense<0.000000e+00> : vector<128xf32>
    %387 = vector.multi_reduction <add>, %386, %cst_126 [1] : vector<128x15xf32> to vector<128xf32>
    %388 = vector.shape_cast %387 : vector<128xf32> to vector<128x1xf32>
    %389 = vector.broadcast %384 : vector<128x1xf32> to vector<128x17xf32>
    %390 = arith.cmpf oeq, %17, %389 : vector<128x17xf32>
    %cst_127 = arith.constant 0.000000e+00 : f32
    %391 = vector.shape_cast %388 : vector<128x1xf32> to vector<128x1xf32>
    %392 = vector.broadcast %391 : vector<128x1xf32> to vector<128x17xf32>
    %393 = vector.broadcast %cst_127 : f32 to vector<128x17xf32>
    %394 = arith.select %390, %392, %393 : vector<128x17xi1>, vector<128x17xf32>
    %395 = arith.addf %378, %394 : vector<128x17xf32>
    %c8_i32_128 = arith.constant 8 : i32
    %396 = vector.broadcast %c8_i32_128 : i32 to vector<128x15xi32>
    %397 = arith.cmpi eq, %15, %396 : vector<128x15xi32>
    %cst_129 = arith.constant 0.000000e+00 : f32
    %398 = vector.broadcast %cst_129 : f32 to vector<128x15xf32>
    %399 = arith.select %397, %3, %398 : vector<128x15xi1>, vector<128x15xf32>
    %cst_130 = arith.constant dense<0.000000e+00> : vector<128xf32>
    %400 = vector.multi_reduction <add>, %399, %cst_130 [1] : vector<128x15xf32> to vector<128xf32>
    %401 = vector.shape_cast %400 : vector<128xf32> to vector<128x1xf32>
    %cst_131 = arith.constant 0.000000e+00 : f32
    %402 = vector.broadcast %cst_131 : f32 to vector<128x15xf32>
    %403 = arith.select %397, %258, %402 : vector<128x15xi1>, vector<128x15xf32>
    %cst_132 = arith.constant dense<0.000000e+00> : vector<128xf32>
    %404 = vector.multi_reduction <add>, %403, %cst_132 [1] : vector<128x15xf32> to vector<128xf32>
    %405 = vector.shape_cast %404 : vector<128xf32> to vector<128x1xf32>
    %406 = vector.broadcast %401 : vector<128x1xf32> to vector<128x17xf32>
    %407 = arith.cmpf oeq, %17, %406 : vector<128x17xf32>
    %cst_133 = arith.constant 0.000000e+00 : f32
    %408 = vector.shape_cast %405 : vector<128x1xf32> to vector<128x1xf32>
    %409 = vector.broadcast %408 : vector<128x1xf32> to vector<128x17xf32>
    %410 = vector.broadcast %cst_133 : f32 to vector<128x17xf32>
    %411 = arith.select %407, %409, %410 : vector<128x17xi1>, vector<128x17xf32>
    %412 = arith.addf %395, %411 : vector<128x17xf32>
    %c9_i32_134 = arith.constant 9 : i32
    %413 = vector.broadcast %c9_i32_134 : i32 to vector<128x15xi32>
    %414 = arith.cmpi eq, %15, %413 : vector<128x15xi32>
    %cst_135 = arith.constant 0.000000e+00 : f32
    %415 = vector.broadcast %cst_135 : f32 to vector<128x15xf32>
    %416 = arith.select %414, %3, %415 : vector<128x15xi1>, vector<128x15xf32>
    %cst_136 = arith.constant dense<0.000000e+00> : vector<128xf32>
    %417 = vector.multi_reduction <add>, %416, %cst_136 [1] : vector<128x15xf32> to vector<128xf32>
    %418 = vector.shape_cast %417 : vector<128xf32> to vector<128x1xf32>
    %cst_137 = arith.constant 0.000000e+00 : f32
    %419 = vector.broadcast %cst_137 : f32 to vector<128x15xf32>
    %420 = arith.select %414, %258, %419 : vector<128x15xi1>, vector<128x15xf32>
    %cst_138 = arith.constant dense<0.000000e+00> : vector<128xf32>
    %421 = vector.multi_reduction <add>, %420, %cst_138 [1] : vector<128x15xf32> to vector<128xf32>
    %422 = vector.shape_cast %421 : vector<128xf32> to vector<128x1xf32>
    %423 = vector.broadcast %418 : vector<128x1xf32> to vector<128x17xf32>
    %424 = arith.cmpf oeq, %17, %423 : vector<128x17xf32>
    %cst_139 = arith.constant 0.000000e+00 : f32
    %425 = vector.shape_cast %422 : vector<128x1xf32> to vector<128x1xf32>
    %426 = vector.broadcast %425 : vector<128x1xf32> to vector<128x17xf32>
    %427 = vector.broadcast %cst_139 : f32 to vector<128x17xf32>
    %428 = arith.select %424, %426, %427 : vector<128x17xi1>, vector<128x17xf32>
    %429 = arith.addf %412, %428 : vector<128x17xf32>
    %c10_i32_140 = arith.constant 10 : i32
    %430 = vector.broadcast %c10_i32_140 : i32 to vector<128x15xi32>
    %431 = arith.cmpi eq, %15, %430 : vector<128x15xi32>
    %cst_141 = arith.constant 0.000000e+00 : f32
    %432 = vector.broadcast %cst_141 : f32 to vector<128x15xf32>
    %433 = arith.select %431, %3, %432 : vector<128x15xi1>, vector<128x15xf32>
    %cst_142 = arith.constant dense<0.000000e+00> : vector<128xf32>
    %434 = vector.multi_reduction <add>, %433, %cst_142 [1] : vector<128x15xf32> to vector<128xf32>
    %435 = vector.shape_cast %434 : vector<128xf32> to vector<128x1xf32>
    %cst_143 = arith.constant 0.000000e+00 : f32
    %436 = vector.broadcast %cst_143 : f32 to vector<128x15xf32>
    %437 = arith.select %431, %258, %436 : vector<128x15xi1>, vector<128x15xf32>
    %cst_144 = arith.constant dense<0.000000e+00> : vector<128xf32>
    %438 = vector.multi_reduction <add>, %437, %cst_144 [1] : vector<128x15xf32> to vector<128xf32>
    %439 = vector.shape_cast %438 : vector<128xf32> to vector<128x1xf32>
    %440 = vector.broadcast %435 : vector<128x1xf32> to vector<128x17xf32>
    %441 = arith.cmpf oeq, %17, %440 : vector<128x17xf32>
    %cst_145 = arith.constant 0.000000e+00 : f32
    %442 = vector.shape_cast %439 : vector<128x1xf32> to vector<128x1xf32>
    %443 = vector.broadcast %442 : vector<128x1xf32> to vector<128x17xf32>
    %444 = vector.broadcast %cst_145 : f32 to vector<128x17xf32>
    %445 = arith.select %441, %443, %444 : vector<128x17xi1>, vector<128x17xf32>
    %446 = arith.addf %429, %445 : vector<128x17xf32>
    %c11_i32_146 = arith.constant 11 : i32
    %447 = vector.broadcast %c11_i32_146 : i32 to vector<128x15xi32>
    %448 = arith.cmpi eq, %15, %447 : vector<128x15xi32>
    %cst_147 = arith.constant 0.000000e+00 : f32
    %449 = vector.broadcast %cst_147 : f32 to vector<128x15xf32>
    %450 = arith.select %448, %3, %449 : vector<128x15xi1>, vector<128x15xf32>
    %cst_148 = arith.constant dense<0.000000e+00> : vector<128xf32>
    %451 = vector.multi_reduction <add>, %450, %cst_148 [1] : vector<128x15xf32> to vector<128xf32>
    %452 = vector.shape_cast %451 : vector<128xf32> to vector<128x1xf32>
    %cst_149 = arith.constant 0.000000e+00 : f32
    %453 = vector.broadcast %cst_149 : f32 to vector<128x15xf32>
    %454 = arith.select %448, %258, %453 : vector<128x15xi1>, vector<128x15xf32>
    %cst_150 = arith.constant dense<0.000000e+00> : vector<128xf32>
    %455 = vector.multi_reduction <add>, %454, %cst_150 [1] : vector<128x15xf32> to vector<128xf32>
    %456 = vector.shape_cast %455 : vector<128xf32> to vector<128x1xf32>
    %457 = vector.broadcast %452 : vector<128x1xf32> to vector<128x17xf32>
    %458 = arith.cmpf oeq, %17, %457 : vector<128x17xf32>
    %cst_151 = arith.constant 0.000000e+00 : f32
    %459 = vector.shape_cast %456 : vector<128x1xf32> to vector<128x1xf32>
    %460 = vector.broadcast %459 : vector<128x1xf32> to vector<128x17xf32>
    %461 = vector.broadcast %cst_151 : f32 to vector<128x17xf32>
    %462 = arith.select %458, %460, %461 : vector<128x17xi1>, vector<128x17xf32>
    %463 = arith.addf %446, %462 : vector<128x17xf32>
    %c12_i32_152 = arith.constant 12 : i32
    %464 = vector.broadcast %c12_i32_152 : i32 to vector<128x15xi32>
    %465 = arith.cmpi eq, %15, %464 : vector<128x15xi32>
    %cst_153 = arith.constant 0.000000e+00 : f32
    %466 = vector.broadcast %cst_153 : f32 to vector<128x15xf32>
    %467 = arith.select %465, %3, %466 : vector<128x15xi1>, vector<128x15xf32>
    %cst_154 = arith.constant dense<0.000000e+00> : vector<128xf32>
    %468 = vector.multi_reduction <add>, %467, %cst_154 [1] : vector<128x15xf32> to vector<128xf32>
    %469 = vector.shape_cast %468 : vector<128xf32> to vector<128x1xf32>
    %cst_155 = arith.constant 0.000000e+00 : f32
    %470 = vector.broadcast %cst_155 : f32 to vector<128x15xf32>
    %471 = arith.select %465, %258, %470 : vector<128x15xi1>, vector<128x15xf32>
    %cst_156 = arith.constant dense<0.000000e+00> : vector<128xf32>
    %472 = vector.multi_reduction <add>, %471, %cst_156 [1] : vector<128x15xf32> to vector<128xf32>
    %473 = vector.shape_cast %472 : vector<128xf32> to vector<128x1xf32>
    %474 = vector.broadcast %469 : vector<128x1xf32> to vector<128x17xf32>
    %475 = arith.cmpf oeq, %17, %474 : vector<128x17xf32>
    %cst_157 = arith.constant 0.000000e+00 : f32
    %476 = vector.shape_cast %473 : vector<128x1xf32> to vector<128x1xf32>
    %477 = vector.broadcast %476 : vector<128x1xf32> to vector<128x17xf32>
    %478 = vector.broadcast %cst_157 : f32 to vector<128x17xf32>
    %479 = arith.select %475, %477, %478 : vector<128x17xi1>, vector<128x17xf32>
    %480 = arith.addf %463, %479 : vector<128x17xf32>
    %c13_i32_158 = arith.constant 13 : i32
    %481 = vector.broadcast %c13_i32_158 : i32 to vector<128x15xi32>
    %482 = arith.cmpi eq, %15, %481 : vector<128x15xi32>
    %cst_159 = arith.constant 0.000000e+00 : f32
    %483 = vector.broadcast %cst_159 : f32 to vector<128x15xf32>
    %484 = arith.select %482, %3, %483 : vector<128x15xi1>, vector<128x15xf32>
    %cst_160 = arith.constant dense<0.000000e+00> : vector<128xf32>
    %485 = vector.multi_reduction <add>, %484, %cst_160 [1] : vector<128x15xf32> to vector<128xf32>
    %486 = vector.shape_cast %485 : vector<128xf32> to vector<128x1xf32>
    %cst_161 = arith.constant 0.000000e+00 : f32
    %487 = vector.broadcast %cst_161 : f32 to vector<128x15xf32>
    %488 = arith.select %482, %258, %487 : vector<128x15xi1>, vector<128x15xf32>
    %cst_162 = arith.constant dense<0.000000e+00> : vector<128xf32>
    %489 = vector.multi_reduction <add>, %488, %cst_162 [1] : vector<128x15xf32> to vector<128xf32>
    %490 = vector.shape_cast %489 : vector<128xf32> to vector<128x1xf32>
    %491 = vector.broadcast %486 : vector<128x1xf32> to vector<128x17xf32>
    %492 = arith.cmpf oeq, %17, %491 : vector<128x17xf32>
    %cst_163 = arith.constant 0.000000e+00 : f32
    %493 = vector.shape_cast %490 : vector<128x1xf32> to vector<128x1xf32>
    %494 = vector.broadcast %493 : vector<128x1xf32> to vector<128x17xf32>
    %495 = vector.broadcast %cst_163 : f32 to vector<128x17xf32>
    %496 = arith.select %492, %494, %495 : vector<128x17xi1>, vector<128x17xf32>
    %497 = arith.addf %480, %496 : vector<128x17xf32>
    %c14_i32_164 = arith.constant 14 : i32
    %498 = vector.broadcast %c14_i32_164 : i32 to vector<128x15xi32>
    %499 = arith.cmpi eq, %15, %498 : vector<128x15xi32>
    %cst_165 = arith.constant 0.000000e+00 : f32
    %500 = vector.broadcast %cst_165 : f32 to vector<128x15xf32>
    %501 = arith.select %499, %3, %500 : vector<128x15xi1>, vector<128x15xf32>
    %cst_166 = arith.constant dense<0.000000e+00> : vector<128xf32>
    %502 = vector.multi_reduction <add>, %501, %cst_166 [1] : vector<128x15xf32> to vector<128xf32>
    %503 = vector.shape_cast %502 : vector<128xf32> to vector<128x1xf32>
    %cst_167 = arith.constant 0.000000e+00 : f32
    %504 = vector.broadcast %cst_167 : f32 to vector<128x15xf32>
    %505 = arith.select %499, %258, %504 : vector<128x15xi1>, vector<128x15xf32>
    %cst_168 = arith.constant dense<0.000000e+00> : vector<128xf32>
    %506 = vector.multi_reduction <add>, %505, %cst_168 [1] : vector<128x15xf32> to vector<128xf32>
    %507 = vector.shape_cast %506 : vector<128xf32> to vector<128x1xf32>
    %508 = vector.broadcast %503 : vector<128x1xf32> to vector<128x17xf32>
    %509 = arith.cmpf oeq, %17, %508 : vector<128x17xf32>
    %cst_169 = arith.constant 0.000000e+00 : f32
    %510 = vector.shape_cast %507 : vector<128x1xf32> to vector<128x1xf32>
    %511 = vector.broadcast %510 : vector<128x1xf32> to vector<128x17xf32>
    %512 = vector.broadcast %cst_169 : f32 to vector<128x17xf32>
    %513 = arith.select %509, %511, %512 : vector<128x17xi1>, vector<128x17xf32>
    %514 = arith.addf %497, %513 : vector<128x17xf32>
    %515 = arith.truncf %514 : vector<128x17xf32> to vector<128x17xbf16>
    %c0_170 = arith.constant 0 : index
    %c0_171 = arith.constant 0 : index
    %516 = vector.load %arg5[%c0_170, %c0_171] : memref<17x128xbf16, #tpu.memory_space<vmem>>, vector<17x128xbf16>
    %cst_172 = arith.constant dense<0.000000e+00> : vector<128x128xf32>
    %517 = tpu.matmul %515, %516, %cst_172 {dimension_numbers = #tpu.dot_dimension_numbers<[1], [0], [0], [1], [0, 0, 1, 1], [], []>} : vector<128x17xbf16>, vector<17x128xbf16>, vector<128x128xf32> -> vector<128x128xf32>
    %518 = arith.truncf %517 : vector<128x128xf32> to vector<128x128xbf16>
    %c0_173 = arith.constant 0 : index
    %c0_174 = arith.constant 0 : index
    %519 = vector.load %arg9[%c0_173, %c0_174] : memref<128x128xbf16, #tpu.memory_space<vmem>>, vector<128x128xbf16>
    %cst_175 = arith.constant dense<0.000000e+00> : vector<128x128xf32>
    %520 = tpu.matmul %518, %519, %cst_175 {dimension_numbers = #tpu.dot_dimension_numbers<[1], [0], [0], [1], [0, 0, 1, 1], [], []>} : vector<128x128xbf16>, vector<128x128xbf16>, vector<128x128xf32> -> vector<128x128xf32>
    %521 = arith.addf %11, %520 : vector<128x128xf32>
    %c0_176 = arith.constant 0 : index
    %c0_177 = arith.constant 0 : index
    %522 = vector.load %arg10[%c0_176, %c0_177] : memref<1x128xf32, #tpu.memory_space<vmem>>, vector<1x128xf32>
    %523 = vector.broadcast %522 : vector<1x128xf32> to vector<128x128xf32>
    %524 = arith.addf %521, %523 : vector<128x128xf32>
    %525 = arith.mulf %524, %524 : vector<128x128xf32>
    %cst_178 = arith.constant dense<0.000000e+00> : vector<128xf32>
    %526 = vector.multi_reduction <add>, %525, %cst_178 [1] : vector<128x128xf32> to vector<128xf32>
    %527 = vector.shape_cast %526 : vector<128xf32> to vector<128x1xf32>
    %528 = math.sqrt %527 : vector<128x1xf32>
    %cst_179 = arith.constant 9.99999993E-9 : f32
    %529 = vector.broadcast %cst_179 : f32 to vector<128x1xf32>
    %530 = arith.addf %528, %529 : vector<128x1xf32>
    %531 = vector.broadcast %530 : vector<128x1xf32> to vector<128x128xf32>
    %532 = arith.divf %524, %531 : vector<128x128xf32>
    %c0_180 = arith.constant 0 : index
    %c0_181 = arith.constant 0 : index
    %533 = vector.load %arg11[%c0_180, %c0_181] : memref<128x128xf32, #tpu.memory_space<vmem>>, vector<128x128xf32>
    tpu.vector_store %arg11[%c0_180, %c0_181], %532 {strides = array<i32>} : memref<128x128xf32, #tpu.memory_space<vmem>>, vector<128x128xf32>,
    return
  }
  func.func @transform_0(%arg0: i32) -> (i32, i32) {
    %c0_i32 = arith.constant 0 : i32
    %c0_i32_0 = arith.constant 0 : i32
    return %arg0, %c0_i32 : i32, i32
  }
  func.func @transform_1(%arg0: i32) -> (i32, i32) {
    %c0_i32 = arith.constant 0 : i32
    %c0_i32_0 = arith.constant 0 : i32
    return %arg0, %c0_i32 : i32, i32
  }
  func.func @transform_2(%arg0: i32) -> (i32, i32) {
    %c0_i32 = arith.constant 0 : i32
    %c0_i32_0 = arith.constant 0 : i32
    return %arg0, %c0_i32 : i32, i32
  }
  func.func @transform_3(%arg0: i32) -> (i32, i32) {
    %c0_i32 = arith.constant 0 : i32
    %c0_i32_0 = arith.constant 0 : i32
    return %arg0, %c0_i32 : i32, i32
  }
  func.func @transform_4(%arg0: i32) -> (i32, i32) {
    %c0_i32 = arith.constant 0 : i32
    %c0_i32_0 = arith.constant 0 : i32
    %c0_i32_1 = arith.constant 0 : i32
    return %c0_i32, %c0_i32_0 : i32, i32
  }
  func.func @transform_5(%arg0: i32) -> (i32, i32) {
    %c0_i32 = arith.constant 0 : i32
    %c0_i32_0 = arith.constant 0 : i32
    %c0_i32_1 = arith.constant 0 : i32
    return %c0_i32, %c0_i32_0 : i32, i32
  }
  func.func @transform_6(%arg0: i32) -> (i32, i32) {
    %c0_i32 = arith.constant 0 : i32
    %c0_i32_0 = arith.constant 0 : i32
    %c0_i32_1 = arith.constant 0 : i32
    return %c0_i32, %c0_i32_0 : i32, i32
  }
  func.func @transform_7(%arg0: i32) -> (i32, i32) {
    %c0_i32 = arith.constant 0 : i32
    %c0_i32_0 = arith.constant 0 : i32
    %c0_i32_1 = arith.constant 0 : i32
    return %c0_i32, %c0_i32_0 : i32, i32
  }
  func.func @transform_8(%arg0: i32) -> (i32, i32) {
    %c0_i32 = arith.constant 0 : i32
    %c0_i32_0 = arith.constant 0 : i32
    %c0_i32_1 = arith.constant 0 : i32
    return %c0_i32, %c0_i32_0 : i32, i32
  }
  func.func @transform_9(%arg0: i32) -> (i32, i32) {
    %c0_i32 = arith.constant 0 : i32
    %c0_i32_0 = arith.constant 0 : i32
    %c0_i32_1 = arith.constant 0 : i32
    return %c0_i32, %c0_i32_0 : i32, i32
  }
  func.func @transform_10(%arg0: i32) -> (i32, i32) {
    %c0_i32 = arith.constant 0 : i32
    %c0_i32_0 = arith.constant 0 : i32
    return %arg0, %c0_i32 : i32, i32
  }
}

</mosaic_0001>

<llo_original>
// kernel: tpu_custom_call.1
$region0: #{tpu_custom_call.1}
  #allocation0 [shape = 'u32[]', space=smem, size = 0x4, offset = 0x4, fixed_abs, tag = 'smem constant byte address 0x4 - core index']
  #allocation1 [shape = 'u32[72,128]{1,0:T(1,128)}', space=vmem, size = 0x9000, scoped, tag = 'internal scratch']
  %s0 = inlined_call_operand.vmem [shape: bf16[256,256], index: 0, kind: input, shape index: {}]
  %s1 = inlined_call_operand.vmem [shape: bf16[256,128], index: 1, kind: input, shape index: {}]
  %s2 = inlined_call_operand.vmem [shape: s32[256,15], index: 2, kind: input, shape index: {}]
  %s3 = inlined_call_operand.vmem [shape: f32[256,15], index: 3, kind: input, shape index: {}]
  %s4 = inlined_call_operand.vmem [shape: bf16[17,128], index: 4, kind: input, shape index: {}]
  %s5 = inlined_call_operand.vmem [shape: bf16[128,17], index: 5, kind: input, shape index: {}]
  %s6 = inlined_call_operand.vmem [shape: bf16[256,256], index: 6, kind: input, shape index: {}]
  %s7 = inlined_call_operand.hbm [shape: bf16[128,256], index: 7, kind: input, shape index: {}]
  %s8 = inlined_call_operand.hbm [shape: bf16[128,128], index: 8, kind: input, shape index: {}]
  %s9 = inlined_call_operand.vmem [shape: f32[1,128], index: 9, kind: input, shape index: {}]
  %s10 = inlined_call_operand.hbm [shape: f32[256,128], index: 10, kind: output, shape index: {}]
  %s11 = sld [smem:[#allocation0]]
  $region81: #{tpu_custom_call.1} parent=0
    _
  %s13 = ssub.s32 1, %s11
  %s14 = scalar_select 0, %s13, %s11
  $region1: #{tpu_custom_call.1} parent=0
    #allocation2 [shape = 'u8[65536]{0}', space=vmem, size = 0x10000, scoped, tag = 'input window, operand 7, single buffered']
    #allocation3 [shape = 's32[2]{0}', space=sflag, size = 0x8, scoped, tag = 'scoped memory for tpu_custom_call.1']
    #allocation4 [shape = 's32[2]{0}', space=sflag, size = 0x8, scoped, tag = 'scoped memory for tpu_custom_call.1']
    #allocation5 [shape = 'u8[32768]{0}', space=vmem, size = 0x8000, scoped, tag = 'input window, operand 8, single buffered']
    #allocation6 [shape = 's32[1]{0}', space=sflag, size = 0x4, scoped, tag = 'scoped memory for tpu_custom_call.1']
    #allocation7 [shape = 'u8[131072]{0}', space=vmem, size = 0x20000, scoped, tag = 'output window, operand 0']
    %15 = vsyncpa [#allocation3], 0
    %16 = vsyncpa [#allocation6], 0
    %17 = vsyncpa [#allocation4], 0
    %s18 = scalar_lea.sflag [#allocation4], 1
    %19 = vsyncpa %s18, 0
    loop: start=0, step=1, limit=4
    $region2: #{tpu_custom_call.1} parent=1 // loop_pre_header
      _
    $region3: #{tpu_custom_call.1} parent=1 // loop_header
      %s21 = sphi 0, %s25
      %p22 = scmp.ge.s32.totalorder %s21, 4
      %s31 = sphi 0, %s33
      %s34 = sphi 0, %s31
      %s35 = sphi 0, %s34
      %s51 = sphi 0, %s35
      %s57 = sphi 0, %s59
      %s60 = sphi 0, %s57
      %s61 = sphi 0, %s60
      %s77 = sphi 0, %s61
      %s83 = sphi 0, %s85
      %s86 = sphi 0, %s83
      %s87 = sphi 0, %s86
      %s103 = sphi 0, %s87
      %s109 = sphi 0, %s111
      %s112 = sphi 0, %s109
      %s113 = sphi 0, %s112
      %s129 = sphi 0, %s113
      %s133 = sphi 0, %s133
      %s135 = sphi 0, %s133
      %s136 = sphi 0, %s135
      %s150 = sphi 0, %s136
      %s154 = sphi 0, %s154
      %s156 = sphi 0, %s154
      %s157 = sphi 0, %s156
      %s171 = sphi 0, %s157
      %s175 = sphi 0, %s175
      %s177 = sphi 0, %s175
      %s178 = sphi 0, %s177
      %s192 = sphi 0, %s178
      %s196 = sphi 0, %s196
      %s198 = sphi 0, %s196
      %s199 = sphi 0, %s198
      %s213 = sphi 0, %s199
      %s217 = sphi 0, %s217
      %s219 = sphi 0, %s217
      %s220 = sphi 0, %s219
      %s234 = sphi 0, %s220
      %s238 = sphi 0, %s238
      %s240 = sphi 0, %s238
      %s241 = sphi 0, %s240
      %s255 = sphi 0, %s241
      %s261 = sphi 0, %s263
      %s264 = sphi 0, %s261
      %s265 = sphi 0, %s264
      %s281 = sphi 0, %s265
    $region4: #{tpu_custom_call.1} parent=1 // loop_header_branch
      %24 = sbr.rel (%p22) target = $region8
    $region5: #{tpu_custom_call.1} parent=1 // loop_body
      %s26 = ssub.s32 %s21, 1
      %s27 = ssub.s32 %s21, 2
      %s28 = sadd.s32 %s21, 1
      %s29 = ssub.s32 %s21, %s28
      %p30 = scmp.eq.s32.totalorder %s29, 0
      %s32 = sadd.s32 %s31, 1
      %s33 = scalar_select %p30, %s31, %s32
      %p36 = pneg %p30
      %p37 = scmp.eq.s32.totalorder %s21, 1
      %p38 = por %p36, %p37
      %p39 = scmp.ne.s32.totalorder %s31, %s34
      %p40 = scmp.eq.s32.totalorder %s21, 0
      %p41 = por %p39, %p40
      %p42 = scmp.ne.s32.totalorder %s31, %s34
      %p43 = scmp.eq.s32.totalorder %s26, 1
      %p44 = por %p42, %p43
      %p45 = scmp.ne.s32.totalorder %s34, %s35
      %p46 = scmp.eq.s32.totalorder %s26, 0
      %p47 = por %p45, %p46
      %p48 = scmp.ne.s32.totalorder %s34, %s35
      %p49 = scmp.eq.s32.totalorder %s27, 1
      %p50 = por %p48, %p49
      %p52 = scmp.ne.s32.totalorder %s35, %s51
      %p53 = scmp.eq.s32.totalorder %s27, 0
      %p54 = por %p52, %p53
      %s55 = ssub.s32 %s21, %s28
      %p56 = scmp.eq.s32.totalorder %s55, 0
      %s58 = sadd.s32 %s57, 1
      %s59 = scalar_select %p56, %s57, %s58
      %p62 = pneg %p56
      %p63 = scmp.eq.s32.totalorder %s21, 1
      %p64 = por %p62, %p63
      %p65 = scmp.ne.s32.totalorder %s57, %s60
      %p66 = scmp.eq.s32.totalorder %s21, 0
      %p67 = por %p65, %p66
      %p68 = scmp.ne.s32.totalorder %s57, %s60
      %p69 = scmp.eq.s32.totalorder %s26, 1
      %p70 = por %p68, %p69
      %p71 = scmp.ne.s32.totalorder %s60, %s61
      %p72 = scmp.eq.s32.totalorder %s26, 0
      %p73 = por %p71, %p72
      %p74 = scmp.ne.s32.totalorder %s60, %s61
      %p75 = scmp.eq.s32.totalorder %s27, 1
      %p76 = por %p74, %p75
      %p78 = scmp.ne.s32.totalorder %s61, %s77
      %p79 = scmp.eq.s32.totalorder %s27, 0
      %p80 = por %p78, %p79
      %s81 = ssub.s32 %s21, %s28
      %p82 = scmp.eq.s32.totalorder %s81, 0
      %s84 = sadd.s32 %s83, 1
      %s85 = scalar_select %p82, %s83, %s84
      %p88 = pneg %p82
      %p89 = scmp.eq.s32.totalorder %s21, 1
      %p90 = por %p88, %p89
      %p91 = scmp.ne.s32.totalorder %s83, %s86
      %p92 = scmp.eq.s32.totalorder %s21, 0
      %p93 = por %p91, %p92
      %p94 = scmp.ne.s32.totalorder %s83, %s86
      %p95 = scmp.eq.s32.totalorder %s26, 1
      %p96 = por %p94, %p95
      %p97 = scmp.ne.s32.totalorder %s86, %s87
      %p98 = scmp.eq.s32.totalorder %s26, 0
      %p99 = por %p97, %p98
      %p100 = scmp.ne.s32.totalorder %s86, %s87
      %p101 = scmp.eq.s32.totalorder %s27, 1
      %p102 = por %p100, %p101
      %p104 = scmp.ne.s32.totalorder %s87, %s103
      %p105 = scmp.eq.s32.totalorder %s27, 0
      %p106 = por %p104, %p105
      %s107 = ssub.s32 %s21, %s28
      %p108 = scmp.eq.s32.totalorder %s107, 0
      %s110 = sadd.s32 %s109, 1
      %s111 = scalar_select %p108, %s109, %s110
      %p114 = pneg %p108
      %p115 = scmp.eq.s32.totalorder %s21, 1
      %p116 = por %p114, %p115
      %p117 = scmp.ne.s32.totalorder %s109, %s112
      %p118 = scmp.eq.s32.totalorder %s21, 0
      %p119 = por %p117, %p118
      %p120 = scmp.ne.s32.totalorder %s109, %s112
      %p121 = scmp.eq.s32.totalorder %s26, 1
      %p122 = por %p120, %p121
      %p123 = scmp.ne.s32.totalorder %s112, %s113
      %p124 = scmp.eq.s32.totalorder %s26, 0
      %p125 = por %p123, %p124
      %p126 = scmp.ne.s32.totalorder %s112, %s113
      %p127 = scmp.eq.s32.totalorder %s27, 1
      %p128 = por %p126, %p127
      %p130 = scmp.ne.s32.totalorder %s113, %s129
      %p131 = scmp.eq.s32.totalorder %s27, 0
      %p132 = por %p130, %p131
      %s134 = sadd.s32 %s133, 1
      %p137 = scmp.eq.s32.totalorder %s21, 1
      %p138 = scmp.ne.s32.totalorder %s133, %s135
      %p139 = scmp.eq.s32.totalorder %s21, 0
      %p140 = por %p138, %p139
      %p141 = scmp.ne.s32.totalorder %s133, %s135
      %p142 = scmp.eq.s32.totalorder %s26, 1
      %p143 = por %p141, %p142
      %p144 = scmp.ne.s32.totalorder %s135, %s136
      %p145 = scmp.eq.s32.totalorder %s26, 0
      %p146 = por %p144, %p145
      %p147 = scmp.ne.s32.totalorder %s135, %s136
      %p148 = scmp.eq.s32.totalorder %s27, 1
      %p149 = por %p147, %p148
      %p151 = scmp.ne.s32.totalorder %s136, %s150
      %p152 = scmp.eq.s32.totalorder %s27, 0
      %p153 = por %p151, %p152
      %s155 = sadd.s32 %s154, 1
      %p158 = scmp.eq.s32.totalorder %s21, 1
      %p159 = scmp.ne.s32.totalorder %s154, %s156
      %p160 = scmp.eq.s32.totalorder %s21, 0
      %p161 = por %p159, %p160
      %p162 = scmp.ne.s32.totalorder %s154, %s156
      %p163 = scmp.eq.s32.totalorder %s26, 1
      %p164 = por %p162, %p163
      %p165 = scmp.ne.s32.totalorder %s156, %s157
      %p166 = scmp.eq.s32.totalorder %s26, 0
      %p167 = por %p165, %p166
      %p168 = scmp.ne.s32.totalorder %s156, %s157
      %p169 = scmp.eq.s32.totalorder %s27, 1
      %p170 = por %p168, %p169
      %p172 = scmp.ne.s32.totalorder %s157, %s171
      %p173 = scmp.eq.s32.totalorder %s27, 0
      %p174 = por %p172, %p173
      %s176 = sadd.s32 %s175, 1
      %p179 = scmp.eq.s32.totalorder %s21, 1
      %p180 = scmp.ne.s32.totalorder %s175, %s177
      %p181 = scmp.eq.s32.totalorder %s21, 0
      %p182 = por %p180, %p181
      %p183 = scmp.ne.s32.totalorder %s175, %s177
      %p184 = scmp.eq.s32.totalorder %s26, 1
      %p185 = por %p183, %p184
      %p186 = scmp.ne.s32.totalorder %s177, %s178
      %p187 = scmp.eq.s32.totalorder %s26, 0
      %p188 = por %p186, %p187
      %p189 = scmp.ne.s32.totalorder %s177, %s178
      %p190 = scmp.eq.s32.totalorder %s27, 1
      %p191 = por %p189, %p190
      %p193 = scmp.ne.s32.totalorder %s178, %s192
      %p194 = scmp.eq.s32.totalorder %s27, 0
      %p195 = por %p193, %p194
      %s197 = sadd.s32 %s196, 1
      %p200 = scmp.eq.s32.totalorder %s21, 1
      %p201 = scmp.ne.s32.totalorder %s196, %s198
      %p202 = scmp.eq.s32.totalorder %s21, 0
      %p203 = por %p201, %p202
      %p204 = scmp.ne.s32.totalorder %s196, %s198
      %p205 = scmp.eq.s32.totalorder %s26, 1
      %p206 = por %p204, %p205
      %p207 = scmp.ne.s32.totalorder %s198, %s199
      %p208 = scmp.eq.s32.totalorder %s26, 0
      %p209 = por %p207, %p208
      %p210 = scmp.ne.s32.totalorder %s198, %s199
      %p211 = scmp.eq.s32.totalorder %s27, 1
      %p212 = por %p210, %p211
      %p214 = scmp.ne.s32.totalorder %s199, %s213
      %p215 = scmp.eq.s32.totalorder %s27, 0
      %p216 = por %p214, %p215
      %s218 = sadd.s32 %s217, 1
      %p221 = scmp.eq.s32.totalorder %s21, 1
      %p222 = scmp.ne.s32.totalorder %s217, %s219
      %p223 = scmp.eq.s32.totalorder %s21, 0
      %p224 = por %p222, %p223
      %p225 = scmp.ne.s32.totalorder %s217, %s219
      %p226 = scmp.eq.s32.totalorder %s26, 1
      %p227 = por %p225, %p226
      %p228 = scmp.ne.s32.totalorder %s219, %s220
      %p229 = scmp.eq.s32.totalorder %s26, 0
      %p230 = por %p228, %p229
      %p231 = scmp.ne.s32.totalorder %s219, %s220
      %p232 = scmp.eq.s32.totalorder %s27, 1
      %p233 = por %p231, %p232
      %p235 = scmp.ne.s32.totalorder %s220, %s234
      %p236 = scmp.eq.s32.totalorder %s27, 0
      %p237 = por %p235, %p236
      %s239 = sadd.s32 %s238, 1
      %p242 = scmp.eq.s32.totalorder %s21, 1
      %p243 = scmp.ne.s32.totalorder %s238, %s240
      %p244 = scmp.eq.s32.totalorder %s21, 0
      %p245 = por %p243, %p244
      %p246 = scmp.ne.s32.totalorder %s238, %s240
      %p247 = scmp.eq.s32.totalorder %s26, 1
      %p248 = por %p246, %p247
      %p249 = scmp.ne.s32.totalorder %s240, %s241
      %p250 = scmp.eq.s32.totalorder %s26, 0
      %p251 = por %p249, %p250
      %p252 = scmp.ne.s32.totalorder %s240, %s241
      %p253 = scmp.eq.s32.totalorder %s27, 1
      %p254 = por %p252, %p253
      %p256 = scmp.ne.s32.totalorder %s241, %s255
      %p257 = scmp.eq.s32.totalorder %s27, 0
      %p258 = por %p256, %p257
      %s259 = ssub.s32 %s21, %s28
      %p260 = scmp.eq.s32.totalorder %s259, 0
      %s262 = sadd.s32 %s261, 1
      %s263 = scalar_select %p260, %s261, %s262
      %p266 = pneg %p260
      %p267 = scmp.eq.s32.totalorder %s21, 1
      %p268 = por %p266, %p267
      %p269 = scmp.ne.s32.totalorder %s261, %s264
      %p270 = scmp.eq.s32.totalorder %s21, 0
      %p271 = por %p269, %p270
      %p272 = scmp.ne.s32.totalorder %s261, %s264
      %p273 = scmp.eq.s32.totalorder %s26, 1
      %p274 = por %p272, %p273
      %p275 = scmp.ne.s32.totalorder %s264, %s265
      %p276 = scmp.eq.s32.totalorder %s26, 0
      %p277 = por %p275, %p276
      %p278 = scmp.ne.s32.totalorder %s264, %s265
      %p279 = scmp.eq.s32.totalorder %s27, 1
      %p280 = por %p278, %p279
      %p282 = scmp.ne.s32.totalorder %s265, %s281
      %p283 = scmp.eq.s32.totalorder %s27, 0
      %p284 = por %p282, %p283
      %p285 = scmp.le.s32.totalorder 1, %s21
      %p286 = scmp.lt.s32.totalorder %s21, 3
      %p287 = pnand %p285, %p286
      %p288 = pneg %p287
      // Predicated region
      $region9: #{tpu_custom_call.1} parent=5 // pred_check
        _
      $region10: #{tpu_custom_call.1} parent=5 // pred_check_branch
        %290 = sbr.rel (%p287) target = $region12
      $region11: #{tpu_custom_call.1} parent=5 // pred_region
        %s291 = ssub.s32 %s21, 1
        // Predicated region
        $region13: #{tpu_custom_call.1} parent=11 // pred_check
          %p292 = pneg %p146
        $region14: #{tpu_custom_call.1} parent=11 // pred_check_branch
          %294 = sbr.rel (%p292) target = $region16
        $region15: #{tpu_custom_call.1} parent=11 // pred_region
          _
        $region16: #{tpu_custom_call.1} parent=11 // pred_fallthru
          _
        // Predicated region
        $region17: #{tpu_custom_call.1} parent=11 // pred_check
          %p295 = pneg %p167
        $region18: #{tpu_custom_call.1} parent=11 // pred_check_branch
          %297 = sbr.rel (%p295) target = $region20
        $region19: #{tpu_custom_call.1} parent=11 // pred_region
          _
        $region20: #{tpu_custom_call.1} parent=11 // pred_fallthru
          _
        // Predicated region
        $region21: #{tpu_custom_call.1} parent=11 // pred_check
          %p298 = pneg %p188
        $region22: #{tpu_custom_call.1} parent=11 // pred_check_branch
          %300 = sbr.rel (%p298) target = $region24
        $region23: #{tpu_custom_call.1} parent=11 // pred_region
          _
        $region24: #{tpu_custom_call.1} parent=11 // pred_fallthru
          _
        // Predicated region
        $region25: #{tpu_custom_call.1} parent=11 // pred_check
          %p301 = pneg %p209
        $region26: #{tpu_custom_call.1} parent=11 // pred_check_branch
          %303 = sbr.rel (%p301) target = $region28
        $region27: #{tpu_custom_call.1} parent=11 // pred_region
          %305 = vsyncadd [#allocation3], 0
          %s306 = sshll.u32 %s7, 4
          %s307 = int_to_ptr.hbm [resolvable:$true] %s306
          %s308 = sshll.u32 [#allocation2], 4
          %s309 = int_to_ptr.vmem [resolvable:$true] %s308
          %314 = dma.hbm_to_vmem [thread:$0]  %s307, 2048, %s309, [#allocation3], 128, 128, 8
        $region28: #{tpu_custom_call.1} parent=11 // pred_fallthru
          _
        // Predicated region
        $region29: #{tpu_custom_call.1} parent=11 // pred_check
          %p315 = pneg %p230
        $region30: #{tpu_custom_call.1} parent=11 // pred_check_branch
          %317 = sbr.rel (%p315) target = $region32
        $region31: #{tpu_custom_call.1} parent=11 // pred_region
          %319 = vsyncadd [#allocation6], 0
          %s320 = sshll.u32 %s8, 4
          %s321 = int_to_ptr.hbm [resolvable:$true] %s320
          %s322 = sshll.u32 [#allocation5], 4
          %s323 = int_to_ptr.vmem [resolvable:$true] %s322
          %328 = dma.hbm_to_vmem [thread:$0]  %s321, 1024, %s323, [#allocation6], 64, 64, 4
        $region32: #{tpu_custom_call.1} parent=11 // pred_fallthru
          _
        // Predicated region
        $region33: #{tpu_custom_call.1} parent=11 // pred_check
          %p329 = pneg %p251
        $region34: #{tpu_custom_call.1} parent=11 // pred_check_branch
          %331 = sbr.rel (%p329) target = $region36
        $region35: #{tpu_custom_call.1} parent=11 // pred_region
          _
        $region36: #{tpu_custom_call.1} parent=11 // pred_fallthru
          _
      $region12: #{tpu_custom_call.1} parent=5 // pred_fallthru
        _
      %p332 = scmp.lt.s32.totalorder %s21, 2
      // Predicated region
      $region37: #{tpu_custom_call.1} parent=5 // pred_check
        %p333 = pneg %p332
      $region38: #{tpu_custom_call.1} parent=5 // pred_check_branch
        %335 = sbr.rel (%p333) target = $region40
      $region39: #{tpu_custom_call.1} parent=5 // pred_region
        // Predicated region
        $region41: #{tpu_custom_call.1} parent=39 // pred_check
          %p336 = pneg %p41
        $region42: #{tpu_custom_call.1} parent=39 // pred_check_branch
          %338 = sbr.rel (%p336) target = $region44
        $region43: #{tpu_custom_call.1} parent=39 // pred_region
          %s339 = smul.u32 16, %s21
          %p340 = scmp.lt.s32.totalorder %s339, 31
          %s341 = scalar_select %p340, %s339, 31
          %s342 = smul.addr %s341, 2
          %s343 = smul.addr %s342, 4
          %s344 = scalar_lea.vmem %s0, %s343
          %s345 = smul.u32 16, %s21
        $region44: #{tpu_custom_call.1} parent=39 // pred_fallthru
          _
        // Predicated region
        $region45: #{tpu_custom_call.1} parent=39 // pred_check
          %p346 = pneg %p67
        $region46: #{tpu_custom_call.1} parent=39 // pred_check_branch
          %348 = sbr.rel (%p346) target = $region48
        $region47: #{tpu_custom_call.1} parent=39 // pred_region
          %s349 = smul.u32 16, %s21
          %p350 = scmp.lt.s32.totalorder %s349, 31
          %s351 = scalar_select %p350, %s349, 31
          %s352 = smul.addr %s351, 4
          %s353 = scalar_lea.vmem %s1, %s352
          %s354 = smul.u32 16, %s21
        $region48: #{tpu_custom_call.1} parent=39 // pred_fallthru
          _
        // Predicated region
        $region49: #{tpu_custom_call.1} parent=39 // pred_check
          %p355 = pneg %p93
        $region50: #{tpu_custom_call.1} parent=39 // pred_check_branch
          %357 = sbr.rel (%p355) target = $region52
        $region51: #{tpu_custom_call.1} parent=39 // pred_region
          %s358 = smul.u32 16, %s21
          %p359 = scmp.lt.s32.totalorder %s358, 31
          %s360 = scalar_select %p359, %s358, 31
          %s361 = smul.addr %s360, 8
          %s362 = scalar_lea.vmem %s2, %s361
          %s363 = smul.u32 16, %s21
        $region52: #{tpu_custom_call.1} parent=39 // pred_fallthru
          _
        // Predicated region
        $region53: #{tpu_custom_call.1} parent=39 // pred_check
          %p364 = pneg %p119
        $region54: #{tpu_custom_call.1} parent=39 // pred_check_branch
          %366 = sbr.rel (%p364) target = $region56
        $region55: #{tpu_custom_call.1} parent=39 // pred_region
          %s367 = smul.u32 16, %s21
          %p368 = scmp.lt.s32.totalorder %s367, 31
          %s369 = scalar_select %p368, %s367, 31
          %s370 = smul.addr %s369, 8
          %s371 = scalar_lea.vmem %s3, %s370
          %s372 = smul.u32 16, %s21
        $region56: #{tpu_custom_call.1} parent=39 // pred_fallthru
          _
      $region40: #{tpu_custom_call.1} parent=5 // pred_fallthru
        _
      %p373 = scmp.le.s32.totalorder 1, %s21
      %p374 = scmp.lt.s32.totalorder %s21, 3
      %p375 = pnand %p373, %p374
      %p376 = pneg %p375
      // Predicated region
      $region57: #{tpu_custom_call.1} parent=5 // pred_check
        _
      $region58: #{tpu_custom_call.1} parent=5 // pred_check_branch
        %378 = sbr.rel (%p375) target = $region60
      $region59: #{tpu_custom_call.1} parent=5 // pred_region
        %s379 = ssub.s32 %s21, 1
        // Predicated region
        $region61: #{tpu_custom_call.1} parent=59 // pred_check
          %p380 = pneg %p209
        $region62: #{tpu_custom_call.1} parent=59 // pred_check_branch
          %382 = sbr.rel (%p380) target = $region64
        $region63: #{tpu_custom_call.1} parent=59 // pred_region
          %384 = dma.done [#allocation3], 2048
        $region64: #{tpu_custom_call.1} parent=59 // pred_fallthru
          _
        // Predicated region
        $region65: #{tpu_custom_call.1} parent=59 // pred_check
          %p385 = pneg %p230
        $region66: #{tpu_custom_call.1} parent=59 // pred_check_branch
          %387 = sbr.rel (%p385) target = $region68
        $region67: #{tpu_custom_call.1} parent=59 // pred_region
          %389 = dma.done [#allocation6], 1024
        $region68: #{tpu_custom_call.1} parent=59 // pred_fallthru
          _
        %s390 = smul.u32 16, %s26
        %p391 = scmp.lt.s32.totalorder %s390, 31
        %s392 = scalar_select %p391, %s390, 31
        %s393 = smul.addr %s392, 2
        %s394 = smul.addr %s393, 4
        %s395 = scalar_lea.vmem %s0, %s394
        %p396 = pneg %p47
        %p397 = pneg %p44
        %s398 = smul.u32 16, %s26
        %p399 = scmp.lt.s32.totalorder %s398, 31
        %s400 = scalar_select %p399, %s398, 31
        %s401 = smul.addr %s400, 4
        %s402 = scalar_lea.vmem %s1, %s401
        %p403 = pneg %p73
        %p404 = pneg %p70
        %s405 = smul.u32 16, %s26
        %p406 = scmp.lt.s32.totalorder %s405, 31
        %s407 = scalar_select %p406, %s405, 31
        %s408 = smul.addr %s407, 8
        %s409 = scalar_lea.vmem %s2, %s408
        %p410 = pneg %p99
        %p411 = pneg %p96
        %s412 = smul.u32 16, %s26
        %p413 = scmp.lt.s32.totalorder %s412, 31
        %s414 = scalar_select %p413, %s412, 31
        %s415 = smul.addr %s414, 8
        %s416 = scalar_lea.vmem %s3, %s415
        %p417 = pneg %p125
        %p418 = pneg %p122
        %p419 = pneg %p146
        %p420 = pneg %p143
        %p421 = pneg %p167
        %p422 = pneg %p164
        %p423 = pneg %p188
        %p424 = pneg %p185
        %p425 = pneg %p209
        %p426 = pneg %p206
        %p427 = pneg %p230
        %p428 = pneg %p227
        %p429 = pneg %p251
        %p430 = pneg %p248
        %p431 = pneg %p277
        %p432 = pneg %p274
        %s433 = sand.u32 %s264, 1
        %s434 = scalar_lea.sflag [#allocation4], %s433
        %s435 = sand.u32 %s264, 1
        %s436 = smul.addr %s435, 128
        %s437 = scalar_lea.vmem [#allocation7], %s436
        %s438 = smul.u32 16, %s26
        %p439 = scmp.lt.s32.totalorder %s438, 31
        %s440 = scalar_select %p439, %s438, 31
        %s441 = smul.addr %s440, 2
        %s442 = smul.addr %s441, 4
        %s443 = scalar_lea.vmem %s0, %s442
        %s444 = smul.u32 16, %s26
        %s445 = smul.u32 16, %s26
        %p446 = scmp.lt.s32.totalorder %s445, 31
        %s447 = scalar_select %p446, %s445, 31
        %s448 = smul.addr %s447, 4
        %s449 = scalar_lea.vmem %s1, %s448
        %s450 = smul.u32 16, %s26
        %s451 = smul.u32 16, %s26
        %p452 = scmp.lt.s32.totalorder %s451, 31
        %s453 = scalar_select %p452, %s451, 31
        %s454 = smul.addr %s453, 8
        %s455 = scalar_lea.vmem %s2, %s454
        %s456 = smul.u32 16, %s26
        %s457 = smul.u32 16, %s26
        %p458 = scmp.lt.s32.totalorder %s457, 31
        %s459 = scalar_select %p458, %s457, 31
        %s460 = smul.addr %s459, 8
        %s461 = scalar_lea.vmem %s3, %s460
        %s462 = smul.u32 16, %s26
        %s463 = smul.u32 16, %s26
        %v465 = vld [vmem:[%s443] sm:$0xff]
        %v466 = vld [vmem:[%s443 + $0x8] sm:$0xff]
        %v467 = vld [vmem:[%s443 + $0x10] sm:$0xff]
        %v468 = vld [vmem:[%s443 + $0x18] sm:$0xff]
        %v469 = vld [vmem:[%s443 + $0x20] sm:$0xff]
        %v470 = vld [vmem:[%s443 + $0x28] sm:$0xff]
        %v471 = vld [vmem:[%s443 + $0x30] sm:$0xff]
        %v472 = vld [vmem:[%s443 + $0x38] sm:$0xff]
        %v473 = vld [vmem:[%s443 + $0x40] sm:$0xff]
        %v474 = vld [vmem:[%s443 + $0x48] sm:$0xff]
        %v475 = vld [vmem:[%s443 + $0x50] sm:$0xff]
        %v476 = vld [vmem:[%s443 + $0x58] sm:$0xff]
        %v477 = vld [vmem:[%s443 + $0x60] sm:$0xff]
        %v478 = vld [vmem:[%s443 + $0x68] sm:$0xff]
        %v479 = vld [vmem:[%s443 + $0x70] sm:$0xff]
        %v480 = vld [vmem:[%s443 + $0x78] sm:$0xff]
        %v481 = vld [vmem:[%s449] sm:$0xf]
        %v482 = vld [vmem:[%s449 + $0x4] sm:$0xf]
        %v483 = vld [vmem:[%s449 + $0x8] sm:$0xf]
        %v484 = vld [vmem:[%s449 + $0xc] sm:$0xf]
        %v485 = vld [vmem:[%s449 + $0x10] sm:$0xf]
        %v486 = vld [vmem:[%s449 + $0x14] sm:$0xf]
        %v487 = vld [vmem:[%s449 + $0x18] sm:$0xf]
        %v488 = vld [vmem:[%s449 + $0x1c] sm:$0xf]
        %v489 = vld [vmem:[%s449 + $0x20] sm:$0xf]
        %v490 = vld [vmem:[%s449 + $0x24] sm:$0xf]
        %v491 = vld [vmem:[%s449 + $0x28] sm:$0xf]
        %v492 = vld [vmem:[%s449 + $0x2c] sm:$0xf]
        %v493 = vld [vmem:[%s449 + $0x30] sm:$0xf]
        %v494 = vld [vmem:[%s449 + $0x34] sm:$0xf]
        %v495 = vld [vmem:[%s449 + $0x38] sm:$0xf]
        %v496 = vld [vmem:[%s449 + $0x3c] sm:$0xf]
        %v497 = vld [vmem:[%s455] sm:$0xff]
        %v498 = vld [vmem:[%s455 + $0x8] sm:$0xff]
        %v499 = vld [vmem:[%s455 + $0x10] sm:$0xff]
        %v500 = vld [vmem:[%s455 + $0x18] sm:$0xff]
        %v501 = vld [vmem:[%s455 + $0x20] sm:$0xff]
        %v502 = vld [vmem:[%s455 + $0x28] sm:$0xff]
        %v503 = vld [vmem:[%s455 + $0x30] sm:$0xff]
        %v504 = vld [vmem:[%s455 + $0x38] sm:$0xff]
        %v505 = vld [vmem:[%s455 + $0x40] sm:$0xff]
        %v506 = vld [vmem:[%s455 + $0x48] sm:$0xff]
        %v507 = vld [vmem:[%s455 + $0x50] sm:$0xff]
        %v508 = vld [vmem:[%s455 + $0x58] sm:$0xff]
        %v509 = vld [vmem:[%s455 + $0x60] sm:$0xff]
        %v510 = vld [vmem:[%s455 + $0x68] sm:$0xff]
        %v511 = vld [vmem:[%s455 + $0x70] sm:$0xff]
        %v512 = vld [vmem:[%s455 + $0x78] sm:$0xff]
        %v513 = vcvt.s32.f32 %v497
        %v514 = vcvt.s32.f32 %v498
        %v515 = vcvt.s32.f32 %v499
        %v516 = vcvt.s32.f32 %v500
        %v517 = vcvt.s32.f32 %v501
        %v518 = vcvt.s32.f32 %v502
        %v519 = vcvt.s32.f32 %v503
        %v520 = vcvt.s32.f32 %v504
        %v521 = vcvt.s32.f32 %v505
        %v522 = vcvt.s32.f32 %v506
        %v523 = vcvt.s32.f32 %v507
        %v524 = vcvt.s32.f32 %v508
        %v525 = vcvt.s32.f32 %v509
        %v526 = vcvt.s32.f32 %v510
        %v527 = vcvt.s32.f32 %v511
        %v528 = vcvt.s32.f32 %v512
        %v529 = vld [vmem:[%s461] sm:$0xff]
        %v530 = vld [vmem:[%s461 + $0x8] sm:$0xff]
        %v531 = vld [vmem:[%s461 + $0x10] sm:$0xff]
        %v532 = vld [vmem:[%s461 + $0x18] sm:$0xff]
        %v533 = vld [vmem:[%s461 + $0x20] sm:$0xff]
        %v534 = vld [vmem:[%s461 + $0x28] sm:$0xff]
        %v535 = vld [vmem:[%s461 + $0x30] sm:$0xff]
        %v536 = vld [vmem:[%s461 + $0x38] sm:$0xff]
        %v537 = vld [vmem:[%s461 + $0x40] sm:$0xff]
        %v538 = vld [vmem:[%s461 + $0x48] sm:$0xff]
        %v539 = vld [vmem:[%s461 + $0x50] sm:$0xff]
        %v540 = vld [vmem:[%s461 + $0x58] sm:$0xff]
        %v541 = vld [vmem:[%s461 + $0x60] sm:$0xff]
        %v542 = vld [vmem:[%s461 + $0x68] sm:$0xff]
        %v543 = vld [vmem:[%s461 + $0x70] sm:$0xff]
        %v544 = vld [vmem:[%s461 + $0x78] sm:$0xff]
        %v545 = vld [vmem:[%s6] sm:$0xff]
        %v546 = vld [vmem:[%s6 + $0x8] sm:$0xff]
        %v547 = vld [vmem:[%s6 + $0x10] sm:$0xff]
        %v548 = vld [vmem:[%s6 + $0x18] sm:$0xff]
        %v549 = vld [vmem:[%s6 + $0x20] sm:$0xff]
        %v550 = vld [vmem:[%s6 + $0x28] sm:$0xff]
        %v551 = vld [vmem:[%s6 + $0x30] sm:$0xff]
        %v552 = vld [vmem:[%s6 + $0x38] sm:$0xff]
        %v553 = vld [vmem:[%s6 + $0x40] sm:$0xff]
        %v554 = vld [vmem:[%s6 + $0x48] sm:$0xff]
        %v555 = vld [vmem:[%s6 + $0x50] sm:$0xff]
        %v556 = vld [vmem:[%s6 + $0x58] sm:$0xff]
        %v557 = vld [vmem:[%s6 + $0x60] sm:$0xff]
        %v558 = vld [vmem:[%s6 + $0x68] sm:$0xff]
        %v559 = vld [vmem:[%s6 + $0x70] sm:$0xff]
        %v560 = vld [vmem:[%s6 + $0x78] sm:$0xff]
        %v561 = vld [vmem:[%s6 + $0x80] sm:$0xff]
        %v562 = vld [vmem:[%s6 + $0x88] sm:$0xff]
        %v563 = vld [vmem:[%s6 + $0x90] sm:$0xff]
        %v564 = vld [vmem:[%s6 + $0x98] sm:$0xff]
        %v565 = vld [vmem:[%s6 + $0xa0] sm:$0xff]
        %v566 = vld [vmem:[%s6 + $0xa8] sm:$0xff]
        %v567 = vld [vmem:[%s6 + $0xb0] sm:$0xff]
        %v568 = vld [vmem:[%s6 + $0xb8] sm:$0xff]
        %v569 = vld [vmem:[%s6 + $0xc0] sm:$0xff]
        %v570 = vld [vmem:[%s6 + $0xc8] sm:$0xff]
        %v571 = vld [vmem:[%s6 + $0xd0] sm:$0xff]
        %v572 = vld [vmem:[%s6 + $0xd8] sm:$0xff]
        %v573 = vld [vmem:[%s6 + $0xe0] sm:$0xff]
        %v574 = vld [vmem:[%s6 + $0xe8] sm:$0xff]
        %v575 = vld [vmem:[%s6 + $0xf0] sm:$0xff]
        %v576 = vld [vmem:[%s6 + $0xf8] sm:$0xff]
        %v577 = vld [vmem:[#allocation2] sm:$0xff]
        %v578 = vld [vmem:[#allocation2 + $0x8] sm:$0xff]
        %v579 = vld [vmem:[#allocation2 + $0x10] sm:$0xff]
        %v580 = vld [vmem:[#allocation2 + $0x18] sm:$0xff]
        %v581 = vld [vmem:[#allocation2 + $0x20] sm:$0xff]
        %v582 = vld [vmem:[#allocation2 + $0x28] sm:$0xff]
        %v583 = vld [vmem:[#allocation2 + $0x30] sm:$0xff]
        %v584 = vld [vmem:[#allocation2 + $0x38] sm:$0xff]
        %v585 = vld [vmem:[#allocation2 + $0x40] sm:$0xff]
        %v586 = vld [vmem:[#allocation2 + $0x48] sm:$0xff]
        %v587 = vld [vmem:[#allocation2 + $0x50] sm:$0xff]
        %v588 = vld [vmem:[#allocation2 + $0x58] sm:$0xff]
        %v589 = vld [vmem:[#allocation2 + $0x60] sm:$0xff]
        %v590 = vld [vmem:[#allocation2 + $0x68] sm:$0xff]
        %v591 = vld [vmem:[#allocation2 + $0x70] sm:$0xff]
        %v592 = vld [vmem:[#allocation2 + $0x78] sm:$0xff]
        %v609 = vunpack.c.l.b16 %v481
        %v610 = vunpack.c.l.b16 %v482
        %v611 = vunpack.c.l.b16 %v483
        %v612 = vunpack.c.l.b16 %v484
        %v613 = vunpack.c.l.b16 %v485
        %v614 = vunpack.c.l.b16 %v486
        %v615 = vunpack.c.l.b16 %v487
        %v616 = vunpack.c.l.b16 %v488
        %v617 = vunpack.c.l.b16 %v489
        %v618 = vunpack.c.l.b16 %v490
        %v619 = vunpack.c.l.b16 %v491
        %v620 = vunpack.c.l.b16 %v492
        %v621 = vunpack.c.l.b16 %v493
        %v622 = vunpack.c.l.b16 %v494
        %v623 = vunpack.c.l.b16 %v495
        %v624 = vunpack.c.l.b16 %v496
        %v625 = vpack.c.b16 %v610, %v609
        %v626 = vpack.c.b16 %v612, %v611
        %v627 = vpack.c.b16 %v614, %v613
        %v628 = vpack.c.b16 %v616, %v615
        %v629 = vpack.c.b16 %v618, %v617
        %v630 = vpack.c.b16 %v620, %v619
        %v631 = vpack.c.b16 %v622, %v621
        %v632 = vpack.c.b16 %v624, %v623
        %v657 = vunpack.c.l.b16 %v577
        %v658 = vunpack.c.h.b16 %v577
        %v659 = vunpack.c.l.b16 %v578
        %v660 = vunpack.c.h.b16 %v578
        %v661 = vunpack.c.l.b16 %v579
        %v662 = vunpack.c.h.b16 %v579
        %v663 = vunpack.c.l.b16 %v580
        %v664 = vunpack.c.h.b16 %v580
        %v665 = vunpack.c.l.b16 %v581
        %v666 = vunpack.c.h.b16 %v581
        %v667 = vunpack.c.l.b16 %v582
        %v668 = vunpack.c.h.b16 %v582
        %v669 = vunpack.c.l.b16 %v583
        %v670 = vunpack.c.h.b16 %v583
        %v671 = vunpack.c.l.b16 %v584
        %v672 = vunpack.c.h.b16 %v584
        %v673 = vunpack.c.l.b16 %v585
        %v674 = vunpack.c.h.b16 %v585
        %v675 = vunpack.c.l.b16 %v586
        %v676 = vunpack.c.h.b16 %v586
        %v677 = vunpack.c.l.b16 %v587
        %v678 = vunpack.c.h.b16 %v587
        %v679 = vunpack.c.l.b16 %v588
        %v680 = vunpack.c.h.b16 %v588
        %v681 = vunpack.c.l.b16 %v589
        %v682 = vunpack.c.h.b16 %v589
        %v683 = vunpack.c.l.b16 %v590
        %v684 = vunpack.c.h.b16 %v590
        %v685 = vunpack.c.l.b16 %v591
        %v686 = vunpack.c.h.b16 %v591
        %v687 = vunpack.c.l.b16 %v592
        %v688 = vunpack.c.h.b16 %v592
        %v689 = vpack.c.b16 %v659, %v657
        %v690 = vpack.c.b16 %v660, %v658
        %v691 = vpack.c.b16 %v663, %v661
        %v692 = vpack.c.b16 %v664, %v662
        %v693 = vpack.c.b16 %v667, %v665
        %v694 = vpack.c.b16 %v668, %v666
        %v695 = vpack.c.b16 %v671, %v669
        %v696 = vpack.c.b16 %v672, %v670
        %v697 = vpack.c.b16 %v675, %v673
        %v698 = vpack.c.b16 %v676, %v674
        %v699 = vpack.c.b16 %v679, %v677
        %v700 = vpack.c.b16 %v680, %v678
        %v701 = vpack.c.b16 %v683, %v681
        %v702 = vpack.c.b16 %v684, %v682
        %v703 = vpack.c.b16 %v687, %v685
        %v704 = vpack.c.b16 %v688, %v686
        %721 = vmatpush.bf16.msra.mxu0 %v703
        %722 = vmatpush.bf16.msra.mxu0 %v701
        %723 = vmatpush.bf16.msra.mxu0 %v699
        %724 = vmatpush.bf16.msra.mxu0 %v697
        %725 = vmatpush.bf16.msra.mxu0 %v695
        %726 = vmatpush.bf16.msra.mxu0 %v693
        %727 = vmatpush.bf16.msra.mxu0 %v691
        %728 = vmatpush.bf16.msra.mxu0 %v689
        %729 = vmatmul.bf16.gmra.mxu0 %v625
        %v730 = vpop.f32.mrf.mxu0
        %v731 = vadd.f32 0.0, %v730
        %v732 = vpop.f32.mrf.mxu0
        %v733 = vadd.f32 0.0, %v732
        %734 = vmatmul.bf16.gmra.mxu0 %v626
        %v735 = vpop.f32.mrf.mxu0
        %v736 = vadd.f32 0.0, %v735
        %v737 = vpop.f32.mrf.mxu0
        %v738 = vadd.f32 0.0, %v737
        %739 = vmatmul.bf16.gmra.mxu0 %v627
        %v740 = vpop.f32.mrf.mxu0
        %v741 = vadd.f32 0.0, %v740
        %v742 = vpop.f32.mrf.mxu0
        %v743 = vadd.f32 0.0, %v742
        %744 = vmatmul.bf16.gmra.mxu0 %v628
        %v745 = vpop.f32.mrf.mxu0
        %v746 = vadd.f32 0.0, %v745
        %v747 = vpop.f32.mrf.mxu0
        %v748 = vadd.f32 0.0, %v747
        %749 = vmatmul.bf16.gmra.mxu0 %v629
        %v750 = vpop.f32.mrf.mxu0
        %v751 = vadd.f32 0.0, %v750
        %v752 = vpop.f32.mrf.mxu0
        %v753 = vadd.f32 0.0, %v752
        %754 = vmatmul.bf16.gmra.mxu0 %v630
        %v755 = vpop.f32.mrf.mxu0
        %v756 = vadd.f32 0.0, %v755
        %v757 = vpop.f32.mrf.mxu0
        %v758 = vadd.f32 0.0, %v757
        %759 = vmatmul.bf16.gmra.mxu0 %v631
        %v760 = vpop.f32.mrf.mxu0
        %v761 = vadd.f32 0.0, %v760
        %v762 = vpop.f32.mrf.mxu0
        %v763 = vadd.f32 0.0, %v762
        %764 = vmatmul.bf16.gmra.mxu0 %v632
        %v765 = vpop.f32.mrf.mxu0
        %v766 = vadd.f32 0.0, %v765
        %v767 = vpop.f32.mrf.mxu0
        %v768 = vadd.f32 0.0, %v767
        %769 = vdwg.mxu0
        %770 = vmatpush.bf16.msra.mxu0 %v704
        %771 = vmatpush.bf16.msra.mxu0 %v702
        %772 = vmatpush.bf16.msra.mxu0 %v700
        %773 = vmatpush.bf16.msra.mxu0 %v698
        %774 = vmatpush.bf16.msra.mxu0 %v696
        %775 = vmatpush.bf16.msra.mxu0 %v694
        %776 = vmatpush.bf16.msra.mxu0 %v692
        %777 = vmatpush.bf16.msra.mxu0 %v690
        %778 = vmatmul.bf16.gmra.mxu0 %v625
        %v779 = vpop.f32.mrf.mxu0
        %v780 = vadd.f32 0.0, %v779
        %v781 = vpop.f32.mrf.mxu0
        %v782 = vadd.f32 0.0, %v781
        %783 = vmatmul.bf16.gmra.mxu0 %v626
        %v784 = vpop.f32.mrf.mxu0
        %v785 = vadd.f32 0.0, %v784
        %v786 = vpop.f32.mrf.mxu0
        %v787 = vadd.f32 0.0, %v786
        %788 = vmatmul.bf16.gmra.mxu0 %v627
        %v789 = vpop.f32.mrf.mxu0
        %v790 = vadd.f32 0.0, %v789
        %v791 = vpop.f32.mrf.mxu0
        %v792 = vadd.f32 0.0, %v791
        %793 = vmatmul.bf16.gmra.mxu0 %v628
        %v794 = vpop.f32.mrf.mxu0
        %v795 = vadd.f32 0.0, %v794
        %v796 = vpop.f32.mrf.mxu0
        %v797 = vadd.f32 0.0, %v796
        %798 = vmatmul.bf16.gmra.mxu0 %v629
        %v799 = vpop.f32.mrf.mxu0
        %v800 = vadd.f32 0.0, %v799
        %v801 = vpop.f32.mrf.mxu0
        %v802 = vadd.f32 0.0, %v801
        %803 = vmatmul.bf16.gmra.mxu0 %v630
        %v804 = vpop.f32.mrf.mxu0
        %v805 = vadd.f32 0.0, %v804
        %v806 = vpop.f32.mrf.mxu0
        %v807 = vadd.f32 0.0, %v806
        %808 = vmatmul.bf16.gmra.mxu0 %v631
        %v809 = vpop.f32.mrf.mxu0
        %v810 = vadd.f32 0.0, %v809
        %v811 = vpop.f32.mrf.mxu0
        %v812 = vadd.f32 0.0, %v811
        %813 = vmatmul.bf16.gmra.mxu0 %v632
        %v814 = vpop.f32.mrf.mxu0
        %v815 = vadd.f32 0.0, %v814
        %v816 = vpop.f32.mrf.mxu0
        %v817 = vadd.f32 0.0, %v816
        %818 = vdwg.mxu0
        %v835 = vunpack.c.l.b16 %v465
        %v836 = vunpack.c.h.b16 %v465
        %v837 = vunpack.c.l.b16 %v466
        %v838 = vunpack.c.h.b16 %v466
        %v839 = vunpack.c.l.b16 %v467
        %v840 = vunpack.c.h.b16 %v467
        %v841 = vunpack.c.l.b16 %v468
        %v842 = vunpack.c.h.b16 %v468
        %v843 = vunpack.c.l.b16 %v469
        %v844 = vunpack.c.h.b16 %v469
        %v845 = vunpack.c.l.b16 %v470
        %v846 = vunpack.c.h.b16 %v470
        %v847 = vunpack.c.l.b16 %v471
        %v848 = vunpack.c.h.b16 %v471
        %v849 = vunpack.c.l.b16 %v472
        %v850 = vunpack.c.h.b16 %v472
        %v851 = vunpack.c.l.b16 %v473
        %v852 = vunpack.c.h.b16 %v473
        %v853 = vunpack.c.l.b16 %v474
        %v854 = vunpack.c.h.b16 %v474
        %v855 = vunpack.c.l.b16 %v475
        %v856 = vunpack.c.h.b16 %v475
        %v857 = vunpack.c.l.b16 %v476
        %v858 = vunpack.c.h.b16 %v476
        %v859 = vunpack.c.l.b16 %v477
        %v860 = vunpack.c.h.b16 %v477
        %v861 = vunpack.c.l.b16 %v478
        %v862 = vunpack.c.h.b16 %v478
        %v863 = vunpack.c.l.b16 %v479
        %v864 = vunpack.c.h.b16 %v479
        %v865 = vunpack.c.l.b16 %v480
        %v866 = vunpack.c.h.b16 %v480
        %v867 = vpack.c.b16 %v837, %v835
        %v868 = vpack.c.b16 %v838, %v836
        %v869 = vpack.c.b16 %v841, %v839
        %v870 = vpack.c.b16 %v842, %v840
        %v871 = vpack.c.b16 %v845, %v843
        %v872 = vpack.c.b16 %v846, %v844
        %v873 = vpack.c.b16 %v849, %v847
        %v874 = vpack.c.b16 %v850, %v848
        %v875 = vpack.c.b16 %v853, %v851
        %v876 = vpack.c.b16 %v854, %v852
        %v877 = vpack.c.b16 %v857, %v855
        %v878 = vpack.c.b16 %v858, %v856
        %v879 = vpack.c.b16 %v861, %v859
        %v880 = vpack.c.b16 %v862, %v860
        %v881 = vpack.c.b16 %v865, %v863
        %v882 = vpack.c.b16 %v866, %v864
        %v931 = vunpack.c.l.b16 %v545
        %v932 = vunpack.c.h.b16 %v545
        %v933 = vunpack.c.l.b16 %v546
        %v934 = vunpack.c.h.b16 %v546
        %v935 = vunpack.c.l.b16 %v547
        %v936 = vunpack.c.h.b16 %v547
        %v937 = vunpack.c.l.b16 %v548
        %v938 = vunpack.c.h.b16 %v548
        %v939 = vunpack.c.l.b16 %v549
        %v940 = vunpack.c.h.b16 %v549
        %v941 = vunpack.c.l.b16 %v550
        %v942 = vunpack.c.h.b16 %v550
        %v943 = vunpack.c.l.b16 %v551
        %v944 = vunpack.c.h.b16 %v551
        %v945 = vunpack.c.l.b16 %v552
        %v946 = vunpack.c.h.b16 %v552
        %v947 = vunpack.c.l.b16 %v553
        %v948 = vunpack.c.h.b16 %v553
        %v949 = vunpack.c.l.b16 %v554
        %v950 = vunpack.c.h.b16 %v554
        %v951 = vunpack.c.l.b16 %v555
        %v952 = vunpack.c.h.b16 %v555
        %v953 = vunpack.c.l.b16 %v556
        %v954 = vunpack.c.h.b16 %v556
        %v955 = vunpack.c.l.b16 %v557
        %v956 = vunpack.c.h.b16 %v557
        %v957 = vunpack.c.l.b16 %v558
        %v958 = vunpack.c.h.b16 %v558
        %v959 = vunpack.c.l.b16 %v559
        %v960 = vunpack.c.h.b16 %v559
        %v961 = vunpack.c.l.b16 %v560
        %v962 = vunpack.c.h.b16 %v560
        %v963 = vunpack.c.l.b16 %v561
        %v964 = vunpack.c.h.b16 %v561
        %v965 = vunpack.c.l.b16 %v562
        %v966 = vunpack.c.h.b16 %v562
        %v967 = vunpack.c.l.b16 %v563
        %v968 = vunpack.c.h.b16 %v563
        %v969 = vunpack.c.l.b16 %v564
        %v970 = vunpack.c.h.b16 %v564
        %v971 = vunpack.c.l.b16 %v565
        %v972 = vunpack.c.h.b16 %v565
        %v973 = vunpack.c.l.b16 %v566
        %v974 = vunpack.c.h.b16 %v566
        %v975 = vunpack.c.l.b16 %v567
        %v976 = vunpack.c.h.b16 %v567
        %v977 = vunpack.c.l.b16 %v568
        %v978 = vunpack.c.h.b16 %v568
        %v979 = vunpack.c.l.b16 %v569
        %v980 = vunpack.c.h.b16 %v569
        %v981 = vunpack.c.l.b16 %v570
        %v982 = vunpack.c.h.b16 %v570
        %v983 = vunpack.c.l.b16 %v571
        %v984 = vunpack.c.h.b16 %v571
        %v985 = vunpack.c.l.b16 %v572
        %v986 = vunpack.c.h.b16 %v572
        %v987 = vunpack.c.l.b16 %v573
        %v988 = vunpack.c.h.b16 %v573
        %v989 = vunpack.c.l.b16 %v574
        %v990 = vunpack.c.h.b16 %v574
        %v991 = vunpack.c.l.b16 %v575
        %v992 = vunpack.c.h.b16 %v575
        %v993 = vunpack.c.l.b16 %v576
        %v994 = vunpack.c.h.b16 %v576
        %v995 = vpack.c.b16 %v933, %v931
        %v996 = vpack.c.b16 %v934, %v932
        %v997 = vpack.c.b16 %v937, %v935
        %v998 = vpack.c.b16 %v938, %v936
        %v999 = vpack.c.b16 %v941, %v939
        %v1000 = vpack.c.b16 %v942, %v940
        %v1001 = vpack.c.b16 %v945, %v943
        %v1002 = vpack.c.b16 %v946, %v944
        %v1003 = vpack.c.b16 %v949, %v947
        %v1004 = vpack.c.b16 %v950, %v948
        %v1005 = vpack.c.b16 %v953, %v951
        %v1006 = vpack.c.b16 %v954, %v952
        %v1007 = vpack.c.b16 %v957, %v955
        %v1008 = vpack.c.b16 %v958, %v956
        %v1009 = vpack.c.b16 %v961, %v959
        %v1010 = vpack.c.b16 %v962, %v960
        %v1011 = vpack.c.b16 %v965, %v963
        %v1012 = vpack.c.b16 %v966, %v964
        %v1013 = vpack.c.b16 %v969, %v967
        %v1014 = vpack.c.b16 %v970, %v968
        %v1015 = vpack.c.b16 %v973, %v971
        %v1016 = vpack.c.b16 %v974, %v972
        %v1017 = vpack.c.b16 %v977, %v975
        %v1018 = vpack.c.b16 %v978, %v976
        %v1019 = vpack.c.b16 %v981, %v979
        %v1020 = vpack.c.b16 %v982, %v980
        %v1021 = vpack.c.b16 %v985, %v983
        %v1022 = vpack.c.b16 %v986, %v984
        %v1023 = vpack.c.b16 %v989, %v987
        %v1024 = vpack.c.b16 %v990, %v988
        %v1025 = vpack.c.b16 %v993, %v991
        %v1026 = vpack.c.b16 %v994, %v992
        %1059 = vmatpush.bf16.msra.mxu0 %v1009
        %1060 = vmatpush.bf16.msra.mxu0 %v1007
        %1061 = vmatpush.bf16.msra.mxu0 %v1005
        %1062 = vmatpush.bf16.msra.mxu0 %v1003
        %1063 = vmatpush.bf16.msra.mxu0 %v1001
        %1064 = vmatpush.bf16.msra.mxu0 %v999
        %1065 = vmatpush.bf16.msra.mxu0 %v997
        %1066 = vmatpush.bf16.msra.mxu0 %v995
        %1067 = vmatmul.bf16.gmra.mxu0 %v867
        %v1068 = vpop.f32.mrf.mxu0
        %v1069 = vadd.f32 %v731, %v1068
        %v1070 = vpop.f32.mrf.mxu0
        %v1071 = vadd.f32 %v733, %v1070
        %1072 = vmatmul.bf16.gmra.mxu0 %v869
        %v1073 = vpop.f32.mrf.mxu0
        %v1074 = vadd.f32 %v736, %v1073
        %v1075 = vpop.f32.mrf.mxu0
        %v1076 = vadd.f32 %v738, %v1075
        %1077 = vmatmul.bf16.gmra.mxu0 %v871
        %v1078 = vpop.f32.mrf.mxu0
        %v1079 = vadd.f32 %v741, %v1078
        %v1080 = vpop.f32.mrf.mxu0
        %v1081 = vadd.f32 %v743, %v1080
        %1082 = vmatmul.bf16.gmra.mxu0 %v873
        %v1083 = vpop.f32.mrf.mxu0
        %v1084 = vadd.f32 %v746, %v1083
        %v1085 = vpop.f32.mrf.mxu0
        %v1086 = vadd.f32 %v748, %v1085
        %1087 = vmatmul.bf16.gmra.mxu0 %v875
        %v1088 = vpop.f32.mrf.mxu0
        %v1089 = vadd.f32 %v751, %v1088
        %v1090 = vpop.f32.mrf.mxu0
        %v1091 = vadd.f32 %v753, %v1090
        %1092 = vmatmul.bf16.gmra.mxu0 %v877
        %v1093 = vpop.f32.mrf.mxu0
        %v1094 = vadd.f32 %v756, %v1093
        %v1095 = vpop.f32.mrf.mxu0
        %v1096 = vadd.f32 %v758, %v1095
        %1097 = vmatmul.bf16.gmra.mxu0 %v879
        %v1098 = vpop.f32.mrf.mxu0
        %v1099 = vadd.f32 %v761, %v1098
        %v1100 = vpop.f32.mrf.mxu0
        %v1101 = vadd.f32 %v763, %v1100
        %1102 = vmatmul.bf16.gmra.mxu0 %v881
        %v1103 = vpop.f32.mrf.mxu0
        %v1104 = vadd.f32 %v766, %v1103
        %v1105 = vpop.f32.mrf.mxu0
        %v1106 = vadd.f32 %v768, %v1105
        %1107 = vdwg.mxu0
        %1108 = vmatpush.bf16.msra.mxu0 %v1025
        %1109 = vmatpush.bf16.msra.mxu0 %v1023
        %1110 = vmatpush.bf16.msra.mxu0 %v1021
        %1111 = vmatpush.bf16.msra.mxu0 %v1019
        %1112 = vmatpush.bf16.msra.mxu0 %v1017
        %1113 = vmatpush.bf16.msra.mxu0 %v1015
        %1114 = vmatpush.bf16.msra.mxu0 %v1013
        %1115 = vmatpush.bf16.msra.mxu0 %v1011
        %1116 = vmatmul.bf16.gmra.mxu0 %v868
        %v1117 = vpop.f32.mrf.mxu0
        %v1118 = vadd.f32 %v1069, %v1117
        %v1119 = vpop.f32.mrf.mxu0
        %v1120 = vadd.f32 %v1071, %v1119
        %1121 = vmatmul.bf16.gmra.mxu0 %v870
        %v1122 = vpop.f32.mrf.mxu0
        %v1123 = vadd.f32 %v1074, %v1122
        %v1124 = vpop.f32.mrf.mxu0
        %v1125 = vadd.f32 %v1076, %v1124
        %1126 = vmatmul.bf16.gmra.mxu0 %v872
        %v1127 = vpop.f32.mrf.mxu0
        %v1128 = vadd.f32 %v1079, %v1127
        %v1129 = vpop.f32.mrf.mxu0
        %v1130 = vadd.f32 %v1081, %v1129
        %1131 = vmatmul.bf16.gmra.mxu0 %v874
        %v1132 = vpop.f32.mrf.mxu0
        %v1133 = vadd.f32 %v1084, %v1132
        %v1134 = vpop.f32.mrf.mxu0
        %v1135 = vadd.f32 %v1086, %v1134
        %1136 = vmatmul.bf16.gmra.mxu0 %v876
        %v1137 = vpop.f32.mrf.mxu0
        %v1138 = vadd.f32 %v1089, %v1137
        %v1139 = vpop.f32.mrf.mxu0
        %v1140 = vadd.f32 %v1091, %v1139
        %1141 = vmatmul.bf16.gmra.mxu0 %v878
        %v1142 = vpop.f32.mrf.mxu0
        %v1143 = vadd.f32 %v1094, %v1142
        %v1144 = vpop.f32.mrf.mxu0
        %v1145 = vadd.f32 %v1096, %v1144
        %1146 = vmatmul.bf16.gmra.mxu0 %v880
        %v1147 = vpop.f32.mrf.mxu0
        %v1148 = vadd.f32 %v1099, %v1147
        %v1149 = vpop.f32.mrf.mxu0
        %v1150 = vadd.f32 %v1101, %v1149
        %1151 = vmatmul.bf16.gmra.mxu0 %v882
        %v1152 = vpop.f32.mrf.mxu0
        %v1153 = vadd.f32 %v1104, %v1152
        %v1154 = vpop.f32.mrf.mxu0
        %v1155 = vadd.f32 %v1106, %v1154
        %1156 = vdwg.mxu0
        %1157 = vmatpush.bf16.msra.mxu0 %v1010
        %1158 = vmatpush.bf16.msra.mxu0 %v1008
        %1159 = vmatpush.bf16.msra.mxu0 %v1006
        %1160 = vmatpush.bf16.msra.mxu0 %v1004
        %1161 = vmatpush.bf16.msra.mxu0 %v1002
        %1162 = vmatpush.bf16.msra.mxu0 %v1000
        %1163 = vmatpush.bf16.msra.mxu0 %v998
        %1164 = vmatpush.bf16.msra.mxu0 %v996
        %1165 = vmatmul.bf16.gmra.mxu0 %v867
        %v1166 = vpop.f32.mrf.mxu0
        %v1167 = vadd.f32 %v780, %v1166
        %v1168 = vpop.f32.mrf.mxu0
        %v1169 = vadd.f32 %v782, %v1168
        %1170 = vmatmul.bf16.gmra.mxu0 %v869
        %v1171 = vpop.f32.mrf.mxu0
        %v1172 = vadd.f32 %v785, %v1171
        %v1173 = vpop.f32.mrf.mxu0
        %v1174 = vadd.f32 %v787, %v1173
        %1175 = vmatmul.bf16.gmra.mxu0 %v871
        %v1176 = vpop.f32.mrf.mxu0
        %v1177 = vadd.f32 %v790, %v1176
        %v1178 = vpop.f32.mrf.mxu0
        %v1179 = vadd.f32 %v792, %v1178
        %1180 = vmatmul.bf16.gmra.mxu0 %v873
        %v1181 = vpop.f32.mrf.mxu0
        %v1182 = vadd.f32 %v795, %v1181
        %v1183 = vpop.f32.mrf.mxu0
        %v1184 = vadd.f32 %v797, %v1183
        %1185 = vmatmul.bf16.gmra.mxu0 %v875
        %v1186 = vpop.f32.mrf.mxu0
        %v1187 = vadd.f32 %v800, %v1186
        %v1188 = vpop.f32.mrf.mxu0
        %v1189 = vadd.f32 %v802, %v1188
        %1190 = vmatmul.bf16.gmra.mxu0 %v877
        %v1191 = vpop.f32.mrf.mxu0
        %v1192 = vadd.f32 %v805, %v1191
        %v1193 = vpop.f32.mrf.mxu0
        %v1194 = vadd.f32 %v807, %v1193
        %1195 = vmatmul.bf16.gmra.mxu0 %v879
        %v1196 = vpop.f32.mrf.mxu0
        %v1197 = vadd.f32 %v810, %v1196
        %v1198 = vpop.f32.mrf.mxu0
        %v1199 = vadd.f32 %v812, %v1198
        %1200 = vmatmul.bf16.gmra.mxu0 %v881
        %v1201 = vpop.f32.mrf.mxu0
        %v1202 = vadd.f32 %v815, %v1201
        %v1203 = vpop.f32.mrf.mxu0
        %v1204 = vadd.f32 %v817, %v1203
        %1205 = vdwg.mxu0
        %1206 = vmatpush.bf16.msra.mxu0 %v1026
        %1207 = vmatpush.bf16.msra.mxu0 %v1024
        %1208 = vmatpush.bf16.msra.mxu0 %v1022
        %1209 = vmatpush.bf16.msra.mxu0 %v1020
        %1210 = vmatpush.bf16.msra.mxu0 %v1018
        %1211 = vmatpush.bf16.msra.mxu0 %v1016
        %1212 = vmatpush.bf16.msra.mxu0 %v1014
        %1213 = vmatpush.bf16.msra.mxu0 %v1012
        %1214 = vmatmul.bf16.gmra.mxu0 %v868
        %v1215 = vpop.f32.mrf.mxu0
        %v1216 = vadd.f32 %v1167, %v1215
        %v1217 = vpop.f32.mrf.mxu0
        %v1218 = vadd.f32 %v1169, %v1217
        %1219 = vmatmul.bf16.gmra.mxu0 %v870
        %v1220 = vpop.f32.mrf.mxu0
        %v1221 = vadd.f32 %v1172, %v1220
        %v1222 = vpop.f32.mrf.mxu0
        %v1223 = vadd.f32 %v1174, %v1222
        %1224 = vmatmul.bf16.gmra.mxu0 %v872
        %v1225 = vpop.f32.mrf.mxu0
        %v1226 = vadd.f32 %v1177, %v1225
        %v1227 = vpop.f32.mrf.mxu0
        %v1228 = vadd.f32 %v1179, %v1227
        %1229 = vmatmul.bf16.gmra.mxu0 %v874
        %v1230 = vpop.f32.mrf.mxu0
        %v1231 = vadd.f32 %v1182, %v1230
        %v1232 = vpop.f32.mrf.mxu0
        %v1233 = vadd.f32 %v1184, %v1232
        %1234 = vmatmul.bf16.gmra.mxu0 %v876
        %v1235 = vpop.f32.mrf.mxu0
        %v1236 = vadd.f32 %v1187, %v1235
        %v1237 = vpop.f32.mrf.mxu0
        %v1238 = vadd.f32 %v1189, %v1237
        %1239 = vmatmul.bf16.gmra.mxu0 %v878
        %v1240 = vpop.f32.mrf.mxu0
        %v1241 = vadd.f32 %v1192, %v1240
        %v1242 = vpop.f32.mrf.mxu0
        %v1243 = vadd.f32 %v1194, %v1242
        %1244 = vmatmul.bf16.gmra.mxu0 %v880
        %v1245 = vpop.f32.mrf.mxu0
        %v1246 = vadd.f32 %v1197, %v1245
        %v1247 = vpop.f32.mrf.mxu0
        %v1248 = vadd.f32 %v1199, %v1247
        %1249 = vmatmul.bf16.gmra.mxu0 %v882
        %v1250 = vpop.f32.mrf.mxu0
        %v1251 = vadd.f32 %v1202, %v1250
        %v1252 = vpop.f32.mrf.mxu0
        %v1253 = vadd.f32 %v1204, %v1252
        %1254 = vdwg.mxu0
        %v1255 = vpack.c.bf16 %v1120, %v1118
        %v1256 = vpack.c.bf16 %v1125, %v1123
        %v1257 = vpack.c.bf16 %v1130, %v1128
        %v1258 = vpack.c.bf16 %v1135, %v1133
        %v1259 = vpack.c.bf16 %v1140, %v1138
        %v1260 = vpack.c.bf16 %v1145, %v1143
        %v1261 = vpack.c.bf16 %v1150, %v1148
        %v1262 = vpack.c.bf16 %v1155, %v1153
        %v1263 = vld [vmem:[%s5] sm:$0xf]
        %v1264 = vld [vmem:[%s5 + $0x4] sm:$0xf]
        %v1265 = vld [vmem:[%s5 + $0x8] sm:$0xf]
        %v1266 = vld [vmem:[%s5 + $0xc] sm:$0xf]
        %v1267 = vld [vmem:[%s5 + $0x10] sm:$0xf]
        %v1268 = vld [vmem:[%s5 + $0x14] sm:$0xf]
        %v1269 = vld [vmem:[%s5 + $0x18] sm:$0xf]
        %v1270 = vld [vmem:[%s5 + $0x1c] sm:$0xf]
        %v1271 = vld [vmem:[%s5 + $0x20] sm:$0xf]
        %v1272 = vld [vmem:[%s5 + $0x24] sm:$0xf]
        %v1273 = vld [vmem:[%s5 + $0x28] sm:$0xf]
        %v1274 = vld [vmem:[%s5 + $0x2c] sm:$0xf]
        %v1275 = vld [vmem:[%s5 + $0x30] sm:$0xf]
        %v1276 = vld [vmem:[%s5 + $0x34] sm:$0xf]
        %v1277 = vld [vmem:[%s5 + $0x38] sm:$0xf]
        %v1278 = vld [vmem:[%s5 + $0x3c] sm:$0xf]
        %v1295 = vunpack.c.l.b16 %v1263
        %v1296 = vunpack.c.l.b16 %v1264
        %v1297 = vunpack.c.l.b16 %v1265
        %v1298 = vunpack.c.l.b16 %v1266
        %v1299 = vunpack.c.l.b16 %v1267
        %v1300 = vunpack.c.l.b16 %v1268
        %v1301 = vunpack.c.l.b16 %v1269
        %v1302 = vunpack.c.l.b16 %v1270
        %v1303 = vunpack.c.l.b16 %v1271
        %v1304 = vunpack.c.l.b16 %v1272
        %v1305 = vunpack.c.l.b16 %v1273
        %v1306 = vunpack.c.l.b16 %v1274
        %v1307 = vunpack.c.l.b16 %v1275
        %v1308 = vunpack.c.l.b16 %v1276
        %v1309 = vunpack.c.l.b16 %v1277
        %v1310 = vunpack.c.l.b16 %v1278
        %v1311 = vpack.c.b16 %v1296, %v1295
        %v1312 = vpack.c.b16 %v1298, %v1297
        %v1313 = vpack.c.b16 %v1300, %v1299
        %v1314 = vpack.c.b16 %v1302, %v1301
        %v1315 = vpack.c.b16 %v1304, %v1303
        %v1316 = vpack.c.b16 %v1306, %v1305
        %v1317 = vpack.c.b16 %v1308, %v1307
        %v1318 = vpack.c.b16 %v1310, %v1309
        %1327 = vmatpush.bf16.msra.mxu0 %v1318
        %1328 = vmatpush.bf16.msra.mxu0 %v1317
        %1329 = vmatpush.bf16.msra.mxu0 %v1316
        %1330 = vmatpush.bf16.msra.mxu0 %v1315
        %1331 = vmatpush.bf16.msra.mxu0 %v1314
        %1332 = vmatpush.bf16.msra.mxu0 %v1313
        %1333 = vmatpush.bf16.msra.mxu0 %v1312
        %1334 = vmatpush.bf16.msra.mxu0 %v1311
        %1335 = vmatmul.bf16.gmra.mxu0 %v1255
        %v1336 = vpop.f32.mrf.mxu0
        %v1337 = vadd.f32 0.0, %v1336
        %v1338 = vpop.f32.mrf.mxu0
        %v1339 = vadd.f32 0.0, %v1338
        %1340 = vmatmul.bf16.gmra.mxu0 %v1256
        %v1341 = vpop.f32.mrf.mxu0
        %v1342 = vadd.f32 0.0, %v1341
        %v1343 = vpop.f32.mrf.mxu0
        %v1344 = vadd.f32 0.0, %v1343
        %1345 = vmatmul.bf16.gmra.mxu0 %v1257
        %v1346 = vpop.f32.mrf.mxu0
        %v1347 = vadd.f32 0.0, %v1346
        %v1348 = vpop.f32.mrf.mxu0
        %v1349 = vadd.f32 0.0, %v1348
        %1350 = vmatmul.bf16.gmra.mxu0 %v1258
        %v1351 = vpop.f32.mrf.mxu0
        %v1352 = vadd.f32 0.0, %v1351
        %v1353 = vpop.f32.mrf.mxu0
        %v1354 = vadd.f32 0.0, %v1353
        %1355 = vmatmul.bf16.gmra.mxu0 %v1259
        %v1356 = vpop.f32.mrf.mxu0
        %v1357 = vadd.f32 0.0, %v1356
        %v1358 = vpop.f32.mrf.mxu0
        %v1359 = vadd.f32 0.0, %v1358
        %1360 = vmatmul.bf16.gmra.mxu0 %v1260
        %v1361 = vpop.f32.mrf.mxu0
        %v1362 = vadd.f32 0.0, %v1361
        %v1363 = vpop.f32.mrf.mxu0
        %v1364 = vadd.f32 0.0, %v1363
        %1365 = vmatmul.bf16.gmra.mxu0 %v1261
        %v1366 = vpop.f32.mrf.mxu0
        %v1367 = vadd.f32 0.0, %v1366
        %v1368 = vpop.f32.mrf.mxu0
        %v1369 = vadd.f32 0.0, %v1368
        %1370 = vmatmul.bf16.gmra.mxu0 %v1262
        %v1371 = vpop.f32.mrf.mxu0
        %v1372 = vadd.f32 0.0, %v1371
        %v1373 = vpop.f32.mrf.mxu0
        %v1374 = vadd.f32 0.0, %v1373
        %1375 = vdwg.mxu0
        %v1376 = vlaneseq
        %v1377 = vand.u32 %v1376, 127
        %v1378 = vcvt.s32.f32 %v1377
        %vm1379 = vcmp.eq.s32.totalorder %v1377, 0
        %v1380 = vsel %vm1379, %v513, 0.0
        %v1381 = vsel %vm1379, %v514, 0.0
        %v1382 = vsel %vm1379, %v515, 0.0
        %v1383 = vsel %vm1379, %v516, 0.0
        %v1384 = vsel %vm1379, %v517, 0.0
        %v1385 = vsel %vm1379, %v518, 0.0
        %v1386 = vsel %vm1379, %v519, 0.0
        %v1387 = vsel %vm1379, %v520, 0.0
        %v1388 = vsel %vm1379, %v521, 0.0
        %v1389 = vsel %vm1379, %v522, 0.0
        %v1390 = vsel %vm1379, %v523, 0.0
        %v1391 = vsel %vm1379, %v524, 0.0
        %v1392 = vsel %vm1379, %v525, 0.0
        %v1393 = vsel %vm1379, %v526, 0.0
        %v1394 = vsel %vm1379, %v527, 0.0
        %v1395 = vsel %vm1379, %v528, 0.0
        %vm1396 = vcmask 121856
        %v1397 = vsel %vm1396, %v1380, 0.0
        %1398 = vadd.xlane.f32.xlu0 %v1397
        %v1399 = vpop.xlane.xlu0 %1398
        %v1400 = vsel %vm1396, %v1381, 0.0
        %1401 = vadd.xlane.f32.xlu0 %v1400
        %v1402 = vpop.xlane.xlu0 %1401
        %v1403 = vsel %vm1396, %v1382, 0.0
        %1404 = vadd.xlane.f32.xlu0 %v1403
        %v1405 = vpop.xlane.xlu0 %1404
        %v1406 = vsel %vm1396, %v1383, 0.0
        %1407 = vadd.xlane.f32.xlu0 %v1406
        %v1408 = vpop.xlane.xlu0 %1407
        %v1409 = vsel %vm1396, %v1384, 0.0
        %1410 = vadd.xlane.f32.xlu0 %v1409
        %v1411 = vpop.xlane.xlu0 %1410
        %v1412 = vsel %vm1396, %v1385, 0.0
        %1413 = vadd.xlane.f32.xlu0 %v1412
        %v1414 = vpop.xlane.xlu0 %1413
        %v1415 = vsel %vm1396, %v1386, 0.0
        %1416 = vadd.xlane.f32.xlu0 %v1415
        %v1417 = vpop.xlane.xlu0 %1416
        %v1418 = vsel %vm1396, %v1387, 0.0
        %1419 = vadd.xlane.f32.xlu0 %v1418
        %v1420 = vpop.xlane.xlu0 %1419
        %v1421 = vsel %vm1396, %v1388, 0.0
        %1422 = vadd.xlane.f32.xlu0 %v1421
        %v1423 = vpop.xlane.xlu0 %1422
        %v1424 = vsel %vm1396, %v1389, 0.0
        %1425 = vadd.xlane.f32.xlu0 %v1424
        %v1426 = vpop.xlane.xlu0 %1425
        %v1427 = vsel %vm1396, %v1390, 0.0
        %1428 = vadd.xlane.f32.xlu0 %v1427
        %v1429 = vpop.xlane.xlu0 %1428
        %v1430 = vsel %vm1396, %v1391, 0.0
        %1431 = vadd.xlane.f32.xlu0 %v1430
        %v1432 = vpop.xlane.xlu0 %1431
        %v1433 = vsel %vm1396, %v1392, 0.0
        %1434 = vadd.xlane.f32.xlu0 %v1433
        %v1435 = vpop.xlane.xlu0 %1434
        %v1436 = vsel %vm1396, %v1393, 0.0
        %1437 = vadd.xlane.f32.xlu0 %v1436
        %v1438 = vpop.xlane.xlu0 %1437
        %v1439 = vsel %vm1396, %v1394, 0.0
        %1440 = vadd.xlane.f32.xlu0 %v1439
        %v1441 = vpop.xlane.xlu0 %1440
        %v1442 = vsel %vm1396, %v1395, 0.0
        %1443 = vadd.xlane.f32.xlu0 %v1442
        %v1444 = vpop.xlane.xlu0 %1443
        %vm1445 = vcmp.eq.f32.partialorder %v1378, %v1399
        %vm1446 = vcmp.eq.f32.partialorder %v1378, %v1402
        %vm1447 = vcmp.eq.f32.partialorder %v1378, %v1405
        %vm1448 = vcmp.eq.f32.partialorder %v1378, %v1408
        %vm1449 = vcmp.eq.f32.partialorder %v1378, %v1411
        %vm1450 = vcmp.eq.f32.partialorder %v1378, %v1414
        %vm1451 = vcmp.eq.f32.partialorder %v1378, %v1417
        %vm1452 = vcmp.eq.f32.partialorder %v1378, %v1420
        %vm1453 = vcmp.eq.f32.partialorder %v1378, %v1423
        %vm1454 = vcmp.eq.f32.partialorder %v1378, %v1426
        %vm1455 = vcmp.eq.f32.partialorder %v1378, %v1429
        %vm1456 = vcmp.eq.f32.partialorder %v1378, %v1432
        %vm1457 = vcmp.eq.f32.partialorder %v1378, %v1435
        %vm1458 = vcmp.eq.f32.partialorder %v1378, %v1438
        %vm1459 = vcmp.eq.f32.partialorder %v1378, %v1441
        %vm1460 = vcmp.eq.f32.partialorder %v1378, %v1444
        %v1461 = vsel %vm1445, %v1337, 0.0
        %v1462 = vsel %vm1446, %v1339, 0.0
        %v1463 = vsel %vm1447, %v1342, 0.0
        %v1464 = vsel %vm1448, %v1344, 0.0
        %v1465 = vsel %vm1449, %v1347, 0.0
        %v1466 = vsel %vm1450, %v1349, 0.0
        %v1467 = vsel %vm1451, %v1352, 0.0
        %v1468 = vsel %vm1452, %v1354, 0.0
        %v1469 = vsel %vm1453, %v1357, 0.0
        %v1470 = vsel %vm1454, %v1359, 0.0
        %v1471 = vsel %vm1455, %v1362, 0.0
        %v1472 = vsel %vm1456, %v1364, 0.0
        %v1473 = vsel %vm1457, %v1367, 0.0
        %v1474 = vsel %vm1458, %v1369, 0.0
        %v1475 = vsel %vm1459, %v1372, 0.0
        %v1476 = vsel %vm1460, %v1374, 0.0
        %vm1477 = vcmask 138240
        %v1478 = vsel %vm1477, %v1461, 0.0
        %1479 = vadd.xlane.f32.xlu0 %v1478
        %v1480 = vpop.xlane.xlu0 %1479
        %v1481 = vsel %vm1477, %v1462, 0.0
        %1482 = vadd.xlane.f32.xlu0 %v1481
        %v1483 = vpop.xlane.xlu0 %1482
        %v1484 = vsel %vm1477, %v1463, 0.0
        %1485 = vadd.xlane.f32.xlu0 %v1484
        %v1486 = vpop.xlane.xlu0 %1485
        %v1487 = vsel %vm1477, %v1464, 0.0
        %1488 = vadd.xlane.f32.xlu0 %v1487
        %v1489 = vpop.xlane.xlu0 %1488
        %v1490 = vsel %vm1477, %v1465, 0.0
        %1491 = vadd.xlane.f32.xlu0 %v1490
        %v1492 = vpop.xlane.xlu0 %1491
        %v1493 = vsel %vm1477, %v1466, 0.0
        %1494 = vadd.xlane.f32.xlu0 %v1493
        %v1495 = vpop.xlane.xlu0 %1494
        %v1496 = vsel %vm1477, %v1467, 0.0
        %1497 = vadd.xlane.f32.xlu0 %v1496
        %v1498 = vpop.xlane.xlu0 %1497
        %v1499 = vsel %vm1477, %v1468, 0.0
        %1500 = vadd.xlane.f32.xlu0 %v1499
        %v1501 = vpop.xlane.xlu0 %1500
        %v1502 = vsel %vm1477, %v1469, 0.0
        %1503 = vadd.xlane.f32.xlu0 %v1502
        %v1504 = vpop.xlane.xlu0 %1503
        %v1505 = vsel %vm1477, %v1470, 0.0
        %1506 = vadd.xlane.f32.xlu0 %v1505
        %v1507 = vpop.xlane.xlu0 %1506
        %v1508 = vsel %vm1477, %v1471, 0.0
        %1509 = vadd.xlane.f32.xlu0 %v1508
        %v1510 = vpop.xlane.xlu0 %1509
        %v1511 = vsel %vm1477, %v1472, 0.0
        %1512 = vadd.xlane.f32.xlu0 %v1511
        %v1513 = vpop.xlane.xlu0 %1512
        %v1514 = vsel %vm1477, %v1473, 0.0
        %1515 = vadd.xlane.f32.xlu0 %v1514
        %v1516 = vpop.xlane.xlu0 %1515
        %v1517 = vsel %vm1477, %v1474, 0.0
        %1518 = vadd.xlane.f32.xlu0 %v1517
        %v1519 = vpop.xlane.xlu0 %1518
        %v1520 = vsel %vm1477, %v1475, 0.0
        %1521 = vadd.xlane.f32.xlu0 %v1520
        %v1522 = vpop.xlane.xlu0 %1521
        %v1523 = vsel %vm1477, %v1476, 0.0
        %1524 = vadd.xlane.f32.xlu0 %v1523
        %v1525 = vpop.xlane.xlu0 %1524
        %v1526 = vsel %vm1379, %v1480, 0.0
        %v1527 = vsel %vm1379, %v1483, 0.0
        %v1528 = vsel %vm1379, %v1486, 0.0
        %v1529 = vsel %vm1379, %v1489, 0.0
        %v1530 = vsel %vm1379, %v1492, 0.0
        %v1531 = vsel %vm1379, %v1495, 0.0
        %v1532 = vsel %vm1379, %v1498, 0.0
        %v1533 = vsel %vm1379, %v1501, 0.0
        %v1534 = vsel %vm1379, %v1504, 0.0
        %v1535 = vsel %vm1379, %v1507, 0.0
        %v1536 = vsel %vm1379, %v1510, 0.0
        %v1537 = vsel %vm1379, %v1513, 0.0
        %v1538 = vsel %vm1379, %v1516, 0.0
        %v1539 = vsel %vm1379, %v1519, 0.0
        %v1540 = vsel %vm1379, %v1522, 0.0
        %v1541 = vsel %vm1379, %v1525, 0.0
        %vm1542 = vcmp.eq.s32.totalorder %v1377, 1
        %v1543 = vsel %vm1542, %v513, 0.0
        %v1544 = vsel %vm1542, %v514, 0.0
        %v1545 = vsel %vm1542, %v515, 0.0
        %v1546 = vsel %vm1542, %v516, 0.0
        %v1547 = vsel %vm1542, %v517, 0.0
        %v1548 = vsel %vm1542, %v518, 0.0
        %v1549 = vsel %vm1542, %v519, 0.0
        %v1550 = vsel %vm1542, %v520, 0.0
        %v1551 = vsel %vm1542, %v521, 0.0
        %v1552 = vsel %vm1542, %v522, 0.0
        %v1553 = vsel %vm1542, %v523, 0.0
        %v1554 = vsel %vm1542, %v524, 0.0
        %v1555 = vsel %vm1542, %v525, 0.0
        %v1556 = vsel %vm1542, %v526, 0.0
        %v1557 = vsel %vm1542, %v527, 0.0
        %v1558 = vsel %vm1542, %v528, 0.0
        %v1559 = vsel %vm1396, %v1543, 0.0
        %1560 = vadd.xlane.f32.xlu0 %v1559
        %v1561 = vpop.xlane.xlu0 %1560
        %v1562 = vsel %vm1396, %v1544, 0.0
        %1563 = vadd.xlane.f32.xlu0 %v1562
        %v1564 = vpop.xlane.xlu0 %1563
        %v1565 = vsel %vm1396, %v1545, 0.0
        %1566 = vadd.xlane.f32.xlu0 %v1565
        %v1567 = vpop.xlane.xlu0 %1566
        %v1568 = vsel %vm1396, %v1546, 0.0
        %1569 = vadd.xlane.f32.xlu0 %v1568
        %v1570 = vpop.xlane.xlu0 %1569
        %v1571 = vsel %vm1396, %v1547, 0.0
        %1572 = vadd.xlane.f32.xlu0 %v1571
        %v1573 = vpop.xlane.xlu0 %1572
        %v1574 = vsel %vm1396, %v1548, 0.0
        %1575 = vadd.xlane.f32.xlu0 %v1574
        %v1576 = vpop.xlane.xlu0 %1575
        %v1577 = vsel %vm1396, %v1549, 0.0
        %1578 = vadd.xlane.f32.xlu0 %v1577
        %v1579 = vpop.xlane.xlu0 %1578
        %v1580 = vsel %vm1396, %v1550, 0.0
        %1581 = vadd.xlane.f32.xlu0 %v1580
        %v1582 = vpop.xlane.xlu0 %1581
        %v1583 = vsel %vm1396, %v1551, 0.0
        %1584 = vadd.xlane.f32.xlu0 %v1583
        %v1585 = vpop.xlane.xlu0 %1584
        %v1586 = vsel %vm1396, %v1552, 0.0
        %1587 = vadd.xlane.f32.xlu0 %v1586
        %v1588 = vpop.xlane.xlu0 %1587
        %v1589 = vsel %vm1396, %v1553, 0.0
        %1590 = vadd.xlane.f32.xlu0 %v1589
        %v1591 = vpop.xlane.xlu0 %1590
        %v1592 = vsel %vm1396, %v1554, 0.0
        %1593 = vadd.xlane.f32.xlu0 %v1592
        %v1594 = vpop.xlane.xlu0 %1593
        %v1595 = vsel %vm1396, %v1555, 0.0
        %1596 = vadd.xlane.f32.xlu0 %v1595
        %v1597 = vpop.xlane.xlu0 %1596
        %v1598 = vsel %vm1396, %v1556, 0.0
        %1599 = vadd.xlane.f32.xlu0 %v1598
        %v1600 = vpop.xlane.xlu0 %1599
        %v1601 = vsel %vm1396, %v1557, 0.0
        %1602 = vadd.xlane.f32.xlu0 %v1601
        %v1603 = vpop.xlane.xlu0 %1602
        %v1604 = vsel %vm1396, %v1558, 0.0
        %1605 = vadd.xlane.f32.xlu0 %v1604
        %v1606 = vpop.xlane.xlu0 %1605
        %vm1607 = vcmp.eq.f32.partialorder %v1378, %v1561
        %vm1608 = vcmp.eq.f32.partialorder %v1378, %v1564
        %vm1609 = vcmp.eq.f32.partialorder %v1378, %v1567
        %vm1610 = vcmp.eq.f32.partialorder %v1378, %v1570
        %vm1611 = vcmp.eq.f32.partialorder %v1378, %v1573
        %vm1612 = vcmp.eq.f32.partialorder %v1378, %v1576
        %vm1613 = vcmp.eq.f32.partialorder %v1378, %v1579
        %vm1614 = vcmp.eq.f32.partialorder %v1378, %v1582
        %vm1615 = vcmp.eq.f32.partialorder %v1378, %v1585
        %vm1616 = vcmp.eq.f32.partialorder %v1378, %v1588
        %vm1617 = vcmp.eq.f32.partialorder %v1378, %v1591
        %vm1618 = vcmp.eq.f32.partialorder %v1378, %v1594
        %vm1619 = vcmp.eq.f32.partialorder %v1378, %v1597
        %vm1620 = vcmp.eq.f32.partialorder %v1378, %v1600
        %vm1621 = vcmp.eq.f32.partialorder %v1378, %v1603
        %vm1622 = vcmp.eq.f32.partialorder %v1378, %v1606
        %v1623 = vsel %vm1607, %v1337, 0.0
        %v1624 = vsel %vm1608, %v1339, 0.0
        %v1625 = vsel %vm1609, %v1342, 0.0
        %v1626 = vsel %vm1610, %v1344, 0.0
        %v1627 = vsel %vm1611, %v1347, 0.0
        %v1628 = vsel %vm1612, %v1349, 0.0
        %v1629 = vsel %vm1613, %v1352, 0.0
        %v1630 = vsel %vm1614, %v1354, 0.0
        %v1631 = vsel %vm1615, %v1357, 0.0
        %v1632 = vsel %vm1616, %v1359, 0.0
        %v1633 = vsel %vm1617, %v1362, 0.0
        %v1634 = vsel %vm1618, %v1364, 0.0
        %v1635 = vsel %vm1619, %v1367, 0.0
        %v1636 = vsel %vm1620, %v1369, 0.0
        %v1637 = vsel %vm1621, %v1372, 0.0
        %v1638 = vsel %vm1622, %v1374, 0.0
        %v1639 = vsel %vm1477, %v1623, 0.0
        %1640 = vadd.xlane.f32.xlu0 %v1639
        %v1641 = vpop.xlane.xlu0 %1640
        %v1642 = vsel %vm1477, %v1624, 0.0
        %1643 = vadd.xlane.f32.xlu0 %v1642
        %v1644 = vpop.xlane.xlu0 %1643
        %v1645 = vsel %vm1477, %v1625, 0.0
        %1646 = vadd.xlane.f32.xlu0 %v1645
        %v1647 = vpop.xlane.xlu0 %1646
        %v1648 = vsel %vm1477, %v1626, 0.0
        %1649 = vadd.xlane.f32.xlu0 %v1648
        %v1650 = vpop.xlane.xlu0 %1649
        %v1651 = vsel %vm1477, %v1627, 0.0
        %1652 = vadd.xlane.f32.xlu0 %v1651
        %v1653 = vpop.xlane.xlu0 %1652
        %v1654 = vsel %vm1477, %v1628, 0.0
        %1655 = vadd.xlane.f32.xlu0 %v1654
        %v1656 = vpop.xlane.xlu0 %1655
        %v1657 = vsel %vm1477, %v1629, 0.0
        %1658 = vadd.xlane.f32.xlu0 %v1657
        %v1659 = vpop.xlane.xlu0 %1658
        %v1660 = vsel %vm1477, %v1630, 0.0
        %1661 = vadd.xlane.f32.xlu0 %v1660
        %v1662 = vpop.xlane.xlu0 %1661
        %v1663 = vsel %vm1477, %v1631, 0.0
        %1664 = vadd.xlane.f32.xlu0 %v1663
        %v1665 = vpop.xlane.xlu0 %1664
        %v1666 = vsel %vm1477, %v1632, 0.0
        %1667 = vadd.xlane.f32.xlu0 %v1666
        %v1668 = vpop.xlane.xlu0 %1667
        %v1669 = vsel %vm1477, %v1633, 0.0
        %1670 = vadd.xlane.f32.xlu0 %v1669
        %v1671 = vpop.xlane.xlu0 %1670
        %v1672 = vsel %vm1477, %v1634, 0.0
        %1673 = vadd.xlane.f32.xlu0 %v1672
        %v1674 = vpop.xlane.xlu0 %1673
        %v1675 = vsel %vm1477, %v1635, 0.0
        %1676 = vadd.xlane.f32.xlu0 %v1675
        %v1677 = vpop.xlane.xlu0 %1676
        %v1678 = vsel %vm1477, %v1636, 0.0
        %1679 = vadd.xlane.f32.xlu0 %v1678
        %v1680 = vpop.xlane.xlu0 %1679
        %v1681 = vsel %vm1477, %v1637, 0.0
        %1682 = vadd.xlane.f32.xlu0 %v1681
        %v1683 = vpop.xlane.xlu0 %1682
        %v1684 = vsel %vm1477, %v1638, 0.0
        %1685 = vadd.xlane.f32.xlu0 %v1684
        %v1686 = vpop.xlane.xlu0 %1685
        %v1687 = vsel %vm1542, %v1641, %v1526
        %v1688 = vsel %vm1542, %v1644, %v1527
        %v1689 = vsel %vm1542, %v1647, %v1528
        %v1690 = vsel %vm1542, %v1650, %v1529
        %v1691 = vsel %vm1542, %v1653, %v1530
        %v1692 = vsel %vm1542, %v1656, %v1531
        %v1693 = vsel %vm1542, %v1659, %v1532
        %v1694 = vsel %vm1542, %v1662, %v1533
        %v1695 = vsel %vm1542, %v1665, %v1534
        %v1696 = vsel %vm1542, %v1668, %v1535
        %v1697 = vsel %vm1542, %v1671, %v1536
        %v1698 = vsel %vm1542, %v1674, %v1537
        %v1699 = vsel %vm1542, %v1677, %v1538
        %v1700 = vsel %vm1542, %v1680, %v1539
        %v1701 = vsel %vm1542, %v1683, %v1540
        %v1702 = vsel %vm1542, %v1686, %v1541
        %vm1703 = vcmp.eq.s32.totalorder %v1377, 2
        %v1704 = vsel %vm1703, %v513, 0.0
        %v1705 = vsel %vm1703, %v514, 0.0
        %v1706 = vsel %vm1703, %v515, 0.0
        %v1707 = vsel %vm1703, %v516, 0.0
        %v1708 = vsel %vm1703, %v517, 0.0
        %v1709 = vsel %vm1703, %v518, 0.0
        %v1710 = vsel %vm1703, %v519, 0.0
        %v1711 = vsel %vm1703, %v520, 0.0
        %v1712 = vsel %vm1703, %v521, 0.0
        %v1713 = vsel %vm1703, %v522, 0.0
        %v1714 = vsel %vm1703, %v523, 0.0
        %v1715 = vsel %vm1703, %v524, 0.0
        %v1716 = vsel %vm1703, %v525, 0.0
        %v1717 = vsel %vm1703, %v526, 0.0
        %v1718 = vsel %vm1703, %v527, 0.0
        %v1719 = vsel %vm1703, %v528, 0.0
        %v1720 = vsel %vm1396, %v1704, 0.0
        %1721 = vadd.xlane.f32.xlu0 %v1720
        %v1722 = vpop.xlane.xlu0 %1721
        %v1723 = vsel %vm1396, %v1705, 0.0
        %1724 = vadd.xlane.f32.xlu0 %v1723
        %v1725 = vpop.xlane.xlu0 %1724
        %v1726 = vsel %vm1396, %v1706, 0.0
        %1727 = vadd.xlane.f32.xlu0 %v1726
        %v1728 = vpop.xlane.xlu0 %1727
        %v1729 = vsel %vm1396, %v1707, 0.0
        %1730 = vadd.xlane.f32.xlu0 %v1729
        %v1731 = vpop.xlane.xlu0 %1730
        %v1732 = vsel %vm1396, %v1708, 0.0
        %1733 = vadd.xlane.f32.xlu0 %v1732
        %v1734 = vpop.xlane.xlu0 %1733
        %v1735 = vsel %vm1396, %v1709, 0.0
        %1736 = vadd.xlane.f32.xlu0 %v1735
        %v1737 = vpop.xlane.xlu0 %1736
        %v1738 = vsel %vm1396, %v1710, 0.0
        %1739 = vadd.xlane.f32.xlu0 %v1738
        %v1740 = vpop.xlane.xlu0 %1739
        %v1741 = vsel %vm1396, %v1711, 0.0
        %1742 = vadd.xlane.f32.xlu0 %v1741
        %v1743 = vpop.xlane.xlu0 %1742
        %v1744 = vsel %vm1396, %v1712, 0.0
        %1745 = vadd.xlane.f32.xlu0 %v1744
        %v1746 = vpop.xlane.xlu0 %1745
        %v1747 = vsel %vm1396, %v1713, 0.0
        %1748 = vadd.xlane.f32.xlu0 %v1747
        %v1749 = vpop.xlane.xlu0 %1748
        %v1750 = vsel %vm1396, %v1714, 0.0
        %1751 = vadd.xlane.f32.xlu0 %v1750
        %v1752 = vpop.xlane.xlu0 %1751
        %v1753 = vsel %vm1396, %v1715, 0.0
        %1754 = vadd.xlane.f32.xlu0 %v1753
        %v1755 = vpop.xlane.xlu0 %1754
        %v1756 = vsel %vm1396, %v1716, 0.0
        %1757 = vadd.xlane.f32.xlu0 %v1756
        %v1758 = vpop.xlane.xlu0 %1757
        %v1759 = vsel %vm1396, %v1717, 0.0
        %1760 = vadd.xlane.f32.xlu0 %v1759
        %v1761 = vpop.xlane.xlu0 %1760
        %v1762 = vsel %vm1396, %v1718, 0.0
        %1763 = vadd.xlane.f32.xlu0 %v1762
        %v1764 = vpop.xlane.xlu0 %1763
        %v1765 = vsel %vm1396, %v1719, 0.0
        %1766 = vadd.xlane.f32.xlu0 %v1765
        %v1767 = vpop.xlane.xlu0 %1766
        %vm1768 = vcmp.eq.f32.partialorder %v1378, %v1722
        %vm1769 = vcmp.eq.f32.partialorder %v1378, %v1725
        %vm1770 = vcmp.eq.f32.partialorder %v1378, %v1728
        %vm1771 = vcmp.eq.f32.partialorder %v1378, %v1731
        %vm1772 = vcmp.eq.f32.partialorder %v1378, %v1734
        %vm1773 = vcmp.eq.f32.partialorder %v1378, %v1737
        %vm1774 = vcmp.eq.f32.partialorder %v1378, %v1740
        %vm1775 = vcmp.eq.f32.partialorder %v1378, %v1743
        %vm1776 = vcmp.eq.f32.partialorder %v1378, %v1746
        %vm1777 = vcmp.eq.f32.partialorder %v1378, %v1749
        %vm1778 = vcmp.eq.f32.partialorder %v1378, %v1752
        %vm1779 = vcmp.eq.f32.partialorder %v1378, %v1755
        %vm1780 = vcmp.eq.f32.partialorder %v1378, %v1758
        %vm1781 = vcmp.eq.f32.partialorder %v1378, %v1761
        %vm1782 = vcmp.eq.f32.partialorder %v1378, %v1764
        %vm1783 = vcmp.eq.f32.partialorder %v1378, %v1767
        %v1784 = vsel %vm1768, %v1337, 0.0
        %v1785 = vsel %vm1769, %v1339, 0.0
        %v1786 = vsel %vm1770, %v1342, 0.0
        %v1787 = vsel %vm1771, %v1344, 0.0
        %v1788 = vsel %vm1772, %v1347, 0.0
        %v1789 = vsel %vm1773, %v1349, 0.0
        %v1790 = vsel %vm1774, %v1352, 0.0
        %v1791 = vsel %vm1775, %v1354, 0.0
        %v1792 = vsel %vm1776, %v1357, 0.0
        %v1793 = vsel %vm1777, %v1359, 0.0
        %v1794 = vsel %vm1778, %v1362, 0.0
        %v1795 = vsel %vm1779, %v1364, 0.0
        %v1796 = vsel %vm1780, %v1367, 0.0
        %v1797 = vsel %vm1781, %v1369, 0.0
        %v1798 = vsel %vm1782, %v1372, 0.0
        %v1799 = vsel %vm1783, %v1374, 0.0
        %v1800 = vsel %vm1477, %v1784, 0.0
        %1801 = vadd.xlane.f32.xlu0 %v1800
        %v1802 = vpop.xlane.xlu0 %1801
        %v1803 = vsel %vm1477, %v1785, 0.0
        %1804 = vadd.xlane.f32.xlu0 %v1803
        %v1805 = vpop.xlane.xlu0 %1804
        %v1806 = vsel %vm1477, %v1786, 0.0
        %1807 = vadd.xlane.f32.xlu0 %v1806
        %v1808 = vpop.xlane.xlu0 %1807
        %v1809 = vsel %vm1477, %v1787, 0.0
        %1810 = vadd.xlane.f32.xlu0 %v1809
        %v1811 = vpop.xlane.xlu0 %1810
        %v1812 = vsel %vm1477, %v1788, 0.0
        %1813 = vadd.xlane.f32.xlu0 %v1812
        %v1814 = vpop.xlane.xlu0 %1813
        %v1815 = vsel %vm1477, %v1789, 0.0
        %1816 = vadd.xlane.f32.xlu0 %v1815
        %v1817 = vpop.xlane.xlu0 %1816
        %v1818 = vsel %vm1477, %v1790, 0.0
        %1819 = vadd.xlane.f32.xlu0 %v1818
        %v1820 = vpop.xlane.xlu0 %1819
        %v1821 = vsel %vm1477, %v1791, 0.0
        %1822 = vadd.xlane.f32.xlu0 %v1821
        %v1823 = vpop.xlane.xlu0 %1822
        %v1824 = vsel %vm1477, %v1792, 0.0
        %1825 = vadd.xlane.f32.xlu0 %v1824
        %v1826 = vpop.xlane.xlu0 %1825
        %v1827 = vsel %vm1477, %v1793, 0.0
        %1828 = vadd.xlane.f32.xlu0 %v1827
        %v1829 = vpop.xlane.xlu0 %1828
        %v1830 = vsel %vm1477, %v1794, 0.0
        %1831 = vadd.xlane.f32.xlu0 %v1830
        %v1832 = vpop.xlane.xlu0 %1831
        %v1833 = vsel %vm1477, %v1795, 0.0
        %1834 = vadd.xlane.f32.xlu0 %v1833
        %v1835 = vpop.xlane.xlu0 %1834
        %v1836 = vsel %vm1477, %v1796, 0.0
        %1837 = vadd.xlane.f32.xlu0 %v1836
        %v1838 = vpop.xlane.xlu0 %1837
        %v1839 = vsel %vm1477, %v1797, 0.0
        %1840 = vadd.xlane.f32.xlu0 %v1839
        %v1841 = vpop.xlane.xlu0 %1840
        %v1842 = vsel %vm1477, %v1798, 0.0
        %1843 = vadd.xlane.f32.xlu0 %v1842
        %v1844 = vpop.xlane.xlu0 %1843
        %v1845 = vsel %vm1477, %v1799, 0.0
        %1846 = vadd.xlane.f32.xlu0 %v1845
        %v1847 = vpop.xlane.xlu0 %1846
        %v1848 = vsel %vm1703, %v1802, %v1687
        %v1849 = vsel %vm1703, %v1805, %v1688
        %v1850 = vsel %vm1703, %v1808, %v1689
        %v1851 = vsel %vm1703, %v1811, %v1690
        %v1852 = vsel %vm1703, %v1814, %v1691
        %v1853 = vsel %vm1703, %v1817, %v1692
        %v1854 = vsel %vm1703, %v1820, %v1693
        %v1855 = vsel %vm1703, %v1823, %v1694
        %v1856 = vsel %vm1703, %v1826, %v1695
        %v1857 = vsel %vm1703, %v1829, %v1696
        %v1858 = vsel %vm1703, %v1832, %v1697
        %v1859 = vsel %vm1703, %v1835, %v1698
        %v1860 = vsel %vm1703, %v1838, %v1699
        %v1861 = vsel %vm1703, %v1841, %v1700
        %v1862 = vsel %vm1703, %v1844, %v1701
        %v1863 = vsel %vm1703, %v1847, %v1702
        %vm1864 = vcmp.eq.s32.totalorder %v1377, 3
        %v1865 = vsel %vm1864, %v513, 0.0
        %v1866 = vsel %vm1864, %v514, 0.0
        %v1867 = vsel %vm1864, %v515, 0.0
        %v1868 = vsel %vm1864, %v516, 0.0
        %v1869 = vsel %vm1864, %v517, 0.0
        %v1870 = vsel %vm1864, %v518, 0.0
        %v1871 = vsel %vm1864, %v519, 0.0
        %v1872 = vsel %vm1864, %v520, 0.0
        %v1873 = vsel %vm1864, %v521, 0.0
        %v1874 = vsel %vm1864, %v522, 0.0
        %v1875 = vsel %vm1864, %v523, 0.0
        %v1876 = vsel %vm1864, %v524, 0.0
        %v1877 = vsel %vm1864, %v525, 0.0
        %v1878 = vsel %vm1864, %v526, 0.0
        %v1879 = vsel %vm1864, %v527, 0.0
        %v1880 = vsel %vm1864, %v528, 0.0
        %v1881 = vsel %vm1396, %v1865, 0.0
        %1882 = vadd.xlane.f32.xlu0 %v1881
        %v1883 = vpop.xlane.xlu0 %1882
        %v1884 = vsel %vm1396, %v1866, 0.0
        %1885 = vadd.xlane.f32.xlu0 %v1884
        %v1886 = vpop.xlane.xlu0 %1885
        %v1887 = vsel %vm1396, %v1867, 0.0
        %1888 = vadd.xlane.f32.xlu0 %v1887
        %v1889 = vpop.xlane.xlu0 %1888
        %v1890 = vsel %vm1396, %v1868, 0.0
        %1891 = vadd.xlane.f32.xlu0 %v1890
        %v1892 = vpop.xlane.xlu0 %1891
        %v1893 = vsel %vm1396, %v1869, 0.0
        %1894 = vadd.xlane.f32.xlu0 %v1893
        %v1895 = vpop.xlane.xlu0 %1894
        %v1896 = vsel %vm1396, %v1870, 0.0
        %1897 = vadd.xlane.f32.xlu0 %v1896
        %v1898 = vpop.xlane.xlu0 %1897
        %v1899 = vsel %vm1396, %v1871, 0.0
        %1900 = vadd.xlane.f32.xlu0 %v1899
        %v1901 = vpop.xlane.xlu0 %1900
        %v1902 = vsel %vm1396, %v1872, 0.0
        %1903 = vadd.xlane.f32.xlu0 %v1902
        %v1904 = vpop.xlane.xlu0 %1903
        %v1905 = vsel %vm1396, %v1873, 0.0
        %1906 = vadd.xlane.f32.xlu0 %v1905
        %v1907 = vpop.xlane.xlu0 %1906
        %v1908 = vsel %vm1396, %v1874, 0.0
        %1909 = vadd.xlane.f32.xlu0 %v1908
        %v1910 = vpop.xlane.xlu0 %1909
        %v1911 = vsel %vm1396, %v1875, 0.0
        %1912 = vadd.xlane.f32.xlu0 %v1911
        %v1913 = vpop.xlane.xlu0 %1912
        %v1914 = vsel %vm1396, %v1876, 0.0
        %1915 = vadd.xlane.f32.xlu0 %v1914
        %v1916 = vpop.xlane.xlu0 %1915
        %v1917 = vsel %vm1396, %v1877, 0.0
        %1918 = vadd.xlane.f32.xlu0 %v1917
        %v1919 = vpop.xlane.xlu0 %1918
        %v1920 = vsel %vm1396, %v1878, 0.0
        %1921 = vadd.xlane.f32.xlu0 %v1920
        %v1922 = vpop.xlane.xlu0 %1921
        %v1923 = vsel %vm1396, %v1879, 0.0
        %1924 = vadd.xlane.f32.xlu0 %v1923
        %v1925 = vpop.xlane.xlu0 %1924
        %v1926 = vsel %vm1396, %v1880, 0.0
        %1927 = vadd.xlane.f32.xlu0 %v1926
        %v1928 = vpop.xlane.xlu0 %1927
        %vm1929 = vcmp.eq.f32.partialorder %v1378, %v1883
        %vm1930 = vcmp.eq.f32.partialorder %v1378, %v1886
        %vm1931 = vcmp.eq.f32.partialorder %v1378, %v1889
        %vm1932 = vcmp.eq.f32.partialorder %v1378, %v1892
        %vm1933 = vcmp.eq.f32.partialorder %v1378, %v1895
        %vm1934 = vcmp.eq.f32.partialorder %v1378, %v1898
        %vm1935 = vcmp.eq.f32.partialorder %v1378, %v1901
        %vm1936 = vcmp.eq.f32.partialorder %v1378, %v1904
        %vm1937 = vcmp.eq.f32.partialorder %v1378, %v1907
        %vm1938 = vcmp.eq.f32.partialorder %v1378, %v1910
        %vm1939 = vcmp.eq.f32.partialorder %v1378, %v1913
        %vm1940 = vcmp.eq.f32.partialorder %v1378, %v1916
        %vm1941 = vcmp.eq.f32.partialorder %v1378, %v1919
        %vm1942 = vcmp.eq.f32.partialorder %v1378, %v1922
        %vm1943 = vcmp.eq.f32.partialorder %v1378, %v1925
        %vm1944 = vcmp.eq.f32.partialorder %v1378, %v1928
        %v1945 = vsel %vm1929, %v1337, 0.0
        %v1946 = vsel %vm1930, %v1339, 0.0
        %v1947 = vsel %vm1931, %v1342, 0.0
        %v1948 = vsel %vm1932, %v1344, 0.0
        %v1949 = vsel %vm1933, %v1347, 0.0
        %v1950 = vsel %vm1934, %v1349, 0.0
        %v1951 = vsel %vm1935, %v1352, 0.0
        %v1952 = vsel %vm1936, %v1354, 0.0
        %v1953 = vsel %vm1937, %v1357, 0.0
        %v1954 = vsel %vm1938, %v1359, 0.0
        %v1955 = vsel %vm1939, %v1362, 0.0
        %v1956 = vsel %vm1940, %v1364, 0.0
        %v1957 = vsel %vm1941, %v1367, 0.0
        %v1958 = vsel %vm1942, %v1369, 0.0
        %v1959 = vsel %vm1943, %v1372, 0.0
        %v1960 = vsel %vm1944, %v1374, 0.0
        %v1961 = vsel %vm1477, %v1945, 0.0
        %1962 = vadd.xlane.f32.xlu0 %v1961
        %v1963 = vpop.xlane.xlu0 %1962
        %v1964 = vsel %vm1477, %v1946, 0.0
        %1965 = vadd.xlane.f32.xlu0 %v1964
        %v1966 = vpop.xlane.xlu0 %1965
        %v1967 = vsel %vm1477, %v1947, 0.0
        %1968 = vadd.xlane.f32.xlu0 %v1967
        %v1969 = vpop.xlane.xlu0 %1968
        %v1970 = vsel %vm1477, %v1948, 0.0
        %1971 = vadd.xlane.f32.xlu0 %v1970
        %v1972 = vpop.xlane.xlu0 %1971
        %v1973 = vsel %vm1477, %v1949, 0.0
        %1974 = vadd.xlane.f32.xlu0 %v1973
        %v1975 = vpop.xlane.xlu0 %1974
        %v1976 = vsel %vm1477, %v1950, 0.0
        %1977 = vadd.xlane.f32.xlu0 %v1976
        %v1978 = vpop.xlane.xlu0 %1977
        %v1979 = vsel %vm1477, %v1951, 0.0
        %1980 = vadd.xlane.f32.xlu0 %v1979
        %v1981 = vpop.xlane.xlu0 %1980
        %v1982 = vsel %vm1477, %v1952, 0.0
        %1983 = vadd.xlane.f32.xlu0 %v1982
        %v1984 = vpop.xlane.xlu0 %1983
        %v1985 = vsel %vm1477, %v1953, 0.0
        %1986 = vadd.xlane.f32.xlu0 %v1985
        %v1987 = vpop.xlane.xlu0 %1986
        %v1988 = vsel %vm1477, %v1954, 0.0
        %1989 = vadd.xlane.f32.xlu0 %v1988
        %v1990 = vpop.xlane.xlu0 %1989
        %v1991 = vsel %vm1477, %v1955, 0.0
        %1992 = vadd.xlane.f32.xlu0 %v1991
        %v1993 = vpop.xlane.xlu0 %1992
        %v1994 = vsel %vm1477, %v1956, 0.0
        %1995 = vadd.xlane.f32.xlu0 %v1994
        %v1996 = vpop.xlane.xlu0 %1995
        %v1997 = vsel %vm1477, %v1957, 0.0
        %1998 = vadd.xlane.f32.xlu0 %v1997
        %v1999 = vpop.xlane.xlu0 %1998
        %v2000 = vsel %vm1477, %v1958, 0.0
        %2001 = vadd.xlane.f32.xlu0 %v2000
        %v2002 = vpop.xlane.xlu0 %2001
        %v2003 = vsel %vm1477, %v1959, 0.0
        %2004 = vadd.xlane.f32.xlu0 %v2003
        %v2005 = vpop.xlane.xlu0 %2004
        %v2006 = vsel %vm1477, %v1960, 0.0
        %2007 = vadd.xlane.f32.xlu0 %v2006
        %v2008 = vpop.xlane.xlu0 %2007
        %v2009 = vsel %vm1864, %v1963, %v1848
        %v2010 = vsel %vm1864, %v1966, %v1849
        %v2011 = vsel %vm1864, %v1969, %v1850
        %v2012 = vsel %vm1864, %v1972, %v1851
        %v2013 = vsel %vm1864, %v1975, %v1852
        %v2014 = vsel %vm1864, %v1978, %v1853
        %v2015 = vsel %vm1864, %v1981, %v1854
        %v2016 = vsel %vm1864, %v1984, %v1855
        %v2017 = vsel %vm1864, %v1987, %v1856
        %v2018 = vsel %vm1864, %v1990, %v1857
        %v2019 = vsel %vm1864, %v1993, %v1858
        %v2020 = vsel %vm1864, %v1996, %v1859
        %v2021 = vsel %vm1864, %v1999, %v1860
        %v2022 = vsel %vm1864, %v2002, %v1861
        %v2023 = vsel %vm1864, %v2005, %v1862
        %v2024 = vsel %vm1864, %v2008, %v1863
        %vm2025 = vcmp.eq.s32.totalorder %v1377, 4
        %v2026 = vsel %vm2025, %v513, 0.0
        %v2027 = vsel %vm2025, %v514, 0.0
        %v2028 = vsel %vm2025, %v515, 0.0
        %v2029 = vsel %vm2025, %v516, 0.0
        %v2030 = vsel %vm2025, %v517, 0.0
        %v2031 = vsel %vm2025, %v518, 0.0
        %v2032 = vsel %vm2025, %v519, 0.0
        %v2033 = vsel %vm2025, %v520, 0.0
        %v2034 = vsel %vm2025, %v521, 0.0
        %v2035 = vsel %vm2025, %v522, 0.0
        %v2036 = vsel %vm2025, %v523, 0.0
        %v2037 = vsel %vm2025, %v524, 0.0
        %v2038 = vsel %vm2025, %v525, 0.0
        %v2039 = vsel %vm2025, %v526, 0.0
        %v2040 = vsel %vm2025, %v527, 0.0
        %v2041 = vsel %vm2025, %v528, 0.0
        %v2042 = vsel %vm1396, %v2026, 0.0
        %2043 = vadd.xlane.f32.xlu0 %v2042
        %v2044 = vpop.xlane.xlu0 %2043
        %v2045 = vsel %vm1396, %v2027, 0.0
        %2046 = vadd.xlane.f32.xlu0 %v2045
        %v2047 = vpop.xlane.xlu0 %2046
        %v2048 = vsel %vm1396, %v2028, 0.0
        %2049 = vadd.xlane.f32.xlu0 %v2048
        %v2050 = vpop.xlane.xlu0 %2049
        %v2051 = vsel %vm1396, %v2029, 0.0
        %2052 = vadd.xlane.f32.xlu0 %v2051
        %v2053 = vpop.xlane.xlu0 %2052
        %v2054 = vsel %vm1396, %v2030, 0.0
        %2055 = vadd.xlane.f32.xlu0 %v2054
        %v2056 = vpop.xlane.xlu0 %2055
        %v2057 = vsel %vm1396, %v2031, 0.0
        %2058 = vadd.xlane.f32.xlu0 %v2057
        %v2059 = vpop.xlane.xlu0 %2058
        %v2060 = vsel %vm1396, %v2032, 0.0
        %2061 = vadd.xlane.f32.xlu0 %v2060
        %v2062 = vpop.xlane.xlu0 %2061
        %v2063 = vsel %vm1396, %v2033, 0.0
        %2064 = vadd.xlane.f32.xlu0 %v2063
        %v2065 = vpop.xlane.xlu0 %2064
        %v2066 = vsel %vm1396, %v2034, 0.0
        %2067 = vadd.xlane.f32.xlu0 %v2066
        %v2068 = vpop.xlane.xlu0 %2067
        %v2069 = vsel %vm1396, %v2035, 0.0
        %2070 = vadd.xlane.f32.xlu0 %v2069
        %v2071 = vpop.xlane.xlu0 %2070
        %v2072 = vsel %vm1396, %v2036, 0.0
        %2073 = vadd.xlane.f32.xlu0 %v2072
        %v2074 = vpop.xlane.xlu0 %2073
        %v2075 = vsel %vm1396, %v2037, 0.0
        %2076 = vadd.xlane.f32.xlu0 %v2075
        %v2077 = vpop.xlane.xlu0 %2076
        %v2078 = vsel %vm1396, %v2038, 0.0
        %2079 = vadd.xlane.f32.xlu0 %v2078
        %v2080 = vpop.xlane.xlu0 %2079
        %v2081 = vsel %vm1396, %v2039, 0.0
        %2082 = vadd.xlane.f32.xlu0 %v2081
        %v2083 = vpop.xlane.xlu0 %2082
        %v2084 = vsel %vm1396, %v2040, 0.0
        %2085 = vadd.xlane.f32.xlu0 %v2084
        %v2086 = vpop.xlane.xlu0 %2085
        %v2087 = vsel %vm1396, %v2041, 0.0
        %2088 = vadd.xlane.f32.xlu0 %v2087
        %v2089 = vpop.xlane.xlu0 %2088
        %vm2090 = vcmp.eq.f32.partialorder %v1378, %v2044
        %vm2091 = vcmp.eq.f32.partialorder %v1378, %v2047
        %vm2092 = vcmp.eq.f32.partialorder %v1378, %v2050
        %vm2093 = vcmp.eq.f32.partialorder %v1378, %v2053
        %vm2094 = vcmp.eq.f32.partialorder %v1378, %v2056
        %vm2095 = vcmp.eq.f32.partialorder %v1378, %v2059
        %vm2096 = vcmp.eq.f32.partialorder %v1378, %v2062
        %vm2097 = vcmp.eq.f32.partialorder %v1378, %v2065
        %vm2098 = vcmp.eq.f32.partialorder %v1378, %v2068
        %vm2099 = vcmp.eq.f32.partialorder %v1378, %v2071
        %vm2100 = vcmp.eq.f32.partialorder %v1378, %v2074
        %vm2101 = vcmp.eq.f32.partialorder %v1378, %v2077
        %vm2102 = vcmp.eq.f32.partialorder %v1378, %v2080
        %vm2103 = vcmp.eq.f32.partialorder %v1378, %v2083
        %vm2104 = vcmp.eq.f32.partialorder %v1378, %v2086
        %vm2105 = vcmp.eq.f32.partialorder %v1378, %v2089
        %v2106 = vsel %vm2090, %v1337, 0.0
        %v2107 = vsel %vm2091, %v1339, 0.0
        %v2108 = vsel %vm2092, %v1342, 0.0
        %v2109 = vsel %vm2093, %v1344, 0.0
        %v2110 = vsel %vm2094, %v1347, 0.0
        %v2111 = vsel %vm2095, %v1349, 0.0
        %v2112 = vsel %vm2096, %v1352, 0.0
        %v2113 = vsel %vm2097, %v1354, 0.0
        %v2114 = vsel %vm2098, %v1357, 0.0
        %v2115 = vsel %vm2099, %v1359, 0.0
        %v2116 = vsel %vm2100, %v1362, 0.0
        %v2117 = vsel %vm2101, %v1364, 0.0
        %v2118 = vsel %vm2102, %v1367, 0.0
        %v2119 = vsel %vm2103, %v1369, 0.0
        %v2120 = vsel %vm2104, %v1372, 0.0
        %v2121 = vsel %vm2105, %v1374, 0.0
        %v2122 = vsel %vm1477, %v2106, 0.0
        %2123 = vadd.xlane.f32.xlu0 %v2122
        %v2124 = vpop.xlane.xlu0 %2123
        %v2125 = vsel %vm1477, %v2107, 0.0
        %2126 = vadd.xlane.f32.xlu0 %v2125
        %v2127 = vpop.xlane.xlu0 %2126
        %v2128 = vsel %vm1477, %v2108, 0.0
        %2129 = vadd.xlane.f32.xlu0 %v2128
        %v2130 = vpop.xlane.xlu0 %2129
        %v2131 = vsel %vm1477, %v2109, 0.0
        %2132 = vadd.xlane.f32.xlu0 %v2131
        %v2133 = vpop.xlane.xlu0 %2132
        %v2134 = vsel %vm1477, %v2110, 0.0
        %2135 = vadd.xlane.f32.xlu0 %v2134
        %v2136 = vpop.xlane.xlu0 %2135
        %v2137 = vsel %vm1477, %v2111, 0.0
        %2138 = vadd.xlane.f32.xlu0 %v2137
        %v2139 = vpop.xlane.xlu0 %2138
        %v2140 = vsel %vm1477, %v2112, 0.0
        %2141 = vadd.xlane.f32.xlu0 %v2140
        %v2142 = vpop.xlane.xlu0 %2141
        %v2143 = vsel %vm1477, %v2113, 0.0
        %2144 = vadd.xlane.f32.xlu0 %v2143
        %v2145 = vpop.xlane.xlu0 %2144
        %v2146 = vsel %vm1477, %v2114, 0.0
        %2147 = vadd.xlane.f32.xlu0 %v2146
        %v2148 = vpop.xlane.xlu0 %2147
        %v2149 = vsel %vm1477, %v2115, 0.0
        %2150 = vadd.xlane.f32.xlu0 %v2149
        %v2151 = vpop.xlane.xlu0 %2150
        %v2152 = vsel %vm1477, %v2116, 0.0
        %2153 = vadd.xlane.f32.xlu0 %v2152
        %v2154 = vpop.xlane.xlu0 %2153
        %v2155 = vsel %vm1477, %v2117, 0.0
        %2156 = vadd.xlane.f32.xlu0 %v2155
        %v2157 = vpop.xlane.xlu0 %2156
        %v2158 = vsel %vm1477, %v2118, 0.0
        %2159 = vadd.xlane.f32.xlu0 %v2158
        %v2160 = vpop.xlane.xlu0 %2159
        %v2161 = vsel %vm1477, %v2119, 0.0
        %2162 = vadd.xlane.f32.xlu0 %v2161
        %v2163 = vpop.xlane.xlu0 %2162
        %v2164 = vsel %vm1477, %v2120, 0.0
        %2165 = vadd.xlane.f32.xlu0 %v2164
        %v2166 = vpop.xlane.xlu0 %2165
        %v2167 = vsel %vm1477, %v2121, 0.0
        %2168 = vadd.xlane.f32.xlu0 %v2167
        %v2169 = vpop.xlane.xlu0 %2168
        %v2170 = vsel %vm2025, %v2124, %v2009
        %v2171 = vsel %vm2025, %v2127, %v2010
        %v2172 = vsel %vm2025, %v2130, %v2011
        %v2173 = vsel %vm2025, %v2133, %v2012
        %v2174 = vsel %vm2025, %v2136, %v2013
        %v2175 = vsel %vm2025, %v2139, %v2014
        %v2176 = vsel %vm2025, %v2142, %v2015
        %v2177 = vsel %vm2025, %v2145, %v2016
        %v2178 = vsel %vm2025, %v2148, %v2017
        %v2179 = vsel %vm2025, %v2151, %v2018
        %v2180 = vsel %vm2025, %v2154, %v2019
        %v2181 = vsel %vm2025, %v2157, %v2020
        %v2182 = vsel %vm2025, %v2160, %v2021
        %v2183 = vsel %vm2025, %v2163, %v2022
        %v2184 = vsel %vm2025, %v2166, %v2023
        %v2185 = vsel %vm2025, %v2169, %v2024
        %vm2186 = vcmp.eq.s32.totalorder %v1377, 5
        %v2187 = vsel %vm2186, %v513, 0.0
        %v2188 = vsel %vm2186, %v514, 0.0
        %v2189 = vsel %vm2186, %v515, 0.0
        %v2190 = vsel %vm2186, %v516, 0.0
        %v2191 = vsel %vm2186, %v517, 0.0
        %v2192 = vsel %vm2186, %v518, 0.0
        %v2193 = vsel %vm2186, %v519, 0.0
        %v2194 = vsel %vm2186, %v520, 0.0
        %v2195 = vsel %vm2186, %v521, 0.0
        %v2196 = vsel %vm2186, %v522, 0.0
        %v2197 = vsel %vm2186, %v523, 0.0
        %v2198 = vsel %vm2186, %v524, 0.0
        %v2199 = vsel %vm2186, %v525, 0.0
        %v2200 = vsel %vm2186, %v526, 0.0
        %v2201 = vsel %vm2186, %v527, 0.0
        %v2202 = vsel %vm2186, %v528, 0.0
        %v2203 = vsel %vm1396, %v2187, 0.0
        %2204 = vadd.xlane.f32.xlu0 %v2203
        %v2205 = vpop.xlane.xlu0 %2204
        %v2206 = vsel %vm1396, %v2188, 0.0
        %2207 = vadd.xlane.f32.xlu0 %v2206
        %v2208 = vpop.xlane.xlu0 %2207
        %v2209 = vsel %vm1396, %v2189, 0.0
        %2210 = vadd.xlane.f32.xlu0 %v2209
        %v2211 = vpop.xlane.xlu0 %2210
        %v2212 = vsel %vm1396, %v2190, 0.0
        %2213 = vadd.xlane.f32.xlu0 %v2212
        %v2214 = vpop.xlane.xlu0 %2213
        %v2215 = vsel %vm1396, %v2191, 0.0
        %2216 = vadd.xlane.f32.xlu0 %v2215
        %v2217 = vpop.xlane.xlu0 %2216
        %v2218 = vsel %vm1396, %v2192, 0.0
        %2219 = vadd.xlane.f32.xlu0 %v2218
        %v2220 = vpop.xlane.xlu0 %2219
        %v2221 = vsel %vm1396, %v2193, 0.0
        %2222 = vadd.xlane.f32.xlu0 %v2221
        %v2223 = vpop.xlane.xlu0 %2222
        %v2224 = vsel %vm1396, %v2194, 0.0
        %2225 = vadd.xlane.f32.xlu0 %v2224
        %v2226 = vpop.xlane.xlu0 %2225
        %v2227 = vsel %vm1396, %v2195, 0.0
        %2228 = vadd.xlane.f32.xlu0 %v2227
        %v2229 = vpop.xlane.xlu0 %2228
        %v2230 = vsel %vm1396, %v2196, 0.0
        %2231 = vadd.xlane.f32.xlu0 %v2230
        %v2232 = vpop.xlane.xlu0 %2231
        %v2233 = vsel %vm1396, %v2197, 0.0
        %2234 = vadd.xlane.f32.xlu0 %v2233
        %v2235 = vpop.xlane.xlu0 %2234
        %v2236 = vsel %vm1396, %v2198, 0.0
        %2237 = vadd.xlane.f32.xlu0 %v2236
        %v2238 = vpop.xlane.xlu0 %2237
        %v2239 = vsel %vm1396, %v2199, 0.0
        %2240 = vadd.xlane.f32.xlu0 %v2239
        %v2241 = vpop.xlane.xlu0 %2240
        %v2242 = vsel %vm1396, %v2200, 0.0
        %2243 = vadd.xlane.f32.xlu0 %v2242
        %v2244 = vpop.xlane.xlu0 %2243
        %v2245 = vsel %vm1396, %v2201, 0.0
        %2246 = vadd.xlane.f32.xlu0 %v2245
        %v2247 = vpop.xlane.xlu0 %2246
        %v2248 = vsel %vm1396, %v2202, 0.0
        %2249 = vadd.xlane.f32.xlu0 %v2248
        %v2250 = vpop.xlane.xlu0 %2249
        %vm2251 = vcmp.eq.f32.partialorder %v1378, %v2205
        %vm2252 = vcmp.eq.f32.partialorder %v1378, %v2208
        %vm2253 = vcmp.eq.f32.partialorder %v1378, %v2211
        %vm2254 = vcmp.eq.f32.partialorder %v1378, %v2214
        %vm2255 = vcmp.eq.f32.partialorder %v1378, %v2217
        %vm2256 = vcmp.eq.f32.partialorder %v1378, %v2220
        %vm2257 = vcmp.eq.f32.partialorder %v1378, %v2223
        %vm2258 = vcmp.eq.f32.partialorder %v1378, %v2226
        %vm2259 = vcmp.eq.f32.partialorder %v1378, %v2229
        %vm2260 = vcmp.eq.f32.partialorder %v1378, %v2232
        %vm2261 = vcmp.eq.f32.partialorder %v1378, %v2235
        %vm2262 = vcmp.eq.f32.partialorder %v1378, %v2238
        %vm2263 = vcmp.eq.f32.partialorder %v1378, %v2241
        %vm2264 = vcmp.eq.f32.partialorder %v1378, %v2244
        %vm2265 = vcmp.eq.f32.partialorder %v1378, %v2247
        %vm2266 = vcmp.eq.f32.partialorder %v1378, %v2250
        %v2267 = vsel %vm2251, %v1337, 0.0
        %v2268 = vsel %vm2252, %v1339, 0.0
        %v2269 = vsel %vm2253, %v1342, 0.0
        %v2270 = vsel %vm2254, %v1344, 0.0
        %v2271 = vsel %vm2255, %v1347, 0.0
        %v2272 = vsel %vm2256, %v1349, 0.0
        %v2273 = vsel %vm2257, %v1352, 0.0
        %v2274 = vsel %vm2258, %v1354, 0.0
        %v2275 = vsel %vm2259, %v1357, 0.0
        %v2276 = vsel %vm2260, %v1359, 0.0
        %v2277 = vsel %vm2261, %v1362, 0.0
        %v2278 = vsel %vm2262, %v1364, 0.0
        %v2279 = vsel %vm2263, %v1367, 0.0
        %v2280 = vsel %vm2264, %v1369, 0.0
        %v2281 = vsel %vm2265, %v1372, 0.0
        %v2282 = vsel %vm2266, %v1374, 0.0
        %v2283 = vsel %vm1477, %v2267, 0.0
        %2284 = vadd.xlane.f32.xlu0 %v2283
        %v2285 = vpop.xlane.xlu0 %2284
        %v2286 = vsel %vm1477, %v2268, 0.0
        %2287 = vadd.xlane.f32.xlu0 %v2286
        %v2288 = vpop.xlane.xlu0 %2287
        %v2289 = vsel %vm1477, %v2269, 0.0
        %2290 = vadd.xlane.f32.xlu0 %v2289
        %v2291 = vpop.xlane.xlu0 %2290
        %v2292 = vsel %vm1477, %v2270, 0.0
        %2293 = vadd.xlane.f32.xlu0 %v2292
        %v2294 = vpop.xlane.xlu0 %2293
        %v2295 = vsel %vm1477, %v2271, 0.0
        %2296 = vadd.xlane.f32.xlu0 %v2295
        %v2297 = vpop.xlane.xlu0 %2296
        %v2298 = vsel %vm1477, %v2272, 0.0
        %2299 = vadd.xlane.f32.xlu0 %v2298
        %v2300 = vpop.xlane.xlu0 %2299
        %v2301 = vsel %vm1477, %v2273, 0.0
        %2302 = vadd.xlane.f32.xlu0 %v2301
        %v2303 = vpop.xlane.xlu0 %2302
        %v2304 = vsel %vm1477, %v2274, 0.0
        %2305 = vadd.xlane.f32.xlu0 %v2304
        %v2306 = vpop.xlane.xlu0 %2305
        %v2307 = vsel %vm1477, %v2275, 0.0
        %2308 = vadd.xlane.f32.xlu0 %v2307
        %v2309 = vpop.xlane.xlu0 %2308
        %v2310 = vsel %vm1477, %v2276, 0.0
        %2311 = vadd.xlane.f32.xlu0 %v2310
        %v2312 = vpop.xlane.xlu0 %2311
        %v2313 = vsel %vm1477, %v2277, 0.0
        %2314 = vadd.xlane.f32.xlu0 %v2313
        %v2315 = vpop.xlane.xlu0 %2314
        %v2316 = vsel %vm1477, %v2278, 0.0
        %2317 = vadd.xlane.f32.xlu0 %v2316
        %v2318 = vpop.xlane.xlu0 %2317
        %v2319 = vsel %vm1477, %v2279, 0.0
        %2320 = vadd.xlane.f32.xlu0 %v2319
        %v2321 = vpop.xlane.xlu0 %2320
        %v2322 = vsel %vm1477, %v2280, 0.0
        %2323 = vadd.xlane.f32.xlu0 %v2322
        %v2324 = vpop.xlane.xlu0 %2323
        %v2325 = vsel %vm1477, %v2281, 0.0
        %2326 = vadd.xlane.f32.xlu0 %v2325
        %v2327 = vpop.xlane.xlu0 %2326
        %v2328 = vsel %vm1477, %v2282, 0.0
        %2329 = vadd.xlane.f32.xlu0 %v2328
        %v2330 = vpop.xlane.xlu0 %2329
        %v2331 = vsel %vm2186, %v2285, %v2170
        %v2332 = vsel %vm2186, %v2288, %v2171
        %v2333 = vsel %vm2186, %v2291, %v2172
        %v2334 = vsel %vm2186, %v2294, %v2173
        %v2335 = vsel %vm2186, %v2297, %v2174
        %v2336 = vsel %vm2186, %v2300, %v2175
        %v2337 = vsel %vm2186, %v2303, %v2176
        %v2338 = vsel %vm2186, %v2306, %v2177
        %v2339 = vsel %vm2186, %v2309, %v2178
        %v2340 = vsel %vm2186, %v2312, %v2179
        %v2341 = vsel %vm2186, %v2315, %v2180
        %v2342 = vsel %vm2186, %v2318, %v2181
        %v2343 = vsel %vm2186, %v2321, %v2182
        %v2344 = vsel %vm2186, %v2324, %v2183
        %v2345 = vsel %vm2186, %v2327, %v2184
        %v2346 = vsel %vm2186, %v2330, %v2185
        %vm2347 = vcmp.eq.s32.totalorder %v1377, 6
        %v2348 = vsel %vm2347, %v513, 0.0
        %v2349 = vsel %vm2347, %v514, 0.0
        %v2350 = vsel %vm2347, %v515, 0.0
        %v2351 = vsel %vm2347, %v516, 0.0
        %v2352 = vsel %vm2347, %v517, 0.0
        %v2353 = vsel %vm2347, %v518, 0.0
        %v2354 = vsel %vm2347, %v519, 0.0
        %v2355 = vsel %vm2347, %v520, 0.0
        %v2356 = vsel %vm2347, %v521, 0.0
        %v2357 = vsel %vm2347, %v522, 0.0
        %v2358 = vsel %vm2347, %v523, 0.0
        %v2359 = vsel %vm2347, %v524, 0.0
        %v2360 = vsel %vm2347, %v525, 0.0
        %v2361 = vsel %vm2347, %v526, 0.0
        %v2362 = vsel %vm2347, %v527, 0.0
        %v2363 = vsel %vm2347, %v528, 0.0
        %v2364 = vsel %vm1396, %v2348, 0.0
        %2365 = vadd.xlane.f32.xlu0 %v2364
        %v2366 = vpop.xlane.xlu0 %2365
        %v2367 = vsel %vm1396, %v2349, 0.0
        %2368 = vadd.xlane.f32.xlu0 %v2367
        %v2369 = vpop.xlane.xlu0 %2368
        %v2370 = vsel %vm1396, %v2350, 0.0
        %2371 = vadd.xlane.f32.xlu0 %v2370
        %v2372 = vpop.xlane.xlu0 %2371
        %v2373 = vsel %vm1396, %v2351, 0.0
        %2374 = vadd.xlane.f32.xlu0 %v2373
        %v2375 = vpop.xlane.xlu0 %2374
        %v2376 = vsel %vm1396, %v2352, 0.0
        %2377 = vadd.xlane.f32.xlu0 %v2376
        %v2378 = vpop.xlane.xlu0 %2377
        %v2379 = vsel %vm1396, %v2353, 0.0
        %2380 = vadd.xlane.f32.xlu0 %v2379
        %v2381 = vpop.xlane.xlu0 %2380
        %v2382 = vsel %vm1396, %v2354, 0.0
        %2383 = vadd.xlane.f32.xlu0 %v2382
        %v2384 = vpop.xlane.xlu0 %2383
        %v2385 = vsel %vm1396, %v2355, 0.0
        %2386 = vadd.xlane.f32.xlu0 %v2385
        %v2387 = vpop.xlane.xlu0 %2386
        %v2388 = vsel %vm1396, %v2356, 0.0
        %2389 = vadd.xlane.f32.xlu0 %v2388
        %v2390 = vpop.xlane.xlu0 %2389
        %v2391 = vsel %vm1396, %v2357, 0.0
        %2392 = vadd.xlane.f32.xlu0 %v2391
        %v2393 = vpop.xlane.xlu0 %2392
        %v2394 = vsel %vm1396, %v2358, 0.0
        %2395 = vadd.xlane.f32.xlu0 %v2394
        %v2396 = vpop.xlane.xlu0 %2395
        %v2397 = vsel %vm1396, %v2359, 0.0
        %2398 = vadd.xlane.f32.xlu0 %v2397
        %v2399 = vpop.xlane.xlu0 %2398
        %v2400 = vsel %vm1396, %v2360, 0.0
        %2401 = vadd.xlane.f32.xlu0 %v2400
        %v2402 = vpop.xlane.xlu0 %2401
        %v2403 = vsel %vm1396, %v2361, 0.0
        %2404 = vadd.xlane.f32.xlu0 %v2403
        %v2405 = vpop.xlane.xlu0 %2404
        %v2406 = vsel %vm1396, %v2362, 0.0
        %2407 = vadd.xlane.f32.xlu0 %v2406
        %v2408 = vpop.xlane.xlu0 %2407
        %v2409 = vsel %vm1396, %v2363, 0.0
        %2410 = vadd.xlane.f32.xlu0 %v2409
        %v2411 = vpop.xlane.xlu0 %2410
        %vm2412 = vcmp.eq.f32.partialorder %v1378, %v2366
        %vm2413 = vcmp.eq.f32.partialorder %v1378, %v2369
        %vm2414 = vcmp.eq.f32.partialorder %v1378, %v2372
        %vm2415 = vcmp.eq.f32.partialorder %v1378, %v2375
        %vm2416 = vcmp.eq.f32.partialorder %v1378, %v2378
        %vm2417 = vcmp.eq.f32.partialorder %v1378, %v2381
        %vm2418 = vcmp.eq.f32.partialorder %v1378, %v2384
        %vm2419 = vcmp.eq.f32.partialorder %v1378, %v2387
        %vm2420 = vcmp.eq.f32.partialorder %v1378, %v2390
        %vm2421 = vcmp.eq.f32.partialorder %v1378, %v2393
        %vm2422 = vcmp.eq.f32.partialorder %v1378, %v2396
        %vm2423 = vcmp.eq.f32.partialorder %v1378, %v2399
        %vm2424 = vcmp.eq.f32.partialorder %v1378, %v2402
        %vm2425 = vcmp.eq.f32.partialorder %v1378, %v2405
        %vm2426 = vcmp.eq.f32.partialorder %v1378, %v2408
        %vm2427 = vcmp.eq.f32.partialorder %v1378, %v2411
        %v2428 = vsel %vm2412, %v1337, 0.0
        %v2429 = vsel %vm2413, %v1339, 0.0
        %v2430 = vsel %vm2414, %v1342, 0.0
        %v2431 = vsel %vm2415, %v1344, 0.0
        %v2432 = vsel %vm2416, %v1347, 0.0
        %v2433 = vsel %vm2417, %v1349, 0.0
        %v2434 = vsel %vm2418, %v1352, 0.0
        %v2435 = vsel %vm2419, %v1354, 0.0
        %v2436 = vsel %vm2420, %v1357, 0.0
        %v2437 = vsel %vm2421, %v1359, 0.0
        %v2438 = vsel %vm2422, %v1362, 0.0
        %v2439 = vsel %vm2423, %v1364, 0.0
        %v2440 = vsel %vm2424, %v1367, 0.0
        %v2441 = vsel %vm2425, %v1369, 0.0
        %v2442 = vsel %vm2426, %v1372, 0.0
        %v2443 = vsel %vm2427, %v1374, 0.0
        %v2444 = vsel %vm1477, %v2428, 0.0
        %2445 = vadd.xlane.f32.xlu0 %v2444
        %v2446 = vpop.xlane.xlu0 %2445
        %v2447 = vsel %vm1477, %v2429, 0.0
        %2448 = vadd.xlane.f32.xlu0 %v2447
        %v2449 = vpop.xlane.xlu0 %2448
        %v2450 = vsel %vm1477, %v2430, 0.0
        %2451 = vadd.xlane.f32.xlu0 %v2450
        %v2452 = vpop.xlane.xlu0 %2451
        %v2453 = vsel %vm1477, %v2431, 0.0
        %2454 = vadd.xlane.f32.xlu0 %v2453
        %v2455 = vpop.xlane.xlu0 %2454
        %v2456 = vsel %vm1477, %v2432, 0.0
        %2457 = vadd.xlane.f32.xlu0 %v2456
        %v2458 = vpop.xlane.xlu0 %2457
        %v2459 = vsel %vm1477, %v2433, 0.0
        %2460 = vadd.xlane.f32.xlu0 %v2459
        %v2461 = vpop.xlane.xlu0 %2460
        %v2462 = vsel %vm1477, %v2434, 0.0
        %2463 = vadd.xlane.f32.xlu0 %v2462
        %v2464 = vpop.xlane.xlu0 %2463
        %v2465 = vsel %vm1477, %v2435, 0.0
        %2466 = vadd.xlane.f32.xlu0 %v2465
        %v2467 = vpop.xlane.xlu0 %2466
        %v2468 = vsel %vm1477, %v2436, 0.0
        %2469 = vadd.xlane.f32.xlu0 %v2468
        %v2470 = vpop.xlane.xlu0 %2469
        %v2471 = vsel %vm1477, %v2437, 0.0
        %2472 = vadd.xlane.f32.xlu0 %v2471
        %v2473 = vpop.xlane.xlu0 %2472
        %v2474 = vsel %vm1477, %v2438, 0.0
        %2475 = vadd.xlane.f32.xlu0 %v2474
        %v2476 = vpop.xlane.xlu0 %2475
        %v2477 = vsel %vm1477, %v2439, 0.0
        %2478 = vadd.xlane.f32.xlu0 %v2477
        %v2479 = vpop.xlane.xlu0 %2478
        %v2480 = vsel %vm1477, %v2440, 0.0
        %2481 = vadd.xlane.f32.xlu0 %v2480
        %v2482 = vpop.xlane.xlu0 %2481
        %v2483 = vsel %vm1477, %v2441, 0.0
        %2484 = vadd.xlane.f32.xlu0 %v2483
        %v2485 = vpop.xlane.xlu0 %2484
        %v2486 = vsel %vm1477, %v2442, 0.0
        %2487 = vadd.xlane.f32.xlu0 %v2486
        %v2488 = vpop.xlane.xlu0 %2487
        %v2489 = vsel %vm1477, %v2443, 0.0
        %2490 = vadd.xlane.f32.xlu0 %v2489
        %v2491 = vpop.xlane.xlu0 %2490
        %v2492 = vsel %vm2347, %v2446, %v2331
        %v2493 = vsel %vm2347, %v2449, %v2332
        %v2494 = vsel %vm2347, %v2452, %v2333
        %v2495 = vsel %vm2347, %v2455, %v2334
        %v2496 = vsel %vm2347, %v2458, %v2335
        %v2497 = vsel %vm2347, %v2461, %v2336
        %v2498 = vsel %vm2347, %v2464, %v2337
        %v2499 = vsel %vm2347, %v2467, %v2338
        %v2500 = vsel %vm2347, %v2470, %v2339
        %v2501 = vsel %vm2347, %v2473, %v2340
        %v2502 = vsel %vm2347, %v2476, %v2341
        %v2503 = vsel %vm2347, %v2479, %v2342
        %v2504 = vsel %vm2347, %v2482, %v2343
        %v2505 = vsel %vm2347, %v2485, %v2344
        %v2506 = vsel %vm2347, %v2488, %v2345
        %v2507 = vsel %vm2347, %v2491, %v2346
        %vm2508 = vcmp.eq.s32.totalorder %v1377, 7
        %v2509 = vsel %vm2508, %v513, 0.0
        %v2510 = vsel %vm2508, %v514, 0.0
        %v2511 = vsel %vm2508, %v515, 0.0
        %v2512 = vsel %vm2508, %v516, 0.0
        %v2513 = vsel %vm2508, %v517, 0.0
        %v2514 = vsel %vm2508, %v518, 0.0
        %v2515 = vsel %vm2508, %v519, 0.0
        %v2516 = vsel %vm2508, %v520, 0.0
        %v2517 = vsel %vm2508, %v521, 0.0
        %v2518 = vsel %vm2508, %v522, 0.0
        %v2519 = vsel %vm2508, %v523, 0.0
        %v2520 = vsel %vm2508, %v524, 0.0
        %v2521 = vsel %vm2508, %v525, 0.0
        %v2522 = vsel %vm2508, %v526, 0.0
        %v2523 = vsel %vm2508, %v527, 0.0
        %v2524 = vsel %vm2508, %v528, 0.0
        %v2525 = vsel %vm1396, %v2509, 0.0
        %2526 = vadd.xlane.f32.xlu0 %v2525
        %v2527 = vpop.xlane.xlu0 %2526
        %v2528 = vsel %vm1396, %v2510, 0.0
        %2529 = vadd.xlane.f32.xlu0 %v2528
        %v2530 = vpop.xlane.xlu0 %2529
        %v2531 = vsel %vm1396, %v2511, 0.0
        %2532 = vadd.xlane.f32.xlu0 %v2531
        %v2533 = vpop.xlane.xlu0 %2532
        %v2534 = vsel %vm1396, %v2512, 0.0
        %2535 = vadd.xlane.f32.xlu0 %v2534
        %v2536 = vpop.xlane.xlu0 %2535
        %v2537 = vsel %vm1396, %v2513, 0.0
        %2538 = vadd.xlane.f32.xlu0 %v2537
        %v2539 = vpop.xlane.xlu0 %2538
        %v2540 = vsel %vm1396, %v2514, 0.0
        %2541 = vadd.xlane.f32.xlu0 %v2540
        %v2542 = vpop.xlane.xlu0 %2541
        %v2543 = vsel %vm1396, %v2515, 0.0
        %2544 = vadd.xlane.f32.xlu0 %v2543
        %v2545 = vpop.xlane.xlu0 %2544
        %v2546 = vsel %vm1396, %v2516, 0.0
        %2547 = vadd.xlane.f32.xlu0 %v2546
        %v2548 = vpop.xlane.xlu0 %2547
        %v2549 = vsel %vm1396, %v2517, 0.0
        %2550 = vadd.xlane.f32.xlu0 %v2549
        %v2551 = vpop.xlane.xlu0 %2550
        %v2552 = vsel %vm1396, %v2518, 0.0
        %2553 = vadd.xlane.f32.xlu0 %v2552
        %v2554 = vpop.xlane.xlu0 %2553
        %v2555 = vsel %vm1396, %v2519, 0.0
        %2556 = vadd.xlane.f32.xlu0 %v2555
        %v2557 = vpop.xlane.xlu0 %2556
        %v2558 = vsel %vm1396, %v2520, 0.0
        %2559 = vadd.xlane.f32.xlu0 %v2558
        %v2560 = vpop.xlane.xlu0 %2559
        %v2561 = vsel %vm1396, %v2521, 0.0
        %2562 = vadd.xlane.f32.xlu0 %v2561
        %v2563 = vpop.xlane.xlu0 %2562
        %v2564 = vsel %vm1396, %v2522, 0.0
        %2565 = vadd.xlane.f32.xlu0 %v2564
        %v2566 = vpop.xlane.xlu0 %2565
        %v2567 = vsel %vm1396, %v2523, 0.0
        %2568 = vadd.xlane.f32.xlu0 %v2567
        %v2569 = vpop.xlane.xlu0 %2568
        %v2570 = vsel %vm1396, %v2524, 0.0
        %2571 = vadd.xlane.f32.xlu0 %v2570
        %v2572 = vpop.xlane.xlu0 %2571
        %vm2573 = vcmp.eq.f32.partialorder %v1378, %v2527
        %vm2574 = vcmp.eq.f32.partialorder %v1378, %v2530
        %vm2575 = vcmp.eq.f32.partialorder %v1378, %v2533
        %vm2576 = vcmp.eq.f32.partialorder %v1378, %v2536
        %vm2577 = vcmp.eq.f32.partialorder %v1378, %v2539
        %vm2578 = vcmp.eq.f32.partialorder %v1378, %v2542
        %vm2579 = vcmp.eq.f32.partialorder %v1378, %v2545
        %vm2580 = vcmp.eq.f32.partialorder %v1378, %v2548
        %vm2581 = vcmp.eq.f32.partialorder %v1378, %v2551
        %vm2582 = vcmp.eq.f32.partialorder %v1378, %v2554
        %vm2583 = vcmp.eq.f32.partialorder %v1378, %v2557
        %vm2584 = vcmp.eq.f32.partialorder %v1378, %v2560
        %vm2585 = vcmp.eq.f32.partialorder %v1378, %v2563
        %vm2586 = vcmp.eq.f32.partialorder %v1378, %v2566
        %vm2587 = vcmp.eq.f32.partialorder %v1378, %v2569
        %vm2588 = vcmp.eq.f32.partialorder %v1378, %v2572
        %v2589 = vsel %vm2573, %v1337, 0.0
        %v2590 = vsel %vm2574, %v1339, 0.0
        %v2591 = vsel %vm2575, %v1342, 0.0
        %v2592 = vsel %vm2576, %v1344, 0.0
        %v2593 = vsel %vm2577, %v1347, 0.0
        %v2594 = vsel %vm2578, %v1349, 0.0
        %v2595 = vsel %vm2579, %v1352, 0.0
        %v2596 = vsel %vm2580, %v1354, 0.0
        %v2597 = vsel %vm2581, %v1357, 0.0
        %v2598 = vsel %vm2582, %v1359, 0.0
        %v2599 = vsel %vm2583, %v1362, 0.0
        %v2600 = vsel %vm2584, %v1364, 0.0
        %v2601 = vsel %vm2585, %v1367, 0.0
        %v2602 = vsel %vm2586, %v1369, 0.0
        %v2603 = vsel %vm2587, %v1372, 0.0
        %v2604 = vsel %vm2588, %v1374, 0.0
        %v2605 = vsel %vm1477, %v2589, 0.0
        %2606 = vadd.xlane.f32.xlu0 %v2605
        %v2607 = vpop.xlane.xlu0 %2606
        %v2608 = vsel %vm1477, %v2590, 0.0
        %2609 = vadd.xlane.f32.xlu0 %v2608
        %v2610 = vpop.xlane.xlu0 %2609
        %v2611 = vsel %vm1477, %v2591, 0.0
        %2612 = vadd.xlane.f32.xlu0 %v2611
        %v2613 = vpop.xlane.xlu0 %2612
        %v2614 = vsel %vm1477, %v2592, 0.0
        %2615 = vadd.xlane.f32.xlu0 %v2614
        %v2616 = vpop.xlane.xlu0 %2615
        %v2617 = vsel %vm1477, %v2593, 0.0
        %2618 = vadd.xlane.f32.xlu0 %v2617
        %v2619 = vpop.xlane.xlu0 %2618
        %v2620 = vsel %vm1477, %v2594, 0.0
        %2621 = vadd.xlane.f32.xlu0 %v2620
        %v2622 = vpop.xlane.xlu0 %2621
        %v2623 = vsel %vm1477, %v2595, 0.0
        %2624 = vadd.xlane.f32.xlu0 %v2623
        %v2625 = vpop.xlane.xlu0 %2624
        %v2626 = vsel %vm1477, %v2596, 0.0
        %2627 = vadd.xlane.f32.xlu0 %v2626
        %v2628 = vpop.xlane.xlu0 %2627
        %v2629 = vsel %vm1477, %v2597, 0.0
        %2630 = vadd.xlane.f32.xlu0 %v2629
        %v2631 = vpop.xlane.xlu0 %2630
        %v2632 = vsel %vm1477, %v2598, 0.0
        %2633 = vadd.xlane.f32.xlu0 %v2632
        %v2634 = vpop.xlane.xlu0 %2633
        %v2635 = vsel %vm1477, %v2599, 0.0
        %2636 = vadd.xlane.f32.xlu0 %v2635
        %v2637 = vpop.xlane.xlu0 %2636
        %v2638 = vsel %vm1477, %v2600, 0.0
        %2639 = vadd.xlane.f32.xlu0 %v2638
        %v2640 = vpop.xlane.xlu0 %2639
        %v2641 = vsel %vm1477, %v2601, 0.0
        %2642 = vadd.xlane.f32.xlu0 %v2641
        %v2643 = vpop.xlane.xlu0 %2642
        %v2644 = vsel %vm1477, %v2602, 0.0
        %2645 = vadd.xlane.f32.xlu0 %v2644
        %v2646 = vpop.xlane.xlu0 %2645
        %v2647 = vsel %vm1477, %v2603, 0.0
        %2648 = vadd.xlane.f32.xlu0 %v2647
        %v2649 = vpop.xlane.xlu0 %2648
        %v2650 = vsel %vm1477, %v2604, 0.0
        %2651 = vadd.xlane.f32.xlu0 %v2650
        %v2652 = vpop.xlane.xlu0 %2651
        %v2653 = vsel %vm2508, %v2607, %v2492
        %v2654 = vsel %vm2508, %v2610, %v2493
        %v2655 = vsel %vm2508, %v2613, %v2494
        %v2656 = vsel %vm2508, %v2616, %v2495
        %v2657 = vsel %vm2508, %v2619, %v2496
        %v2658 = vsel %vm2508, %v2622, %v2497
        %v2659 = vsel %vm2508, %v2625, %v2498
        %v2660 = vsel %vm2508, %v2628, %v2499
        %v2661 = vsel %vm2508, %v2631, %v2500
        %v2662 = vsel %vm2508, %v2634, %v2501
        %v2663 = vsel %vm2508, %v2637, %v2502
        %v2664 = vsel %vm2508, %v2640, %v2503
        %v2665 = vsel %vm2508, %v2643, %v2504
        %v2666 = vsel %vm2508, %v2646, %v2505
        %v2667 = vsel %vm2508, %v2649, %v2506
        %v2668 = vsel %vm2508, %v2652, %v2507
        %vm2669 = vcmp.eq.s32.totalorder %v1377, 8
        %v2670 = vsel %vm2669, %v513, 0.0
        %v2671 = vsel %vm2669, %v514, 0.0
        %v2672 = vsel %vm2669, %v515, 0.0
        %v2673 = vsel %vm2669, %v516, 0.0
        %v2674 = vsel %vm2669, %v517, 0.0
        %v2675 = vsel %vm2669, %v518, 0.0
        %v2676 = vsel %vm2669, %v519, 0.0
        %v2677 = vsel %vm2669, %v520, 0.0
        %v2678 = vsel %vm2669, %v521, 0.0
        %v2679 = vsel %vm2669, %v522, 0.0
        %v2680 = vsel %vm2669, %v523, 0.0
        %v2681 = vsel %vm2669, %v524, 0.0
        %v2682 = vsel %vm2669, %v525, 0.0
        %v2683 = vsel %vm2669, %v526, 0.0
        %v2684 = vsel %vm2669, %v527, 0.0
        %v2685 = vsel %vm2669, %v528, 0.0
        %v2686 = vsel %vm1396, %v2670, 0.0
        %2687 = vadd.xlane.f32.xlu0 %v2686
        %v2688 = vpop.xlane.xlu0 %2687
        %v2689 = vsel %vm1396, %v2671, 0.0
        %2690 = vadd.xlane.f32.xlu0 %v2689
        %v2691 = vpop.xlane.xlu0 %2690
        %v2692 = vsel %vm1396, %v2672, 0.0
        %2693 = vadd.xlane.f32.xlu0 %v2692
        %v2694 = vpop.xlane.xlu0 %2693
        %v2695 = vsel %vm1396, %v2673, 0.0
        %2696 = vadd.xlane.f32.xlu0 %v2695
        %v2697 = vpop.xlane.xlu0 %2696
        %v2698 = vsel %vm1396, %v2674, 0.0
        %2699 = vadd.xlane.f32.xlu0 %v2698
        %v2700 = vpop.xlane.xlu0 %2699
        %v2701 = vsel %vm1396, %v2675, 0.0
        %2702 = vadd.xlane.f32.xlu0 %v2701
        %v2703 = vpop.xlane.xlu0 %2702
        %v2704 = vsel %vm1396, %v2676, 0.0
        %2705 = vadd.xlane.f32.xlu0 %v2704
        %v2706 = vpop.xlane.xlu0 %2705
        %v2707 = vsel %vm1396, %v2677, 0.0
        %2708 = vadd.xlane.f32.xlu0 %v2707
        %v2709 = vpop.xlane.xlu0 %2708
        %v2710 = vsel %vm1396, %v2678, 0.0
        %2711 = vadd.xlane.f32.xlu0 %v2710
        %v2712 = vpop.xlane.xlu0 %2711
        %v2713 = vsel %vm1396, %v2679, 0.0
        %2714 = vadd.xlane.f32.xlu0 %v2713
        %v2715 = vpop.xlane.xlu0 %2714
        %v2716 = vsel %vm1396, %v2680, 0.0
        %2717 = vadd.xlane.f32.xlu0 %v2716
        %v2718 = vpop.xlane.xlu0 %2717
        %v2719 = vsel %vm1396, %v2681, 0.0
        %2720 = vadd.xlane.f32.xlu0 %v2719
        %v2721 = vpop.xlane.xlu0 %2720
        %v2722 = vsel %vm1396, %v2682, 0.0
        %2723 = vadd.xlane.f32.xlu0 %v2722
        %v2724 = vpop.xlane.xlu0 %2723
        %v2725 = vsel %vm1396, %v2683, 0.0
        %2726 = vadd.xlane.f32.xlu0 %v2725
        %v2727 = vpop.xlane.xlu0 %2726
        %v2728 = vsel %vm1396, %v2684, 0.0
        %2729 = vadd.xlane.f32.xlu0 %v2728
        %v2730 = vpop.xlane.xlu0 %2729
        %v2731 = vsel %vm1396, %v2685, 0.0
        %2732 = vadd.xlane.f32.xlu0 %v2731
        %v2733 = vpop.xlane.xlu0 %2732
        %vm2734 = vcmp.eq.f32.partialorder %v1378, %v2688
        %vm2735 = vcmp.eq.f32.partialorder %v1378, %v2691
        %vm2736 = vcmp.eq.f32.partialorder %v1378, %v2694
        %vm2737 = vcmp.eq.f32.partialorder %v1378, %v2697
        %vm2738 = vcmp.eq.f32.partialorder %v1378, %v2700
        %vm2739 = vcmp.eq.f32.partialorder %v1378, %v2703
        %vm2740 = vcmp.eq.f32.partialorder %v1378, %v2706
        %vm2741 = vcmp.eq.f32.partialorder %v1378, %v2709
        %vm2742 = vcmp.eq.f32.partialorder %v1378, %v2712
        %vm2743 = vcmp.eq.f32.partialorder %v1378, %v2715
        %vm2744 = vcmp.eq.f32.partialorder %v1378, %v2718
        %vm2745 = vcmp.eq.f32.partialorder %v1378, %v2721
        %vm2746 = vcmp.eq.f32.partialorder %v1378, %v2724
        %vm2747 = vcmp.eq.f32.partialorder %v1378, %v2727
        %vm2748 = vcmp.eq.f32.partialorder %v1378, %v2730
        %vm2749 = vcmp.eq.f32.partialorder %v1378, %v2733
        %v2750 = vsel %vm2734, %v1337, 0.0
        %v2751 = vsel %vm2735, %v1339, 0.0
        %v2752 = vsel %vm2736, %v1342, 0.0
        %v2753 = vsel %vm2737, %v1344, 0.0
        %v2754 = vsel %vm2738, %v1347, 0.0
        %v2755 = vsel %vm2739, %v1349, 0.0
        %v2756 = vsel %vm2740, %v1352, 0.0
        %v2757 = vsel %vm2741, %v1354, 0.0
        %v2758 = vsel %vm2742, %v1357, 0.0
        %v2759 = vsel %vm2743, %v1359, 0.0
        %v2760 = vsel %vm2744, %v1362, 0.0
        %v2761 = vsel %vm2745, %v1364, 0.0
        %v2762 = vsel %vm2746, %v1367, 0.0
        %v2763 = vsel %vm2747, %v1369, 0.0
        %v2764 = vsel %vm2748, %v1372, 0.0
        %v2765 = vsel %vm2749, %v1374, 0.0
        %v2766 = vsel %vm1477, %v2750, 0.0
        %2767 = vadd.xlane.f32.xlu0 %v2766
        %v2768 = vpop.xlane.xlu0 %2767
        %v2769 = vsel %vm1477, %v2751, 0.0
        %2770 = vadd.xlane.f32.xlu0 %v2769
        %v2771 = vpop.xlane.xlu0 %2770
        %v2772 = vsel %vm1477, %v2752, 0.0
        %2773 = vadd.xlane.f32.xlu0 %v2772
        %v2774 = vpop.xlane.xlu0 %2773
        %v2775 = vsel %vm1477, %v2753, 0.0
        %2776 = vadd.xlane.f32.xlu0 %v2775
        %v2777 = vpop.xlane.xlu0 %2776
        %v2778 = vsel %vm1477, %v2754, 0.0
        %2779 = vadd.xlane.f32.xlu0 %v2778
        %v2780 = vpop.xlane.xlu0 %2779
        %v2781 = vsel %vm1477, %v2755, 0.0
        %2782 = vadd.xlane.f32.xlu0 %v2781
        %v2783 = vpop.xlane.xlu0 %2782
        %v2784 = vsel %vm1477, %v2756, 0.0
        %2785 = vadd.xlane.f32.xlu0 %v2784
        %v2786 = vpop.xlane.xlu0 %2785
        %v2787 = vsel %vm1477, %v2757, 0.0
        %2788 = vadd.xlane.f32.xlu0 %v2787
        %v2789 = vpop.xlane.xlu0 %2788
        %v2790 = vsel %vm1477, %v2758, 0.0
        %2791 = vadd.xlane.f32.xlu0 %v2790
        %v2792 = vpop.xlane.xlu0 %2791
        %v2793 = vsel %vm1477, %v2759, 0.0
        %2794 = vadd.xlane.f32.xlu0 %v2793
        %v2795 = vpop.xlane.xlu0 %2794
        %v2796 = vsel %vm1477, %v2760, 0.0
        %2797 = vadd.xlane.f32.xlu0 %v2796
        %v2798 = vpop.xlane.xlu0 %2797
        %v2799 = vsel %vm1477, %v2761, 0.0
        %2800 = vadd.xlane.f32.xlu0 %v2799
        %v2801 = vpop.xlane.xlu0 %2800
        %v2802 = vsel %vm1477, %v2762, 0.0
        %2803 = vadd.xlane.f32.xlu0 %v2802
        %v2804 = vpop.xlane.xlu0 %2803
        %v2805 = vsel %vm1477, %v2763, 0.0
        %2806 = vadd.xlane.f32.xlu0 %v2805
        %v2807 = vpop.xlane.xlu0 %2806
        %v2808 = vsel %vm1477, %v2764, 0.0
        %2809 = vadd.xlane.f32.xlu0 %v2808
        %v2810 = vpop.xlane.xlu0 %2809
        %v2811 = vsel %vm1477, %v2765, 0.0
        %2812 = vadd.xlane.f32.xlu0 %v2811
        %v2813 = vpop.xlane.xlu0 %2812
        %v2814 = vsel %vm2669, %v2768, %v2653
        %v2815 = vsel %vm2669, %v2771, %v2654
        %v2816 = vsel %vm2669, %v2774, %v2655
        %v2817 = vsel %vm2669, %v2777, %v2656
        %v2818 = vsel %vm2669, %v2780, %v2657
        %v2819 = vsel %vm2669, %v2783, %v2658
        %v2820 = vsel %vm2669, %v2786, %v2659
        %v2821 = vsel %vm2669, %v2789, %v2660
        %v2822 = vsel %vm2669, %v2792, %v2661
        %v2823 = vsel %vm2669, %v2795, %v2662
        %v2824 = vsel %vm2669, %v2798, %v2663
        %v2825 = vsel %vm2669, %v2801, %v2664
        %v2826 = vsel %vm2669, %v2804, %v2665
        %v2827 = vsel %vm2669, %v2807, %v2666
        %v2828 = vsel %vm2669, %v2810, %v2667
        %v2829 = vsel %vm2669, %v2813, %v2668
        %vm2830 = vcmp.eq.s32.totalorder %v1377, 9
        %v2831 = vsel %vm2830, %v513, 0.0
        %v2832 = vsel %vm2830, %v514, 0.0
        %v2833 = vsel %vm2830, %v515, 0.0
        %v2834 = vsel %vm2830, %v516, 0.0
        %v2835 = vsel %vm2830, %v517, 0.0
        %v2836 = vsel %vm2830, %v518, 0.0
        %v2837 = vsel %vm2830, %v519, 0.0
        %v2838 = vsel %vm2830, %v520, 0.0
        %v2839 = vsel %vm2830, %v521, 0.0
        %v2840 = vsel %vm2830, %v522, 0.0
        %v2841 = vsel %vm2830, %v523, 0.0
        %v2842 = vsel %vm2830, %v524, 0.0
        %v2843 = vsel %vm2830, %v525, 0.0
        %v2844 = vsel %vm2830, %v526, 0.0
        %v2845 = vsel %vm2830, %v527, 0.0
        %v2846 = vsel %vm2830, %v528, 0.0
        %v2847 = vsel %vm1396, %v2831, 0.0
        %2848 = vadd.xlane.f32.xlu0 %v2847
        %v2849 = vpop.xlane.xlu0 %2848
        %v2850 = vsel %vm1396, %v2832, 0.0
        %2851 = vadd.xlane.f32.xlu0 %v2850
        %v2852 = vpop.xlane.xlu0 %2851
        %v2853 = vsel %vm1396, %v2833, 0.0
        %2854 = vadd.xlane.f32.xlu0 %v2853
        %v2855 = vpop.xlane.xlu0 %2854
        %v2856 = vsel %vm1396, %v2834, 0.0
        %2857 = vadd.xlane.f32.xlu0 %v2856
        %v2858 = vpop.xlane.xlu0 %2857
        %v2859 = vsel %vm1396, %v2835, 0.0
        %2860 = vadd.xlane.f32.xlu0 %v2859
        %v2861 = vpop.xlane.xlu0 %2860
        %v2862 = vsel %vm1396, %v2836, 0.0
        %2863 = vadd.xlane.f32.xlu0 %v2862
        %v2864 = vpop.xlane.xlu0 %2863
        %v2865 = vsel %vm1396, %v2837, 0.0
        %2866 = vadd.xlane.f32.xlu0 %v2865
        %v2867 = vpop.xlane.xlu0 %2866
        %v2868 = vsel %vm1396, %v2838, 0.0
        %2869 = vadd.xlane.f32.xlu0 %v2868
        %v2870 = vpop.xlane.xlu0 %2869
        %v2871 = vsel %vm1396, %v2839, 0.0
        %2872 = vadd.xlane.f32.xlu0 %v2871
        %v2873 = vpop.xlane.xlu0 %2872
        %v2874 = vsel %vm1396, %v2840, 0.0
        %2875 = vadd.xlane.f32.xlu0 %v2874
        %v2876 = vpop.xlane.xlu0 %2875
        %v2877 = vsel %vm1396, %v2841, 0.0
        %2878 = vadd.xlane.f32.xlu0 %v2877
        %v2879 = vpop.xlane.xlu0 %2878
        %v2880 = vsel %vm1396, %v2842, 0.0
        %2881 = vadd.xlane.f32.xlu0 %v2880
        %v2882 = vpop.xlane.xlu0 %2881
        %v2883 = vsel %vm1396, %v2843, 0.0
        %2884 = vadd.xlane.f32.xlu0 %v2883
        %v2885 = vpop.xlane.xlu0 %2884
        %v2886 = vsel %vm1396, %v2844, 0.0
        %2887 = vadd.xlane.f32.xlu0 %v2886
        %v2888 = vpop.xlane.xlu0 %2887
        %v2889 = vsel %vm1396, %v2845, 0.0
        %2890 = vadd.xlane.f32.xlu0 %v2889
        %v2891 = vpop.xlane.xlu0 %2890
        %v2892 = vsel %vm1396, %v2846, 0.0
        %2893 = vadd.xlane.f32.xlu0 %v2892
        %v2894 = vpop.xlane.xlu0 %2893
        %vm2895 = vcmp.eq.f32.partialorder %v1378, %v2849
        %vm2896 = vcmp.eq.f32.partialorder %v1378, %v2852
        %vm2897 = vcmp.eq.f32.partialorder %v1378, %v2855
        %vm2898 = vcmp.eq.f32.partialorder %v1378, %v2858
        %vm2899 = vcmp.eq.f32.partialorder %v1378, %v2861
        %vm2900 = vcmp.eq.f32.partialorder %v1378, %v2864
        %vm2901 = vcmp.eq.f32.partialorder %v1378, %v2867
        %vm2902 = vcmp.eq.f32.partialorder %v1378, %v2870
        %vm2903 = vcmp.eq.f32.partialorder %v1378, %v2873
        %vm2904 = vcmp.eq.f32.partialorder %v1378, %v2876
        %vm2905 = vcmp.eq.f32.partialorder %v1378, %v2879
        %vm2906 = vcmp.eq.f32.partialorder %v1378, %v2882
        %vm2907 = vcmp.eq.f32.partialorder %v1378, %v2885
        %vm2908 = vcmp.eq.f32.partialorder %v1378, %v2888
        %vm2909 = vcmp.eq.f32.partialorder %v1378, %v2891
        %vm2910 = vcmp.eq.f32.partialorder %v1378, %v2894
        %v2911 = vsel %vm2895, %v1337, 0.0
        %v2912 = vsel %vm2896, %v1339, 0.0
        %v2913 = vsel %vm2897, %v1342, 0.0
        %v2914 = vsel %vm2898, %v1344, 0.0
        %v2915 = vsel %vm2899, %v1347, 0.0
        %v2916 = vsel %vm2900, %v1349, 0.0
        %v2917 = vsel %vm2901, %v1352, 0.0
        %v2918 = vsel %vm2902, %v1354, 0.0
        %v2919 = vsel %vm2903, %v1357, 0.0
        %v2920 = vsel %vm2904, %v1359, 0.0
        %v2921 = vsel %vm2905, %v1362, 0.0
        %v2922 = vsel %vm2906, %v1364, 0.0
        %v2923 = vsel %vm2907, %v1367, 0.0
        %v2924 = vsel %vm2908, %v1369, 0.0
        %v2925 = vsel %vm2909, %v1372, 0.0
        %v2926 = vsel %vm2910, %v1374, 0.0
        %v2927 = vsel %vm1477, %v2911, 0.0
        %2928 = vadd.xlane.f32.xlu0 %v2927
        %v2929 = vpop.xlane.xlu0 %2928
        %v2930 = vsel %vm1477, %v2912, 0.0
        %2931 = vadd.xlane.f32.xlu0 %v2930
        %v2932 = vpop.xlane.xlu0 %2931
        %v2933 = vsel %vm1477, %v2913, 0.0
        %2934 = vadd.xlane.f32.xlu0 %v2933
        %v2935 = vpop.xlane.xlu0 %2934
        %v2936 = vsel %vm1477, %v2914, 0.0
        %2937 = vadd.xlane.f32.xlu0 %v2936
        %v2938 = vpop.xlane.xlu0 %2937
        %v2939 = vsel %vm1477, %v2915, 0.0
        %2940 = vadd.xlane.f32.xlu0 %v2939
        %v2941 = vpop.xlane.xlu0 %2940
        %v2942 = vsel %vm1477, %v2916, 0.0
        %2943 = vadd.xlane.f32.xlu0 %v2942
        %v2944 = vpop.xlane.xlu0 %2943
        %v2945 = vsel %vm1477, %v2917, 0.0
        %2946 = vadd.xlane.f32.xlu0 %v2945
        %v2947 = vpop.xlane.xlu0 %2946
        %v2948 = vsel %vm1477, %v2918, 0.0
        %2949 = vadd.xlane.f32.xlu0 %v2948
        %v2950 = vpop.xlane.xlu0 %2949
        %v2951 = vsel %vm1477, %v2919, 0.0
        %2952 = vadd.xlane.f32.xlu0 %v2951
        %v2953 = vpop.xlane.xlu0 %2952
        %v2954 = vsel %vm1477, %v2920, 0.0
        %2955 = vadd.xlane.f32.xlu0 %v2954
        %v2956 = vpop.xlane.xlu0 %2955
        %v2957 = vsel %vm1477, %v2921, 0.0
        %2958 = vadd.xlane.f32.xlu0 %v2957
        %v2959 = vpop.xlane.xlu0 %2958
        %v2960 = vsel %vm1477, %v2922, 0.0
        %2961 = vadd.xlane.f32.xlu0 %v2960
        %v2962 = vpop.xlane.xlu0 %2961
        %v2963 = vsel %vm1477, %v2923, 0.0
        %2964 = vadd.xlane.f32.xlu0 %v2963
        %v2965 = vpop.xlane.xlu0 %2964
        %v2966 = vsel %vm1477, %v2924, 0.0
        %2967 = vadd.xlane.f32.xlu0 %v2966
        %v2968 = vpop.xlane.xlu0 %2967
        %v2969 = vsel %vm1477, %v2925, 0.0
        %2970 = vadd.xlane.f32.xlu0 %v2969
        %v2971 = vpop.xlane.xlu0 %2970
        %v2972 = vsel %vm1477, %v2926, 0.0
        %2973 = vadd.xlane.f32.xlu0 %v2972
        %v2974 = vpop.xlane.xlu0 %2973
        %v2975 = vsel %vm2830, %v2929, %v2814
        %v2976 = vsel %vm2830, %v2932, %v2815
        %v2977 = vsel %vm2830, %v2935, %v2816
        %v2978 = vsel %vm2830, %v2938, %v2817
        %v2979 = vsel %vm2830, %v2941, %v2818
        %v2980 = vsel %vm2830, %v2944, %v2819
        %v2981 = vsel %vm2830, %v2947, %v2820
        %v2982 = vsel %vm2830, %v2950, %v2821
        %v2983 = vsel %vm2830, %v2953, %v2822
        %v2984 = vsel %vm2830, %v2956, %v2823
        %v2985 = vsel %vm2830, %v2959, %v2824
        %v2986 = vsel %vm2830, %v2962, %v2825
        %v2987 = vsel %vm2830, %v2965, %v2826
        %v2988 = vsel %vm2830, %v2968, %v2827
        %v2989 = vsel %vm2830, %v2971, %v2828
        %v2990 = vsel %vm2830, %v2974, %v2829
        %vm2991 = vcmp.eq.s32.totalorder %v1377, 10
        %v2992 = vsel %vm2991, %v513, 0.0
        %v2993 = vsel %vm2991, %v514, 0.0
        %v2994 = vsel %vm2991, %v515, 0.0
        %v2995 = vsel %vm2991, %v516, 0.0
        %v2996 = vsel %vm2991, %v517, 0.0
        %v2997 = vsel %vm2991, %v518, 0.0
        %v2998 = vsel %vm2991, %v519, 0.0
        %v2999 = vsel %vm2991, %v520, 0.0
        %v3000 = vsel %vm2991, %v521, 0.0
        %v3001 = vsel %vm2991, %v522, 0.0
        %v3002 = vsel %vm2991, %v523, 0.0
        %v3003 = vsel %vm2991, %v524, 0.0
        %v3004 = vsel %vm2991, %v525, 0.0
        %v3005 = vsel %vm2991, %v526, 0.0
        %v3006 = vsel %vm2991, %v527, 0.0
        %v3007 = vsel %vm2991, %v528, 0.0
        %v3008 = vsel %vm1396, %v2992, 0.0
        %3009 = vadd.xlane.f32.xlu0 %v3008
        %v3010 = vpop.xlane.xlu0 %3009
        %v3011 = vsel %vm1396, %v2993, 0.0
        %3012 = vadd.xlane.f32.xlu0 %v3011
        %v3013 = vpop.xlane.xlu0 %3012
        %v3014 = vsel %vm1396, %v2994, 0.0
        %3015 = vadd.xlane.f32.xlu0 %v3014
        %v3016 = vpop.xlane.xlu0 %3015
        %v3017 = vsel %vm1396, %v2995, 0.0
        %3018 = vadd.xlane.f32.xlu0 %v3017
        %v3019 = vpop.xlane.xlu0 %3018
        %v3020 = vsel %vm1396, %v2996, 0.0
        %3021 = vadd.xlane.f32.xlu0 %v3020
        %v3022 = vpop.xlane.xlu0 %3021
        %v3023 = vsel %vm1396, %v2997, 0.0
        %3024 = vadd.xlane.f32.xlu0 %v3023
        %v3025 = vpop.xlane.xlu0 %3024
        %v3026 = vsel %vm1396, %v2998, 0.0
        %3027 = vadd.xlane.f32.xlu0 %v3026
        %v3028 = vpop.xlane.xlu0 %3027
        %v3029 = vsel %vm1396, %v2999, 0.0
        %3030 = vadd.xlane.f32.xlu0 %v3029
        %v3031 = vpop.xlane.xlu0 %3030
        %v3032 = vsel %vm1396, %v3000, 0.0
        %3033 = vadd.xlane.f32.xlu0 %v3032
        %v3034 = vpop.xlane.xlu0 %3033
        %v3035 = vsel %vm1396, %v3001, 0.0
        %3036 = vadd.xlane.f32.xlu0 %v3035
        %v3037 = vpop.xlane.xlu0 %3036
        %v3038 = vsel %vm1396, %v3002, 0.0
        %3039 = vadd.xlane.f32.xlu0 %v3038
        %v3040 = vpop.xlane.xlu0 %3039
        %v3041 = vsel %vm1396, %v3003, 0.0
        %3042 = vadd.xlane.f32.xlu0 %v3041
        %v3043 = vpop.xlane.xlu0 %3042
        %v3044 = vsel %vm1396, %v3004, 0.0
        %3045 = vadd.xlane.f32.xlu0 %v3044
        %v3046 = vpop.xlane.xlu0 %3045
        %v3047 = vsel %vm1396, %v3005, 0.0
        %3048 = vadd.xlane.f32.xlu0 %v3047
        %v3049 = vpop.xlane.xlu0 %3048
        %v3050 = vsel %vm1396, %v3006, 0.0
        %3051 = vadd.xlane.f32.xlu0 %v3050
        %v3052 = vpop.xlane.xlu0 %3051
        %v3053 = vsel %vm1396, %v3007, 0.0
        %3054 = vadd.xlane.f32.xlu0 %v3053
        %v3055 = vpop.xlane.xlu0 %3054
        %vm3056 = vcmp.eq.f32.partialorder %v1378, %v3010
        %vm3057 = vcmp.eq.f32.partialorder %v1378, %v3013
        %vm3058 = vcmp.eq.f32.partialorder %v1378, %v3016
        %vm3059 = vcmp.eq.f32.partialorder %v1378, %v3019
        %vm3060 = vcmp.eq.f32.partialorder %v1378, %v3022
        %vm3061 = vcmp.eq.f32.partialorder %v1378, %v3025
        %vm3062 = vcmp.eq.f32.partialorder %v1378, %v3028
        %vm3063 = vcmp.eq.f32.partialorder %v1378, %v3031
        %vm3064 = vcmp.eq.f32.partialorder %v1378, %v3034
        %vm3065 = vcmp.eq.f32.partialorder %v1378, %v3037
        %vm3066 = vcmp.eq.f32.partialorder %v1378, %v3040
        %vm3067 = vcmp.eq.f32.partialorder %v1378, %v3043
        %vm3068 = vcmp.eq.f32.partialorder %v1378, %v3046
        %vm3069 = vcmp.eq.f32.partialorder %v1378, %v3049
        %vm3070 = vcmp.eq.f32.partialorder %v1378, %v3052
        %vm3071 = vcmp.eq.f32.partialorder %v1378, %v3055
        %v3072 = vsel %vm3056, %v1337, 0.0
        %v3073 = vsel %vm3057, %v1339, 0.0
        %v3074 = vsel %vm3058, %v1342, 0.0
        %v3075 = vsel %vm3059, %v1344, 0.0
        %v3076 = vsel %vm3060, %v1347, 0.0
        %v3077 = vsel %vm3061, %v1349, 0.0
        %v3078 = vsel %vm3062, %v1352, 0.0
        %v3079 = vsel %vm3063, %v1354, 0.0
        %v3080 = vsel %vm3064, %v1357, 0.0
        %v3081 = vsel %vm3065, %v1359, 0.0
        %v3082 = vsel %vm3066, %v1362, 0.0
        %v3083 = vsel %vm3067, %v1364, 0.0
        %v3084 = vsel %vm3068, %v1367, 0.0
        %v3085 = vsel %vm3069, %v1369, 0.0
        %v3086 = vsel %vm3070, %v1372, 0.0
        %v3087 = vsel %vm3071, %v1374, 0.0
        %v3088 = vsel %vm1477, %v3072, 0.0
        %3089 = vadd.xlane.f32.xlu0 %v3088
        %v3090 = vpop.xlane.xlu0 %3089
        %v3091 = vsel %vm1477, %v3073, 0.0
        %3092 = vadd.xlane.f32.xlu0 %v3091
        %v3093 = vpop.xlane.xlu0 %3092
        %v3094 = vsel %vm1477, %v3074, 0.0
        %3095 = vadd.xlane.f32.xlu0 %v3094
        %v3096 = vpop.xlane.xlu0 %3095
        %v3097 = vsel %vm1477, %v3075, 0.0
        %3098 = vadd.xlane.f32.xlu0 %v3097
        %v3099 = vpop.xlane.xlu0 %3098
        %v3100 = vsel %vm1477, %v3076, 0.0
        %3101 = vadd.xlane.f32.xlu0 %v3100
        %v3102 = vpop.xlane.xlu0 %3101
        %v3103 = vsel %vm1477, %v3077, 0.0
        %3104 = vadd.xlane.f32.xlu0 %v3103
        %v3105 = vpop.xlane.xlu0 %3104
        %v3106 = vsel %vm1477, %v3078, 0.0
        %3107 = vadd.xlane.f32.xlu0 %v3106
        %v3108 = vpop.xlane.xlu0 %3107
        %v3109 = vsel %vm1477, %v3079, 0.0
        %3110 = vadd.xlane.f32.xlu0 %v3109
        %v3111 = vpop.xlane.xlu0 %3110
        %v3112 = vsel %vm1477, %v3080, 0.0
        %3113 = vadd.xlane.f32.xlu0 %v3112
        %v3114 = vpop.xlane.xlu0 %3113
        %v3115 = vsel %vm1477, %v3081, 0.0
        %3116 = vadd.xlane.f32.xlu0 %v3115
        %v3117 = vpop.xlane.xlu0 %3116
        %v3118 = vsel %vm1477, %v3082, 0.0
        %3119 = vadd.xlane.f32.xlu0 %v3118
        %v3120 = vpop.xlane.xlu0 %3119
        %v3121 = vsel %vm1477, %v3083, 0.0
        %3122 = vadd.xlane.f32.xlu0 %v3121
        %v3123 = vpop.xlane.xlu0 %3122
        %v3124 = vsel %vm1477, %v3084, 0.0
        %3125 = vadd.xlane.f32.xlu0 %v3124
        %v3126 = vpop.xlane.xlu0 %3125
        %v3127 = vsel %vm1477, %v3085, 0.0
        %3128 = vadd.xlane.f32.xlu0 %v3127
        %v3129 = vpop.xlane.xlu0 %3128
        %v3130 = vsel %vm1477, %v3086, 0.0
        %3131 = vadd.xlane.f32.xlu0 %v3130
        %v3132 = vpop.xlane.xlu0 %3131
        %v3133 = vsel %vm1477, %v3087, 0.0
        %3134 = vadd.xlane.f32.xlu0 %v3133
        %v3135 = vpop.xlane.xlu0 %3134
        %v3136 = vsel %vm2991, %v3090, %v2975
        %v3137 = vsel %vm2991, %v3093, %v2976
        %v3138 = vsel %vm2991, %v3096, %v2977
        %v3139 = vsel %vm2991, %v3099, %v2978
        %v3140 = vsel %vm2991, %v3102, %v2979
        %v3141 = vsel %vm2991, %v3105, %v2980
        %v3142 = vsel %vm2991, %v3108, %v2981
        %v3143 = vsel %vm2991, %v3111, %v2982
        %v3144 = vsel %vm2991, %v3114, %v2983
        %v3145 = vsel %vm2991, %v3117, %v2984
        %v3146 = vsel %vm2991, %v3120, %v2985
        %v3147 = vsel %vm2991, %v3123, %v2986
        %v3148 = vsel %vm2991, %v3126, %v2987
        %v3149 = vsel %vm2991, %v3129, %v2988
        %v3150 = vsel %vm2991, %v3132, %v2989
        %v3151 = vsel %vm2991, %v3135, %v2990
        %vm3152 = vcmp.eq.s32.totalorder %v1377, 11
        %v3153 = vsel %vm3152, %v513, 0.0
        %v3154 = vsel %vm3152, %v514, 0.0
        %v3155 = vsel %vm3152, %v515, 0.0
        %v3156 = vsel %vm3152, %v516, 0.0
        %v3157 = vsel %vm3152, %v517, 0.0
        %v3158 = vsel %vm3152, %v518, 0.0
        %v3159 = vsel %vm3152, %v519, 0.0
        %v3160 = vsel %vm3152, %v520, 0.0
        %v3161 = vsel %vm3152, %v521, 0.0
        %v3162 = vsel %vm3152, %v522, 0.0
        %v3163 = vsel %vm3152, %v523, 0.0
        %v3164 = vsel %vm3152, %v524, 0.0
        %v3165 = vsel %vm3152, %v525, 0.0
        %v3166 = vsel %vm3152, %v526, 0.0
        %v3167 = vsel %vm3152, %v527, 0.0
        %v3168 = vsel %vm3152, %v528, 0.0
        %v3169 = vsel %vm1396, %v3153, 0.0
        %3170 = vadd.xlane.f32.xlu0 %v3169
        %v3171 = vpop.xlane.xlu0 %3170
        %v3172 = vsel %vm1396, %v3154, 0.0
        %3173 = vadd.xlane.f32.xlu0 %v3172
        %v3174 = vpop.xlane.xlu0 %3173
        %v3175 = vsel %vm1396, %v3155, 0.0
        %3176 = vadd.xlane.f32.xlu0 %v3175
        %v3177 = vpop.xlane.xlu0 %3176
        %v3178 = vsel %vm1396, %v3156, 0.0
        %3179 = vadd.xlane.f32.xlu0 %v3178
        %v3180 = vpop.xlane.xlu0 %3179
        %v3181 = vsel %vm1396, %v3157, 0.0
        %3182 = vadd.xlane.f32.xlu0 %v3181
        %v3183 = vpop.xlane.xlu0 %3182
        %v3184 = vsel %vm1396, %v3158, 0.0
        %3185 = vadd.xlane.f32.xlu0 %v3184
        %v3186 = vpop.xlane.xlu0 %3185
        %v3187 = vsel %vm1396, %v3159, 0.0
        %3188 = vadd.xlane.f32.xlu0 %v3187
        %v3189 = vpop.xlane.xlu0 %3188
        %v3190 = vsel %vm1396, %v3160, 0.0
        %3191 = vadd.xlane.f32.xlu0 %v3190
        %v3192 = vpop.xlane.xlu0 %3191
        %v3193 = vsel %vm1396, %v3161, 0.0
        %3194 = vadd.xlane.f32.xlu0 %v3193
        %v3195 = vpop.xlane.xlu0 %3194
        %v3196 = vsel %vm1396, %v3162, 0.0
        %3197 = vadd.xlane.f32.xlu0 %v3196
        %v3198 = vpop.xlane.xlu0 %3197
        %v3199 = vsel %vm1396, %v3163, 0.0
        %3200 = vadd.xlane.f32.xlu0 %v3199
        %v3201 = vpop.xlane.xlu0 %3200
        %v3202 = vsel %vm1396, %v3164, 0.0
        %3203 = vadd.xlane.f32.xlu0 %v3202
        %v3204 = vpop.xlane.xlu0 %3203
        %v3205 = vsel %vm1396, %v3165, 0.0
        %3206 = vadd.xlane.f32.xlu0 %v3205
        %v3207 = vpop.xlane.xlu0 %3206
        %v3208 = vsel %vm1396, %v3166, 0.0
        %3209 = vadd.xlane.f32.xlu0 %v3208
        %v3210 = vpop.xlane.xlu0 %3209
        %v3211 = vsel %vm1396, %v3167, 0.0
        %3212 = vadd.xlane.f32.xlu0 %v3211
        %v3213 = vpop.xlane.xlu0 %3212
        %v3214 = vsel %vm1396, %v3168, 0.0
        %3215 = vadd.xlane.f32.xlu0 %v3214
        %v3216 = vpop.xlane.xlu0 %3215
        %vm3217 = vcmp.eq.f32.partialorder %v1378, %v3171
        %vm3218 = vcmp.eq.f32.partialorder %v1378, %v3174
        %vm3219 = vcmp.eq.f32.partialorder %v1378, %v3177
        %vm3220 = vcmp.eq.f32.partialorder %v1378, %v3180
        %vm3221 = vcmp.eq.f32.partialorder %v1378, %v3183
        %vm3222 = vcmp.eq.f32.partialorder %v1378, %v3186
        %vm3223 = vcmp.eq.f32.partialorder %v1378, %v3189
        %vm3224 = vcmp.eq.f32.partialorder %v1378, %v3192
        %vm3225 = vcmp.eq.f32.partialorder %v1378, %v3195
        %vm3226 = vcmp.eq.f32.partialorder %v1378, %v3198
        %vm3227 = vcmp.eq.f32.partialorder %v1378, %v3201
        %vm3228 = vcmp.eq.f32.partialorder %v1378, %v3204
        %vm3229 = vcmp.eq.f32.partialorder %v1378, %v3207
        %vm3230 = vcmp.eq.f32.partialorder %v1378, %v3210
        %vm3231 = vcmp.eq.f32.partialorder %v1378, %v3213
        %vm3232 = vcmp.eq.f32.partialorder %v1378, %v3216
        %v3233 = vsel %vm3217, %v1337, 0.0
        %v3234 = vsel %vm3218, %v1339, 0.0
        %v3235 = vsel %vm3219, %v1342, 0.0
        %v3236 = vsel %vm3220, %v1344, 0.0
        %v3237 = vsel %vm3221, %v1347, 0.0
        %v3238 = vsel %vm3222, %v1349, 0.0
        %v3239 = vsel %vm3223, %v1352, 0.0
        %v3240 = vsel %vm3224, %v1354, 0.0
        %v3241 = vsel %vm3225, %v1357, 0.0
        %v3242 = vsel %vm3226, %v1359, 0.0
        %v3243 = vsel %vm3227, %v1362, 0.0
        %v3244 = vsel %vm3228, %v1364, 0.0
        %v3245 = vsel %vm3229, %v1367, 0.0
        %v3246 = vsel %vm3230, %v1369, 0.0
        %v3247 = vsel %vm3231, %v1372, 0.0
        %v3248 = vsel %vm3232, %v1374, 0.0
        %v3249 = vsel %vm1477, %v3233, 0.0
        %3250 = vadd.xlane.f32.xlu0 %v3249
        %v3251 = vpop.xlane.xlu0 %3250
        %v3252 = vsel %vm1477, %v3234, 0.0
        %3253 = vadd.xlane.f32.xlu0 %v3252
        %v3254 = vpop.xlane.xlu0 %3253
        %v3255 = vsel %vm1477, %v3235, 0.0
        %3256 = vadd.xlane.f32.xlu0 %v3255
        %v3257 = vpop.xlane.xlu0 %3256
        %v3258 = vsel %vm1477, %v3236, 0.0
        %3259 = vadd.xlane.f32.xlu0 %v3258
        %v3260 = vpop.xlane.xlu0 %3259
        %v3261 = vsel %vm1477, %v3237, 0.0
        %3262 = vadd.xlane.f32.xlu0 %v3261
        %v3263 = vpop.xlane.xlu0 %3262
        %v3264 = vsel %vm1477, %v3238, 0.0
        %3265 = vadd.xlane.f32.xlu0 %v3264
        %v3266 = vpop.xlane.xlu0 %3265
        %v3267 = vsel %vm1477, %v3239, 0.0
        %3268 = vadd.xlane.f32.xlu0 %v3267
        %v3269 = vpop.xlane.xlu0 %3268
        %v3270 = vsel %vm1477, %v3240, 0.0
        %3271 = vadd.xlane.f32.xlu0 %v3270
        %v3272 = vpop.xlane.xlu0 %3271
        %v3273 = vsel %vm1477, %v3241, 0.0
        %3274 = vadd.xlane.f32.xlu0 %v3273
        %v3275 = vpop.xlane.xlu0 %3274
        %v3276 = vsel %vm1477, %v3242, 0.0
        %3277 = vadd.xlane.f32.xlu0 %v3276
        %v3278 = vpop.xlane.xlu0 %3277
        %v3279 = vsel %vm1477, %v3243, 0.0
        %3280 = vadd.xlane.f32.xlu0 %v3279
        %v3281 = vpop.xlane.xlu0 %3280
        %v3282 = vsel %vm1477, %v3244, 0.0
        %3283 = vadd.xlane.f32.xlu0 %v3282
        %v3284 = vpop.xlane.xlu0 %3283
        %v3285 = vsel %vm1477, %v3245, 0.0
        %3286 = vadd.xlane.f32.xlu0 %v3285
        %v3287 = vpop.xlane.xlu0 %3286
        %v3288 = vsel %vm1477, %v3246, 0.0
        %3289 = vadd.xlane.f32.xlu0 %v3288
        %v3290 = vpop.xlane.xlu0 %3289
        %v3291 = vsel %vm1477, %v3247, 0.0
        %3292 = vadd.xlane.f32.xlu0 %v3291
        %v3293 = vpop.xlane.xlu0 %3292
        %v3294 = vsel %vm1477, %v3248, 0.0
        %3295 = vadd.xlane.f32.xlu0 %v3294
        %v3296 = vpop.xlane.xlu0 %3295
        %v3297 = vsel %vm3152, %v3251, %v3136
        %v3298 = vsel %vm3152, %v3254, %v3137
        %v3299 = vsel %vm3152, %v3257, %v3138
        %v3300 = vsel %vm3152, %v3260, %v3139
        %v3301 = vsel %vm3152, %v3263, %v3140
        %v3302 = vsel %vm3152, %v3266, %v3141
        %v3303 = vsel %vm3152, %v3269, %v3142
        %v3304 = vsel %vm3152, %v3272, %v3143
        %v3305 = vsel %vm3152, %v3275, %v3144
        %v3306 = vsel %vm3152, %v3278, %v3145
        %v3307 = vsel %vm3152, %v3281, %v3146
        %v3308 = vsel %vm3152, %v3284, %v3147
        %v3309 = vsel %vm3152, %v3287, %v3148
        %v3310 = vsel %vm3152, %v3290, %v3149
        %v3311 = vsel %vm3152, %v3293, %v3150
        %v3312 = vsel %vm3152, %v3296, %v3151
        %vm3313 = vcmp.eq.s32.totalorder %v1377, 12
        %v3314 = vsel %vm3313, %v513, 0.0
        %v3315 = vsel %vm3313, %v514, 0.0
        %v3316 = vsel %vm3313, %v515, 0.0
        %v3317 = vsel %vm3313, %v516, 0.0
        %v3318 = vsel %vm3313, %v517, 0.0
        %v3319 = vsel %vm3313, %v518, 0.0
        %v3320 = vsel %vm3313, %v519, 0.0
        %v3321 = vsel %vm3313, %v520, 0.0
        %v3322 = vsel %vm3313, %v521, 0.0
        %v3323 = vsel %vm3313, %v522, 0.0
        %v3324 = vsel %vm3313, %v523, 0.0
        %v3325 = vsel %vm3313, %v524, 0.0
        %v3326 = vsel %vm3313, %v525, 0.0
        %v3327 = vsel %vm3313, %v526, 0.0
        %v3328 = vsel %vm3313, %v527, 0.0
        %v3329 = vsel %vm3313, %v528, 0.0
        %v3330 = vsel %vm1396, %v3314, 0.0
        %3331 = vadd.xlane.f32.xlu0 %v3330
        %v3332 = vpop.xlane.xlu0 %3331
        %v3333 = vsel %vm1396, %v3315, 0.0
        %3334 = vadd.xlane.f32.xlu0 %v3333
        %v3335 = vpop.xlane.xlu0 %3334
        %v3336 = vsel %vm1396, %v3316, 0.0
        %3337 = vadd.xlane.f32.xlu0 %v3336
        %v3338 = vpop.xlane.xlu0 %3337
        %v3339 = vsel %vm1396, %v3317, 0.0
        %3340 = vadd.xlane.f32.xlu0 %v3339
        %v3341 = vpop.xlane.xlu0 %3340
        %v3342 = vsel %vm1396, %v3318, 0.0
        %3343 = vadd.xlane.f32.xlu0 %v3342
        %v3344 = vpop.xlane.xlu0 %3343
        %v3345 = vsel %vm1396, %v3319, 0.0
        %3346 = vadd.xlane.f32.xlu0 %v3345
        %v3347 = vpop.xlane.xlu0 %3346
        %v3348 = vsel %vm1396, %v3320, 0.0
        %3349 = vadd.xlane.f32.xlu0 %v3348
        %v3350 = vpop.xlane.xlu0 %3349
        %v3351 = vsel %vm1396, %v3321, 0.0
        %3352 = vadd.xlane.f32.xlu0 %v3351
        %v3353 = vpop.xlane.xlu0 %3352
        %v3354 = vsel %vm1396, %v3322, 0.0
        %3355 = vadd.xlane.f32.xlu0 %v3354
        %v3356 = vpop.xlane.xlu0 %3355
        %v3357 = vsel %vm1396, %v3323, 0.0
        %3358 = vadd.xlane.f32.xlu0 %v3357
        %v3359 = vpop.xlane.xlu0 %3358
        %v3360 = vsel %vm1396, %v3324, 0.0
        %3361 = vadd.xlane.f32.xlu0 %v3360
        %v3362 = vpop.xlane.xlu0 %3361
        %v3363 = vsel %vm1396, %v3325, 0.0
        %3364 = vadd.xlane.f32.xlu0 %v3363
        %v3365 = vpop.xlane.xlu0 %3364
        %v3366 = vsel %vm1396, %v3326, 0.0
        %3367 = vadd.xlane.f32.xlu0 %v3366
        %v3368 = vpop.xlane.xlu0 %3367
        %v3369 = vsel %vm1396, %v3327, 0.0
        %3370 = vadd.xlane.f32.xlu0 %v3369
        %v3371 = vpop.xlane.xlu0 %3370
        %v3372 = vsel %vm1396, %v3328, 0.0
        %3373 = vadd.xlane.f32.xlu0 %v3372
        %v3374 = vpop.xlane.xlu0 %3373
        %v3375 = vsel %vm1396, %v3329, 0.0
        %3376 = vadd.xlane.f32.xlu0 %v3375
        %v3377 = vpop.xlane.xlu0 %3376
        %vm3378 = vcmp.eq.f32.partialorder %v1378, %v3332
        %vm3379 = vcmp.eq.f32.partialorder %v1378, %v3335
        %vm3380 = vcmp.eq.f32.partialorder %v1378, %v3338
        %vm3381 = vcmp.eq.f32.partialorder %v1378, %v3341
        %vm3382 = vcmp.eq.f32.partialorder %v1378, %v3344
        %vm3383 = vcmp.eq.f32.partialorder %v1378, %v3347
        %vm3384 = vcmp.eq.f32.partialorder %v1378, %v3350
        %vm3385 = vcmp.eq.f32.partialorder %v1378, %v3353
        %vm3386 = vcmp.eq.f32.partialorder %v1378, %v3356
        %vm3387 = vcmp.eq.f32.partialorder %v1378, %v3359
        %vm3388 = vcmp.eq.f32.partialorder %v1378, %v3362
        %vm3389 = vcmp.eq.f32.partialorder %v1378, %v3365
        %vm3390 = vcmp.eq.f32.partialorder %v1378, %v3368
        %vm3391 = vcmp.eq.f32.partialorder %v1378, %v3371
        %vm3392 = vcmp.eq.f32.partialorder %v1378, %v3374
        %vm3393 = vcmp.eq.f32.partialorder %v1378, %v3377
        %v3394 = vsel %vm3378, %v1337, 0.0
        %v3395 = vsel %vm3379, %v1339, 0.0
        %v3396 = vsel %vm3380, %v1342, 0.0
        %v3397 = vsel %vm3381, %v1344, 0.0
        %v3398 = vsel %vm3382, %v1347, 0.0
        %v3399 = vsel %vm3383, %v1349, 0.0
        %v3400 = vsel %vm3384, %v1352, 0.0
        %v3401 = vsel %vm3385, %v1354, 0.0
        %v3402 = vsel %vm3386, %v1357, 0.0
        %v3403 = vsel %vm3387, %v1359, 0.0
        %v3404 = vsel %vm3388, %v1362, 0.0
        %v3405 = vsel %vm3389, %v1364, 0.0
        %v3406 = vsel %vm3390, %v1367, 0.0
        %v3407 = vsel %vm3391, %v1369, 0.0
        %v3408 = vsel %vm3392, %v1372, 0.0
        %v3409 = vsel %vm3393, %v1374, 0.0
        %v3410 = vsel %vm1477, %v3394, 0.0
        %3411 = vadd.xlane.f32.xlu0 %v3410
        %v3412 = vpop.xlane.xlu0 %3411
        %v3413 = vsel %vm1477, %v3395, 0.0
        %3414 = vadd.xlane.f32.xlu0 %v3413
        %v3415 = vpop.xlane.xlu0 %3414
        %v3416 = vsel %vm1477, %v3396, 0.0
        %3417 = vadd.xlane.f32.xlu0 %v3416
        %v3418 = vpop.xlane.xlu0 %3417
        %v3419 = vsel %vm1477, %v3397, 0.0
        %3420 = vadd.xlane.f32.xlu0 %v3419
        %v3421 = vpop.xlane.xlu0 %3420
        %v3422 = vsel %vm1477, %v3398, 0.0
        %3423 = vadd.xlane.f32.xlu0 %v3422
        %v3424 = vpop.xlane.xlu0 %3423
        %v3425 = vsel %vm1477, %v3399, 0.0
        %3426 = vadd.xlane.f32.xlu0 %v3425
        %v3427 = vpop.xlane.xlu0 %3426
        %v3428 = vsel %vm1477, %v3400, 0.0
        %3429 = vadd.xlane.f32.xlu0 %v3428
        %v3430 = vpop.xlane.xlu0 %3429
        %v3431 = vsel %vm1477, %v3401, 0.0
        %3432 = vadd.xlane.f32.xlu0 %v3431
        %v3433 = vpop.xlane.xlu0 %3432
        %v3434 = vsel %vm1477, %v3402, 0.0
        %3435 = vadd.xlane.f32.xlu0 %v3434
        %v3436 = vpop.xlane.xlu0 %3435
        %v3437 = vsel %vm1477, %v3403, 0.0
        %3438 = vadd.xlane.f32.xlu0 %v3437
        %v3439 = vpop.xlane.xlu0 %3438
        %v3440 = vsel %vm1477, %v3404, 0.0
        %3441 = vadd.xlane.f32.xlu0 %v3440
        %v3442 = vpop.xlane.xlu0 %3441
        %v3443 = vsel %vm1477, %v3405, 0.0
        %3444 = vadd.xlane.f32.xlu0 %v3443
        %v3445 = vpop.xlane.xlu0 %3444
        %v3446 = vsel %vm1477, %v3406, 0.0
        %3447 = vadd.xlane.f32.xlu0 %v3446
        %v3448 = vpop.xlane.xlu0 %3447
        %v3449 = vsel %vm1477, %v3407, 0.0
        %3450 = vadd.xlane.f32.xlu0 %v3449
        %v3451 = vpop.xlane.xlu0 %3450
        %v3452 = vsel %vm1477, %v3408, 0.0
        %3453 = vadd.xlane.f32.xlu0 %v3452
        %v3454 = vpop.xlane.xlu0 %3453
        %v3455 = vsel %vm1477, %v3409, 0.0
        %3456 = vadd.xlane.f32.xlu0 %v3455
        %v3457 = vpop.xlane.xlu0 %3456
        %v3458 = vsel %vm3313, %v3412, %v3297
        %v3459 = vsel %vm3313, %v3415, %v3298
        %v3460 = vsel %vm3313, %v3418, %v3299
        %v3461 = vsel %vm3313, %v3421, %v3300
        %v3462 = vsel %vm3313, %v3424, %v3301
        %v3463 = vsel %vm3313, %v3427, %v3302
        %v3464 = vsel %vm3313, %v3430, %v3303
        %v3465 = vsel %vm3313, %v3433, %v3304
        %v3466 = vsel %vm3313, %v3436, %v3305
        %v3467 = vsel %vm3313, %v3439, %v3306
        %v3468 = vsel %vm3313, %v3442, %v3307
        %v3469 = vsel %vm3313, %v3445, %v3308
        %v3470 = vsel %vm3313, %v3448, %v3309
        %v3471 = vsel %vm3313, %v3451, %v3310
        %v3472 = vsel %vm3313, %v3454, %v3311
        %v3473 = vsel %vm3313, %v3457, %v3312
        %vm3474 = vcmp.eq.s32.totalorder %v1377, 13
        %v3475 = vsel %vm3474, %v513, 0.0
        %v3476 = vsel %vm3474, %v514, 0.0
        %v3477 = vsel %vm3474, %v515, 0.0
        %v3478 = vsel %vm3474, %v516, 0.0
        %v3479 = vsel %vm3474, %v517, 0.0
        %v3480 = vsel %vm3474, %v518, 0.0
        %v3481 = vsel %vm3474, %v519, 0.0
        %v3482 = vsel %vm3474, %v520, 0.0
        %v3483 = vsel %vm3474, %v521, 0.0
        %v3484 = vsel %vm3474, %v522, 0.0
        %v3485 = vsel %vm3474, %v523, 0.0
        %v3486 = vsel %vm3474, %v524, 0.0
        %v3487 = vsel %vm3474, %v525, 0.0
        %v3488 = vsel %vm3474, %v526, 0.0
        %v3489 = vsel %vm3474, %v527, 0.0
        %v3490 = vsel %vm3474, %v528, 0.0
        %v3491 = vsel %vm1396, %v3475, 0.0
        %3492 = vadd.xlane.f32.xlu0 %v3491
        %v3493 = vpop.xlane.xlu0 %3492
        %v3494 = vsel %vm1396, %v3476, 0.0
        %3495 = vadd.xlane.f32.xlu0 %v3494
        %v3496 = vpop.xlane.xlu0 %3495
        %v3497 = vsel %vm1396, %v3477, 0.0
        %3498 = vadd.xlane.f32.xlu0 %v3497
        %v3499 = vpop.xlane.xlu0 %3498
        %v3500 = vsel %vm1396, %v3478, 0.0
        %3501 = vadd.xlane.f32.xlu0 %v3500
        %v3502 = vpop.xlane.xlu0 %3501
        %v3503 = vsel %vm1396, %v3479, 0.0
        %3504 = vadd.xlane.f32.xlu0 %v3503
        %v3505 = vpop.xlane.xlu0 %3504
        %v3506 = vsel %vm1396, %v3480, 0.0
        %3507 = vadd.xlane.f32.xlu0 %v3506
        %v3508 = vpop.xlane.xlu0 %3507
        %v3509 = vsel %vm1396, %v3481, 0.0
        %3510 = vadd.xlane.f32.xlu0 %v3509
        %v3511 = vpop.xlane.xlu0 %3510
        %v3512 = vsel %vm1396, %v3482, 0.0
        %3513 = vadd.xlane.f32.xlu0 %v3512
        %v3514 = vpop.xlane.xlu0 %3513
        %v3515 = vsel %vm1396, %v3483, 0.0
        %3516 = vadd.xlane.f32.xlu0 %v3515
        %v3517 = vpop.xlane.xlu0 %3516
        %v3518 = vsel %vm1396, %v3484, 0.0
        %3519 = vadd.xlane.f32.xlu0 %v3518
        %v3520 = vpop.xlane.xlu0 %3519
        %v3521 = vsel %vm1396, %v3485, 0.0
        %3522 = vadd.xlane.f32.xlu0 %v3521
        %v3523 = vpop.xlane.xlu0 %3522
        %v3524 = vsel %vm1396, %v3486, 0.0
        %3525 = vadd.xlane.f32.xlu0 %v3524
        %v3526 = vpop.xlane.xlu0 %3525
        %v3527 = vsel %vm1396, %v3487, 0.0
        %3528 = vadd.xlane.f32.xlu0 %v3527
        %v3529 = vpop.xlane.xlu0 %3528
        %v3530 = vsel %vm1396, %v3488, 0.0
        %3531 = vadd.xlane.f32.xlu0 %v3530
        %v3532 = vpop.xlane.xlu0 %3531
        %v3533 = vsel %vm1396, %v3489, 0.0
        %3534 = vadd.xlane.f32.xlu0 %v3533
        %v3535 = vpop.xlane.xlu0 %3534
        %v3536 = vsel %vm1396, %v3490, 0.0
        %3537 = vadd.xlane.f32.xlu0 %v3536
        %v3538 = vpop.xlane.xlu0 %3537
        %vm3539 = vcmp.eq.f32.partialorder %v1378, %v3493
        %vm3540 = vcmp.eq.f32.partialorder %v1378, %v3496
        %vm3541 = vcmp.eq.f32.partialorder %v1378, %v3499
        %vm3542 = vcmp.eq.f32.partialorder %v1378, %v3502
        %vm3543 = vcmp.eq.f32.partialorder %v1378, %v3505
        %vm3544 = vcmp.eq.f32.partialorder %v1378, %v3508
        %vm3545 = vcmp.eq.f32.partialorder %v1378, %v3511
        %vm3546 = vcmp.eq.f32.partialorder %v1378, %v3514
        %vm3547 = vcmp.eq.f32.partialorder %v1378, %v3517
        %vm3548 = vcmp.eq.f32.partialorder %v1378, %v3520
        %vm3549 = vcmp.eq.f32.partialorder %v1378, %v3523
        %vm3550 = vcmp.eq.f32.partialorder %v1378, %v3526
        %vm3551 = vcmp.eq.f32.partialorder %v1378, %v3529
        %vm3552 = vcmp.eq.f32.partialorder %v1378, %v3532
        %vm3553 = vcmp.eq.f32.partialorder %v1378, %v3535
        %vm3554 = vcmp.eq.f32.partialorder %v1378, %v3538
        %v3555 = vsel %vm3539, %v1337, 0.0
        %v3556 = vsel %vm3540, %v1339, 0.0
        %v3557 = vsel %vm3541, %v1342, 0.0
        %v3558 = vsel %vm3542, %v1344, 0.0
        %v3559 = vsel %vm3543, %v1347, 0.0
        %v3560 = vsel %vm3544, %v1349, 0.0
        %v3561 = vsel %vm3545, %v1352, 0.0
        %v3562 = vsel %vm3546, %v1354, 0.0
        %v3563 = vsel %vm3547, %v1357, 0.0
        %v3564 = vsel %vm3548, %v1359, 0.0
        %v3565 = vsel %vm3549, %v1362, 0.0
        %v3566 = vsel %vm3550, %v1364, 0.0
        %v3567 = vsel %vm3551, %v1367, 0.0
        %v3568 = vsel %vm3552, %v1369, 0.0
        %v3569 = vsel %vm3553, %v1372, 0.0
        %v3570 = vsel %vm3554, %v1374, 0.0
        %v3571 = vsel %vm1477, %v3555, 0.0
        %3572 = vadd.xlane.f32.xlu0 %v3571
        %v3573 = vpop.xlane.xlu0 %3572
        %v3574 = vsel %vm1477, %v3556, 0.0
        %3575 = vadd.xlane.f32.xlu0 %v3574
        %v3576 = vpop.xlane.xlu0 %3575
        %v3577 = vsel %vm1477, %v3557, 0.0
        %3578 = vadd.xlane.f32.xlu0 %v3577
        %v3579 = vpop.xlane.xlu0 %3578
        %v3580 = vsel %vm1477, %v3558, 0.0
        %3581 = vadd.xlane.f32.xlu0 %v3580
        %v3582 = vpop.xlane.xlu0 %3581
        %v3583 = vsel %vm1477, %v3559, 0.0
        %3584 = vadd.xlane.f32.xlu0 %v3583
        %v3585 = vpop.xlane.xlu0 %3584
        %v3586 = vsel %vm1477, %v3560, 0.0
        %3587 = vadd.xlane.f32.xlu0 %v3586
        %v3588 = vpop.xlane.xlu0 %3587
        %v3589 = vsel %vm1477, %v3561, 0.0
        %3590 = vadd.xlane.f32.xlu0 %v3589
        %v3591 = vpop.xlane.xlu0 %3590
        %v3592 = vsel %vm1477, %v3562, 0.0
        %3593 = vadd.xlane.f32.xlu0 %v3592
        %v3594 = vpop.xlane.xlu0 %3593
        %v3595 = vsel %vm1477, %v3563, 0.0
        %3596 = vadd.xlane.f32.xlu0 %v3595
        %v3597 = vpop.xlane.xlu0 %3596
        %v3598 = vsel %vm1477, %v3564, 0.0
        %3599 = vadd.xlane.f32.xlu0 %v3598
        %v3600 = vpop.xlane.xlu0 %3599
        %v3601 = vsel %vm1477, %v3565, 0.0
        %3602 = vadd.xlane.f32.xlu0 %v3601
        %v3603 = vpop.xlane.xlu0 %3602
        %v3604 = vsel %vm1477, %v3566, 0.0
        %3605 = vadd.xlane.f32.xlu0 %v3604
        %v3606 = vpop.xlane.xlu0 %3605
        %v3607 = vsel %vm1477, %v3567, 0.0
        %3608 = vadd.xlane.f32.xlu0 %v3607
        %v3609 = vpop.xlane.xlu0 %3608
        %v3610 = vsel %vm1477, %v3568, 0.0
        %3611 = vadd.xlane.f32.xlu0 %v3610
        %v3612 = vpop.xlane.xlu0 %3611
        %v3613 = vsel %vm1477, %v3569, 0.0
        %3614 = vadd.xlane.f32.xlu0 %v3613
        %v3615 = vpop.xlane.xlu0 %3614
        %v3616 = vsel %vm1477, %v3570, 0.0
        %3617 = vadd.xlane.f32.xlu0 %v3616
        %v3618 = vpop.xlane.xlu0 %3617
        %v3619 = vsel %vm3474, %v3573, %v3458
        %v3620 = vsel %vm3474, %v3576, %v3459
        %v3621 = vsel %vm3474, %v3579, %v3460
        %v3622 = vsel %vm3474, %v3582, %v3461
        %v3623 = vsel %vm3474, %v3585, %v3462
        %v3624 = vsel %vm3474, %v3588, %v3463
        %v3625 = vsel %vm3474, %v3591, %v3464
        %v3626 = vsel %vm3474, %v3594, %v3465
        %v3627 = vsel %vm3474, %v3597, %v3466
        %v3628 = vsel %vm3474, %v3600, %v3467
        %v3629 = vsel %vm3474, %v3603, %v3468
        %v3630 = vsel %vm3474, %v3606, %v3469
        %v3631 = vsel %vm3474, %v3609, %v3470
        %v3632 = vsel %vm3474, %v3612, %v3471
        %v3633 = vsel %vm3474, %v3615, %v3472
        %v3634 = vsel %vm3474, %v3618, %v3473
        %vm3635 = vcmp.eq.s32.totalorder %v1377, 14
        %v3636 = vsel %vm3635, %v513, 0.0
        %v3637 = vsel %vm3635, %v514, 0.0
        %v3638 = vsel %vm3635, %v515, 0.0
        %v3639 = vsel %vm3635, %v516, 0.0
        %v3640 = vsel %vm3635, %v517, 0.0
        %v3641 = vsel %vm3635, %v518, 0.0
        %v3642 = vsel %vm3635, %v519, 0.0
        %v3643 = vsel %vm3635, %v520, 0.0
        %v3644 = vsel %vm3635, %v521, 0.0
        %v3645 = vsel %vm3635, %v522, 0.0
        %v3646 = vsel %vm3635, %v523, 0.0
        %v3647 = vsel %vm3635, %v524, 0.0
        %v3648 = vsel %vm3635, %v525, 0.0
        %v3649 = vsel %vm3635, %v526, 0.0
        %v3650 = vsel %vm3635, %v527, 0.0
        %v3651 = vsel %vm3635, %v528, 0.0
        %v3652 = vsel %vm1396, %v3636, 0.0
        %3653 = vadd.xlane.f32.xlu0 %v3652
        %v3654 = vpop.xlane.xlu0 %3653
        %v3655 = vsel %vm1396, %v3637, 0.0
        %3656 = vadd.xlane.f32.xlu0 %v3655
        %v3657 = vpop.xlane.xlu0 %3656
        %v3658 = vsel %vm1396, %v3638, 0.0
        %3659 = vadd.xlane.f32.xlu0 %v3658
        %v3660 = vpop.xlane.xlu0 %3659
        %v3661 = vsel %vm1396, %v3639, 0.0
        %3662 = vadd.xlane.f32.xlu0 %v3661
        %v3663 = vpop.xlane.xlu0 %3662
        %v3664 = vsel %vm1396, %v3640, 0.0
        %3665 = vadd.xlane.f32.xlu0 %v3664
        %v3666 = vpop.xlane.xlu0 %3665
        %v3667 = vsel %vm1396, %v3641, 0.0
        %3668 = vadd.xlane.f32.xlu0 %v3667
        %v3669 = vpop.xlane.xlu0 %3668
        %v3670 = vsel %vm1396, %v3642, 0.0
        %3671 = vadd.xlane.f32.xlu0 %v3670
        %v3672 = vpop.xlane.xlu0 %3671
        %v3673 = vsel %vm1396, %v3643, 0.0
        %3674 = vadd.xlane.f32.xlu0 %v3673
        %v3675 = vpop.xlane.xlu0 %3674
        %v3676 = vsel %vm1396, %v3644, 0.0
        %3677 = vadd.xlane.f32.xlu0 %v3676
        %v3678 = vpop.xlane.xlu0 %3677
        %v3679 = vsel %vm1396, %v3645, 0.0
        %3680 = vadd.xlane.f32.xlu0 %v3679
        %v3681 = vpop.xlane.xlu0 %3680
        %v3682 = vsel %vm1396, %v3646, 0.0
        %3683 = vadd.xlane.f32.xlu0 %v3682
        %v3684 = vpop.xlane.xlu0 %3683
        %v3685 = vsel %vm1396, %v3647, 0.0
        %3686 = vadd.xlane.f32.xlu0 %v3685
        %v3687 = vpop.xlane.xlu0 %3686
        %v3688 = vsel %vm1396, %v3648, 0.0
        %3689 = vadd.xlane.f32.xlu0 %v3688
        %v3690 = vpop.xlane.xlu0 %3689
        %v3691 = vsel %vm1396, %v3649, 0.0
        %3692 = vadd.xlane.f32.xlu0 %v3691
        %v3693 = vpop.xlane.xlu0 %3692
        %v3694 = vsel %vm1396, %v3650, 0.0
        %3695 = vadd.xlane.f32.xlu0 %v3694
        %v3696 = vpop.xlane.xlu0 %3695
        %v3697 = vsel %vm1396, %v3651, 0.0
        %3698 = vadd.xlane.f32.xlu0 %v3697
        %v3699 = vpop.xlane.xlu0 %3698
        %vm3700 = vcmp.eq.f32.partialorder %v1378, %v3654
        %vm3701 = vcmp.eq.f32.partialorder %v1378, %v3657
        %vm3702 = vcmp.eq.f32.partialorder %v1378, %v3660
        %vm3703 = vcmp.eq.f32.partialorder %v1378, %v3663
        %vm3704 = vcmp.eq.f32.partialorder %v1378, %v3666
        %vm3705 = vcmp.eq.f32.partialorder %v1378, %v3669
        %vm3706 = vcmp.eq.f32.partialorder %v1378, %v3672
        %vm3707 = vcmp.eq.f32.partialorder %v1378, %v3675
        %vm3708 = vcmp.eq.f32.partialorder %v1378, %v3678
        %vm3709 = vcmp.eq.f32.partialorder %v1378, %v3681
        %vm3710 = vcmp.eq.f32.partialorder %v1378, %v3684
        %vm3711 = vcmp.eq.f32.partialorder %v1378, %v3687
        %vm3712 = vcmp.eq.f32.partialorder %v1378, %v3690
        %vm3713 = vcmp.eq.f32.partialorder %v1378, %v3693
        %vm3714 = vcmp.eq.f32.partialorder %v1378, %v3696
        %vm3715 = vcmp.eq.f32.partialorder %v1378, %v3699
        %v3716 = vsel %vm3700, %v1337, 0.0
        %v3717 = vsel %vm3701, %v1339, 0.0
        %v3718 = vsel %vm3702, %v1342, 0.0
        %v3719 = vsel %vm3703, %v1344, 0.0
        %v3720 = vsel %vm3704, %v1347, 0.0
        %v3721 = vsel %vm3705, %v1349, 0.0
        %v3722 = vsel %vm3706, %v1352, 0.0
        %v3723 = vsel %vm3707, %v1354, 0.0
        %v3724 = vsel %vm3708, %v1357, 0.0
        %v3725 = vsel %vm3709, %v1359, 0.0
        %v3726 = vsel %vm3710, %v1362, 0.0
        %v3727 = vsel %vm3711, %v1364, 0.0
        %v3728 = vsel %vm3712, %v1367, 0.0
        %v3729 = vsel %vm3713, %v1369, 0.0
        %v3730 = vsel %vm3714, %v1372, 0.0
        %v3731 = vsel %vm3715, %v1374, 0.0
        %v3732 = vsel %vm1477, %v3716, 0.0
        %3733 = vadd.xlane.f32.xlu0 %v3732
        %v3734 = vpop.xlane.xlu0 %3733
        %v3735 = vsel %vm1477, %v3717, 0.0
        %3736 = vadd.xlane.f32.xlu0 %v3735
        %v3737 = vpop.xlane.xlu0 %3736
        %v3738 = vsel %vm1477, %v3718, 0.0
        %3739 = vadd.xlane.f32.xlu0 %v3738
        %v3740 = vpop.xlane.xlu0 %3739
        %v3741 = vsel %vm1477, %v3719, 0.0
        %3742 = vadd.xlane.f32.xlu0 %v3741
        %v3743 = vpop.xlane.xlu0 %3742
        %v3744 = vsel %vm1477, %v3720, 0.0
        %3745 = vadd.xlane.f32.xlu0 %v3744
        %v3746 = vpop.xlane.xlu0 %3745
        %v3747 = vsel %vm1477, %v3721, 0.0
        %3748 = vadd.xlane.f32.xlu0 %v3747
        %v3749 = vpop.xlane.xlu0 %3748
        %v3750 = vsel %vm1477, %v3722, 0.0
        %3751 = vadd.xlane.f32.xlu0 %v3750
        %v3752 = vpop.xlane.xlu0 %3751
        %v3753 = vsel %vm1477, %v3723, 0.0
        %3754 = vadd.xlane.f32.xlu0 %v3753
        %v3755 = vpop.xlane.xlu0 %3754
        %v3756 = vsel %vm1477, %v3724, 0.0
        %3757 = vadd.xlane.f32.xlu0 %v3756
        %v3758 = vpop.xlane.xlu0 %3757
        %v3759 = vsel %vm1477, %v3725, 0.0
        %3760 = vadd.xlane.f32.xlu0 %v3759
        %v3761 = vpop.xlane.xlu0 %3760
        %v3762 = vsel %vm1477, %v3726, 0.0
        %3763 = vadd.xlane.f32.xlu0 %v3762
        %v3764 = vpop.xlane.xlu0 %3763
        %v3765 = vsel %vm1477, %v3727, 0.0
        %3766 = vadd.xlane.f32.xlu0 %v3765
        %v3767 = vpop.xlane.xlu0 %3766
        %v3768 = vsel %vm1477, %v3728, 0.0
        %3769 = vadd.xlane.f32.xlu0 %v3768
        %v3770 = vpop.xlane.xlu0 %3769
        %v3771 = vsel %vm1477, %v3729, 0.0
        %3772 = vadd.xlane.f32.xlu0 %v3771
        %v3773 = vpop.xlane.xlu0 %3772
        %v3774 = vsel %vm1477, %v3730, 0.0
        %3775 = vadd.xlane.f32.xlu0 %v3774
        %v3776 = vpop.xlane.xlu0 %3775
        %v3777 = vsel %vm1477, %v3731, 0.0
        %3778 = vadd.xlane.f32.xlu0 %v3777
        %v3779 = vpop.xlane.xlu0 %3778
        %v3780 = vsel %vm3635, %v3734, %v3619
        %v3781 = vsel %vm3635, %v3737, %v3620
        %v3782 = vsel %vm3635, %v3740, %v3621
        %v3783 = vsel %vm3635, %v3743, %v3622
        %v3784 = vsel %vm3635, %v3746, %v3623
        %v3785 = vsel %vm3635, %v3749, %v3624
        %v3786 = vsel %vm3635, %v3752, %v3625
        %v3787 = vsel %vm3635, %v3755, %v3626
        %v3788 = vsel %vm3635, %v3758, %v3627
        %v3789 = vsel %vm3635, %v3761, %v3628
        %v3790 = vsel %vm3635, %v3764, %v3629
        %v3791 = vsel %vm3635, %v3767, %v3630
        %v3792 = vsel %vm3635, %v3770, %v3631
        %v3793 = vsel %vm3635, %v3773, %v3632
        %v3794 = vsel %vm3635, %v3776, %v3633
        %v3795 = vsel %vm3635, %v3779, %v3634
        %v3796 = vtanh.pop %v3780
        %v3797 = vtanh.pop %v3781
        %v3798 = vtanh.pop %v3782
        %v3799 = vtanh.pop %v3783
        %v3800 = vtanh.pop %v3784
        %v3801 = vtanh.pop %v3785
        %v3802 = vtanh.pop %v3786
        %v3803 = vtanh.pop %v3787
        %v3804 = vtanh.pop %v3788
        %v3805 = vtanh.pop %v3789
        %v3806 = vtanh.pop %v3790
        %v3807 = vtanh.pop %v3791
        %v3808 = vtanh.pop %v3792
        %v3809 = vtanh.pop %v3793
        %v3810 = vtanh.pop %v3794
        %v3811 = vtanh.pop %v3795
        %v3812 = vmul.f32 %v3796, 1.442695
        %v3813 = vpow.pop %v3812
        %v3814 = vmul.f32 %v3797, 1.442695
        %v3815 = vpow.pop %v3814
        %v3816 = vmul.f32 %v3798, 1.442695
        %v3817 = vpow.pop %v3816
        %v3818 = vmul.f32 %v3799, 1.442695
        %v3819 = vpow.pop %v3818
        %v3820 = vmul.f32 %v3800, 1.442695
        %v3821 = vpow.pop %v3820
        %v3822 = vmul.f32 %v3801, 1.442695
        %v3823 = vpow.pop %v3822
        %v3824 = vmul.f32 %v3802, 1.442695
        %v3825 = vpow.pop %v3824
        %v3826 = vmul.f32 %v3803, 1.442695
        %v3827 = vpow.pop %v3826
        %v3828 = vmul.f32 %v3804, 1.442695
        %v3829 = vpow.pop %v3828
        %v3830 = vmul.f32 %v3805, 1.442695
        %v3831 = vpow.pop %v3830
        %v3832 = vmul.f32 %v3806, 1.442695
        %v3833 = vpow.pop %v3832
        %v3834 = vmul.f32 %v3807, 1.442695
        %v3835 = vpow.pop %v3834
        %v3836 = vmul.f32 %v3808, 1.442695
        %v3837 = vpow.pop %v3836
        %v3838 = vmul.f32 %v3809, 1.442695
        %v3839 = vpow.pop %v3838
        %v3840 = vmul.f32 %v3810, 1.442695
        %v3841 = vpow.pop %v3840
        %v3842 = vmul.f32 %v3811, 1.442695
        %v3843 = vpow.pop %v3842
        %v3844 = vsel %vm1396, %v3813, 0.0
        %3845 = vadd.xlane.f32.xlu0 %v3844
        %v3846 = vpop.xlane.xlu0 %3845
        %v3847 = vsel %vm1396, %v3815, 0.0
        %3848 = vadd.xlane.f32.xlu0 %v3847
        %v3849 = vpop.xlane.xlu0 %3848
        %v3850 = vsel %vm1396, %v3817, 0.0
        %3851 = vadd.xlane.f32.xlu0 %v3850
        %v3852 = vpop.xlane.xlu0 %3851
        %v3853 = vsel %vm1396, %v3819, 0.0
        %3854 = vadd.xlane.f32.xlu0 %v3853
        %v3855 = vpop.xlane.xlu0 %3854
        %v3856 = vsel %vm1396, %v3821, 0.0
        %3857 = vadd.xlane.f32.xlu0 %v3856
        %v3858 = vpop.xlane.xlu0 %3857
        %v3859 = vsel %vm1396, %v3823, 0.0
        %3860 = vadd.xlane.f32.xlu0 %v3859
        %v3861 = vpop.xlane.xlu0 %3860
        %v3862 = vsel %vm1396, %v3825, 0.0
        %3863 = vadd.xlane.f32.xlu0 %v3862
        %v3864 = vpop.xlane.xlu0 %3863
        %v3865 = vsel %vm1396, %v3827, 0.0
        %3866 = vadd.xlane.f32.xlu0 %v3865
        %v3867 = vpop.xlane.xlu0 %3866
        %v3868 = vsel %vm1396, %v3829, 0.0
        %3869 = vadd.xlane.f32.xlu0 %v3868
        %v3870 = vpop.xlane.xlu0 %3869
        %v3871 = vsel %vm1396, %v3831, 0.0
        %3872 = vadd.xlane.f32.xlu0 %v3871
        %v3873 = vpop.xlane.xlu0 %3872
        %v3874 = vsel %vm1396, %v3833, 0.0
        %3875 = vadd.xlane.f32.xlu0 %v3874
        %v3876 = vpop.xlane.xlu0 %3875
        %v3877 = vsel %vm1396, %v3835, 0.0
        %3878 = vadd.xlane.f32.xlu0 %v3877
        %v3879 = vpop.xlane.xlu0 %3878
        %v3880 = vsel %vm1396, %v3837, 0.0
        %3881 = vadd.xlane.f32.xlu0 %v3880
        %v3882 = vpop.xlane.xlu0 %3881
        %v3883 = vsel %vm1396, %v3839, 0.0
        %3884 = vadd.xlane.f32.xlu0 %v3883
        %v3885 = vpop.xlane.xlu0 %3884
        %v3886 = vsel %vm1396, %v3841, 0.0
        %3887 = vadd.xlane.f32.xlu0 %v3886
        %v3888 = vpop.xlane.xlu0 %3887
        %v3889 = vsel %vm1396, %v3843, 0.0
        %3890 = vadd.xlane.f32.xlu0 %v3889
        %v3891 = vpop.xlane.xlu0 %3890
        %v3892 = vrcp.pop %v3846
        %v3893 = vrcp.pop %v3849
        %v3894 = vrcp.pop %v3852
        %v3895 = vrcp.pop %v3855
        %v3896 = vrcp.pop %v3858
        %v3897 = vrcp.pop %v3861
        %v3898 = vrcp.pop %v3864
        %v3899 = vrcp.pop %v3867
        %v3900 = vrcp.pop %v3870
        %v3901 = vrcp.pop %v3873
        %v3902 = vrcp.pop %v3876
        %v3903 = vrcp.pop %v3879
        %v3904 = vrcp.pop %v3882
        %v3905 = vrcp.pop %v3885
        %v3906 = vrcp.pop %v3888
        %v3907 = vrcp.pop %v3891
        %v3908 = vmul.f32 %v3813, %v3892
        %v3909 = vmul.f32 %v3815, %v3893
        %v3910 = vmul.f32 %v3817, %v3894
        %v3911 = vmul.f32 %v3819, %v3895
        %v3912 = vmul.f32 %v3821, %v3896
        %v3913 = vmul.f32 %v3823, %v3897
        %v3914 = vmul.f32 %v3825, %v3898
        %v3915 = vmul.f32 %v3827, %v3899
        %v3916 = vmul.f32 %v3829, %v3900
        %v3917 = vmul.f32 %v3831, %v3901
        %v3918 = vmul.f32 %v3833, %v3902
        %v3919 = vmul.f32 %v3835, %v3903
        %v3920 = vmul.f32 %v3837, %v3904
        %v3921 = vmul.f32 %v3839, %v3905
        %v3922 = vmul.f32 %v3841, %v3906
        %v3923 = vmul.f32 %v3843, %v3907
        %v3924 = vmul.f32 %v3908, %v529
        %v3925 = vmul.f32 %v3909, %v530
        %v3926 = vmul.f32 %v3910, %v531
        %v3927 = vmul.f32 %v3911, %v532
        %v3928 = vmul.f32 %v3912, %v533
        %v3929 = vmul.f32 %v3913, %v534
        %v3930 = vmul.f32 %v3914, %v535
        %v3931 = vmul.f32 %v3915, %v536
        %v3932 = vmul.f32 %v3916, %v537
        %v3933 = vmul.f32 %v3917, %v538
        %v3934 = vmul.f32 %v3918, %v539
        %v3935 = vmul.f32 %v3919, %v540
        %v3936 = vmul.f32 %v3920, %v541
        %v3937 = vmul.f32 %v3921, %v542
        %v3938 = vmul.f32 %v3922, %v543
        %v3939 = vmul.f32 %v3923, %v544
        %v3940 = vsel %vm1396, %v3924, 0.0
        %3941 = vadd.xlane.f32.xlu0 %v3940
        %v3942 = vpop.xlane.xlu0 %3941
        %v3943 = vsel %vm1396, %v3925, 0.0
        %3944 = vadd.xlane.f32.xlu0 %v3943
        %v3945 = vpop.xlane.xlu0 %3944
        %v3946 = vsel %vm1396, %v3926, 0.0
        %3947 = vadd.xlane.f32.xlu0 %v3946
        %v3948 = vpop.xlane.xlu0 %3947
        %v3949 = vsel %vm1396, %v3927, 0.0
        %3950 = vadd.xlane.f32.xlu0 %v3949
        %v3951 = vpop.xlane.xlu0 %3950
        %v3952 = vsel %vm1396, %v3928, 0.0
        %3953 = vadd.xlane.f32.xlu0 %v3952
        %v3954 = vpop.xlane.xlu0 %3953
        %v3955 = vsel %vm1396, %v3929, 0.0
        %3956 = vadd.xlane.f32.xlu0 %v3955
        %v3957 = vpop.xlane.xlu0 %3956
        %v3958 = vsel %vm1396, %v3930, 0.0
        %3959 = vadd.xlane.f32.xlu0 %v3958
        %v3960 = vpop.xlane.xlu0 %3959
        %v3961 = vsel %vm1396, %v3931, 0.0
        %3962 = vadd.xlane.f32.xlu0 %v3961
        %v3963 = vpop.xlane.xlu0 %3962
        %v3964 = vsel %vm1396, %v3932, 0.0
        %3965 = vadd.xlane.f32.xlu0 %v3964
        %v3966 = vpop.xlane.xlu0 %3965
        %v3967 = vsel %vm1396, %v3933, 0.0
        %3968 = vadd.xlane.f32.xlu0 %v3967
        %v3969 = vpop.xlane.xlu0 %3968
        %v3970 = vsel %vm1396, %v3934, 0.0
        %3971 = vadd.xlane.f32.xlu0 %v3970
        %v3972 = vpop.xlane.xlu0 %3971
        %v3973 = vsel %vm1396, %v3935, 0.0
        %3974 = vadd.xlane.f32.xlu0 %v3973
        %v3975 = vpop.xlane.xlu0 %3974
        %v3976 = vsel %vm1396, %v3936, 0.0
        %3977 = vadd.xlane.f32.xlu0 %v3976
        %v3978 = vpop.xlane.xlu0 %3977
        %v3979 = vsel %vm1396, %v3937, 0.0
        %3980 = vadd.xlane.f32.xlu0 %v3979
        %v3981 = vpop.xlane.xlu0 %3980
        %v3982 = vsel %vm1396, %v3938, 0.0
        %3983 = vadd.xlane.f32.xlu0 %v3982
        %v3984 = vpop.xlane.xlu0 %3983
        %v3985 = vsel %vm1396, %v3939, 0.0
        %3986 = vadd.xlane.f32.xlu0 %v3985
        %v3987 = vpop.xlane.xlu0 %3986
        %v3988 = vadd.f32 %v3942, 1e-06
        %v3989 = vadd.f32 %v3945, 1e-06
        %v3990 = vadd.f32 %v3948, 1e-06
        %v3991 = vadd.f32 %v3951, 1e-06
        %v3992 = vadd.f32 %v3954, 1e-06
        %v3993 = vadd.f32 %v3957, 1e-06
        %v3994 = vadd.f32 %v3960, 1e-06
        %v3995 = vadd.f32 %v3963, 1e-06
        %v3996 = vadd.f32 %v3966, 1e-06
        %v3997 = vadd.f32 %v3969, 1e-06
        %v3998 = vadd.f32 %v3972, 1e-06
        %v3999 = vadd.f32 %v3975, 1e-06
        %v4000 = vadd.f32 %v3978, 1e-06
        %v4001 = vadd.f32 %v3981, 1e-06
        %v4002 = vadd.f32 %v3984, 1e-06
        %v4003 = vadd.f32 %v3987, 1e-06
        %v4004 = vrcp.pop %v3988
        %v4005 = vrcp.pop %v3989
        %v4006 = vrcp.pop %v3990
        %v4007 = vrcp.pop %v3991
        %v4008 = vrcp.pop %v3992
        %v4009 = vrcp.pop %v3993
        %v4010 = vrcp.pop %v3994
        %v4011 = vrcp.pop %v3995
        %v4012 = vrcp.pop %v3996
        %v4013 = vrcp.pop %v3997
        %v4014 = vrcp.pop %v3998
        %v4015 = vrcp.pop %v3999
        %v4016 = vrcp.pop %v4000
        %v4017 = vrcp.pop %v4001
        %v4018 = vrcp.pop %v4002
        %v4019 = vrcp.pop %v4003
        %v4020 = vmul.f32 %v3924, %v4004
        %v4021 = vmul.f32 %v3925, %v4005
        %v4022 = vmul.f32 %v3926, %v4006
        %v4023 = vmul.f32 %v3927, %v4007
        %v4024 = vmul.f32 %v3928, %v4008
        %v4025 = vmul.f32 %v3929, %v4009
        %v4026 = vmul.f32 %v3930, %v4010
        %v4027 = vmul.f32 %v3931, %v4011
        %v4028 = vmul.f32 %v3932, %v4012
        %v4029 = vmul.f32 %v3933, %v4013
        %v4030 = vmul.f32 %v3934, %v4014
        %v4031 = vmul.f32 %v3935, %v4015
        %v4032 = vmul.f32 %v3936, %v4016
        %v4033 = vmul.f32 %v3937, %v4017
        %v4034 = vmul.f32 %v3938, %v4018
        %v4035 = vmul.f32 %v3939, %v4019
        %v4036 = vsel %vm1379, %v4020, 0.0
        %v4037 = vsel %vm1379, %v4021, 0.0
        %v4038 = vsel %vm1379, %v4022, 0.0
        %v4039 = vsel %vm1379, %v4023, 0.0
        %v4040 = vsel %vm1379, %v4024, 0.0
        %v4041 = vsel %vm1379, %v4025, 0.0
        %v4042 = vsel %vm1379, %v4026, 0.0
        %v4043 = vsel %vm1379, %v4027, 0.0
        %v4044 = vsel %vm1379, %v4028, 0.0
        %v4045 = vsel %vm1379, %v4029, 0.0
        %v4046 = vsel %vm1379, %v4030, 0.0
        %v4047 = vsel %vm1379, %v4031, 0.0
        %v4048 = vsel %vm1379, %v4032, 0.0
        %v4049 = vsel %vm1379, %v4033, 0.0
        %v4050 = vsel %vm1379, %v4034, 0.0
        %v4051 = vsel %vm1379, %v4035, 0.0
        %v4052 = vsel %vm1396, %v4036, 0.0
        %4053 = vadd.xlane.f32.xlu0 %v4052
        %v4054 = vpop.xlane.xlu0 %4053
        %v4055 = vsel %vm1396, %v4037, 0.0
        %4056 = vadd.xlane.f32.xlu0 %v4055
        %v4057 = vpop.xlane.xlu0 %4056
        %v4058 = vsel %vm1396, %v4038, 0.0
        %4059 = vadd.xlane.f32.xlu0 %v4058
        %v4060 = vpop.xlane.xlu0 %4059
        %v4061 = vsel %vm1396, %v4039, 0.0
        %4062 = vadd.xlane.f32.xlu0 %v4061
        %v4063 = vpop.xlane.xlu0 %4062
        %v4064 = vsel %vm1396, %v4040, 0.0
        %4065 = vadd.xlane.f32.xlu0 %v4064
        %v4066 = vpop.xlane.xlu0 %4065
        %v4067 = vsel %vm1396, %v4041, 0.0
        %4068 = vadd.xlane.f32.xlu0 %v4067
        %v4069 = vpop.xlane.xlu0 %4068
        %v4070 = vsel %vm1396, %v4042, 0.0
        %4071 = vadd.xlane.f32.xlu0 %v4070
        %v4072 = vpop.xlane.xlu0 %4071
        %v4073 = vsel %vm1396, %v4043, 0.0
        %4074 = vadd.xlane.f32.xlu0 %v4073
        %v4075 = vpop.xlane.xlu0 %4074
        %v4076 = vsel %vm1396, %v4044, 0.0
        %4077 = vadd.xlane.f32.xlu0 %v4076
        %v4078 = vpop.xlane.xlu0 %4077
        %v4079 = vsel %vm1396, %v4045, 0.0
        %4080 = vadd.xlane.f32.xlu0 %v4079
        %v4081 = vpop.xlane.xlu0 %4080
        %v4082 = vsel %vm1396, %v4046, 0.0
        %4083 = vadd.xlane.f32.xlu0 %v4082
        %v4084 = vpop.xlane.xlu0 %4083
        %v4085 = vsel %vm1396, %v4047, 0.0
        %4086 = vadd.xlane.f32.xlu0 %v4085
        %v4087 = vpop.xlane.xlu0 %4086
        %v4088 = vsel %vm1396, %v4048, 0.0
        %4089 = vadd.xlane.f32.xlu0 %v4088
        %v4090 = vpop.xlane.xlu0 %4089
        %v4091 = vsel %vm1396, %v4049, 0.0
        %4092 = vadd.xlane.f32.xlu0 %v4091
        %v4093 = vpop.xlane.xlu0 %4092
        %v4094 = vsel %vm1396, %v4050, 0.0
        %4095 = vadd.xlane.f32.xlu0 %v4094
        %v4096 = vpop.xlane.xlu0 %4095
        %v4097 = vsel %vm1396, %v4051, 0.0
        %4098 = vadd.xlane.f32.xlu0 %v4097
        %v4099 = vpop.xlane.xlu0 %4098
        %v4100 = vsel %vm1445, %v4054, 0.0
        %v4101 = vsel %vm1446, %v4057, 0.0
        %v4102 = vsel %vm1447, %v4060, 0.0
        %v4103 = vsel %vm1448, %v4063, 0.0
        %v4104 = vsel %vm1449, %v4066, 0.0
        %v4105 = vsel %vm1450, %v4069, 0.0
        %v4106 = vsel %vm1451, %v4072, 0.0
        %v4107 = vsel %vm1452, %v4075, 0.0
        %v4108 = vsel %vm1453, %v4078, 0.0
        %v4109 = vsel %vm1454, %v4081, 0.0
        %v4110 = vsel %vm1455, %v4084, 0.0
        %v4111 = vsel %vm1456, %v4087, 0.0
        %v4112 = vsel %vm1457, %v4090, 0.0
        %v4113 = vsel %vm1458, %v4093, 0.0
        %v4114 = vsel %vm1459, %v4096, 0.0
        %v4115 = vsel %vm1460, %v4099, 0.0
        %v4116 = vadd.f32 %v4100, 0.0
        %v4117 = vadd.f32 %v4101, 0.0
        %v4118 = vadd.f32 %v4102, 0.0
        %v4119 = vadd.f32 %v4103, 0.0
        %v4120 = vadd.f32 %v4104, 0.0
        %v4121 = vadd.f32 %v4105, 0.0
        %v4122 = vadd.f32 %v4106, 0.0
        %v4123 = vadd.f32 %v4107, 0.0
        %v4124 = vadd.f32 %v4108, 0.0
        %v4125 = vadd.f32 %v4109, 0.0
        %v4126 = vadd.f32 %v4110, 0.0
        %v4127 = vadd.f32 %v4111, 0.0
        %v4128 = vadd.f32 %v4112, 0.0
        %v4129 = vadd.f32 %v4113, 0.0
        %v4130 = vadd.f32 %v4114, 0.0
        %v4131 = vadd.f32 %v4115, 0.0
        %v4132 = vsel %vm1542, %v4020, 0.0
        %v4133 = vsel %vm1542, %v4021, 0.0
        %v4134 = vsel %vm1542, %v4022, 0.0
        %v4135 = vsel %vm1542, %v4023, 0.0
        %v4136 = vsel %vm1542, %v4024, 0.0
        %v4137 = vsel %vm1542, %v4025, 0.0
        %v4138 = vsel %vm1542, %v4026, 0.0
        %v4139 = vsel %vm1542, %v4027, 0.0
        %v4140 = vsel %vm1542, %v4028, 0.0
        %v4141 = vsel %vm1542, %v4029, 0.0
        %v4142 = vsel %vm1542, %v4030, 0.0
        %v4143 = vsel %vm1542, %v4031, 0.0
        %v4144 = vsel %vm1542, %v4032, 0.0
        %v4145 = vsel %vm1542, %v4033, 0.0
        %v4146 = vsel %vm1542, %v4034, 0.0
        %v4147 = vsel %vm1542, %v4035, 0.0
        %v4148 = vsel %vm1396, %v4132, 0.0
        %4149 = vadd.xlane.f32.xlu0 %v4148
        %v4150 = vpop.xlane.xlu0 %4149
        %v4151 = vsel %vm1396, %v4133, 0.0
        %4152 = vadd.xlane.f32.xlu0 %v4151
        %v4153 = vpop.xlane.xlu0 %4152
        %v4154 = vsel %vm1396, %v4134, 0.0
        %4155 = vadd.xlane.f32.xlu0 %v4154
        %v4156 = vpop.xlane.xlu0 %4155
        %v4157 = vsel %vm1396, %v4135, 0.0
        %4158 = vadd.xlane.f32.xlu0 %v4157
        %v4159 = vpop.xlane.xlu0 %4158
        %v4160 = vsel %vm1396, %v4136, 0.0
        %4161 = vadd.xlane.f32.xlu0 %v4160
        %v4162 = vpop.xlane.xlu0 %4161
        %v4163 = vsel %vm1396, %v4137, 0.0
        %4164 = vadd.xlane.f32.xlu0 %v4163
        %v4165 = vpop.xlane.xlu0 %4164
        %v4166 = vsel %vm1396, %v4138, 0.0
        %4167 = vadd.xlane.f32.xlu0 %v4166
        %v4168 = vpop.xlane.xlu0 %4167
        %v4169 = vsel %vm1396, %v4139, 0.0
        %4170 = vadd.xlane.f32.xlu0 %v4169
        %v4171 = vpop.xlane.xlu0 %4170
        %v4172 = vsel %vm1396, %v4140, 0.0
        %4173 = vadd.xlane.f32.xlu0 %v4172
        %v4174 = vpop.xlane.xlu0 %4173
        %v4175 = vsel %vm1396, %v4141, 0.0
        %4176 = vadd.xlane.f32.xlu0 %v4175
        %v4177 = vpop.xlane.xlu0 %4176
        %v4178 = vsel %vm1396, %v4142, 0.0
        %4179 = vadd.xlane.f32.xlu0 %v4178
        %v4180 = vpop.xlane.xlu0 %4179
        %v4181 = vsel %vm1396, %v4143, 0.0
        %4182 = vadd.xlane.f32.xlu0 %v4181
        %v4183 = vpop.xlane.xlu0 %4182
        %v4184 = vsel %vm1396, %v4144, 0.0
        %4185 = vadd.xlane.f32.xlu0 %v4184
        %v4186 = vpop.xlane.xlu0 %4185
        %v4187 = vsel %vm1396, %v4145, 0.0
        %4188 = vadd.xlane.f32.xlu0 %v4187
        %v4189 = vpop.xlane.xlu0 %4188
        %v4190 = vsel %vm1396, %v4146, 0.0
        %4191 = vadd.xlane.f32.xlu0 %v4190
        %v4192 = vpop.xlane.xlu0 %4191
        %v4193 = vsel %vm1396, %v4147, 0.0
        %4194 = vadd.xlane.f32.xlu0 %v4193
        %v4195 = vpop.xlane.xlu0 %4194
        %v4196 = vsel %vm1607, %v4150, 0.0
        %v4197 = vsel %vm1608, %v4153, 0.0
        %v4198 = vsel %vm1609, %v4156, 0.0
        %v4199 = vsel %vm1610, %v4159, 0.0
        %v4200 = vsel %vm1611, %v4162, 0.0
        %v4201 = vsel %vm1612, %v4165, 0.0
        %v4202 = vsel %vm1613, %v4168, 0.0
        %v4203 = vsel %vm1614, %v4171, 0.0
        %v4204 = vsel %vm1615, %v4174, 0.0
        %v4205 = vsel %vm1616, %v4177, 0.0
        %v4206 = vsel %vm1617, %v4180, 0.0
        %v4207 = vsel %vm1618, %v4183, 0.0
        %v4208 = vsel %vm1619, %v4186, 0.0
        %v4209 = vsel %vm1620, %v4189, 0.0
        %v4210 = vsel %vm1621, %v4192, 0.0
        %v4211 = vsel %vm1622, %v4195, 0.0
        %v4212 = vadd.f32 %v4116, %v4196
        %v4213 = vadd.f32 %v4117, %v4197
        %v4214 = vadd.f32 %v4118, %v4198
        %v4215 = vadd.f32 %v4119, %v4199
        %v4216 = vadd.f32 %v4120, %v4200
        %v4217 = vadd.f32 %v4121, %v4201
        %v4218 = vadd.f32 %v4122, %v4202
        %v4219 = vadd.f32 %v4123, %v4203
        %v4220 = vadd.f32 %v4124, %v4204
        %v4221 = vadd.f32 %v4125, %v4205
        %v4222 = vadd.f32 %v4126, %v4206
        %v4223 = vadd.f32 %v4127, %v4207
        %v4224 = vadd.f32 %v4128, %v4208
        %v4225 = vadd.f32 %v4129, %v4209
        %v4226 = vadd.f32 %v4130, %v4210
        %v4227 = vadd.f32 %v4131, %v4211
        %v4228 = vsel %vm1703, %v4020, 0.0
        %v4229 = vsel %vm1703, %v4021, 0.0
        %v4230 = vsel %vm1703, %v4022, 0.0
        %v4231 = vsel %vm1703, %v4023, 0.0
        %v4232 = vsel %vm1703, %v4024, 0.0
        %v4233 = vsel %vm1703, %v4025, 0.0
        %v4234 = vsel %vm1703, %v4026, 0.0
        %v4235 = vsel %vm1703, %v4027, 0.0
        %v4236 = vsel %vm1703, %v4028, 0.0
        %v4237 = vsel %vm1703, %v4029, 0.0
        %v4238 = vsel %vm1703, %v4030, 0.0
        %v4239 = vsel %vm1703, %v4031, 0.0
        %v4240 = vsel %vm1703, %v4032, 0.0
        %v4241 = vsel %vm1703, %v4033, 0.0
        %v4242 = vsel %vm1703, %v4034, 0.0
        %v4243 = vsel %vm1703, %v4035, 0.0
        %v4244 = vsel %vm1396, %v4228, 0.0
        %4245 = vadd.xlane.f32.xlu0 %v4244
        %v4246 = vpop.xlane.xlu0 %4245
        %v4247 = vsel %vm1396, %v4229, 0.0
        %4248 = vadd.xlane.f32.xlu0 %v4247
        %v4249 = vpop.xlane.xlu0 %4248
        %v4250 = vsel %vm1396, %v4230, 0.0
        %4251 = vadd.xlane.f32.xlu0 %v4250
        %v4252 = vpop.xlane.xlu0 %4251
        %v4253 = vsel %vm1396, %v4231, 0.0
        %4254 = vadd.xlane.f32.xlu0 %v4253
        %v4255 = vpop.xlane.xlu0 %4254
        %v4256 = vsel %vm1396, %v4232, 0.0
        %4257 = vadd.xlane.f32.xlu0 %v4256
        %v4258 = vpop.xlane.xlu0 %4257
        %v4259 = vsel %vm1396, %v4233, 0.0
        %4260 = vadd.xlane.f32.xlu0 %v4259
        %v4261 = vpop.xlane.xlu0 %4260
        %v4262 = vsel %vm1396, %v4234, 0.0
        %4263 = vadd.xlane.f32.xlu0 %v4262
        %v4264 = vpop.xlane.xlu0 %4263
        %v4265 = vsel %vm1396, %v4235, 0.0
        %4266 = vadd.xlane.f32.xlu0 %v4265
        %v4267 = vpop.xlane.xlu0 %4266
        %v4268 = vsel %vm1396, %v4236, 0.0
        %4269 = vadd.xlane.f32.xlu0 %v4268
        %v4270 = vpop.xlane.xlu0 %4269
        %v4271 = vsel %vm1396, %v4237, 0.0
        %4272 = vadd.xlane.f32.xlu0 %v4271
        %v4273 = vpop.xlane.xlu0 %4272
        %v4274 = vsel %vm1396, %v4238, 0.0
        %4275 = vadd.xlane.f32.xlu0 %v4274
        %v4276 = vpop.xlane.xlu0 %4275
        %v4277 = vsel %vm1396, %v4239, 0.0
        %4278 = vadd.xlane.f32.xlu0 %v4277
        %v4279 = vpop.xlane.xlu0 %4278
        %v4280 = vsel %vm1396, %v4240, 0.0
        %4281 = vadd.xlane.f32.xlu0 %v4280
        %v4282 = vpop.xlane.xlu0 %4281
        %v4283 = vsel %vm1396, %v4241, 0.0
        %4284 = vadd.xlane.f32.xlu0 %v4283
        %v4285 = vpop.xlane.xlu0 %4284
        %v4286 = vsel %vm1396, %v4242, 0.0
        %4287 = vadd.xlane.f32.xlu0 %v4286
        %v4288 = vpop.xlane.xlu0 %4287
        %v4289 = vsel %vm1396, %v4243, 0.0
        %4290 = vadd.xlane.f32.xlu0 %v4289
        %v4291 = vpop.xlane.xlu0 %4290
        %v4292 = vsel %vm1768, %v4246, 0.0
        %v4293 = vsel %vm1769, %v4249, 0.0
        %v4294 = vsel %vm1770, %v4252, 0.0
        %v4295 = vsel %vm1771, %v4255, 0.0
        %v4296 = vsel %vm1772, %v4258, 0.0
        %v4297 = vsel %vm1773, %v4261, 0.0
        %v4298 = vsel %vm1774, %v4264, 0.0
        %v4299 = vsel %vm1775, %v4267, 0.0
        %v4300 = vsel %vm1776, %v4270, 0.0
        %v4301 = vsel %vm1777, %v4273, 0.0
        %v4302 = vsel %vm1778, %v4276, 0.0
        %v4303 = vsel %vm1779, %v4279, 0.0
        %v4304 = vsel %vm1780, %v4282, 0.0
        %v4305 = vsel %vm1781, %v4285, 0.0
        %v4306 = vsel %vm1782, %v4288, 0.0
        %v4307 = vsel %vm1783, %v4291, 0.0
        %v4308 = vadd.f32 %v4212, %v4292
        %v4309 = vadd.f32 %v4213, %v4293
        %v4310 = vadd.f32 %v4214, %v4294
        %v4311 = vadd.f32 %v4215, %v4295
        %v4312 = vadd.f32 %v4216, %v4296
        %v4313 = vadd.f32 %v4217, %v4297
        %v4314 = vadd.f32 %v4218, %v4298
        %v4315 = vadd.f32 %v4219, %v4299
        %v4316 = vadd.f32 %v4220, %v4300
        %v4317 = vadd.f32 %v4221, %v4301
        %v4318 = vadd.f32 %v4222, %v4302
        %v4319 = vadd.f32 %v4223, %v4303
        %v4320 = vadd.f32 %v4224, %v4304
        %v4321 = vadd.f32 %v4225, %v4305
        %v4322 = vadd.f32 %v4226, %v4306
        %v4323 = vadd.f32 %v4227, %v4307
        %v4324 = vsel %vm1864, %v4020, 0.0
        %v4325 = vsel %vm1864, %v4021, 0.0
        %v4326 = vsel %vm1864, %v4022, 0.0
        %v4327 = vsel %vm1864, %v4023, 0.0
        %v4328 = vsel %vm1864, %v4024, 0.0
        %v4329 = vsel %vm1864, %v4025, 0.0
        %v4330 = vsel %vm1864, %v4026, 0.0
        %v4331 = vsel %vm1864, %v4027, 0.0
        %v4332 = vsel %vm1864, %v4028, 0.0
        %v4333 = vsel %vm1864, %v4029, 0.0
        %v4334 = vsel %vm1864, %v4030, 0.0
        %v4335 = vsel %vm1864, %v4031, 0.0
        %v4336 = vsel %vm1864, %v4032, 0.0
        %v4337 = vsel %vm1864, %v4033, 0.0
        %v4338 = vsel %vm1864, %v4034, 0.0
        %v4339 = vsel %vm1864, %v4035, 0.0
        %v4340 = vsel %vm1396, %v4324, 0.0
        %4341 = vadd.xlane.f32.xlu0 %v4340
        %v4342 = vpop.xlane.xlu0 %4341
        %v4343 = vsel %vm1396, %v4325, 0.0
        %4344 = vadd.xlane.f32.xlu0 %v4343
        %v4345 = vpop.xlane.xlu0 %4344
        %v4346 = vsel %vm1396, %v4326, 0.0
        %4347 = vadd.xlane.f32.xlu0 %v4346
        %v4348 = vpop.xlane.xlu0 %4347
        %v4349 = vsel %vm1396, %v4327, 0.0
        %4350 = vadd.xlane.f32.xlu0 %v4349
        %v4351 = vpop.xlane.xlu0 %4350
        %v4352 = vsel %vm1396, %v4328, 0.0
        %4353 = vadd.xlane.f32.xlu0 %v4352
        %v4354 = vpop.xlane.xlu0 %4353
        %v4355 = vsel %vm1396, %v4329, 0.0
        %4356 = vadd.xlane.f32.xlu0 %v4355
        %v4357 = vpop.xlane.xlu0 %4356
        %v4358 = vsel %vm1396, %v4330, 0.0
        %4359 = vadd.xlane.f32.xlu0 %v4358
        %v4360 = vpop.xlane.xlu0 %4359
        %v4361 = vsel %vm1396, %v4331, 0.0
        %4362 = vadd.xlane.f32.xlu0 %v4361
        %v4363 = vpop.xlane.xlu0 %4362
        %v4364 = vsel %vm1396, %v4332, 0.0
        %4365 = vadd.xlane.f32.xlu0 %v4364
        %v4366 = vpop.xlane.xlu0 %4365
        %v4367 = vsel %vm1396, %v4333, 0.0
        %4368 = vadd.xlane.f32.xlu0 %v4367
        %v4369 = vpop.xlane.xlu0 %4368
        %v4370 = vsel %vm1396, %v4334, 0.0
        %4371 = vadd.xlane.f32.xlu0 %v4370
        %v4372 = vpop.xlane.xlu0 %4371
        %v4373 = vsel %vm1396, %v4335, 0.0
        %4374 = vadd.xlane.f32.xlu0 %v4373
        %v4375 = vpop.xlane.xlu0 %4374
        %v4376 = vsel %vm1396, %v4336, 0.0
        %4377 = vadd.xlane.f32.xlu0 %v4376
        %v4378 = vpop.xlane.xlu0 %4377
        %v4379 = vsel %vm1396, %v4337, 0.0
        %4380 = vadd.xlane.f32.xlu0 %v4379
        %v4381 = vpop.xlane.xlu0 %4380
        %v4382 = vsel %vm1396, %v4338, 0.0
        %4383 = vadd.xlane.f32.xlu0 %v4382
        %v4384 = vpop.xlane.xlu0 %4383
        %v4385 = vsel %vm1396, %v4339, 0.0
        %4386 = vadd.xlane.f32.xlu0 %v4385
        %v4387 = vpop.xlane.xlu0 %4386
        %v4388 = vsel %vm1929, %v4342, 0.0
        %v4389 = vsel %vm1930, %v4345, 0.0
        %v4390 = vsel %vm1931, %v4348, 0.0
        %v4391 = vsel %vm1932, %v4351, 0.0
        %v4392 = vsel %vm1933, %v4354, 0.0
        %v4393 = vsel %vm1934, %v4357, 0.0
        %v4394 = vsel %vm1935, %v4360, 0.0
        %v4395 = vsel %vm1936, %v4363, 0.0
        %v4396 = vsel %vm1937, %v4366, 0.0
        %v4397 = vsel %vm1938, %v4369, 0.0
        %v4398 = vsel %vm1939, %v4372, 0.0
        %v4399 = vsel %vm1940, %v4375, 0.0
        %v4400 = vsel %vm1941, %v4378, 0.0
        %v4401 = vsel %vm1942, %v4381, 0.0
        %v4402 = vsel %vm1943, %v4384, 0.0
        %v4403 = vsel %vm1944, %v4387, 0.0
        %v4404 = vadd.f32 %v4308, %v4388
        %v4405 = vadd.f32 %v4309, %v4389
        %v4406 = vadd.f32 %v4310, %v4390
        %v4407 = vadd.f32 %v4311, %v4391
        %v4408 = vadd.f32 %v4312, %v4392
        %v4409 = vadd.f32 %v4313, %v4393
        %v4410 = vadd.f32 %v4314, %v4394
        %v4411 = vadd.f32 %v4315, %v4395
        %v4412 = vadd.f32 %v4316, %v4396
        %v4413 = vadd.f32 %v4317, %v4397
        %v4414 = vadd.f32 %v4318, %v4398
        %v4415 = vadd.f32 %v4319, %v4399
        %v4416 = vadd.f32 %v4320, %v4400
        %v4417 = vadd.f32 %v4321, %v4401
        %v4418 = vadd.f32 %v4322, %v4402
        %v4419 = vadd.f32 %v4323, %v4403
        %v4420 = vsel %vm2025, %v4020, 0.0
        %v4421 = vsel %vm2025, %v4021, 0.0
        %v4422 = vsel %vm2025, %v4022, 0.0
        %v4423 = vsel %vm2025, %v4023, 0.0
        %v4424 = vsel %vm2025, %v4024, 0.0
        %v4425 = vsel %vm2025, %v4025, 0.0
        %v4426 = vsel %vm2025, %v4026, 0.0
        %v4427 = vsel %vm2025, %v4027, 0.0
        %v4428 = vsel %vm2025, %v4028, 0.0
        %v4429 = vsel %vm2025, %v4029, 0.0
        %v4430 = vsel %vm2025, %v4030, 0.0
        %v4431 = vsel %vm2025, %v4031, 0.0
        %v4432 = vsel %vm2025, %v4032, 0.0
        %v4433 = vsel %vm2025, %v4033, 0.0
        %v4434 = vsel %vm2025, %v4034, 0.0
        %v4435 = vsel %vm2025, %v4035, 0.0
        %v4436 = vsel %vm1396, %v4420, 0.0
        %4437 = vadd.xlane.f32.xlu0 %v4436
        %v4438 = vpop.xlane.xlu0 %4437
        %v4439 = vsel %vm1396, %v4421, 0.0
        %4440 = vadd.xlane.f32.xlu0 %v4439
        %v4441 = vpop.xlane.xlu0 %4440
        %v4442 = vsel %vm1396, %v4422, 0.0
        %4443 = vadd.xlane.f32.xlu0 %v4442
        %v4444 = vpop.xlane.xlu0 %4443
        %v4445 = vsel %vm1396, %v4423, 0.0
        %4446 = vadd.xlane.f32.xlu0 %v4445
        %v4447 = vpop.xlane.xlu0 %4446
        %v4448 = vsel %vm1396, %v4424, 0.0
        %4449 = vadd.xlane.f32.xlu0 %v4448
        %v4450 = vpop.xlane.xlu0 %4449
        %v4451 = vsel %vm1396, %v4425, 0.0
        %4452 = vadd.xlane.f32.xlu0 %v4451
        %v4453 = vpop.xlane.xlu0 %4452
        %v4454 = vsel %vm1396, %v4426, 0.0
        %4455 = vadd.xlane.f32.xlu0 %v4454
        %v4456 = vpop.xlane.xlu0 %4455
        %v4457 = vsel %vm1396, %v4427, 0.0
        %4458 = vadd.xlane.f32.xlu0 %v4457
        %v4459 = vpop.xlane.xlu0 %4458
        %v4460 = vsel %vm1396, %v4428, 0.0
        %4461 = vadd.xlane.f32.xlu0 %v4460
        %v4462 = vpop.xlane.xlu0 %4461
        %v4463 = vsel %vm1396, %v4429, 0.0
        %4464 = vadd.xlane.f32.xlu0 %v4463
        %v4465 = vpop.xlane.xlu0 %4464
        %v4466 = vsel %vm1396, %v4430, 0.0
        %4467 = vadd.xlane.f32.xlu0 %v4466
        %v4468 = vpop.xlane.xlu0 %4467
        %v4469 = vsel %vm1396, %v4431, 0.0
        %4470 = vadd.xlane.f32.xlu0 %v4469
        %v4471 = vpop.xlane.xlu0 %4470
        %v4472 = vsel %vm1396, %v4432, 0.0
        %4473 = vadd.xlane.f32.xlu0 %v4472
        %v4474 = vpop.xlane.xlu0 %4473
        %v4475 = vsel %vm1396, %v4433, 0.0
        %4476 = vadd.xlane.f32.xlu0 %v4475
        %v4477 = vpop.xlane.xlu0 %4476
        %v4478 = vsel %vm1396, %v4434, 0.0
        %4479 = vadd.xlane.f32.xlu0 %v4478
        %v4480 = vpop.xlane.xlu0 %4479
        %v4481 = vsel %vm1396, %v4435, 0.0
        %4482 = vadd.xlane.f32.xlu0 %v4481
        %v4483 = vpop.xlane.xlu0 %4482
        %v4484 = vsel %vm2090, %v4438, 0.0
        %v4485 = vsel %vm2091, %v4441, 0.0
        %v4486 = vsel %vm2092, %v4444, 0.0
        %v4487 = vsel %vm2093, %v4447, 0.0
        %v4488 = vsel %vm2094, %v4450, 0.0
        %v4489 = vsel %vm2095, %v4453, 0.0
        %v4490 = vsel %vm2096, %v4456, 0.0
        %v4491 = vsel %vm2097, %v4459, 0.0
        %v4492 = vsel %vm2098, %v4462, 0.0
        %v4493 = vsel %vm2099, %v4465, 0.0
        %v4494 = vsel %vm2100, %v4468, 0.0
        %v4495 = vsel %vm2101, %v4471, 0.0
        %v4496 = vsel %vm2102, %v4474, 0.0
        %v4497 = vsel %vm2103, %v4477, 0.0
        %v4498 = vsel %vm2104, %v4480, 0.0
        %v4499 = vsel %vm2105, %v4483, 0.0
        %v4500 = vadd.f32 %v4404, %v4484
        %v4501 = vadd.f32 %v4405, %v4485
        %v4502 = vadd.f32 %v4406, %v4486
        %v4503 = vadd.f32 %v4407, %v4487
        %v4504 = vadd.f32 %v4408, %v4488
        %v4505 = vadd.f32 %v4409, %v4489
        %v4506 = vadd.f32 %v4410, %v4490
        %v4507 = vadd.f32 %v4411, %v4491
        %v4508 = vadd.f32 %v4412, %v4492
        %v4509 = vadd.f32 %v4413, %v4493
        %v4510 = vadd.f32 %v4414, %v4494
        %v4511 = vadd.f32 %v4415, %v4495
        %v4512 = vadd.f32 %v4416, %v4496
        %v4513 = vadd.f32 %v4417, %v4497
        %v4514 = vadd.f32 %v4418, %v4498
        %v4515 = vadd.f32 %v4419, %v4499
        %v4516 = vsel %vm2186, %v4020, 0.0
        %v4517 = vsel %vm2186, %v4021, 0.0
        %v4518 = vsel %vm2186, %v4022, 0.0
        %v4519 = vsel %vm2186, %v4023, 0.0
        %v4520 = vsel %vm2186, %v4024, 0.0
        %v4521 = vsel %vm2186, %v4025, 0.0
        %v4522 = vsel %vm2186, %v4026, 0.0
        %v4523 = vsel %vm2186, %v4027, 0.0
        %v4524 = vsel %vm2186, %v4028, 0.0
        %v4525 = vsel %vm2186, %v4029, 0.0
        %v4526 = vsel %vm2186, %v4030, 0.0
        %v4527 = vsel %vm2186, %v4031, 0.0
        %v4528 = vsel %vm2186, %v4032, 0.0
        %v4529 = vsel %vm2186, %v4033, 0.0
        %v4530 = vsel %vm2186, %v4034, 0.0
        %v4531 = vsel %vm2186, %v4035, 0.0
        %v4532 = vsel %vm1396, %v4516, 0.0
        %4533 = vadd.xlane.f32.xlu0 %v4532
        %v4534 = vpop.xlane.xlu0 %4533
        %v4535 = vsel %vm1396, %v4517, 0.0
        %4536 = vadd.xlane.f32.xlu0 %v4535
        %v4537 = vpop.xlane.xlu0 %4536
        %v4538 = vsel %vm1396, %v4518, 0.0
        %4539 = vadd.xlane.f32.xlu0 %v4538
        %v4540 = vpop.xlane.xlu0 %4539
        %v4541 = vsel %vm1396, %v4519, 0.0
        %4542 = vadd.xlane.f32.xlu0 %v4541
        %v4543 = vpop.xlane.xlu0 %4542
        %v4544 = vsel %vm1396, %v4520, 0.0
        %4545 = vadd.xlane.f32.xlu0 %v4544
        %v4546 = vpop.xlane.xlu0 %4545
        %v4547 = vsel %vm1396, %v4521, 0.0
        %4548 = vadd.xlane.f32.xlu0 %v4547
        %v4549 = vpop.xlane.xlu0 %4548
        %v4550 = vsel %vm1396, %v4522, 0.0
        %4551 = vadd.xlane.f32.xlu0 %v4550
        %v4552 = vpop.xlane.xlu0 %4551
        %v4553 = vsel %vm1396, %v4523, 0.0
        %4554 = vadd.xlane.f32.xlu0 %v4553
        %v4555 = vpop.xlane.xlu0 %4554
        %v4556 = vsel %vm1396, %v4524, 0.0
        %4557 = vadd.xlane.f32.xlu0 %v4556
        %v4558 = vpop.xlane.xlu0 %4557
        %v4559 = vsel %vm1396, %v4525, 0.0
        %4560 = vadd.xlane.f32.xlu0 %v4559
        %v4561 = vpop.xlane.xlu0 %4560
        %v4562 = vsel %vm1396, %v4526, 0.0
        %4563 = vadd.xlane.f32.xlu0 %v4562
        %v4564 = vpop.xlane.xlu0 %4563
        %v4565 = vsel %vm1396, %v4527, 0.0
        %4566 = vadd.xlane.f32.xlu0 %v4565
        %v4567 = vpop.xlane.xlu0 %4566
        %v4568 = vsel %vm1396, %v4528, 0.0
        %4569 = vadd.xlane.f32.xlu0 %v4568
        %v4570 = vpop.xlane.xlu0 %4569
        %v4571 = vsel %vm1396, %v4529, 0.0
        %4572 = vadd.xlane.f32.xlu0 %v4571
        %v4573 = vpop.xlane.xlu0 %4572
        %v4574 = vsel %vm1396, %v4530, 0.0
        %4575 = vadd.xlane.f32.xlu0 %v4574
        %v4576 = vpop.xlane.xlu0 %4575
        %v4577 = vsel %vm1396, %v4531, 0.0
        %4578 = vadd.xlane.f32.xlu0 %v4577
        %v4579 = vpop.xlane.xlu0 %4578
        %v4580 = vsel %vm2251, %v4534, 0.0
        %v4581 = vsel %vm2252, %v4537, 0.0
        %v4582 = vsel %vm2253, %v4540, 0.0
        %v4583 = vsel %vm2254, %v4543, 0.0
        %v4584 = vsel %vm2255, %v4546, 0.0
        %v4585 = vsel %vm2256, %v4549, 0.0
        %v4586 = vsel %vm2257, %v4552, 0.0
        %v4587 = vsel %vm2258, %v4555, 0.0
        %v4588 = vsel %vm2259, %v4558, 0.0
        %v4589 = vsel %vm2260, %v4561, 0.0
        %v4590 = vsel %vm2261, %v4564, 0.0
        %v4591 = vsel %vm2262, %v4567, 0.0
        %v4592 = vsel %vm2263, %v4570, 0.0
        %v4593 = vsel %vm2264, %v4573, 0.0
        %v4594 = vsel %vm2265, %v4576, 0.0
        %v4595 = vsel %vm2266, %v4579, 0.0
        %v4596 = vadd.f32 %v4500, %v4580
        %v4597 = vadd.f32 %v4501, %v4581
        %v4598 = vadd.f32 %v4502, %v4582
        %v4599 = vadd.f32 %v4503, %v4583
        %v4600 = vadd.f32 %v4504, %v4584
        %v4601 = vadd.f32 %v4505, %v4585
        %v4602 = vadd.f32 %v4506, %v4586
        %v4603 = vadd.f32 %v4507, %v4587
        %v4604 = vadd.f32 %v4508, %v4588
        %v4605 = vadd.f32 %v4509, %v4589
        %v4606 = vadd.f32 %v4510, %v4590
        %v4607 = vadd.f32 %v4511, %v4591
        %v4608 = vadd.f32 %v4512, %v4592
        %v4609 = vadd.f32 %v4513, %v4593
        %v4610 = vadd.f32 %v4514, %v4594
        %v4611 = vadd.f32 %v4515, %v4595
        %v4612 = vsel %vm2347, %v4020, 0.0
        %v4613 = vsel %vm2347, %v4021, 0.0
        %v4614 = vsel %vm2347, %v4022, 0.0
        %v4615 = vsel %vm2347, %v4023, 0.0
        %v4616 = vsel %vm2347, %v4024, 0.0
        %v4617 = vsel %vm2347, %v4025, 0.0
        %v4618 = vsel %vm2347, %v4026, 0.0
        %v4619 = vsel %vm2347, %v4027, 0.0
        %v4620 = vsel %vm2347, %v4028, 0.0
        %v4621 = vsel %vm2347, %v4029, 0.0
        %v4622 = vsel %vm2347, %v4030, 0.0
        %v4623 = vsel %vm2347, %v4031, 0.0
        %v4624 = vsel %vm2347, %v4032, 0.0
        %v4625 = vsel %vm2347, %v4033, 0.0
        %v4626 = vsel %vm2347, %v4034, 0.0
        %v4627 = vsel %vm2347, %v4035, 0.0
        %v4628 = vsel %vm1396, %v4612, 0.0
        %4629 = vadd.xlane.f32.xlu0 %v4628
        %v4630 = vpop.xlane.xlu0 %4629
        %v4631 = vsel %vm1396, %v4613, 0.0
        %4632 = vadd.xlane.f32.xlu0 %v4631
        %v4633 = vpop.xlane.xlu0 %4632
        %v4634 = vsel %vm1396, %v4614, 0.0
        %4635 = vadd.xlane.f32.xlu0 %v4634
        %v4636 = vpop.xlane.xlu0 %4635
        %v4637 = vsel %vm1396, %v4615, 0.0
        %4638 = vadd.xlane.f32.xlu0 %v4637
        %v4639 = vpop.xlane.xlu0 %4638
        %v4640 = vsel %vm1396, %v4616, 0.0
        %4641 = vadd.xlane.f32.xlu0 %v4640
        %v4642 = vpop.xlane.xlu0 %4641
        %v4643 = vsel %vm1396, %v4617, 0.0
        %4644 = vadd.xlane.f32.xlu0 %v4643
        %v4645 = vpop.xlane.xlu0 %4644
        %v4646 = vsel %vm1396, %v4618, 0.0
        %4647 = vadd.xlane.f32.xlu0 %v4646
        %v4648 = vpop.xlane.xlu0 %4647
        %v4649 = vsel %vm1396, %v4619, 0.0
        %4650 = vadd.xlane.f32.xlu0 %v4649
        %v4651 = vpop.xlane.xlu0 %4650
        %v4652 = vsel %vm1396, %v4620, 0.0
        %4653 = vadd.xlane.f32.xlu0 %v4652
        %v4654 = vpop.xlane.xlu0 %4653
        %v4655 = vsel %vm1396, %v4621, 0.0
        %4656 = vadd.xlane.f32.xlu0 %v4655
        %v4657 = vpop.xlane.xlu0 %4656
        %v4658 = vsel %vm1396, %v4622, 0.0
        %4659 = vadd.xlane.f32.xlu0 %v4658
        %v4660 = vpop.xlane.xlu0 %4659
        %v4661 = vsel %vm1396, %v4623, 0.0
        %4662 = vadd.xlane.f32.xlu0 %v4661
        %v4663 = vpop.xlane.xlu0 %4662
        %v4664 = vsel %vm1396, %v4624, 0.0
        %4665 = vadd.xlane.f32.xlu0 %v4664
        %v4666 = vpop.xlane.xlu0 %4665
        %v4667 = vsel %vm1396, %v4625, 0.0
        %4668 = vadd.xlane.f32.xlu0 %v4667
        %v4669 = vpop.xlane.xlu0 %4668
        %v4670 = vsel %vm1396, %v4626, 0.0
        %4671 = vadd.xlane.f32.xlu0 %v4670
        %v4672 = vpop.xlane.xlu0 %4671
        %v4673 = vsel %vm1396, %v4627, 0.0
        %4674 = vadd.xlane.f32.xlu0 %v4673
        %v4675 = vpop.xlane.xlu0 %4674
        %v4676 = vsel %vm2412, %v4630, 0.0
        %v4677 = vsel %vm2413, %v4633, 0.0
        %v4678 = vsel %vm2414, %v4636, 0.0
        %v4679 = vsel %vm2415, %v4639, 0.0
        %v4680 = vsel %vm2416, %v4642, 0.0
        %v4681 = vsel %vm2417, %v4645, 0.0
        %v4682 = vsel %vm2418, %v4648, 0.0
        %v4683 = vsel %vm2419, %v4651, 0.0
        %v4684 = vsel %vm2420, %v4654, 0.0
        %v4685 = vsel %vm2421, %v4657, 0.0
        %v4686 = vsel %vm2422, %v4660, 0.0
        %v4687 = vsel %vm2423, %v4663, 0.0
        %v4688 = vsel %vm2424, %v4666, 0.0
        %v4689 = vsel %vm2425, %v4669, 0.0
        %v4690 = vsel %vm2426, %v4672, 0.0
        %v4691 = vsel %vm2427, %v4675, 0.0
        %v4692 = vadd.f32 %v4596, %v4676
        %v4693 = vadd.f32 %v4597, %v4677
        %v4694 = vadd.f32 %v4598, %v4678
        %v4695 = vadd.f32 %v4599, %v4679
        %v4696 = vadd.f32 %v4600, %v4680
        %v4697 = vadd.f32 %v4601, %v4681
        %v4698 = vadd.f32 %v4602, %v4682
        %v4699 = vadd.f32 %v4603, %v4683
        %v4700 = vadd.f32 %v4604, %v4684
        %v4701 = vadd.f32 %v4605, %v4685
        %v4702 = vadd.f32 %v4606, %v4686
        %v4703 = vadd.f32 %v4607, %v4687
        %v4704 = vadd.f32 %v4608, %v4688
        %v4705 = vadd.f32 %v4609, %v4689
        %v4706 = vadd.f32 %v4610, %v4690
        %v4707 = vadd.f32 %v4611, %v4691
        %v4708 = vsel %vm2508, %v4020, 0.0
        %v4709 = vsel %vm2508, %v4021, 0.0
        %v4710 = vsel %vm2508, %v4022, 0.0
        %v4711 = vsel %vm2508, %v4023, 0.0
        %v4712 = vsel %vm2508, %v4024, 0.0
        %v4713 = vsel %vm2508, %v4025, 0.0
        %v4714 = vsel %vm2508, %v4026, 0.0
        %v4715 = vsel %vm2508, %v4027, 0.0
        %v4716 = vsel %vm2508, %v4028, 0.0
        %v4717 = vsel %vm2508, %v4029, 0.0
        %v4718 = vsel %vm2508, %v4030, 0.0
        %v4719 = vsel %vm2508, %v4031, 0.0
        %v4720 = vsel %vm2508, %v4032, 0.0
        %v4721 = vsel %vm2508, %v4033, 0.0
        %v4722 = vsel %vm2508, %v4034, 0.0
        %v4723 = vsel %vm2508, %v4035, 0.0
        %v4724 = vsel %vm1396, %v4708, 0.0
        %4725 = vadd.xlane.f32.xlu0 %v4724
        %v4726 = vpop.xlane.xlu0 %4725
        %v4727 = vsel %vm1396, %v4709, 0.0
        %4728 = vadd.xlane.f32.xlu0 %v4727
        %v4729 = vpop.xlane.xlu0 %4728
        %v4730 = vsel %vm1396, %v4710, 0.0
        %4731 = vadd.xlane.f32.xlu0 %v4730
        %v4732 = vpop.xlane.xlu0 %4731
        %v4733 = vsel %vm1396, %v4711, 0.0
        %4734 = vadd.xlane.f32.xlu0 %v4733
        %v4735 = vpop.xlane.xlu0 %4734
        %v4736 = vsel %vm1396, %v4712, 0.0
        %4737 = vadd.xlane.f32.xlu0 %v4736
        %v4738 = vpop.xlane.xlu0 %4737
        %v4739 = vsel %vm1396, %v4713, 0.0
        %4740 = vadd.xlane.f32.xlu0 %v4739
        %v4741 = vpop.xlane.xlu0 %4740
        %v4742 = vsel %vm1396, %v4714, 0.0
        %4743 = vadd.xlane.f32.xlu0 %v4742
        %v4744 = vpop.xlane.xlu0 %4743
        %v4745 = vsel %vm1396, %v4715, 0.0
        %4746 = vadd.xlane.f32.xlu0 %v4745
        %v4747 = vpop.xlane.xlu0 %4746
        %v4748 = vsel %vm1396, %v4716, 0.0
        %4749 = vadd.xlane.f32.xlu0 %v4748
        %v4750 = vpop.xlane.xlu0 %4749
        %v4751 = vsel %vm1396, %v4717, 0.0
        %4752 = vadd.xlane.f32.xlu0 %v4751
        %v4753 = vpop.xlane.xlu0 %4752
        %v4754 = vsel %vm1396, %v4718, 0.0
        %4755 = vadd.xlane.f32.xlu0 %v4754
        %v4756 = vpop.xlane.xlu0 %4755
        %v4757 = vsel %vm1396, %v4719, 0.0
        %4758 = vadd.xlane.f32.xlu0 %v4757
        %v4759 = vpop.xlane.xlu0 %4758
        %v4760 = vsel %vm1396, %v4720, 0.0
        %4761 = vadd.xlane.f32.xlu0 %v4760
        %v4762 = vpop.xlane.xlu0 %4761
        %v4763 = vsel %vm1396, %v4721, 0.0
        %4764 = vadd.xlane.f32.xlu0 %v4763
        %v4765 = vpop.xlane.xlu0 %4764
        %v4766 = vsel %vm1396, %v4722, 0.0
        %4767 = vadd.xlane.f32.xlu0 %v4766
        %v4768 = vpop.xlane.xlu0 %4767
        %v4769 = vsel %vm1396, %v4723, 0.0
        %4770 = vadd.xlane.f32.xlu0 %v4769
        %v4771 = vpop.xlane.xlu0 %4770
        %v4772 = vsel %vm2573, %v4726, 0.0
        %v4773 = vsel %vm2574, %v4729, 0.0
        %v4774 = vsel %vm2575, %v4732, 0.0
        %v4775 = vsel %vm2576, %v4735, 0.0
        %v4776 = vsel %vm2577, %v4738, 0.0
        %v4777 = vsel %vm2578, %v4741, 0.0
        %v4778 = vsel %vm2579, %v4744, 0.0
        %v4779 = vsel %vm2580, %v4747, 0.0
        %v4780 = vsel %vm2581, %v4750, 0.0
        %v4781 = vsel %vm2582, %v4753, 0.0
        %v4782 = vsel %vm2583, %v4756, 0.0
        %v4783 = vsel %vm2584, %v4759, 0.0
        %v4784 = vsel %vm2585, %v4762, 0.0
        %v4785 = vsel %vm2586, %v4765, 0.0
        %v4786 = vsel %vm2587, %v4768, 0.0
        %v4787 = vsel %vm2588, %v4771, 0.0
        %v4788 = vadd.f32 %v4692, %v4772
        %v4789 = vadd.f32 %v4693, %v4773
        %v4790 = vadd.f32 %v4694, %v4774
        %v4791 = vadd.f32 %v4695, %v4775
        %v4792 = vadd.f32 %v4696, %v4776
        %v4793 = vadd.f32 %v4697, %v4777
        %v4794 = vadd.f32 %v4698, %v4778
        %v4795 = vadd.f32 %v4699, %v4779
        %v4796 = vadd.f32 %v4700, %v4780
        %v4797 = vadd.f32 %v4701, %v4781
        %v4798 = vadd.f32 %v4702, %v4782
        %v4799 = vadd.f32 %v4703, %v4783
        %v4800 = vadd.f32 %v4704, %v4784
        %v4801 = vadd.f32 %v4705, %v4785
        %v4802 = vadd.f32 %v4706, %v4786
        %v4803 = vadd.f32 %v4707, %v4787
        %v4804 = vsel %vm2669, %v4020, 0.0
        %v4805 = vsel %vm2669, %v4021, 0.0
        %v4806 = vsel %vm2669, %v4022, 0.0
        %v4807 = vsel %vm2669, %v4023, 0.0
        %v4808 = vsel %vm2669, %v4024, 0.0
        %v4809 = vsel %vm2669, %v4025, 0.0
        %v4810 = vsel %vm2669, %v4026, 0.0
        %v4811 = vsel %vm2669, %v4027, 0.0
        %v4812 = vsel %vm2669, %v4028, 0.0
        %v4813 = vsel %vm2669, %v4029, 0.0
        %v4814 = vsel %vm2669, %v4030, 0.0
        %v4815 = vsel %vm2669, %v4031, 0.0
        %v4816 = vsel %vm2669, %v4032, 0.0
        %v4817 = vsel %vm2669, %v4033, 0.0
        %v4818 = vsel %vm2669, %v4034, 0.0
        %v4819 = vsel %vm2669, %v4035, 0.0
        %v4820 = vsel %vm1396, %v4804, 0.0
        %4821 = vadd.xlane.f32.xlu0 %v4820
        %v4822 = vpop.xlane.xlu0 %4821
        %v4823 = vsel %vm1396, %v4805, 0.0
        %4824 = vadd.xlane.f32.xlu0 %v4823
        %v4825 = vpop.xlane.xlu0 %4824
        %v4826 = vsel %vm1396, %v4806, 0.0
        %4827 = vadd.xlane.f32.xlu0 %v4826
        %v4828 = vpop.xlane.xlu0 %4827
        %v4829 = vsel %vm1396, %v4807, 0.0
        %4830 = vadd.xlane.f32.xlu0 %v4829
        %v4831 = vpop.xlane.xlu0 %4830
        %v4832 = vsel %vm1396, %v4808, 0.0
        %4833 = vadd.xlane.f32.xlu0 %v4832
        %v4834 = vpop.xlane.xlu0 %4833
        %v4835 = vsel %vm1396, %v4809, 0.0
        %4836 = vadd.xlane.f32.xlu0 %v4835
        %v4837 = vpop.xlane.xlu0 %4836
        %v4838 = vsel %vm1396, %v4810, 0.0
        %4839 = vadd.xlane.f32.xlu0 %v4838
        %v4840 = vpop.xlane.xlu0 %4839
        %v4841 = vsel %vm1396, %v4811, 0.0
        %4842 = vadd.xlane.f32.xlu0 %v4841
        %v4843 = vpop.xlane.xlu0 %4842
        %v4844 = vsel %vm1396, %v4812, 0.0
        %4845 = vadd.xlane.f32.xlu0 %v4844
        %v4846 = vpop.xlane.xlu0 %4845
        %v4847 = vsel %vm1396, %v4813, 0.0
        %4848 = vadd.xlane.f32.xlu0 %v4847
        %v4849 = vpop.xlane.xlu0 %4848
        %v4850 = vsel %vm1396, %v4814, 0.0
        %4851 = vadd.xlane.f32.xlu0 %v4850
        %v4852 = vpop.xlane.xlu0 %4851
        %v4853 = vsel %vm1396, %v4815, 0.0
        %4854 = vadd.xlane.f32.xlu0 %v4853
        %v4855 = vpop.xlane.xlu0 %4854
        %v4856 = vsel %vm1396, %v4816, 0.0
        %4857 = vadd.xlane.f32.xlu0 %v4856
        %v4858 = vpop.xlane.xlu0 %4857
        %v4859 = vsel %vm1396, %v4817, 0.0
        %4860 = vadd.xlane.f32.xlu0 %v4859
        %v4861 = vpop.xlane.xlu0 %4860
        %v4862 = vsel %vm1396, %v4818, 0.0
        %4863 = vadd.xlane.f32.xlu0 %v4862
        %v4864 = vpop.xlane.xlu0 %4863
        %v4865 = vsel %vm1396, %v4819, 0.0
        %4866 = vadd.xlane.f32.xlu0 %v4865
        %v4867 = vpop.xlane.xlu0 %4866
        %v4868 = vsel %vm2734, %v4822, 0.0
        %v4869 = vsel %vm2735, %v4825, 0.0
        %v4870 = vsel %vm2736, %v4828, 0.0
        %v4871 = vsel %vm2737, %v4831, 0.0
        %v4872 = vsel %vm2738, %v4834, 0.0
        %v4873 = vsel %vm2739, %v4837, 0.0
        %v4874 = vsel %vm2740, %v4840, 0.0
        %v4875 = vsel %vm2741, %v4843, 0.0
        %v4876 = vsel %vm2742, %v4846, 0.0
        %v4877 = vsel %vm2743, %v4849, 0.0
        %v4878 = vsel %vm2744, %v4852, 0.0
        %v4879 = vsel %vm2745, %v4855, 0.0
        %v4880 = vsel %vm2746, %v4858, 0.0
        %v4881 = vsel %vm2747, %v4861, 0.0
        %v4882 = vsel %vm2748, %v4864, 0.0
        %v4883 = vsel %vm2749, %v4867, 0.0
        %v4884 = vadd.f32 %v4788, %v4868
        %v4885 = vadd.f32 %v4789, %v4869
        %v4886 = vadd.f32 %v4790, %v4870
        %v4887 = vadd.f32 %v4791, %v4871
        %v4888 = vadd.f32 %v4792, %v4872
        %v4889 = vadd.f32 %v4793, %v4873
        %v4890 = vadd.f32 %v4794, %v4874
        %v4891 = vadd.f32 %v4795, %v4875
        %v4892 = vadd.f32 %v4796, %v4876
        %v4893 = vadd.f32 %v4797, %v4877
        %v4894 = vadd.f32 %v4798, %v4878
        %v4895 = vadd.f32 %v4799, %v4879
        %v4896 = vadd.f32 %v4800, %v4880
        %v4897 = vadd.f32 %v4801, %v4881
        %v4898 = vadd.f32 %v4802, %v4882
        %v4899 = vadd.f32 %v4803, %v4883
        %v4900 = vsel %vm2830, %v4020, 0.0
        %v4901 = vsel %vm2830, %v4021, 0.0
        %v4902 = vsel %vm2830, %v4022, 0.0
        %v4903 = vsel %vm2830, %v4023, 0.0
        %v4904 = vsel %vm2830, %v4024, 0.0
        %v4905 = vsel %vm2830, %v4025, 0.0
        %v4906 = vsel %vm2830, %v4026, 0.0
        %v4907 = vsel %vm2830, %v4027, 0.0
        %v4908 = vsel %vm2830, %v4028, 0.0
        %v4909 = vsel %vm2830, %v4029, 0.0
        %v4910 = vsel %vm2830, %v4030, 0.0
        %v4911 = vsel %vm2830, %v4031, 0.0
        %v4912 = vsel %vm2830, %v4032, 0.0
        %v4913 = vsel %vm2830, %v4033, 0.0
        %v4914 = vsel %vm2830, %v4034, 0.0
        %v4915 = vsel %vm2830, %v4035, 0.0
        %v4916 = vsel %vm1396, %v4900, 0.0
        %4917 = vadd.xlane.f32.xlu0 %v4916
        %v4918 = vpop.xlane.xlu0 %4917
        %v4919 = vsel %vm1396, %v4901, 0.0
        %4920 = vadd.xlane.f32.xlu0 %v4919
        %v4921 = vpop.xlane.xlu0 %4920
        %v4922 = vsel %vm1396, %v4902, 0.0
        %4923 = vadd.xlane.f32.xlu0 %v4922
        %v4924 = vpop.xlane.xlu0 %4923
        %v4925 = vsel %vm1396, %v4903, 0.0
        %4926 = vadd.xlane.f32.xlu0 %v4925
        %v4927 = vpop.xlane.xlu0 %4926
        %v4928 = vsel %vm1396, %v4904, 0.0
        %4929 = vadd.xlane.f32.xlu0 %v4928
        %v4930 = vpop.xlane.xlu0 %4929
        %v4931 = vsel %vm1396, %v4905, 0.0
        %4932 = vadd.xlane.f32.xlu0 %v4931
        %v4933 = vpop.xlane.xlu0 %4932
        %v4934 = vsel %vm1396, %v4906, 0.0
        %4935 = vadd.xlane.f32.xlu0 %v4934
        %v4936 = vpop.xlane.xlu0 %4935
        %v4937 = vsel %vm1396, %v4907, 0.0
        %4938 = vadd.xlane.f32.xlu0 %v4937
        %v4939 = vpop.xlane.xlu0 %4938
        %v4940 = vsel %vm1396, %v4908, 0.0
        %4941 = vadd.xlane.f32.xlu0 %v4940
        %v4942 = vpop.xlane.xlu0 %4941
        %v4943 = vsel %vm1396, %v4909, 0.0
        %4944 = vadd.xlane.f32.xlu0 %v4943
        %v4945 = vpop.xlane.xlu0 %4944
        %v4946 = vsel %vm1396, %v4910, 0.0
        %4947 = vadd.xlane.f32.xlu0 %v4946
        %v4948 = vpop.xlane.xlu0 %4947
        %v4949 = vsel %vm1396, %v4911, 0.0
        %4950 = vadd.xlane.f32.xlu0 %v4949
        %v4951 = vpop.xlane.xlu0 %4950
        %v4952 = vsel %vm1396, %v4912, 0.0
        %4953 = vadd.xlane.f32.xlu0 %v4952
        %v4954 = vpop.xlane.xlu0 %4953
        %v4955 = vsel %vm1396, %v4913, 0.0
        %4956 = vadd.xlane.f32.xlu0 %v4955
        %v4957 = vpop.xlane.xlu0 %4956
        %v4958 = vsel %vm1396, %v4914, 0.0
        %4959 = vadd.xlane.f32.xlu0 %v4958
        %v4960 = vpop.xlane.xlu0 %4959
        %v4961 = vsel %vm1396, %v4915, 0.0
        %4962 = vadd.xlane.f32.xlu0 %v4961
        %v4963 = vpop.xlane.xlu0 %4962
        %v4964 = vsel %vm2895, %v4918, 0.0
        %v4965 = vsel %vm2896, %v4921, 0.0
        %v4966 = vsel %vm2897, %v4924, 0.0
        %v4967 = vsel %vm2898, %v4927, 0.0
        %v4968 = vsel %vm2899, %v4930, 0.0
        %v4969 = vsel %vm2900, %v4933, 0.0
        %v4970 = vsel %vm2901, %v4936, 0.0
        %v4971 = vsel %vm2902, %v4939, 0.0
        %v4972 = vsel %vm2903, %v4942, 0.0
        %v4973 = vsel %vm2904, %v4945, 0.0
        %v4974 = vsel %vm2905, %v4948, 0.0
        %v4975 = vsel %vm2906, %v4951, 0.0
        %v4976 = vsel %vm2907, %v4954, 0.0
        %v4977 = vsel %vm2908, %v4957, 0.0
        %v4978 = vsel %vm2909, %v4960, 0.0
        %v4979 = vsel %vm2910, %v4963, 0.0
        %v4980 = vadd.f32 %v4884, %v4964
        %v4981 = vadd.f32 %v4885, %v4965
        %v4982 = vadd.f32 %v4886, %v4966
        %v4983 = vadd.f32 %v4887, %v4967
        %v4984 = vadd.f32 %v4888, %v4968
        %v4985 = vadd.f32 %v4889, %v4969
        %v4986 = vadd.f32 %v4890, %v4970
        %v4987 = vadd.f32 %v4891, %v4971
        %v4988 = vadd.f32 %v4892, %v4972
        %v4989 = vadd.f32 %v4893, %v4973
        %v4990 = vadd.f32 %v4894, %v4974
        %v4991 = vadd.f32 %v4895, %v4975
        %v4992 = vadd.f32 %v4896, %v4976
        %v4993 = vadd.f32 %v4897, %v4977
        %v4994 = vadd.f32 %v4898, %v4978
        %v4995 = vadd.f32 %v4899, %v4979
        %v4996 = vsel %vm2991, %v4020, 0.0
        %v4997 = vsel %vm2991, %v4021, 0.0
        %v4998 = vsel %vm2991, %v4022, 0.0
        %v4999 = vsel %vm2991, %v4023, 0.0
        %v5000 = vsel %vm2991, %v4024, 0.0
        %v5001 = vsel %vm2991, %v4025, 0.0
        %v5002 = vsel %vm2991, %v4026, 0.0
        %v5003 = vsel %vm2991, %v4027, 0.0
        %v5004 = vsel %vm2991, %v4028, 0.0
        %v5005 = vsel %vm2991, %v4029, 0.0
        %v5006 = vsel %vm2991, %v4030, 0.0
        %v5007 = vsel %vm2991, %v4031, 0.0
        %v5008 = vsel %vm2991, %v4032, 0.0
        %v5009 = vsel %vm2991, %v4033, 0.0
        %v5010 = vsel %vm2991, %v4034, 0.0
        %v5011 = vsel %vm2991, %v4035, 0.0
        %v5012 = vsel %vm1396, %v4996, 0.0
        %5013 = vadd.xlane.f32.xlu0 %v5012
        %v5014 = vpop.xlane.xlu0 %5013
        %v5015 = vsel %vm1396, %v4997, 0.0
        %5016 = vadd.xlane.f32.xlu0 %v5015
        %v5017 = vpop.xlane.xlu0 %5016
        %v5018 = vsel %vm1396, %v4998, 0.0
        %5019 = vadd.xlane.f32.xlu0 %v5018
        %v5020 = vpop.xlane.xlu0 %5019
        %v5021 = vsel %vm1396, %v4999, 0.0
        %5022 = vadd.xlane.f32.xlu0 %v5021
        %v5023 = vpop.xlane.xlu0 %5022
        %v5024 = vsel %vm1396, %v5000, 0.0
        %5025 = vadd.xlane.f32.xlu0 %v5024
        %v5026 = vpop.xlane.xlu0 %5025
        %v5027 = vsel %vm1396, %v5001, 0.0
        %5028 = vadd.xlane.f32.xlu0 %v5027
        %v5029 = vpop.xlane.xlu0 %5028
        %v5030 = vsel %vm1396, %v5002, 0.0
        %5031 = vadd.xlane.f32.xlu0 %v5030
        %v5032 = vpop.xlane.xlu0 %5031
        %v5033 = vsel %vm1396, %v5003, 0.0
        %5034 = vadd.xlane.f32.xlu0 %v5033
        %v5035 = vpop.xlane.xlu0 %5034
        %v5036 = vsel %vm1396, %v5004, 0.0
        %5037 = vadd.xlane.f32.xlu0 %v5036
        %v5038 = vpop.xlane.xlu0 %5037
        %v5039 = vsel %vm1396, %v5005, 0.0
        %5040 = vadd.xlane.f32.xlu0 %v5039
        %v5041 = vpop.xlane.xlu0 %5040
        %v5042 = vsel %vm1396, %v5006, 0.0
        %5043 = vadd.xlane.f32.xlu0 %v5042
        %v5044 = vpop.xlane.xlu0 %5043
        %v5045 = vsel %vm1396, %v5007, 0.0
        %5046 = vadd.xlane.f32.xlu0 %v5045
        %v5047 = vpop.xlane.xlu0 %5046
        %v5048 = vsel %vm1396, %v5008, 0.0
        %5049 = vadd.xlane.f32.xlu0 %v5048
        %v5050 = vpop.xlane.xlu0 %5049
        %v5051 = vsel %vm1396, %v5009, 0.0
        %5052 = vadd.xlane.f32.xlu0 %v5051
        %v5053 = vpop.xlane.xlu0 %5052
        %v5054 = vsel %vm1396, %v5010, 0.0
        %5055 = vadd.xlane.f32.xlu0 %v5054
        %v5056 = vpop.xlane.xlu0 %5055
        %v5057 = vsel %vm1396, %v5011, 0.0
        %5058 = vadd.xlane.f32.xlu0 %v5057
        %v5059 = vpop.xlane.xlu0 %5058
        %v5060 = vsel %vm3056, %v5014, 0.0
        %v5061 = vsel %vm3057, %v5017, 0.0
        %v5062 = vsel %vm3058, %v5020, 0.0
        %v5063 = vsel %vm3059, %v5023, 0.0
        %v5064 = vsel %vm3060, %v5026, 0.0
        %v5065 = vsel %vm3061, %v5029, 0.0
        %v5066 = vsel %vm3062, %v5032, 0.0
        %v5067 = vsel %vm3063, %v5035, 0.0
        %v5068 = vsel %vm3064, %v5038, 0.0
        %v5069 = vsel %vm3065, %v5041, 0.0
        %v5070 = vsel %vm3066, %v5044, 0.0
        %v5071 = vsel %vm3067, %v5047, 0.0
        %v5072 = vsel %vm3068, %v5050, 0.0
        %v5073 = vsel %vm3069, %v5053, 0.0
        %v5074 = vsel %vm3070, %v5056, 0.0
        %v5075 = vsel %vm3071, %v5059, 0.0
        %v5076 = vadd.f32 %v4980, %v5060
        %v5077 = vadd.f32 %v4981, %v5061
        %v5078 = vadd.f32 %v4982, %v5062
        %v5079 = vadd.f32 %v4983, %v5063
        %v5080 = vadd.f32 %v4984, %v5064
        %v5081 = vadd.f32 %v4985, %v5065
        %v5082 = vadd.f32 %v4986, %v5066
        %v5083 = vadd.f32 %v4987, %v5067
        %v5084 = vadd.f32 %v4988, %v5068
        %v5085 = vadd.f32 %v4989, %v5069
        %v5086 = vadd.f32 %v4990, %v5070
        %v5087 = vadd.f32 %v4991, %v5071
        %v5088 = vadd.f32 %v4992, %v5072
        %v5089 = vadd.f32 %v4993, %v5073
        %v5090 = vadd.f32 %v4994, %v5074
        %v5091 = vadd.f32 %v4995, %v5075
        %v5092 = vsel %vm3152, %v4020, 0.0
        %v5093 = vsel %vm3152, %v4021, 0.0
        %v5094 = vsel %vm3152, %v4022, 0.0
        %v5095 = vsel %vm3152, %v4023, 0.0
        %v5096 = vsel %vm3152, %v4024, 0.0
        %v5097 = vsel %vm3152, %v4025, 0.0
        %v5098 = vsel %vm3152, %v4026, 0.0
        %v5099 = vsel %vm3152, %v4027, 0.0
        %v5100 = vsel %vm3152, %v4028, 0.0
        %v5101 = vsel %vm3152, %v4029, 0.0
        %v5102 = vsel %vm3152, %v4030, 0.0
        %v5103 = vsel %vm3152, %v4031, 0.0
        %v5104 = vsel %vm3152, %v4032, 0.0
        %v5105 = vsel %vm3152, %v4033, 0.0
        %v5106 = vsel %vm3152, %v4034, 0.0
        %v5107 = vsel %vm3152, %v4035, 0.0
        %v5108 = vsel %vm1396, %v5092, 0.0
        %5109 = vadd.xlane.f32.xlu0 %v5108
        %v5110 = vpop.xlane.xlu0 %5109
        %v5111 = vsel %vm1396, %v5093, 0.0
        %5112 = vadd.xlane.f32.xlu0 %v5111
        %v5113 = vpop.xlane.xlu0 %5112
        %v5114 = vsel %vm1396, %v5094, 0.0
        %5115 = vadd.xlane.f32.xlu0 %v5114
        %v5116 = vpop.xlane.xlu0 %5115
        %v5117 = vsel %vm1396, %v5095, 0.0
        %5118 = vadd.xlane.f32.xlu0 %v5117
        %v5119 = vpop.xlane.xlu0 %5118
        %v5120 = vsel %vm1396, %v5096, 0.0
        %5121 = vadd.xlane.f32.xlu0 %v5120
        %v5122 = vpop.xlane.xlu0 %5121
        %v5123 = vsel %vm1396, %v5097, 0.0
        %5124 = vadd.xlane.f32.xlu0 %v5123
        %v5125 = vpop.xlane.xlu0 %5124
        %v5126 = vsel %vm1396, %v5098, 0.0
        %5127 = vadd.xlane.f32.xlu0 %v5126
        %v5128 = vpop.xlane.xlu0 %5127
        %v5129 = vsel %vm1396, %v5099, 0.0
        %5130 = vadd.xlane.f32.xlu0 %v5129
        %v5131 = vpop.xlane.xlu0 %5130
        %v5132 = vsel %vm1396, %v5100, 0.0
        %5133 = vadd.xlane.f32.xlu0 %v5132
        %v5134 = vpop.xlane.xlu0 %5133
        %v5135 = vsel %vm1396, %v5101, 0.0
        %5136 = vadd.xlane.f32.xlu0 %v5135
        %v5137 = vpop.xlane.xlu0 %5136
        %v5138 = vsel %vm1396, %v5102, 0.0
        %5139 = vadd.xlane.f32.xlu0 %v5138
        %v5140 = vpop.xlane.xlu0 %5139
        %v5141 = vsel %vm1396, %v5103, 0.0
        %5142 = vadd.xlane.f32.xlu0 %v5141
        %v5143 = vpop.xlane.xlu0 %5142
        %v5144 = vsel %vm1396, %v5104, 0.0
        %5145 = vadd.xlane.f32.xlu0 %v5144
        %v5146 = vpop.xlane.xlu0 %5145
        %v5147 = vsel %vm1396, %v5105, 0.0
        %5148 = vadd.xlane.f32.xlu0 %v5147
        %v5149 = vpop.xlane.xlu0 %5148
        %v5150 = vsel %vm1396, %v5106, 0.0
        %5151 = vadd.xlane.f32.xlu0 %v5150
        %v5152 = vpop.xlane.xlu0 %5151
        %v5153 = vsel %vm1396, %v5107, 0.0
        %5154 = vadd.xlane.f32.xlu0 %v5153
        %v5155 = vpop.xlane.xlu0 %5154
        %v5156 = vsel %vm3217, %v5110, 0.0
        %v5157 = vsel %vm3218, %v5113, 0.0
        %v5158 = vsel %vm3219, %v5116, 0.0
        %v5159 = vsel %vm3220, %v5119, 0.0
        %v5160 = vsel %vm3221, %v5122, 0.0
        %v5161 = vsel %vm3222, %v5125, 0.0
        %v5162 = vsel %vm3223, %v5128, 0.0
        %v5163 = vsel %vm3224, %v5131, 0.0
        %v5164 = vsel %vm3225, %v5134, 0.0
        %v5165 = vsel %vm3226, %v5137, 0.0
        %v5166 = vsel %vm3227, %v5140, 0.0
        %v5167 = vsel %vm3228, %v5143, 0.0
        %v5168 = vsel %vm3229, %v5146, 0.0
        %v5169 = vsel %vm3230, %v5149, 0.0
        %v5170 = vsel %vm3231, %v5152, 0.0
        %v5171 = vsel %vm3232, %v5155, 0.0
        %v5172 = vadd.f32 %v5076, %v5156
        %v5173 = vadd.f32 %v5077, %v5157
        %v5174 = vadd.f32 %v5078, %v5158
        %v5175 = vadd.f32 %v5079, %v5159
        %v5176 = vadd.f32 %v5080, %v5160
        %v5177 = vadd.f32 %v5081, %v5161
        %v5178 = vadd.f32 %v5082, %v5162
        %v5179 = vadd.f32 %v5083, %v5163
        %v5180 = vadd.f32 %v5084, %v5164
        %v5181 = vadd.f32 %v5085, %v5165
        %v5182 = vadd.f32 %v5086, %v5166
        %v5183 = vadd.f32 %v5087, %v5167
        %v5184 = vadd.f32 %v5088, %v5168
        %v5185 = vadd.f32 %v5089, %v5169
        %v5186 = vadd.f32 %v5090, %v5170
        %v5187 = vadd.f32 %v5091, %v5171
        %v5188 = vsel %vm3313, %v4020, 0.0
        %v5189 = vsel %vm3313, %v4021, 0.0
        %v5190 = vsel %vm3313, %v4022, 0.0
        %v5191 = vsel %vm3313, %v4023, 0.0
        %v5192 = vsel %vm3313, %v4024, 0.0
        %v5193 = vsel %vm3313, %v4025, 0.0
        %v5194 = vsel %vm3313, %v4026, 0.0
        %v5195 = vsel %vm3313, %v4027, 0.0
        %v5196 = vsel %vm3313, %v4028, 0.0
        %v5197 = vsel %vm3313, %v4029, 0.0
        %v5198 = vsel %vm3313, %v4030, 0.0
        %v5199 = vsel %vm3313, %v4031, 0.0
        %v5200 = vsel %vm3313, %v4032, 0.0
        %v5201 = vsel %vm3313, %v4033, 0.0
        %v5202 = vsel %vm3313, %v4034, 0.0
        %v5203 = vsel %vm3313, %v4035, 0.0
        %v5204 = vsel %vm1396, %v5188, 0.0
        %5205 = vadd.xlane.f32.xlu0 %v5204
        %v5206 = vpop.xlane.xlu0 %5205
        %v5207 = vsel %vm1396, %v5189, 0.0
        %5208 = vadd.xlane.f32.xlu0 %v5207
        %v5209 = vpop.xlane.xlu0 %5208
        %v5210 = vsel %vm1396, %v5190, 0.0
        %5211 = vadd.xlane.f32.xlu0 %v5210
        %v5212 = vpop.xlane.xlu0 %5211
        %v5213 = vsel %vm1396, %v5191, 0.0
        %5214 = vadd.xlane.f32.xlu0 %v5213
        %v5215 = vpop.xlane.xlu0 %5214
        %v5216 = vsel %vm1396, %v5192, 0.0
        %5217 = vadd.xlane.f32.xlu0 %v5216
        %v5218 = vpop.xlane.xlu0 %5217
        %v5219 = vsel %vm1396, %v5193, 0.0
        %5220 = vadd.xlane.f32.xlu0 %v5219
        %v5221 = vpop.xlane.xlu0 %5220
        %v5222 = vsel %vm1396, %v5194, 0.0
        %5223 = vadd.xlane.f32.xlu0 %v5222
        %v5224 = vpop.xlane.xlu0 %5223
        %v5225 = vsel %vm1396, %v5195, 0.0
        %5226 = vadd.xlane.f32.xlu0 %v5225
        %v5227 = vpop.xlane.xlu0 %5226
        %v5228 = vsel %vm1396, %v5196, 0.0
        %5229 = vadd.xlane.f32.xlu0 %v5228
        %v5230 = vpop.xlane.xlu0 %5229
        %v5231 = vsel %vm1396, %v5197, 0.0
        %5232 = vadd.xlane.f32.xlu0 %v5231
        %v5233 = vpop.xlane.xlu0 %5232
        %v5234 = vsel %vm1396, %v5198, 0.0
        %5235 = vadd.xlane.f32.xlu0 %v5234
        %v5236 = vpop.xlane.xlu0 %5235
        %v5237 = vsel %vm1396, %v5199, 0.0
        %5238 = vadd.xlane.f32.xlu0 %v5237
        %v5239 = vpop.xlane.xlu0 %5238
        %v5240 = vsel %vm1396, %v5200, 0.0
        %5241 = vadd.xlane.f32.xlu0 %v5240
        %v5242 = vpop.xlane.xlu0 %5241
        %v5243 = vsel %vm1396, %v5201, 0.0
        %5244 = vadd.xlane.f32.xlu0 %v5243
        %v5245 = vpop.xlane.xlu0 %5244
        %v5246 = vsel %vm1396, %v5202, 0.0
        %5247 = vadd.xlane.f32.xlu0 %v5246
        %v5248 = vpop.xlane.xlu0 %5247
        %v5249 = vsel %vm1396, %v5203, 0.0
        %5250 = vadd.xlane.f32.xlu0 %v5249
        %v5251 = vpop.xlane.xlu0 %5250
        %v5252 = vsel %vm3378, %v5206, 0.0
        %v5253 = vsel %vm3379, %v5209, 0.0
        %v5254 = vsel %vm3380, %v5212, 0.0
        %v5255 = vsel %vm3381, %v5215, 0.0
        %v5256 = vsel %vm3382, %v5218, 0.0
        %v5257 = vsel %vm3383, %v5221, 0.0
        %v5258 = vsel %vm3384, %v5224, 0.0
        %v5259 = vsel %vm3385, %v5227, 0.0
        %v5260 = vsel %vm3386, %v5230, 0.0
        %v5261 = vsel %vm3387, %v5233, 0.0
        %v5262 = vsel %vm3388, %v5236, 0.0
        %v5263 = vsel %vm3389, %v5239, 0.0
        %v5264 = vsel %vm3390, %v5242, 0.0
        %v5265 = vsel %vm3391, %v5245, 0.0
        %v5266 = vsel %vm3392, %v5248, 0.0
        %v5267 = vsel %vm3393, %v5251, 0.0
        %v5268 = vadd.f32 %v5172, %v5252
        %v5269 = vadd.f32 %v5173, %v5253
        %v5270 = vadd.f32 %v5174, %v5254
        %v5271 = vadd.f32 %v5175, %v5255
        %v5272 = vadd.f32 %v5176, %v5256
        %v5273 = vadd.f32 %v5177, %v5257
        %v5274 = vadd.f32 %v5178, %v5258
        %v5275 = vadd.f32 %v5179, %v5259
        %v5276 = vadd.f32 %v5180, %v5260
        %v5277 = vadd.f32 %v5181, %v5261
        %v5278 = vadd.f32 %v5182, %v5262
        %v5279 = vadd.f32 %v5183, %v5263
        %v5280 = vadd.f32 %v5184, %v5264
        %v5281 = vadd.f32 %v5185, %v5265
        %v5282 = vadd.f32 %v5186, %v5266
        %v5283 = vadd.f32 %v5187, %v5267
        %v5284 = vsel %vm3474, %v4020, 0.0
        %v5285 = vsel %vm3474, %v4021, 0.0
        %v5286 = vsel %vm3474, %v4022, 0.0
        %v5287 = vsel %vm3474, %v4023, 0.0
        %v5288 = vsel %vm3474, %v4024, 0.0
        %v5289 = vsel %vm3474, %v4025, 0.0
        %v5290 = vsel %vm3474, %v4026, 0.0
        %v5291 = vsel %vm3474, %v4027, 0.0
        %v5292 = vsel %vm3474, %v4028, 0.0
        %v5293 = vsel %vm3474, %v4029, 0.0
        %v5294 = vsel %vm3474, %v4030, 0.0
        %v5295 = vsel %vm3474, %v4031, 0.0
        %v5296 = vsel %vm3474, %v4032, 0.0
        %v5297 = vsel %vm3474, %v4033, 0.0
        %v5298 = vsel %vm3474, %v4034, 0.0
        %v5299 = vsel %vm3474, %v4035, 0.0
        %v5300 = vsel %vm1396, %v5284, 0.0
        %5301 = vadd.xlane.f32.xlu0 %v5300
        %v5302 = vpop.xlane.xlu0 %5301
        %v5303 = vsel %vm1396, %v5285, 0.0
        %5304 = vadd.xlane.f32.xlu0 %v5303
        %v5305 = vpop.xlane.xlu0 %5304
        %v5306 = vsel %vm1396, %v5286, 0.0
        %5307 = vadd.xlane.f32.xlu0 %v5306
        %v5308 = vpop.xlane.xlu0 %5307
        %v5309 = vsel %vm1396, %v5287, 0.0
        %5310 = vadd.xlane.f32.xlu0 %v5309
        %v5311 = vpop.xlane.xlu0 %5310
        %v5312 = vsel %vm1396, %v5288, 0.0
        %5313 = vadd.xlane.f32.xlu0 %v5312
        %v5314 = vpop.xlane.xlu0 %5313
        %v5315 = vsel %vm1396, %v5289, 0.0
        %5316 = vadd.xlane.f32.xlu0 %v5315
        %v5317 = vpop.xlane.xlu0 %5316
        %v5318 = vsel %vm1396, %v5290, 0.0
        %5319 = vadd.xlane.f32.xlu0 %v5318
        %v5320 = vpop.xlane.xlu0 %5319
        %v5321 = vsel %vm1396, %v5291, 0.0
        %5322 = vadd.xlane.f32.xlu0 %v5321
        %v5323 = vpop.xlane.xlu0 %5322
        %v5324 = vsel %vm1396, %v5292, 0.0
        %5325 = vadd.xlane.f32.xlu0 %v5324
        %v5326 = vpop.xlane.xlu0 %5325
        %v5327 = vsel %vm1396, %v5293, 0.0
        %5328 = vadd.xlane.f32.xlu0 %v5327
        %v5329 = vpop.xlane.xlu0 %5328
        %v5330 = vsel %vm1396, %v5294, 0.0
        %5331 = vadd.xlane.f32.xlu0 %v5330
        %v5332 = vpop.xlane.xlu0 %5331
        %v5333 = vsel %vm1396, %v5295, 0.0
        %5334 = vadd.xlane.f32.xlu0 %v5333
        %v5335 = vpop.xlane.xlu0 %5334
        %v5336 = vsel %vm1396, %v5296, 0.0
        %5337 = vadd.xlane.f32.xlu0 %v5336
        %v5338 = vpop.xlane.xlu0 %5337
        %v5339 = vsel %vm1396, %v5297, 0.0
        %5340 = vadd.xlane.f32.xlu0 %v5339
        %v5341 = vpop.xlane.xlu0 %5340
        %v5342 = vsel %vm1396, %v5298, 0.0
        %5343 = vadd.xlane.f32.xlu0 %v5342
        %v5344 = vpop.xlane.xlu0 %5343
        %v5345 = vsel %vm1396, %v5299, 0.0
        %5346 = vadd.xlane.f32.xlu0 %v5345
        %v5347 = vpop.xlane.xlu0 %5346
        %v5348 = vsel %vm3539, %v5302, 0.0
        %v5349 = vsel %vm3540, %v5305, 0.0
        %v5350 = vsel %vm3541, %v5308, 0.0
        %v5351 = vsel %vm3542, %v5311, 0.0
        %v5352 = vsel %vm3543, %v5314, 0.0
        %v5353 = vsel %vm3544, %v5317, 0.0
        %v5354 = vsel %vm3545, %v5320, 0.0
        %v5355 = vsel %vm3546, %v5323, 0.0
        %v5356 = vsel %vm3547, %v5326, 0.0
        %v5357 = vsel %vm3548, %v5329, 0.0
        %v5358 = vsel %vm3549, %v5332, 0.0
        %v5359 = vsel %vm3550, %v5335, 0.0
        %v5360 = vsel %vm3551, %v5338, 0.0
        %v5361 = vsel %vm3552, %v5341, 0.0
        %v5362 = vsel %vm3553, %v5344, 0.0
        %v5363 = vsel %vm3554, %v5347, 0.0
        %v5364 = vadd.f32 %v5268, %v5348
        %v5365 = vadd.f32 %v5269, %v5349
        %v5366 = vadd.f32 %v5270, %v5350
        %v5367 = vadd.f32 %v5271, %v5351
        %v5368 = vadd.f32 %v5272, %v5352
        %v5369 = vadd.f32 %v5273, %v5353
        %v5370 = vadd.f32 %v5274, %v5354
        %v5371 = vadd.f32 %v5275, %v5355
        %v5372 = vadd.f32 %v5276, %v5356
        %v5373 = vadd.f32 %v5277, %v5357
        %v5374 = vadd.f32 %v5278, %v5358
        %v5375 = vadd.f32 %v5279, %v5359
        %v5376 = vadd.f32 %v5280, %v5360
        %v5377 = vadd.f32 %v5281, %v5361
        %v5378 = vadd.f32 %v5282, %v5362
        %v5379 = vadd.f32 %v5283, %v5363
        %v5380 = vsel %vm3635, %v4020, 0.0
        %v5381 = vsel %vm3635, %v4021, 0.0
        %v5382 = vsel %vm3635, %v4022, 0.0
        %v5383 = vsel %vm3635, %v4023, 0.0
        %v5384 = vsel %vm3635, %v4024, 0.0
        %v5385 = vsel %vm3635, %v4025, 0.0
        %v5386 = vsel %vm3635, %v4026, 0.0
        %v5387 = vsel %vm3635, %v4027, 0.0
        %v5388 = vsel %vm3635, %v4028, 0.0
        %v5389 = vsel %vm3635, %v4029, 0.0
        %v5390 = vsel %vm3635, %v4030, 0.0
        %v5391 = vsel %vm3635, %v4031, 0.0
        %v5392 = vsel %vm3635, %v4032, 0.0
        %v5393 = vsel %vm3635, %v4033, 0.0
        %v5394 = vsel %vm3635, %v4034, 0.0
        %v5395 = vsel %vm3635, %v4035, 0.0
        %v5396 = vsel %vm1396, %v5380, 0.0
        %5397 = vadd.xlane.f32.xlu0 %v5396
        %v5398 = vpop.xlane.xlu0 %5397
        %v5399 = vsel %vm1396, %v5381, 0.0
        %5400 = vadd.xlane.f32.xlu0 %v5399
        %v5401 = vpop.xlane.xlu0 %5400
        %v5402 = vsel %vm1396, %v5382, 0.0
        %5403 = vadd.xlane.f32.xlu0 %v5402
        %v5404 = vpop.xlane.xlu0 %5403
        %v5405 = vsel %vm1396, %v5383, 0.0
        %5406 = vadd.xlane.f32.xlu0 %v5405
        %v5407 = vpop.xlane.xlu0 %5406
        %v5408 = vsel %vm1396, %v5384, 0.0
        %5409 = vadd.xlane.f32.xlu0 %v5408
        %v5410 = vpop.xlane.xlu0 %5409
        %v5411 = vsel %vm1396, %v5385, 0.0
        %5412 = vadd.xlane.f32.xlu0 %v5411
        %v5413 = vpop.xlane.xlu0 %5412
        %v5414 = vsel %vm1396, %v5386, 0.0
        %5415 = vadd.xlane.f32.xlu0 %v5414
        %v5416 = vpop.xlane.xlu0 %5415
        %v5417 = vsel %vm1396, %v5387, 0.0
        %5418 = vadd.xlane.f32.xlu0 %v5417
        %v5419 = vpop.xlane.xlu0 %5418
        %v5420 = vsel %vm1396, %v5388, 0.0
        %5421 = vadd.xlane.f32.xlu0 %v5420
        %v5422 = vpop.xlane.xlu0 %5421
        %v5423 = vsel %vm1396, %v5389, 0.0
        %5424 = vadd.xlane.f32.xlu0 %v5423
        %v5425 = vpop.xlane.xlu0 %5424
        %v5426 = vsel %vm1396, %v5390, 0.0
        %5427 = vadd.xlane.f32.xlu0 %v5426
        %v5428 = vpop.xlane.xlu0 %5427
        %v5429 = vsel %vm1396, %v5391, 0.0
        %5430 = vadd.xlane.f32.xlu0 %v5429
        %v5431 = vpop.xlane.xlu0 %5430
        %v5432 = vsel %vm1396, %v5392, 0.0
        %5433 = vadd.xlane.f32.xlu0 %v5432
        %v5434 = vpop.xlane.xlu0 %5433
        %v5435 = vsel %vm1396, %v5393, 0.0
        %5436 = vadd.xlane.f32.xlu0 %v5435
        %v5437 = vpop.xlane.xlu0 %5436
        %v5438 = vsel %vm1396, %v5394, 0.0
        %5439 = vadd.xlane.f32.xlu0 %v5438
        %v5440 = vpop.xlane.xlu0 %5439
        %v5441 = vsel %vm1396, %v5395, 0.0
        %5442 = vadd.xlane.f32.xlu0 %v5441
        %v5443 = vpop.xlane.xlu0 %5442
        %v5444 = vsel %vm3700, %v5398, 0.0
        %v5445 = vsel %vm3701, %v5401, 0.0
        %v5446 = vsel %vm3702, %v5404, 0.0
        %v5447 = vsel %vm3703, %v5407, 0.0
        %v5448 = vsel %vm3704, %v5410, 0.0
        %v5449 = vsel %vm3705, %v5413, 0.0
        %v5450 = vsel %vm3706, %v5416, 0.0
        %v5451 = vsel %vm3707, %v5419, 0.0
        %v5452 = vsel %vm3708, %v5422, 0.0
        %v5453 = vsel %vm3709, %v5425, 0.0
        %v5454 = vsel %vm3710, %v5428, 0.0
        %v5455 = vsel %vm3711, %v5431, 0.0
        %v5456 = vsel %vm3712, %v5434, 0.0
        %v5457 = vsel %vm3713, %v5437, 0.0
        %v5458 = vsel %vm3714, %v5440, 0.0
        %v5459 = vsel %vm3715, %v5443, 0.0
        %v5460 = vadd.f32 %v5364, %v5444
        %v5461 = vadd.f32 %v5365, %v5445
        %v5462 = vadd.f32 %v5366, %v5446
        %v5463 = vadd.f32 %v5367, %v5447
        %v5464 = vadd.f32 %v5368, %v5448
        %v5465 = vadd.f32 %v5369, %v5449
        %v5466 = vadd.f32 %v5370, %v5450
        %v5467 = vadd.f32 %v5371, %v5451
        %v5468 = vadd.f32 %v5372, %v5452
        %v5469 = vadd.f32 %v5373, %v5453
        %v5470 = vadd.f32 %v5374, %v5454
        %v5471 = vadd.f32 %v5375, %v5455
        %v5472 = vadd.f32 %v5376, %v5456
        %v5473 = vadd.f32 %v5377, %v5457
        %v5474 = vadd.f32 %v5378, %v5458
        %v5475 = vadd.f32 %v5379, %v5459
        %v5476 = vpack.c.bf16 %v5461, %v5460
        %v5477 = vpack.c.bf16 %v5463, %v5462
        %v5478 = vpack.c.bf16 %v5465, %v5464
        %v5479 = vpack.c.bf16 %v5467, %v5466
        %v5480 = vpack.c.bf16 %v5469, %v5468
        %v5481 = vpack.c.bf16 %v5471, %v5470
        %v5482 = vpack.c.bf16 %v5473, %v5472
        %v5483 = vpack.c.bf16 %v5475, %v5474
        %v5484 = vld [vmem:[%s4] sm:$0xf]
        %v5485 = vld [vmem:[%s4 + $0x4] sm:$0xf]
        %v5486 = vld [vmem:[%s4 + $0x8] sm:$0x1]
        %v5490 = vunpack.c.l.b16 %v5484
        %v5491 = vunpack.c.l.b16 %v5485
        %v5492 = vunpack.c.l.b16 %v5486
        %v5493 = vpack.c.b16 %v5491, %v5490
        %v5494 = vpack.c.b16 %v5492, %v5492
        %v5497 = vsel %vm1477, %v5476, 0
        %v5500 = vsel %vm1477, %v5477, 0
        %v5503 = vsel %vm1477, %v5478, 0
        %v5506 = vsel %vm1477, %v5479, 0
        %v5509 = vsel %vm1477, %v5480, 0
        %v5512 = vsel %vm1477, %v5481, 0
        %v5515 = vsel %vm1477, %v5482, 0
        %v5518 = vsel %vm1477, %v5483, 0
        %vm5520 = vcmask 1040384
        %v5521 = vsel 0, 4294967295, 65535
        %v5522 = vsel %vm5520, %v5521, 0
        %v5524 = vand.u32 %v5494, %v5522
        %5526 = vmatpush.bf16.msra.mxu0 0
        %5527 = vmatpush.bf16.msra.mxu0 0
        %5528 = vmatpush.bf16.msra.mxu0 0
        %5529 = vmatpush.bf16.msra.mxu0 0
        %5530 = vmatpush.bf16.msra.mxu0 0
        %5531 = vmatpush.bf16.msra.mxu0 0
        %5532 = vmatpush.bf16.msra.mxu0 %v5524
        %5533 = vmatpush.bf16.msra.mxu0 %v5493
        %5534 = vmatmul.bf16.gmra.mxu0 %v5497
        %v5535 = vpop.f32.mrf.mxu0
        %v5536 = vadd.f32 0.0, %v5535
        %v5537 = vpop.f32.mrf.mxu0
        %v5538 = vadd.f32 0.0, %v5537
        %5539 = vmatmul.bf16.gmra.mxu0 %v5500
        %v5540 = vpop.f32.mrf.mxu0
        %v5541 = vadd.f32 0.0, %v5540
        %v5542 = vpop.f32.mrf.mxu0
        %v5543 = vadd.f32 0.0, %v5542
        %5544 = vmatmul.bf16.gmra.mxu0 %v5503
        %v5545 = vpop.f32.mrf.mxu0
        %v5546 = vadd.f32 0.0, %v5545
        %v5547 = vpop.f32.mrf.mxu0
        %v5548 = vadd.f32 0.0, %v5547
        %5549 = vmatmul.bf16.gmra.mxu0 %v5506
        %v5550 = vpop.f32.mrf.mxu0
        %v5551 = vadd.f32 0.0, %v5550
        %v5552 = vpop.f32.mrf.mxu0
        %v5553 = vadd.f32 0.0, %v5552
        %5554 = vmatmul.bf16.gmra.mxu0 %v5509
        %v5555 = vpop.f32.mrf.mxu0
        %v5556 = vadd.f32 0.0, %v5555
        %v5557 = vpop.f32.mrf.mxu0
        %v5558 = vadd.f32 0.0, %v5557
        %5559 = vmatmul.bf16.gmra.mxu0 %v5512
        %v5560 = vpop.f32.mrf.mxu0
        %v5561 = vadd.f32 0.0, %v5560
        %v5562 = vpop.f32.mrf.mxu0
        %v5563 = vadd.f32 0.0, %v5562
        %5564 = vmatmul.bf16.gmra.mxu0 %v5515
        %v5565 = vpop.f32.mrf.mxu0
        %v5566 = vadd.f32 0.0, %v5565
        %v5567 = vpop.f32.mrf.mxu0
        %v5568 = vadd.f32 0.0, %v5567
        %5569 = vmatmul.bf16.gmra.mxu0 %v5518
        %v5570 = vpop.f32.mrf.mxu0
        %v5571 = vadd.f32 0.0, %v5570
        %v5572 = vpop.f32.mrf.mxu0
        %v5573 = vadd.f32 0.0, %v5572
        %5574 = vdwg.mxu0
        %v5575 = vpack.c.bf16 %v5538, %v5536
        %v5576 = vpack.c.bf16 %v5543, %v5541
        %v5577 = vpack.c.bf16 %v5548, %v5546
        %v5578 = vpack.c.bf16 %v5553, %v5551
        %v5579 = vpack.c.bf16 %v5558, %v5556
        %v5580 = vpack.c.bf16 %v5563, %v5561
        %v5581 = vpack.c.bf16 %v5568, %v5566
        %v5582 = vpack.c.bf16 %v5573, %v5571
        %v5583 = vld [vmem:[#allocation5] sm:$0xf]
        %v5584 = vld [vmem:[#allocation5 + $0x4] sm:$0xf]
        %v5585 = vld [vmem:[#allocation5 + $0x8] sm:$0xf]
        %v5586 = vld [vmem:[#allocation5 + $0xc] sm:$0xf]
        %v5587 = vld [vmem:[#allocation5 + $0x10] sm:$0xf]
        %v5588 = vld [vmem:[#allocation5 + $0x14] sm:$0xf]
        %v5589 = vld [vmem:[#allocation5 + $0x18] sm:$0xf]
        %v5590 = vld [vmem:[#allocation5 + $0x1c] sm:$0xf]
        %v5591 = vld [vmem:[#allocation5 + $0x20] sm:$0xf]
        %v5592 = vld [vmem:[#allocation5 + $0x24] sm:$0xf]
        %v5593 = vld [vmem:[#allocation5 + $0x28] sm:$0xf]
        %v5594 = vld [vmem:[#allocation5 + $0x2c] sm:$0xf]
        %v5595 = vld [vmem:[#allocation5 + $0x30] sm:$0xf]
        %v5596 = vld [vmem:[#allocation5 + $0x34] sm:$0xf]
        %v5597 = vld [vmem:[#allocation5 + $0x38] sm:$0xf]
        %v5598 = vld [vmem:[#allocation5 + $0x3c] sm:$0xf]
        %v5615 = vunpack.c.l.b16 %v5583
        %v5616 = vunpack.c.l.b16 %v5584
        %v5617 = vunpack.c.l.b16 %v5585
        %v5618 = vunpack.c.l.b16 %v5586
        %v5619 = vunpack.c.l.b16 %v5587
        %v5620 = vunpack.c.l.b16 %v5588
        %v5621 = vunpack.c.l.b16 %v5589
        %v5622 = vunpack.c.l.b16 %v5590
        %v5623 = vunpack.c.l.b16 %v5591
        %v5624 = vunpack.c.l.b16 %v5592
        %v5625 = vunpack.c.l.b16 %v5593
        %v5626 = vunpack.c.l.b16 %v5594
        %v5627 = vunpack.c.l.b16 %v5595
        %v5628 = vunpack.c.l.b16 %v5596
        %v5629 = vunpack.c.l.b16 %v5597
        %v5630 = vunpack.c.l.b16 %v5598
        %v5631 = vpack.c.b16 %v5616, %v5615
        %v5632 = vpack.c.b16 %v5618, %v5617
        %v5633 = vpack.c.b16 %v5620, %v5619
        %v5634 = vpack.c.b16 %v5622, %v5621
        %v5635 = vpack.c.b16 %v5624, %v5623
        %v5636 = vpack.c.b16 %v5626, %v5625
        %v5637 = vpack.c.b16 %v5628, %v5627
        %v5638 = vpack.c.b16 %v5630, %v5629
        %5647 = vmatpush.bf16.msra.mxu0 %v5638
        %5648 = vmatpush.bf16.msra.mxu0 %v5637
        %5649 = vmatpush.bf16.msra.mxu0 %v5636
        %5650 = vmatpush.bf16.msra.mxu0 %v5635
        %5651 = vmatpush.bf16.msra.mxu0 %v5634
        %5652 = vmatpush.bf16.msra.mxu0 %v5633
        %5653 = vmatpush.bf16.msra.mxu0 %v5632
        %5654 = vmatpush.bf16.msra.mxu0 %v5631
        %5655 = vmatmul.bf16.gmra.mxu0 %v5575
        %v5656 = vpop.f32.mrf.mxu0
        %v5657 = vadd.f32 0.0, %v5656
        %v5658 = vpop.f32.mrf.mxu0
        %v5659 = vadd.f32 0.0, %v5658
        %5660 = vmatmul.bf16.gmra.mxu0 %v5576
        %v5661 = vpop.f32.mrf.mxu0
        %v5662 = vadd.f32 0.0, %v5661
        %v5663 = vpop.f32.mrf.mxu0
        %v5664 = vadd.f32 0.0, %v5663
        %5665 = vmatmul.bf16.gmra.mxu0 %v5577
        %v5666 = vpop.f32.mrf.mxu0
        %v5667 = vadd.f32 0.0, %v5666
        %v5668 = vpop.f32.mrf.mxu0
        %v5669 = vadd.f32 0.0, %v5668
        %5670 = vmatmul.bf16.gmra.mxu0 %v5578
        %v5671 = vpop.f32.mrf.mxu0
        %v5672 = vadd.f32 0.0, %v5671
        %v5673 = vpop.f32.mrf.mxu0
        %v5674 = vadd.f32 0.0, %v5673
        %5675 = vmatmul.bf16.gmra.mxu0 %v5579
        %v5676 = vpop.f32.mrf.mxu0
        %v5677 = vadd.f32 0.0, %v5676
        %v5678 = vpop.f32.mrf.mxu0
        %v5679 = vadd.f32 0.0, %v5678
        %5680 = vmatmul.bf16.gmra.mxu0 %v5580
        %v5681 = vpop.f32.mrf.mxu0
        %v5682 = vadd.f32 0.0, %v5681
        %v5683 = vpop.f32.mrf.mxu0
        %v5684 = vadd.f32 0.0, %v5683
        %5685 = vmatmul.bf16.gmra.mxu0 %v5581
        %v5686 = vpop.f32.mrf.mxu0
        %v5687 = vadd.f32 0.0, %v5686
        %v5688 = vpop.f32.mrf.mxu0
        %v5689 = vadd.f32 0.0, %v5688
        %5690 = vmatmul.bf16.gmra.mxu0 %v5582
        %v5691 = vpop.f32.mrf.mxu0
        %v5692 = vadd.f32 0.0, %v5691
        %v5693 = vpop.f32.mrf.mxu0
        %v5694 = vadd.f32 0.0, %v5693
        %5695 = vdwg.mxu0
        %v5696 = vadd.f32 %v1216, %v5657
        %v5697 = vadd.f32 %v1218, %v5659
        %v5698 = vadd.f32 %v1221, %v5662
        %v5699 = vadd.f32 %v1223, %v5664
        %v5700 = vadd.f32 %v1226, %v5667
        %v5701 = vadd.f32 %v1228, %v5669
        %v5702 = vadd.f32 %v1231, %v5672
        %v5703 = vadd.f32 %v1233, %v5674
        %v5704 = vadd.f32 %v1236, %v5677
        %v5705 = vadd.f32 %v1238, %v5679
        %v5706 = vadd.f32 %v1241, %v5682
        %v5707 = vadd.f32 %v1243, %v5684
        %v5708 = vadd.f32 %v1246, %v5687
        %v5709 = vadd.f32 %v1248, %v5689
        %v5710 = vadd.f32 %v1251, %v5692
        %v5711 = vadd.f32 %v1253, %v5694
        %v5712 = vld [vmem:[%s9] sm:$0x1]
        %v5714 = vperm.slane %v5712, 0
        %v5716 = vadd.f32 %v5696, %v5714
        %v5717 = vadd.f32 %v5697, %v5714
        %v5718 = vadd.f32 %v5698, %v5714
        %v5719 = vadd.f32 %v5699, %v5714
        %v5720 = vadd.f32 %v5700, %v5714
        %v5721 = vadd.f32 %v5701, %v5714
        %v5722 = vadd.f32 %v5702, %v5714
        %v5723 = vadd.f32 %v5703, %v5714
        %v5724 = vadd.f32 %v5704, %v5714
        %v5725 = vadd.f32 %v5705, %v5714
        %v5726 = vadd.f32 %v5706, %v5714
        %v5727 = vadd.f32 %v5707, %v5714
        %v5728 = vadd.f32 %v5708, %v5714
        %v5729 = vadd.f32 %v5709, %v5714
        %v5730 = vadd.f32 %v5710, %v5714
        %v5731 = vadd.f32 %v5711, %v5714
        %v5732 = vmul.f32 %v5716, %v5716
        %v5733 = vmul.f32 %v5717, %v5717
        %v5734 = vmul.f32 %v5718, %v5718
        %v5735 = vmul.f32 %v5719, %v5719
        %v5736 = vmul.f32 %v5720, %v5720
        %v5737 = vmul.f32 %v5721, %v5721
        %v5738 = vmul.f32 %v5722, %v5722
        %v5739 = vmul.f32 %v5723, %v5723
        %v5740 = vmul.f32 %v5724, %v5724
        %v5741 = vmul.f32 %v5725, %v5725
        %v5742 = vmul.f32 %v5726, %v5726
        %v5743 = vmul.f32 %v5727, %v5727
        %v5744 = vmul.f32 %v5728, %v5728
        %v5745 = vmul.f32 %v5729, %v5729
        %v5746 = vmul.f32 %v5730, %v5730
        %v5747 = vmul.f32 %v5731, %v5731
        %5748 = vadd.xlane.f32.xlu0 %v5732
        %v5749 = vpop.xlane.xlu0 %5748
        %5750 = vadd.xlane.f32.xlu0 %v5733
        %v5751 = vpop.xlane.xlu0 %5750
        %5752 = vadd.xlane.f32.xlu0 %v5734
        %v5753 = vpop.xlane.xlu0 %5752
        %5754 = vadd.xlane.f32.xlu0 %v5735
        %v5755 = vpop.xlane.xlu0 %5754
        %5756 = vadd.xlane.f32.xlu0 %v5736
        %v5757 = vpop.xlane.xlu0 %5756
        %5758 = vadd.xlane.f32.xlu0 %v5737
        %v5759 = vpop.xlane.xlu0 %5758
        %5760 = vadd.xlane.f32.xlu0 %v5738
        %v5761 = vpop.xlane.xlu0 %5760
        %5762 = vadd.xlane.f32.xlu0 %v5739
        %v5763 = vpop.xlane.xlu0 %5762
        %5764 = vadd.xlane.f32.xlu0 %v5740
        %v5765 = vpop.xlane.xlu0 %5764
        %5766 = vadd.xlane.f32.xlu0 %v5741
        %v5767 = vpop.xlane.xlu0 %5766
        %5768 = vadd.xlane.f32.xlu0 %v5742
        %v5769 = vpop.xlane.xlu0 %5768
        %5770 = vadd.xlane.f32.xlu0 %v5743
        %v5771 = vpop.xlane.xlu0 %5770
        %5772 = vadd.xlane.f32.xlu0 %v5744
        %v5773 = vpop.xlane.xlu0 %5772
        %5774 = vadd.xlane.f32.xlu0 %v5745
        %v5775 = vpop.xlane.xlu0 %5774
        %5776 = vadd.xlane.f32.xlu0 %v5746
        %v5777 = vpop.xlane.xlu0 %5776
        %5778 = vadd.xlane.f32.xlu0 %v5747
        %v5779 = vpop.xlane.xlu0 %5778
        %v5780 = vrsqrt.pop %v5749
        %v5781 = vmul.f32 %v5780, %v5749
        %v5782 = vmul.f32 %v5781, %v5780
        %v5783 = vmul.f32 0.5, %v5782
        %v5784 = vsub.f32 1.5, %v5783
        %v5785 = vmul.f32 %v5780, %v5784
        %v5786 = vmul.f32 %v5749, %v5785
        %vm5787 = vcmp.eq.f32.partialorder %v5749, inf
        %v5788 = vsel %vm5787, %v5749, %v5786
        %vm5789 = vcmp.eq.f32.partialorder %v5749, 0.0
        %v5790 = vand.u32 %v5749, 2147483648
        %v5791 = vsel %vm5789, %v5790, %v5788
        %v5792 = vrsqrt.pop %v5751
        %v5793 = vmul.f32 %v5792, %v5751
        %v5794 = vmul.f32 %v5793, %v5792
        %v5795 = vmul.f32 0.5, %v5794
        %v5796 = vsub.f32 1.5, %v5795
        %v5797 = vmul.f32 %v5792, %v5796
        %v5798 = vmul.f32 %v5751, %v5797
        %vm5799 = vcmp.eq.f32.partialorder %v5751, inf
        %v5800 = vsel %vm5799, %v5751, %v5798
        %vm5801 = vcmp.eq.f32.partialorder %v5751, 0.0
        %v5802 = vand.u32 %v5751, 2147483648
        %v5803 = vsel %vm5801, %v5802, %v5800
        %v5804 = vrsqrt.pop %v5753
        %v5805 = vmul.f32 %v5804, %v5753
        %v5806 = vmul.f32 %v5805, %v5804
        %v5807 = vmul.f32 0.5, %v5806
        %v5808 = vsub.f32 1.5, %v5807
        %v5809 = vmul.f32 %v5804, %v5808
        %v5810 = vmul.f32 %v5753, %v5809
        %vm5811 = vcmp.eq.f32.partialorder %v5753, inf
        %v5812 = vsel %vm5811, %v5753, %v5810
        %vm5813 = vcmp.eq.f32.partialorder %v5753, 0.0
        %v5814 = vand.u32 %v5753, 2147483648
        %v5815 = vsel %vm5813, %v5814, %v5812
        %v5816 = vrsqrt.pop %v5755
        %v5817 = vmul.f32 %v5816, %v5755
        %v5818 = vmul.f32 %v5817, %v5816
        %v5819 = vmul.f32 0.5, %v5818
        %v5820 = vsub.f32 1.5, %v5819
        %v5821 = vmul.f32 %v5816, %v5820
        %v5822 = vmul.f32 %v5755, %v5821
        %vm5823 = vcmp.eq.f32.partialorder %v5755, inf
        %v5824 = vsel %vm5823, %v5755, %v5822
        %vm5825 = vcmp.eq.f32.partialorder %v5755, 0.0
        %v5826 = vand.u32 %v5755, 2147483648
        %v5827 = vsel %vm5825, %v5826, %v5824
        %v5828 = vrsqrt.pop %v5757
        %v5829 = vmul.f32 %v5828, %v5757
        %v5830 = vmul.f32 %v5829, %v5828
        %v5831 = vmul.f32 0.5, %v5830
        %v5832 = vsub.f32 1.5, %v5831
        %v5833 = vmul.f32 %v5828, %v5832
        %v5834 = vmul.f32 %v5757, %v5833
        %vm5835 = vcmp.eq.f32.partialorder %v5757, inf
        %v5836 = vsel %vm5835, %v5757, %v5834
        %vm5837 = vcmp.eq.f32.partialorder %v5757, 0.0
        %v5838 = vand.u32 %v5757, 2147483648
        %v5839 = vsel %vm5837, %v5838, %v5836
        %v5840 = vrsqrt.pop %v5759
        %v5841 = vmul.f32 %v5840, %v5759
        %v5842 = vmul.f32 %v5841, %v5840
        %v5843 = vmul.f32 0.5, %v5842
        %v5844 = vsub.f32 1.5, %v5843
        %v5845 = vmul.f32 %v5840, %v5844
        %v5846 = vmul.f32 %v5759, %v5845
        %vm5847 = vcmp.eq.f32.partialorder %v5759, inf
        %v5848 = vsel %vm5847, %v5759, %v5846
        %vm5849 = vcmp.eq.f32.partialorder %v5759, 0.0
        %v5850 = vand.u32 %v5759, 2147483648
        %v5851 = vsel %vm5849, %v5850, %v5848
        %v5852 = vrsqrt.pop %v5761
        %v5853 = vmul.f32 %v5852, %v5761
        %v5854 = vmul.f32 %v5853, %v5852
        %v5855 = vmul.f32 0.5, %v5854
        %v5856 = vsub.f32 1.5, %v5855
        %v5857 = vmul.f32 %v5852, %v5856
        %v5858 = vmul.f32 %v5761, %v5857
        %vm5859 = vcmp.eq.f32.partialorder %v5761, inf
        %v5860 = vsel %vm5859, %v5761, %v5858
        %vm5861 = vcmp.eq.f32.partialorder %v5761, 0.0
        %v5862 = vand.u32 %v5761, 2147483648
        %v5863 = vsel %vm5861, %v5862, %v5860
        %v5864 = vrsqrt.pop %v5763
        %v5865 = vmul.f32 %v5864, %v5763
        %v5866 = vmul.f32 %v5865, %v5864
        %v5867 = vmul.f32 0.5, %v5866
        %v5868 = vsub.f32 1.5, %v5867
        %v5869 = vmul.f32 %v5864, %v5868
        %v5870 = vmul.f32 %v5763, %v5869
        %vm5871 = vcmp.eq.f32.partialorder %v5763, inf
        %v5872 = vsel %vm5871, %v5763, %v5870
        %vm5873 = vcmp.eq.f32.partialorder %v5763, 0.0
        %v5874 = vand.u32 %v5763, 2147483648
        %v5875 = vsel %vm5873, %v5874, %v5872
        %v5876 = vrsqrt.pop %v5765
        %v5877 = vmul.f32 %v5876, %v5765
        %v5878 = vmul.f32 %v5877, %v5876
        %v5879 = vmul.f32 0.5, %v5878
        %v5880 = vsub.f32 1.5, %v5879
        %v5881 = vmul.f32 %v5876, %v5880
        %v5882 = vmul.f32 %v5765, %v5881
        %vm5883 = vcmp.eq.f32.partialorder %v5765, inf
        %v5884 = vsel %vm5883, %v5765, %v5882
        %vm5885 = vcmp.eq.f32.partialorder %v5765, 0.0
        %v5886 = vand.u32 %v5765, 2147483648
        %v5887 = vsel %vm5885, %v5886, %v5884
        %v5888 = vrsqrt.pop %v5767
        %v5889 = vmul.f32 %v5888, %v5767
        %v5890 = vmul.f32 %v5889, %v5888
        %v5891 = vmul.f32 0.5, %v5890
        %v5892 = vsub.f32 1.5, %v5891
        %v5893 = vmul.f32 %v5888, %v5892
        %v5894 = vmul.f32 %v5767, %v5893
        %vm5895 = vcmp.eq.f32.partialorder %v5767, inf
        %v5896 = vsel %vm5895, %v5767, %v5894
        %vm5897 = vcmp.eq.f32.partialorder %v5767, 0.0
        %v5898 = vand.u32 %v5767, 2147483648
        %v5899 = vsel %vm5897, %v5898, %v5896
        %v5900 = vrsqrt.pop %v5769
        %v5901 = vmul.f32 %v5900, %v5769
        %v5902 = vmul.f32 %v5901, %v5900
        %v5903 = vmul.f32 0.5, %v5902
        %v5904 = vsub.f32 1.5, %v5903
        %v5905 = vmul.f32 %v5900, %v5904
        %v5906 = vmul.f32 %v5769, %v5905
        %vm5907 = vcmp.eq.f32.partialorder %v5769, inf
        %v5908 = vsel %vm5907, %v5769, %v5906
        %vm5909 = vcmp.eq.f32.partialorder %v5769, 0.0
        %v5910 = vand.u32 %v5769, 2147483648
        %v5911 = vsel %vm5909, %v5910, %v5908
        %v5912 = vrsqrt.pop %v5771
        %v5913 = vmul.f32 %v5912, %v5771
        %v5914 = vmul.f32 %v5913, %v5912
        %v5915 = vmul.f32 0.5, %v5914
        %v5916 = vsub.f32 1.5, %v5915
        %v5917 = vmul.f32 %v5912, %v5916
        %v5918 = vmul.f32 %v5771, %v5917
        %vm5919 = vcmp.eq.f32.partialorder %v5771, inf
        %v5920 = vsel %vm5919, %v5771, %v5918
        %vm5921 = vcmp.eq.f32.partialorder %v5771, 0.0
        %v5922 = vand.u32 %v5771, 2147483648
        %v5923 = vsel %vm5921, %v5922, %v5920
        %v5924 = vrsqrt.pop %v5773
        %v5925 = vmul.f32 %v5924, %v5773
        %v5926 = vmul.f32 %v5925, %v5924
        %v5927 = vmul.f32 0.5, %v5926
        %v5928 = vsub.f32 1.5, %v5927
        %v5929 = vmul.f32 %v5924, %v5928
        %v5930 = vmul.f32 %v5773, %v5929
        %vm5931 = vcmp.eq.f32.partialorder %v5773, inf
        %v5932 = vsel %vm5931, %v5773, %v5930
        %vm5933 = vcmp.eq.f32.partialorder %v5773, 0.0
        %v5934 = vand.u32 %v5773, 2147483648
        %v5935 = vsel %vm5933, %v5934, %v5932
        %v5936 = vrsqrt.pop %v5775
        %v5937 = vmul.f32 %v5936, %v5775
        %v5938 = vmul.f32 %v5937, %v5936
        %v5939 = vmul.f32 0.5, %v5938
        %v5940 = vsub.f32 1.5, %v5939
        %v5941 = vmul.f32 %v5936, %v5940
        %v5942 = vmul.f32 %v5775, %v5941
        %vm5943 = vcmp.eq.f32.partialorder %v5775, inf
        %v5944 = vsel %vm5943, %v5775, %v5942
        %vm5945 = vcmp.eq.f32.partialorder %v5775, 0.0
        %v5946 = vand.u32 %v5775, 2147483648
        %v5947 = vsel %vm5945, %v5946, %v5944
        %v5948 = vrsqrt.pop %v5777
        %v5949 = vmul.f32 %v5948, %v5777
        %v5950 = vmul.f32 %v5949, %v5948
        %v5951 = vmul.f32 0.5, %v5950
        %v5952 = vsub.f32 1.5, %v5951
        %v5953 = vmul.f32 %v5948, %v5952
        %v5954 = vmul.f32 %v5777, %v5953
        %vm5955 = vcmp.eq.f32.partialorder %v5777, inf
        %v5956 = vsel %vm5955, %v5777, %v5954
        %vm5957 = vcmp.eq.f32.partialorder %v5777, 0.0
        %v5958 = vand.u32 %v5777, 2147483648
        %v5959 = vsel %vm5957, %v5958, %v5956
        %v5960 = vrsqrt.pop %v5779
        %v5961 = vmul.f32 %v5960, %v5779
        %v5962 = vmul.f32 %v5961, %v5960
        %v5963 = vmul.f32 0.5, %v5962
        %v5964 = vsub.f32 1.5, %v5963
        %v5965 = vmul.f32 %v5960, %v5964
        %v5966 = vmul.f32 %v5779, %v5965
        %vm5967 = vcmp.eq.f32.partialorder %v5779, inf
        %v5968 = vsel %vm5967, %v5779, %v5966
        %vm5969 = vcmp.eq.f32.partialorder %v5779, 0.0
        %v5970 = vand.u32 %v5779, 2147483648
        %v5971 = vsel %vm5969, %v5970, %v5968
        %v5972 = vadd.f32 %v5791, 1e-08
        %v5973 = vadd.f32 %v5803, 1e-08
        %v5974 = vadd.f32 %v5815, 1e-08
        %v5975 = vadd.f32 %v5827, 1e-08
        %v5976 = vadd.f32 %v5839, 1e-08
        %v5977 = vadd.f32 %v5851, 1e-08
        %v5978 = vadd.f32 %v5863, 1e-08
        %v5979 = vadd.f32 %v5875, 1e-08
        %v5980 = vadd.f32 %v5887, 1e-08
        %v5981 = vadd.f32 %v5899, 1e-08
        %v5982 = vadd.f32 %v5911, 1e-08
        %v5983 = vadd.f32 %v5923, 1e-08
        %v5984 = vadd.f32 %v5935, 1e-08
        %v5985 = vadd.f32 %v5947, 1e-08
        %v5986 = vadd.f32 %v5959, 1e-08
        %v5987 = vadd.f32 %v5971, 1e-08
        %v5988 = vrcp.pop %v5972
        %v5989 = vmul.f32 %v5972, %v5988
        %v5990 = vsub.f32 1.0, %v5989
        %v5991 = vmul.f32 %v5988, %v5990
        %v5992 = vadd.f32 %v5988, %v5991
        %vm5993 = vweird.f32 %v5972
        %vm5994 = vweird.f32 %v5988
        %vm5995 = vmor %vm5993, %vm5994
        %v5996 = vsel %vm5995, %v5988, %v5992
        %v5997 = vand.u32 2147483647, %v5972
        %vm5998 = vcmp.eq.f32.partialorder %v5997, 8.507059e+37
        %v5999 = vand.u32 %v5972, 2147483648
        %v6000 = vor.u32 1.1754944e-38, %v5999
        %v6001 = vsel %vm5998, %v6000, %v5996
        %v6002 = vmul.f32 %v5716, %v6001
        %v6003 = vrcp.pop %v5973
        %v6004 = vmul.f32 %v5973, %v6003
        %v6005 = vsub.f32 1.0, %v6004
        %v6006 = vmul.f32 %v6003, %v6005
        %v6007 = vadd.f32 %v6003, %v6006
        %vm6008 = vweird.f32 %v5973
        %vm6009 = vweird.f32 %v6003
        %vm6010 = vmor %vm6008, %vm6009
        %v6011 = vsel %vm6010, %v6003, %v6007
        %v6012 = vand.u32 2147483647, %v5973
        %vm6013 = vcmp.eq.f32.partialorder %v6012, 8.507059e+37
        %v6014 = vand.u32 %v5973, 2147483648
        %v6015 = vor.u32 1.1754944e-38, %v6014
        %v6016 = vsel %vm6013, %v6015, %v6011
        %v6017 = vmul.f32 %v5717, %v6016
        %v6018 = vrcp.pop %v5974
        %v6019 = vmul.f32 %v5974, %v6018
        %v6020 = vsub.f32 1.0, %v6019
        %v6021 = vmul.f32 %v6018, %v6020
        %v6022 = vadd.f32 %v6018, %v6021
        %vm6023 = vweird.f32 %v5974
        %vm6024 = vweird.f32 %v6018
        %vm6025 = vmor %vm6023, %vm6024
        %v6026 = vsel %vm6025, %v6018, %v6022
        %v6027 = vand.u32 2147483647, %v5974
        %vm6028 = vcmp.eq.f32.partialorder %v6027, 8.507059e+37
        %v6029 = vand.u32 %v5974, 2147483648
        %v6030 = vor.u32 1.1754944e-38, %v6029
        %v6031 = vsel %vm6028, %v6030, %v6026
        %v6032 = vmul.f32 %v5718, %v6031
        %v6033 = vrcp.pop %v5975
        %v6034 = vmul.f32 %v5975, %v6033
        %v6035 = vsub.f32 1.0, %v6034
        %v6036 = vmul.f32 %v6033, %v6035
        %v6037 = vadd.f32 %v6033, %v6036
        %vm6038 = vweird.f32 %v5975
        %vm6039 = vweird.f32 %v6033
        %vm6040 = vmor %vm6038, %vm6039
        %v6041 = vsel %vm6040, %v6033, %v6037
        %v6042 = vand.u32 2147483647, %v5975
        %vm6043 = vcmp.eq.f32.partialorder %v6042, 8.507059e+37
        %v6044 = vand.u32 %v5975, 2147483648
        %v6045 = vor.u32 1.1754944e-38, %v6044
        %v6046 = vsel %vm6043, %v6045, %v6041
        %v6047 = vmul.f32 %v5719, %v6046
        %v6048 = vrcp.pop %v5976
        %v6049 = vmul.f32 %v5976, %v6048
        %v6050 = vsub.f32 1.0, %v6049
        %v6051 = vmul.f32 %v6048, %v6050
        %v6052 = vadd.f32 %v6048, %v6051
        %vm6053 = vweird.f32 %v5976
        %vm6054 = vweird.f32 %v6048
        %vm6055 = vmor %vm6053, %vm6054
        %v6056 = vsel %vm6055, %v6048, %v6052
        %v6057 = vand.u32 2147483647, %v5976
        %vm6058 = vcmp.eq.f32.partialorder %v6057, 8.507059e+37
        %v6059 = vand.u32 %v5976, 2147483648
        %v6060 = vor.u32 1.1754944e-38, %v6059
        %v6061 = vsel %vm6058, %v6060, %v6056
        %v6062 = vmul.f32 %v5720, %v6061
        %v6063 = vrcp.pop %v5977
        %v6064 = vmul.f32 %v5977, %v6063
        %v6065 = vsub.f32 1.0, %v6064
        %v6066 = vmul.f32 %v6063, %v6065
        %v6067 = vadd.f32 %v6063, %v6066
        %vm6068 = vweird.f32 %v5977
        %vm6069 = vweird.f32 %v6063
        %vm6070 = vmor %vm6068, %vm6069
        %v6071 = vsel %vm6070, %v6063, %v6067
        %v6072 = vand.u32 2147483647, %v5977
        %vm6073 = vcmp.eq.f32.partialorder %v6072, 8.507059e+37
        %v6074 = vand.u32 %v5977, 2147483648
        %v6075 = vor.u32 1.1754944e-38, %v6074
        %v6076 = vsel %vm6073, %v6075, %v6071
        %v6077 = vmul.f32 %v5721, %v6076
        %v6078 = vrcp.pop %v5978
        %v6079 = vmul.f32 %v5978, %v6078
        %v6080 = vsub.f32 1.0, %v6079
        %v6081 = vmul.f32 %v6078, %v6080
        %v6082 = vadd.f32 %v6078, %v6081
        %vm6083 = vweird.f32 %v5978
        %vm6084 = vweird.f32 %v6078
        %vm6085 = vmor %vm6083, %vm6084
        %v6086 = vsel %vm6085, %v6078, %v6082
        %v6087 = vand.u32 2147483647, %v5978
        %vm6088 = vcmp.eq.f32.partialorder %v6087, 8.507059e+37
        %v6089 = vand.u32 %v5978, 2147483648
        %v6090 = vor.u32 1.1754944e-38, %v6089
        %v6091 = vsel %vm6088, %v6090, %v6086
        %v6092 = vmul.f32 %v5722, %v6091
        %v6093 = vrcp.pop %v5979
        %v6094 = vmul.f32 %v5979, %v6093
        %v6095 = vsub.f32 1.0, %v6094
        %v6096 = vmul.f32 %v6093, %v6095
        %v6097 = vadd.f32 %v6093, %v6096
        %vm6098 = vweird.f32 %v5979
        %vm6099 = vweird.f32 %v6093
        %vm6100 = vmor %vm6098, %vm6099
        %v6101 = vsel %vm6100, %v6093, %v6097
        %v6102 = vand.u32 2147483647, %v5979
        %vm6103 = vcmp.eq.f32.partialorder %v6102, 8.507059e+37
        %v6104 = vand.u32 %v5979, 2147483648
        %v6105 = vor.u32 1.1754944e-38, %v6104
        %v6106 = vsel %vm6103, %v6105, %v6101
        %v6107 = vmul.f32 %v5723, %v6106
        %v6108 = vrcp.pop %v5980
        %v6109 = vmul.f32 %v5980, %v6108
        %v6110 = vsub.f32 1.0, %v6109
        %v6111 = vmul.f32 %v6108, %v6110
        %v6112 = vadd.f32 %v6108, %v6111
        %vm6113 = vweird.f32 %v5980
        %vm6114 = vweird.f32 %v6108
        %vm6115 = vmor %vm6113, %vm6114
        %v6116 = vsel %vm6115, %v6108, %v6112
        %v6117 = vand.u32 2147483647, %v5980
        %vm6118 = vcmp.eq.f32.partialorder %v6117, 8.507059e+37
        %v6119 = vand.u32 %v5980, 2147483648
        %v6120 = vor.u32 1.1754944e-38, %v6119
        %v6121 = vsel %vm6118, %v6120, %v6116
        %v6122 = vmul.f32 %v5724, %v6121
        %v6123 = vrcp.pop %v5981
        %v6124 = vmul.f32 %v5981, %v6123
        %v6125 = vsub.f32 1.0, %v6124
        %v6126 = vmul.f32 %v6123, %v6125
        %v6127 = vadd.f32 %v6123, %v6126
        %vm6128 = vweird.f32 %v5981
        %vm6129 = vweird.f32 %v6123
        %vm6130 = vmor %vm6128, %vm6129
        %v6131 = vsel %vm6130, %v6123, %v6127
        %v6132 = vand.u32 2147483647, %v5981
        %vm6133 = vcmp.eq.f32.partialorder %v6132, 8.507059e+37
        %v6134 = vand.u32 %v5981, 2147483648
        %v6135 = vor.u32 1.1754944e-38, %v6134
        %v6136 = vsel %vm6133, %v6135, %v6131
        %v6137 = vmul.f32 %v5725, %v6136
        %v6138 = vrcp.pop %v5982
        %v6139 = vmul.f32 %v5982, %v6138
        %v6140 = vsub.f32 1.0, %v6139
        %v6141 = vmul.f32 %v6138, %v6140
        %v6142 = vadd.f32 %v6138, %v6141
        %vm6143 = vweird.f32 %v5982
        %vm6144 = vweird.f32 %v6138
        %vm6145 = vmor %vm6143, %vm6144
        %v6146 = vsel %vm6145, %v6138, %v6142
        %v6147 = vand.u32 2147483647, %v5982
        %vm6148 = vcmp.eq.f32.partialorder %v6147, 8.507059e+37
        %v6149 = vand.u32 %v5982, 2147483648
        %v6150 = vor.u32 1.1754944e-38, %v6149
        %v6151 = vsel %vm6148, %v6150, %v6146
        %v6152 = vmul.f32 %v5726, %v6151
        %v6153 = vrcp.pop %v5983
        %v6154 = vmul.f32 %v5983, %v6153
        %v6155 = vsub.f32 1.0, %v6154
        %v6156 = vmul.f32 %v6153, %v6155
        %v6157 = vadd.f32 %v6153, %v6156
        %vm6158 = vweird.f32 %v5983
        %vm6159 = vweird.f32 %v6153
        %vm6160 = vmor %vm6158, %vm6159
        %v6161 = vsel %vm6160, %v6153, %v6157
        %v6162 = vand.u32 2147483647, %v5983
        %vm6163 = vcmp.eq.f32.partialorder %v6162, 8.507059e+37
        %v6164 = vand.u32 %v5983, 2147483648
        %v6165 = vor.u32 1.1754944e-38, %v6164
        %v6166 = vsel %vm6163, %v6165, %v6161
        %v6167 = vmul.f32 %v5727, %v6166
        %v6168 = vrcp.pop %v5984
        %v6169 = vmul.f32 %v5984, %v6168
        %v6170 = vsub.f32 1.0, %v6169
        %v6171 = vmul.f32 %v6168, %v6170
        %v6172 = vadd.f32 %v6168, %v6171
        %vm6173 = vweird.f32 %v5984
        %vm6174 = vweird.f32 %v6168
        %vm6175 = vmor %vm6173, %vm6174
        %v6176 = vsel %vm6175, %v6168, %v6172
        %v6177 = vand.u32 2147483647, %v5984
        %vm6178 = vcmp.eq.f32.partialorder %v6177, 8.507059e+37
        %v6179 = vand.u32 %v5984, 2147483648
        %v6180 = vor.u32 1.1754944e-38, %v6179
        %v6181 = vsel %vm6178, %v6180, %v6176
        %v6182 = vmul.f32 %v5728, %v6181
        %v6183 = vrcp.pop %v5985
        %v6184 = vmul.f32 %v5985, %v6183
        %v6185 = vsub.f32 1.0, %v6184
        %v6186 = vmul.f32 %v6183, %v6185
        %v6187 = vadd.f32 %v6183, %v6186
        %vm6188 = vweird.f32 %v5985
        %vm6189 = vweird.f32 %v6183
        %vm6190 = vmor %vm6188, %vm6189
        %v6191 = vsel %vm6190, %v6183, %v6187
        %v6192 = vand.u32 2147483647, %v5985
        %vm6193 = vcmp.eq.f32.partialorder %v6192, 8.507059e+37
        %v6194 = vand.u32 %v5985, 2147483648
        %v6195 = vor.u32 1.1754944e-38, %v6194
        %v6196 = vsel %vm6193, %v6195, %v6191
        %v6197 = vmul.f32 %v5729, %v6196
        %v6198 = vrcp.pop %v5986
        %v6199 = vmul.f32 %v5986, %v6198
        %v6200 = vsub.f32 1.0, %v6199
        %v6201 = vmul.f32 %v6198, %v6200
        %v6202 = vadd.f32 %v6198, %v6201
        %vm6203 = vweird.f32 %v5986
        %vm6204 = vweird.f32 %v6198
        %vm6205 = vmor %vm6203, %vm6204
        %v6206 = vsel %vm6205, %v6198, %v6202
        %v6207 = vand.u32 2147483647, %v5986
        %vm6208 = vcmp.eq.f32.partialorder %v6207, 8.507059e+37
        %v6209 = vand.u32 %v5986, 2147483648
        %v6210 = vor.u32 1.1754944e-38, %v6209
        %v6211 = vsel %vm6208, %v6210, %v6206
        %v6212 = vmul.f32 %v5730, %v6211
        %v6213 = vrcp.pop %v5987
        %v6214 = vmul.f32 %v5987, %v6213
        %v6215 = vsub.f32 1.0, %v6214
        %v6216 = vmul.f32 %v6213, %v6215
        %v6217 = vadd.f32 %v6213, %v6216
        %vm6218 = vweird.f32 %v5987
        %vm6219 = vweird.f32 %v6213
        %vm6220 = vmor %vm6218, %vm6219
        %v6221 = vsel %vm6220, %v6213, %v6217
        %v6222 = vand.u32 2147483647, %v5987
        %vm6223 = vcmp.eq.f32.partialorder %v6222, 8.507059e+37
        %v6224 = vand.u32 %v5987, 2147483648
        %v6225 = vor.u32 1.1754944e-38, %v6224
        %v6226 = vsel %vm6223, %v6225, %v6221
        %v6227 = vmul.f32 %v5731, %v6226
        %6228 = vst [vmem:[%s437] sm:$0xff] %v6002
        %6229 = vst [vmem:[%s437 + $0x8] sm:$0xff] %v6017
        %6230 = vst [vmem:[%s437 + $0x10] sm:$0xff] %v6032
        %6231 = vst [vmem:[%s437 + $0x18] sm:$0xff] %v6047
        %6232 = vst [vmem:[%s437 + $0x20] sm:$0xff] %v6062
        %6233 = vst [vmem:[%s437 + $0x28] sm:$0xff] %v6077
        %6234 = vst [vmem:[%s437 + $0x30] sm:$0xff] %v6092
        %6235 = vst [vmem:[%s437 + $0x38] sm:$0xff] %v6107
        %6236 = vst [vmem:[%s437 + $0x40] sm:$0xff] %v6122
        %6237 = vst [vmem:[%s437 + $0x48] sm:$0xff] %v6137
        %6238 = vst [vmem:[%s437 + $0x50] sm:$0xff] %v6152
        %6239 = vst [vmem:[%s437 + $0x58] sm:$0xff] %v6167
        %6240 = vst [vmem:[%s437 + $0x60] sm:$0xff] %v6182
        %6241 = vst [vmem:[%s437 + $0x68] sm:$0xff] %v6197
        %6242 = vst [vmem:[%s437 + $0x70] sm:$0xff] %v6212
        %6243 = vst [vmem:[%s437 + $0x78] sm:$0xff] %v6227
        %s6244 = sand.u32 %s264, 1
        %s6245 = scalar_lea.sflag [#allocation4], %s6244
        %s6246 = sand.u32 %s264, 1
        %s6247 = smul.addr %s6246, 128
        %s6248 = scalar_lea.vmem [#allocation7], %s6247
        // Predicated region
        $region69: #{tpu_custom_call.1} parent=59 // pred_check
          %p6249 = pneg %p274
        $region70: #{tpu_custom_call.1} parent=59 // pred_check_branch
          %6251 = sbr.rel (%p6249) target = $region72
        $region71: #{tpu_custom_call.1} parent=59 // pred_region
          %s6252 = smul.u32 16, %s26
          %6254 = vsyncadd %s6245, 0
          %s6255 = smul.addr %s6252, 8
          %s6256 = scalar_lea.hbm %s10, %s6255
          %s6257 = sshll.u32 %s6248, 4
          %s6258 = int_to_ptr.vmem [resolvable:$true] %s6257
          %s6259 = sshll.u32 %s6256, 4
          %s6260 = int_to_ptr.hbm [resolvable:$true] %s6259
          %6265 = dma.vmem_to_hbm [thread:$0]  %s6258, 2048, %s6260, %s6245, 128, 128, 8
        $region72: #{tpu_custom_call.1} parent=59 // pred_fallthru
          _
      $region60: #{tpu_custom_call.1} parent=5 // pred_fallthru
        _
      %p6266 = scmp.le.s32.totalorder 2, %s21
      // Predicated region
      $region73: #{tpu_custom_call.1} parent=5 // pred_check
        %p6267 = pneg %p6266
      $region74: #{tpu_custom_call.1} parent=5 // pred_check_branch
        %6269 = sbr.rel (%p6267) target = $region76
      $region75: #{tpu_custom_call.1} parent=5 // pred_region
        %s6270 = ssub.s32 %s21, 2
        // Predicated region
        $region77: #{tpu_custom_call.1} parent=75 // pred_check
          %p6271 = pneg %p280
        $region78: #{tpu_custom_call.1} parent=75 // pred_check_branch
          %6273 = sbr.rel (%p6271) target = $region80
        $region79: #{tpu_custom_call.1} parent=75 // pred_region
          %s6274 = sand.u32 %s265, 1
          %s6275 = scalar_lea.sflag [#allocation4], %s6274
          %s6276 = sand.u32 %s265, 1
          %s6277 = smul.addr %s6276, 128
          %s6278 = scalar_lea.vmem [#allocation7], %s6277
          %6280 = dma.done %s6275, 2048
        $region80: #{tpu_custom_call.1} parent=75 // pred_fallthru
          _
      $region76: #{tpu_custom_call.1} parent=5 // pred_fallthru
        _
    $region6: #{tpu_custom_call.1} parent=1 // loop_footer
      %s25 = sadd.s32 1, %s21
    $region7: #{tpu_custom_call.1} parent=1 // loop_footer_branch
      %20 = sbr.rel target = $region3
    $region8: #{tpu_custom_call.1} parent=1 // loop_exit
      _
    %6281 = vsyncpa [#allocation3], 1
    %s6282 = scalar_lea.sflag [#allocation3], 1
    %6283 = vsyncpa %s6282, 1
    %6284 = vsyncpa [#allocation6], 1
    %6285 = vsyncpa [#allocation4], 1
    %s6286 = scalar_lea.sflag [#allocation4], 1
    %6287 = vsyncpa %s6286, 1

</llo_original>
